<compile_context>
chip_gen: v7x
topology: tpu7x:2x2x1
jax: 0.10.0
libtpu: 0.0.40
codegen_flags: <defaults>
</compile_context>

<pallas_src>
import functools

import jax
import jax.numpy as jnp
from jax.experimental import pallas as pl
from jax.experimental.pallas import tpu as pltpu

POOL = 5     # maxout pool size from the module
LANE = 128   # TPU lane width; each maxout slice is one padded vreg width


# ---------------------------------------------------------------------------
# Pallas kernels
# ---------------------------------------------------------------------------
def _conv_gemm_maxout_kernel(a_ref, w_ref, b_ref, o_ref, *, pool):
    """One (TM, K) patch-row tile. Per maxout slice q: (TM,K)@(K,128) + bias_q,
    running max across the `pool` slices. Only a (TM, 128) f32 value stays live
    (no (TM, pool*128) intermediate); the output store is lane-dense."""
    a = a_ref[...]
    out = jnp.dot(a, w_ref[0], preferred_element_type=jnp.float32) + b_ref[0]
    for q in range(1, pool):
        out = jnp.maximum(
            out,
            jnp.dot(a, w_ref[q], preferred_element_type=jnp.float32) + b_ref[q])
    o_ref[...] = out.astype(o_ref.dtype)


def _pick_tm(M, max_tm=1024, min_steps=4):
    """>= min_steps grid steps keeps the 'parallel' axis able to feed both v7x
    TensorCores; the cap bounds per-step VMEM on every generation."""
    tm = ((-(-M // min_steps)) + 7) // 8 * 8
    return max(8, min(max_tm, tm))


def conv_gemm_maxout(a, w_pad, b_pad, *, tm=None, pool=POOL, lane=LANE):
    """a: (M, K) bf16 im2col patches; w_pad: (pool, K, 128) bf16 (permuted +
    zero-padded); b_pad: (pool, 1, 128) f32. Returns (M, 128) bf16; only the
    first Cout//pool lanes are valid."""
    M, K = a.shape
    if tm is None:
        tm = _pick_tm(M)
    mp = pl.cdiv(M, tm) * tm
    if mp != M:
        a = jnp.pad(a, ((0, mp - M), (0, 0)))
    out = pl.pallas_call(
        functools.partial(_conv_gemm_maxout_kernel, pool=pool),
        out_shape=jax.ShapeDtypeStruct((mp, lane), jnp.bfloat16),
        grid=(mp // tm,),
        in_specs=[
            pl.BlockSpec((tm, K), lambda i: (i, 0)),           # activation tile
            pl.BlockSpec((pool, K, lane), lambda i: (0, 0, 0)),  # weight resident
            pl.BlockSpec((pool, 1, lane), lambda i: (0, 0, 0)),  # bias resident
        ],
        out_specs=pl.BlockSpec((tm, lane), lambda i: (i, 0)),
        compiler_params=pltpu.CompilerParams(
            dimension_semantics=("parallel",),
            vmem_limit_bytes=16 * 1024 * 1024,
        ),
    )(a, w_pad, b_pad)
    return out[:M]


def _fc_tail_kernel(flat_ref, w3_ref, b3_ref, w4_ref, b4_ref, o_ref, acc_ref,
                    *, pool, g1):
    """Fused fc1 (K-tiled) + maxout + fc3 + softmax. Grid axis = fc1 reduction."""
    k = pl.program_id(0)

    @pl.when(k == 0)
    def _():
        acc_ref[...] = jnp.zeros_like(acc_ref)

    acc_ref[...] += jnp.dot(flat_ref[...], w3_ref[...],
                            preferred_element_type=jnp.float32)

    @pl.when(k == pl.num_programs(0) - 1)
    def _():
        z = acc_ref[...] + b3_ref[...]              # (Bp, 128); first 120 valid
        m = z[:, 0:g1]
        for q in range(1, pool):                    # maxout(5): 120 -> 24
            m = jnp.maximum(m, z[:, q * g1:(q + 1) * g1])
        logits = jnp.dot(m, w4_ref[...], preferred_element_type=jnp.float32)
        logits = logits + b4_ref[...]               # pad lanes carry -1e30 bias
        mx = jnp.max(logits, axis=-1, keepdims=True)
        e = jnp.exp(logits - mx)                    # pad lanes underflow to 0 (f32)
        inv = pl.reciprocal(jnp.sum(e, axis=-1, keepdims=True), approx=True)
        o_ref[...] = (e * inv).astype(o_ref.dtype)


def fc_tail(flat, w3_pad, b3_pad, w4_pad, b4_pad, *, out_dim, tk=9216):
    """flat: (B, 18432) bf16. Returns (B, out_dim) f32 softmax probabilities."""
    B, K = flat.shape
    assert K % tk == 0, (K, tk)
    bp = max(16, ((B + 15) // 16) * 16)     # 16 sublanes/vreg for bf16 operands
    if bp != B:
        flat = jnp.pad(flat, ((0, bp - B), (0, 0)))
    nk = K // tk
    kin = w4_pad.shape[0]      # 24
    lane = w4_pad.shape[1]     # 128
    out = pl.pallas_call(
        functools.partial(_fc_tail_kernel, pool=POOL, g1=120 // POOL),
        out_shape=jax.ShapeDtypeStruct((bp, lane), jnp.float32),
        grid=(nk,),
        in_specs=[
            pl.BlockSpec((bp, tk), lambda k: (0, k)),     # activation K tile
            pl.BlockSpec((tk, lane), lambda k: (k, 0)),   # fc1 weight K tile
            pl.BlockSpec((1, lane), lambda k: (0, 0)),    # fc1 bias (resident)
            pl.BlockSpec((kin, lane), lambda k: (0, 0)),  # fc3 weight (resident)
            pl.BlockSpec((1, lane), lambda k: (0, 0)),    # fc3 bias (resident)
        ],
        out_specs=pl.BlockSpec((bp, lane), lambda k: (0, 0)),
        scratch_shapes=[pltpu.VMEM((bp, lane), jnp.float32)],
        compiler_params=pltpu.CompilerParams(
            dimension_semantics=("arbitrary",),
            vmem_limit_bytes=16 * 1024 * 1024,
        ),
    )(flat, w3_pad, b3_pad, w4_pad, b4_pad)
    return out[:B, :out_dim]


# ---------------------------------------------------------------------------
# Glue (plain JAX): im2col (NHWC), one-time weight preprocessing, init
# ---------------------------------------------------------------------------
def im2col_nhwc(x, k):
    """x: (B, H, W, C) -> patches (B*Ho*Wo, k*k*C), columns ordered (kh, kw, c),
    rows ordered (b, oh, ow)."""
    B, H, W, C = x.shape
    Ho, Wo = H - k + 1, W - k + 1
    cols = []
    for kh in range(k):
        for kw in range(k):
            cols.append(x[:, kh:kh + Ho, kw:kw + Wo, :])   # (B, Ho, Wo, C)
    p = jnp.stack(cols, axis=3)                            # (B, Ho, Wo, k*k, C)
    return p.reshape(B * Ho * Wo, k * k * C), (Ho, Wo)


def maxout_perm(n, pool=POOL):
    # new column q*(n//pool)+g holds original channel g*pool+q
    return jnp.arange(n).reshape(n // pool, pool).T.reshape(-1)


def _prep_conv(w_torch, b_torch, pool=POOL, lane=LANE):
    """torch conv weight (Cout, Cin, kh, kw) -> per-maxout-slice GEMM weights:
    (pool, K, 128) where slice q, lane g holds original output channel
    g*pool+q; pad lanes (g..127) are zero in every slice."""
    cout, cin, kh, kw = w_torch.shape
    g = cout // pool
    K = kh * kw * cin
    wm = jnp.transpose(w_torch, (2, 3, 1, 0)).reshape(K, cout)   # (K, Cout)
    wq = jnp.transpose(wm.reshape(K, g, pool), (2, 0, 1))        # (pool, K, g)
    bq = b_torch.reshape(g, pool).T                              # (pool, g)
    w_pad = jnp.zeros((pool, K, lane), jnp.float32).at[:, :, :g].set(wq)
    b_pad = jnp.zeros((pool, 1, lane), jnp.float32).at[:, 0, :g].set(bq)
    # pad lanes have zero weight/bias in every slice; the maxout result there is
    # 0 and gets sliced off downstream, so valid lanes are unaffected.
    return w_pad.astype(jnp.bfloat16), b_pad.astype(jnp.float32)


def _prep_fc1(w_torch, b_torch, c2, h2, w2, pool=POOL, lane=LANE):
    """torch fc1 (120, c2*h2*w2) with (c,h,w) input order -> (18432, 128) bf16
    with columns maxout-permuted (and matched to our NHWC (h,w,c) flatten)."""
    nout = w_torch.shape[0]
    wm = w_torch.reshape(nout, c2, h2, w2)
    wm = jnp.transpose(wm, (0, 2, 3, 1)).reshape(nout, h2 * w2 * c2).T
    perm = maxout_perm(nout, pool)
    w_perm = wm[:, perm]
    b_perm = b_torch[perm]
    w_pad = jnp.zeros((wm.shape[0], lane), jnp.float32).at[:, :nout].set(w_perm)
    b_pad = jnp.zeros((1, lane), jnp.float32).at[0, :nout].set(b_perm)
    return w_pad.astype(jnp.bfloat16), b_pad


def _prep_fc3(w_torch, b_torch, lane=LANE):
    """torch fc3 (out_dim, 24) -> (24, 128) f32; pad lanes get -1e30 bias so the
    in-kernel softmax ignores them (exp underflows to 0 in f32)."""
    nout, nin = w_torch.shape
    w_pad = jnp.zeros((nin, lane), jnp.float32).at[:, :nout].set(w_torch.T)
    b_pad = jnp.full((1, lane), -1e30, jnp.float32).at[0, :nout].set(b_torch)
    return w_pad, b_pad


def prepare_params(params):
    """One-time weight layout preprocessing (hoisted out of forward())."""
    w1, b1 = _prep_conv(params["conv1_w"], params["conv1_b"])
    w2, b2 = _prep_conv(params["conv2_w"], params["conv2_b"])
    c2 = params["conv2_w"].shape[0] // POOL        # 32
    w3, b3 = _prep_fc1(params["fc1_w"], params["fc1_b"], c2, 24, 24)
    w4, b4 = _prep_fc3(params["fc3_w"], params["fc3_b"])
    return {"w1": w1, "b1": b1, "w2": w2, "b2": b2,
            "w3": w3, "b3": b3, "w4": w4, "b4": b4}


def init_params(key, in_ch, output_dim):
    ks = jax.random.split(key, 8)

    def mk(k, shape, fan_in):
        return jax.random.normal(k, shape, jnp.float32) / jnp.sqrt(float(fan_in))

    return {
        "conv1_w": mk(ks[0], (60, in_ch, 5, 5), in_ch * 25),     # torch Conv2d layout
        "conv1_b": mk(ks[1], (60,), in_ch * 25),
        "conv2_w": mk(ks[2], (160, 60 // POOL, 5, 5), (60 // POOL) * 25),
        "conv2_b": mk(ks[3], (160,), (60 // POOL) * 25),
        "fc1_w": mk(ks[4], (120, (160 // POOL) * 24 * 24), (160 // POOL) * 24 * 24),
        "fc1_b": mk(ks[5], (120,), (160 // POOL) * 24 * 24),
        "fc3_w": mk(ks[6], (output_dim, 120 // POOL), 120 // POOL),
        "fc3_b": mk(ks[7], (output_dim,), 120 // POOL),
    }


# ---------------------------------------------------------------------------
# Forward pass (mirrors BaseModel.forward)
# ---------------------------------------------------------------------------
def forward(prep, x_nchw, *, out_dim):
    B = x_nchw.shape[0]
    x = jnp.transpose(x_nchw, (0, 2, 3, 1)).astype(jnp.bfloat16)   # NHWC, bf16

    # conv1 (5x5, valid) + maxout(5): 60 -> 12 channels, spatial 32 -> 28
    a1, (h1, w1) = im2col_nhwc(x, 5)                               # (B*784, 75)
    y1 = conv_gemm_maxout(a1, prep["w1"], prep["b1"])              # (B*784, 128)
    y1 = y1[:, :60 // POOL].reshape(B, h1, w1, 60 // POOL)         # (B,28,28,12)

    # conv2 (5x5, valid) + maxout(5): 160 -> 32 channels, spatial 28 -> 24
    a2, (h2, w2) = im2col_nhwc(y1, 5)                              # (B*576, 300)
    y2 = conv_gemm_maxout(a2, prep["w2"], prep["b2"])              # (B*576, 128)

    # flatten in NHWC (h, w, c) order; fc1 weight columns were permuted in prep
    # to match PyTorch's NCHW .view(-1, 32*24*24) semantics.
    c2 = 160 // POOL
    flat = y2[:, :c2].reshape(B, h2 * w2 * c2)                     # (B, 18432)

    # fused fc1 + maxout(5) + fc3 + softmax (fc1 reduction tiled, tk=9216)
    return fc_tail(flat, prep["w3"], prep["b3"], prep["w4"], prep["b4"],
                   out_dim=out_dim)


if __name__ == "__main__":
    key = jax.random.PRNGKey(0)
    k_x, k_p = jax.random.split(key)

    B, C_IN, H, W = 2, 3, 32, 32       # 32x32 input implied by the hard-coded 24*24 view
    OUTPUT_DIM = 10

    x = jax.random.normal(k_x, (B, C_IN, H, W), jnp.float32)
    params = init_params(k_p, C_IN, OUTPUT_DIM)
    prep = prepare_params(params)      # one-time weight layout prep

    fwd = jax.jit(functools.partial(forward, out_dim=OUTPUT_DIM))
    out = fwd(prep, x)
    out = jax.block_until_ready(out)

    assert out.shape == (B, OUTPUT_DIM), out.shape
    # softmax rows must sum to ~1 (f32 math; denominator uses approx reciprocal)
    assert bool(jnp.all(jnp.abs(jnp.sum(out, axis=-1) - 1.0) < 5e-3))
    print("KERNEL_OK")
</pallas_src>

<mosaic_0001>
module attributes {stable_mosaic.version = 11 : i64} {
  func.func @_conv_gemm_maxout_kernel(%arg0: i32, %arg1: memref<392x75xbf16, #tpu.memory_space<vmem>>, %arg2: memref<5x75x128xbf16, #tpu.memory_space<vmem>>, %arg3: memref<5x1x128xf32, #tpu.memory_space<vmem>>, %arg4: memref<392x128xbf16, #tpu.memory_space<vmem>>) attributes {dimension_semantics = [#tpu.dimension_semantics<parallel>], iteration_bounds = array<i64: 4>, scalar_prefetch = 0 : i64, scratch_operands = 0 : i64, tpu.core_type = #tpu.core_type<tc>, window_params = [{transform_indices = @transform_0, window_bounds = array<i64: 392, 75>}, {pipeline_mode = #tpu.pipeline_mode<synchronous>, transform_indices = @transform_1, window_bounds = array<i64: 5, 75, 128>}, {pipeline_mode = #tpu.pipeline_mode<synchronous>, transform_indices = @transform_2, window_bounds = array<i64: 5, 1, 128>}, {transform_indices = @transform_3, window_bounds = array<i64: 392, 128>}]} {
    %c0 = arith.constant 0 : index
    %c0_0 = arith.constant 0 : index
    %0 = vector.load %arg1[%c0, %c0_0] : memref<392x75xbf16, #tpu.memory_space<vmem>>, vector<392x75xbf16>
    %c0_1 = arith.constant 0 : index
    %c0_2 = arith.constant 0 : index
    %c0_3 = arith.constant 0 : index
    %1 = vector.load %arg2[%c0_1, %c0_2, %c0_3] : memref<5x75x128xbf16, #tpu.memory_space<vmem>>, vector<1x75x128xbf16>
    %2 = vector.shape_cast %1 : vector<1x75x128xbf16> to vector<75x128xbf16>
    %cst = arith.constant dense<0.000000e+00> : vector<392x128xf32>
    %3 = tpu.matmul %0, %2, %cst {dimension_numbers = #tpu.dot_dimension_numbers<[1], [0], [0], [1], [0, 0, 1, 1], [], []>} : vector<392x75xbf16>, vector<75x128xbf16>, vector<392x128xf32> -> vector<392x128xf32>
    %c0_4 = arith.constant 0 : index
    %c0_5 = arith.constant 0 : index
    %c0_6 = arith.constant 0 : index
    %4 = vector.load %arg3[%c0_4, %c0_5, %c0_6] : memref<5x1x128xf32, #tpu.memory_space<vmem>>, vector<1x1x128xf32>
    %5 = vector.shape_cast %4 : vector<1x1x128xf32> to vector<1x128xf32>
    %6 = vector.broadcast %5 : vector<1x128xf32> to vector<392x128xf32>
    %7 = arith.addf %3, %6 : vector<392x128xf32>
    %c1 = arith.constant 1 : index
    %c0_7 = arith.constant 0 : index
    %c0_8 = arith.constant 0 : index
    %8 = vector.load %arg2[%c1, %c0_7, %c0_8] : memref<5x75x128xbf16, #tpu.memory_space<vmem>>, vector<1x75x128xbf16>
    %9 = vector.shape_cast %8 : vector<1x75x128xbf16> to vector<75x128xbf16>
    %cst_9 = arith.constant dense<0.000000e+00> : vector<392x128xf32>
    %10 = tpu.matmul %0, %9, %cst_9 {dimension_numbers = #tpu.dot_dimension_numbers<[1], [0], [0], [1], [0, 0, 1, 1], [], []>} : vector<392x75xbf16>, vector<75x128xbf16>, vector<392x128xf32> -> vector<392x128xf32>
    %c1_10 = arith.constant 1 : index
    %c0_11 = arith.constant 0 : index
    %c0_12 = arith.constant 0 : index
    %11 = vector.load %arg3[%c1_10, %c0_11, %c0_12] : memref<5x1x128xf32, #tpu.memory_space<vmem>>, vector<1x1x128xf32>
    %12 = vector.shape_cast %11 : vector<1x1x128xf32> to vector<1x128xf32>
    %13 = vector.broadcast %12 : vector<1x128xf32> to vector<392x128xf32>
    %14 = arith.addf %10, %13 : vector<392x128xf32>
    %15 = arith.maximumf %7, %14 : vector<392x128xf32>
    %c2 = arith.constant 2 : index
    %c0_13 = arith.constant 0 : index
    %c0_14 = arith.constant 0 : index
    %16 = vector.load %arg2[%c2, %c0_13, %c0_14] : memref<5x75x128xbf16, #tpu.memory_space<vmem>>, vector<1x75x128xbf16>
    %17 = vector.shape_cast %16 : vector<1x75x128xbf16> to vector<75x128xbf16>
    %cst_15 = arith.constant dense<0.000000e+00> : vector<392x128xf32>
    %18 = tpu.matmul %0, %17, %cst_15 {dimension_numbers = #tpu.dot_dimension_numbers<[1], [0], [0], [1], [0, 0, 1, 1], [], []>} : vector<392x75xbf16>, vector<75x128xbf16>, vector<392x128xf32> -> vector<392x128xf32>
    %c2_16 = arith.constant 2 : index
    %c0_17 = arith.constant 0 : index
    %c0_18 = arith.constant 0 : index
    %19 = vector.load %arg3[%c2_16, %c0_17, %c0_18] : memref<5x1x128xf32, #tpu.memory_space<vmem>>, vector<1x1x128xf32>
    %20 = vector.shape_cast %19 : vector<1x1x128xf32> to vector<1x128xf32>
    %21 = vector.broadcast %20 : vector<1x128xf32> to vector<392x128xf32>
    %22 = arith.addf %18, %21 : vector<392x128xf32>
    %23 = arith.maximumf %15, %22 : vector<392x128xf32>
    %c3 = arith.constant 3 : index
    %c0_19 = arith.constant 0 : index
    %c0_20 = arith.constant 0 : index
    %24 = vector.load %arg2[%c3, %c0_19, %c0_20] : memref<5x75x128xbf16, #tpu.memory_space<vmem>>, vector<1x75x128xbf16>
    %25 = vector.shape_cast %24 : vector<1x75x128xbf16> to vector<75x128xbf16>
    %cst_21 = arith.constant dense<0.000000e+00> : vector<392x128xf32>
    %26 = tpu.matmul %0, %25, %cst_21 {dimension_numbers = #tpu.dot_dimension_numbers<[1], [0], [0], [1], [0, 0, 1, 1], [], []>} : vector<392x75xbf16>, vector<75x128xbf16>, vector<392x128xf32> -> vector<392x128xf32>
    %c3_22 = arith.constant 3 : index
    %c0_23 = arith.constant 0 : index
    %c0_24 = arith.constant 0 : index
    %27 = vector.load %arg3[%c3_22, %c0_23, %c0_24] : memref<5x1x128xf32, #tpu.memory_space<vmem>>, vector<1x1x128xf32>
    %28 = vector.shape_cast %27 : vector<1x1x128xf32> to vector<1x128xf32>
    %29 = vector.broadcast %28 : vector<1x128xf32> to vector<392x128xf32>
    %30 = arith.addf %26, %29 : vector<392x128xf32>
    %31 = arith.maximumf %23, %30 : vector<392x128xf32>
    %c4 = arith.constant 4 : index
    %c0_25 = arith.constant 0 : index
    %c0_26 = arith.constant 0 : index
    %32 = vector.load %arg2[%c4, %c0_25, %c0_26] : memref<5x75x128xbf16, #tpu.memory_space<vmem>>, vector<1x75x128xbf16>
    %33 = vector.shape_cast %32 : vector<1x75x128xbf16> to vector<75x128xbf16>
    %cst_27 = arith.constant dense<0.000000e+00> : vector<392x128xf32>
    %34 = tpu.matmul %0, %33, %cst_27 {dimension_numbers = #tpu.dot_dimension_numbers<[1], [0], [0], [1], [0, 0, 1, 1], [], []>} : vector<392x75xbf16>, vector<75x128xbf16>, vector<392x128xf32> -> vector<392x128xf32>
    %c4_28 = arith.constant 4 : index
    %c0_29 = arith.constant 0 : index
    %c0_30 = arith.constant 0 : index
    %35 = vector.load %arg3[%c4_28, %c0_29, %c0_30] : memref<5x1x128xf32, #tpu.memory_space<vmem>>, vector<1x1x128xf32>
    %36 = vector.shape_cast %35 : vector<1x1x128xf32> to vector<1x128xf32>
    %37 = vector.broadcast %36 : vector<1x128xf32> to vector<392x128xf32>
    %38 = arith.addf %34, %37 : vector<392x128xf32>
    %39 = arith.maximumf %31, %38 : vector<392x128xf32>
    %40 = arith.truncf %39 : vector<392x128xf32> to vector<392x128xbf16>
    %c0_31 = arith.constant 0 : index
    %c0_32 = arith.constant 0 : index
    %41 = vector.load %arg4[%c0_31, %c0_32] : memref<392x128xbf16, #tpu.memory_space<vmem>>, vector<392x128xbf16>
    tpu.vector_store %arg4[%c0_31, %c0_32], %40 {strides = array<i32>} : memref<392x128xbf16, #tpu.memory_space<vmem>>, vector<392x128xbf16>,
    return
  }
  func.func @transform_0(%arg0: i32) -> (i32, i32) {
    %c0_i32 = arith.constant 0 : i32
    %c0_i32_0 = arith.constant 0 : i32
    return %arg0, %c0_i32 : i32, i32
  }
  func.func @transform_1(%arg0: i32) -> (i32, i32, i32) {
    %c0_i32 = arith.constant 0 : i32
    %c0_i32_0 = arith.constant 0 : i32
    %c0_i32_1 = arith.constant 0 : i32
    %c0_i32_2 = arith.constant 0 : i32
    return %c0_i32, %c0_i32_0, %c0_i32_1 : i32, i32, i32
  }
  func.func @transform_2(%arg0: i32) -> (i32, i32, i32) {
    %c0_i32 = arith.constant 0 : i32
    %c0_i32_0 = arith.constant 0 : i32
    %c0_i32_1 = arith.constant 0 : i32
    %c0_i32_2 = arith.constant 0 : i32
    return %c0_i32, %c0_i32_0, %c0_i32_1 : i32, i32, i32
  }
  func.func @transform_3(%arg0: i32) -> (i32, i32) {
    %c0_i32 = arith.constant 0 : i32
    %c0_i32_0 = arith.constant 0 : i32
    return %arg0, %c0_i32 : i32, i32
  }
}

module attributes {stable_mosaic.version = 11 : i64} {
  func.func @_conv_gemm_maxout_kernel(%arg0: i32, %arg1: memref<288x300xbf16, #tpu.memory_space<vmem>>, %arg2: memref<5x300x128xbf16, #tpu.memory_space<vmem>>, %arg3: memref<5x1x128xf32, #tpu.memory_space<vmem>>, %arg4: memref<288x128xbf16, #tpu.memory_space<vmem>>) attributes {dimension_semantics = [#tpu.dimension_semantics<parallel>], iteration_bounds = array<i64: 4>, scalar_prefetch = 0 : i64, scratch_operands = 0 : i64, tpu.core_type = #tpu.core_type<tc>, window_params = [{transform_indices = @transform_0, window_bounds = array<i64: 288, 300>}, {pipeline_mode = #tpu.pipeline_mode<synchronous>, transform_indices = @transform_1, window_bounds = array<i64: 5, 300, 128>}, {pipeline_mode = #tpu.pipeline_mode<synchronous>, transform_indices = @transform_2, window_bounds = array<i64: 5, 1, 128>}, {transform_indices = @transform_3, window_bounds = array<i64: 288, 128>}]} {
    %c0 = arith.constant 0 : index
    %c0_0 = arith.constant 0 : index
    %0 = vector.load %arg1[%c0, %c0_0] : memref<288x300xbf16, #tpu.memory_space<vmem>>, vector<288x300xbf16>
    %c0_1 = arith.constant 0 : index
    %c0_2 = arith.constant 0 : index
    %c0_3 = arith.constant 0 : index
    %1 = vector.load %arg2[%c0_1, %c0_2, %c0_3] : memref<5x300x128xbf16, #tpu.memory_space<vmem>>, vector<1x300x128xbf16>
    %2 = vector.shape_cast %1 : vector<1x300x128xbf16> to vector<300x128xbf16>
    %cst = arith.constant dense<0.000000e+00> : vector<288x128xf32>
    %3 = tpu.matmul %0, %2, %cst {dimension_numbers = #tpu.dot_dimension_numbers<[1], [0], [0], [1], [0, 0, 1, 1], [], []>} : vector<288x300xbf16>, vector<300x128xbf16>, vector<288x128xf32> -> vector<288x128xf32>
    %c0_4 = arith.constant 0 : index
    %c0_5 = arith.constant 0 : index
    %c0_6 = arith.constant 0 : index
    %4 = vector.load %arg3[%c0_4, %c0_5, %c0_6] : memref<5x1x128xf32, #tpu.memory_space<vmem>>, vector<1x1x128xf32>
    %5 = vector.shape_cast %4 : vector<1x1x128xf32> to vector<1x128xf32>
    %6 = vector.broadcast %5 : vector<1x128xf32> to vector<288x128xf32>
    %7 = arith.addf %3, %6 : vector<288x128xf32>
    %c1 = arith.constant 1 : index
    %c0_7 = arith.constant 0 : index
    %c0_8 = arith.constant 0 : index
    %8 = vector.load %arg2[%c1, %c0_7, %c0_8] : memref<5x300x128xbf16, #tpu.memory_space<vmem>>, vector<1x300x128xbf16>
    %9 = vector.shape_cast %8 : vector<1x300x128xbf16> to vector<300x128xbf16>
    %cst_9 = arith.constant dense<0.000000e+00> : vector<288x128xf32>
    %10 = tpu.matmul %0, %9, %cst_9 {dimension_numbers = #tpu.dot_dimension_numbers<[1], [0], [0], [1], [0, 0, 1, 1], [], []>} : vector<288x300xbf16>, vector<300x128xbf16>, vector<288x128xf32> -> vector<288x128xf32>
    %c1_10 = arith.constant 1 : index
    %c0_11 = arith.constant 0 : index
    %c0_12 = arith.constant 0 : index
    %11 = vector.load %arg3[%c1_10, %c0_11, %c0_12] : memref<5x1x128xf32, #tpu.memory_space<vmem>>, vector<1x1x128xf32>
    %12 = vector.shape_cast %11 : vector<1x1x128xf32> to vector<1x128xf32>
    %13 = vector.broadcast %12 : vector<1x128xf32> to vector<288x128xf32>
    %14 = arith.addf %10, %13 : vector<288x128xf32>
    %15 = arith.maximumf %7, %14 : vector<288x128xf32>
    %c2 = arith.constant 2 : index
    %c0_13 = arith.constant 0 : index
    %c0_14 = arith.constant 0 : index
    %16 = vector.load %arg2[%c2, %c0_13, %c0_14] : memref<5x300x128xbf16, #tpu.memory_space<vmem>>, vector<1x300x128xbf16>
    %17 = vector.shape_cast %16 : vector<1x300x128xbf16> to vector<300x128xbf16>
    %cst_15 = arith.constant dense<0.000000e+00> : vector<288x128xf32>
    %18 = tpu.matmul %0, %17, %cst_15 {dimension_numbers = #tpu.dot_dimension_numbers<[1], [0], [0], [1], [0, 0, 1, 1], [], []>} : vector<288x300xbf16>, vector<300x128xbf16>, vector<288x128xf32> -> vector<288x128xf32>
    %c2_16 = arith.constant 2 : index
    %c0_17 = arith.constant 0 : index
    %c0_18 = arith.constant 0 : index
    %19 = vector.load %arg3[%c2_16, %c0_17, %c0_18] : memref<5x1x128xf32, #tpu.memory_space<vmem>>, vector<1x1x128xf32>
    %20 = vector.shape_cast %19 : vector<1x1x128xf32> to vector<1x128xf32>
    %21 = vector.broadcast %20 : vector<1x128xf32> to vector<288x128xf32>
    %22 = arith.addf %18, %21 : vector<288x128xf32>
    %23 = arith.maximumf %15, %22 : vector<288x128xf32>
    %c3 = arith.constant 3 : index
    %c0_19 = arith.constant 0 : index
    %c0_20 = arith.constant 0 : index
    %24 = vector.load %arg2[%c3, %c0_19, %c0_20] : memref<5x300x128xbf16, #tpu.memory_space<vmem>>, vector<1x300x128xbf16>
    %25 = vector.shape_cast %24 : vector<1x300x128xbf16> to vector<300x128xbf16>
    %cst_21 = arith.constant dense<0.000000e+00> : vector<288x128xf32>
    %26 = tpu.matmul %0, %25, %cst_21 {dimension_numbers = #tpu.dot_dimension_numbers<[1], [0], [0], [1], [0, 0, 1, 1], [], []>} : vector<288x300xbf16>, vector<300x128xbf16>, vector<288x128xf32> -> vector<288x128xf32>
    %c3_22 = arith.constant 3 : index
    %c0_23 = arith.constant 0 : index
    %c0_24 = arith.constant 0 : index
    %27 = vector.load %arg3[%c3_22, %c0_23, %c0_24] : memref<5x1x128xf32, #tpu.memory_space<vmem>>, vector<1x1x128xf32>
    %28 = vector.shape_cast %27 : vector<1x1x128xf32> to vector<1x128xf32>
    %29 = vector.broadcast %28 : vector<1x128xf32> to vector<288x128xf32>
    %30 = arith.addf %26, %29 : vector<288x128xf32>
    %31 = arith.maximumf %23, %30 : vector<288x128xf32>
    %c4 = arith.constant 4 : index
    %c0_25 = arith.constant 0 : index
    %c0_26 = arith.constant 0 : index
    %32 = vector.load %arg2[%c4, %c0_25, %c0_26] : memref<5x300x128xbf16, #tpu.memory_space<vmem>>, vector<1x300x128xbf16>
    %33 = vector.shape_cast %32 : vector<1x300x128xbf16> to vector<300x128xbf16>
    %cst_27 = arith.constant dense<0.000000e+00> : vector<288x128xf32>
    %34 = tpu.matmul %0, %33, %cst_27 {dimension_numbers = #tpu.dot_dimension_numbers<[1], [0], [0], [1], [0, 0, 1, 1], [], []>} : vector<288x300xbf16>, vector<300x128xbf16>, vector<288x128xf32> -> vector<288x128xf32>
    %c4_28 = arith.constant 4 : index
    %c0_29 = arith.constant 0 : index
    %c0_30 = arith.constant 0 : index
    %35 = vector.load %arg3[%c4_28, %c0_29, %c0_30] : memref<5x1x128xf32, #tpu.memory_space<vmem>>, vector<1x1x128xf32>
    %36 = vector.shape_cast %35 : vector<1x1x128xf32> to vector<1x128xf32>
    %37 = vector.broadcast %36 : vector<1x128xf32> to vector<288x128xf32>
    %38 = arith.addf %34, %37 : vector<288x128xf32>
    %39 = arith.maximumf %31, %38 : vector<288x128xf32>
    %40 = arith.truncf %39 : vector<288x128xf32> to vector<288x128xbf16>
    %c0_31 = arith.constant 0 : index
    %c0_32 = arith.constant 0 : index
    %41 = vector.load %arg4[%c0_31, %c0_32] : memref<288x128xbf16, #tpu.memory_space<vmem>>, vector<288x128xbf16>
    tpu.vector_store %arg4[%c0_31, %c0_32], %40 {strides = array<i32>} : memref<288x128xbf16, #tpu.memory_space<vmem>>, vector<288x128xbf16>,
    return
  }
  func.func @transform_0(%arg0: i32) -> (i32, i32) {
    %c0_i32 = arith.constant 0 : i32
    %c0_i32_0 = arith.constant 0 : i32
    return %arg0, %c0_i32 : i32, i32
  }
  func.func @transform_1(%arg0: i32) -> (i32, i32, i32) {
    %c0_i32 = arith.constant 0 : i32
    %c0_i32_0 = arith.constant 0 : i32
    %c0_i32_1 = arith.constant 0 : i32
    %c0_i32_2 = arith.constant 0 : i32
    return %c0_i32, %c0_i32_0, %c0_i32_1 : i32, i32, i32
  }
  func.func @transform_2(%arg0: i32) -> (i32, i32, i32) {
    %c0_i32 = arith.constant 0 : i32
    %c0_i32_0 = arith.constant 0 : i32
    %c0_i32_1 = arith.constant 0 : i32
    %c0_i32_2 = arith.constant 0 : i32
    return %c0_i32, %c0_i32_0, %c0_i32_1 : i32, i32, i32
  }
  func.func @transform_3(%arg0: i32) -> (i32, i32) {
    %c0_i32 = arith.constant 0 : i32
    %c0_i32_0 = arith.constant 0 : i32
    return %arg0, %c0_i32 : i32, i32
  }
}

module attributes {stable_mosaic.version = 11 : i64} {
  func.func @_fc_tail_kernel(%arg0: i32, %arg1: memref<16x9216xbf16, #tpu.memory_space<vmem>>, %arg2: memref<9216x128xbf16, #tpu.memory_space<vmem>>, %arg3: memref<1x128xf32, #tpu.memory_space<vmem>>, %arg4: memref<24x128xf32, #tpu.memory_space<vmem>>, %arg5: memref<1x128xf32, #tpu.memory_space<vmem>>, %arg6: memref<16x128xf32, #tpu.memory_space<vmem>>, %arg7: memref<16x128xf32, #tpu.memory_space<vmem>>) attributes {dimension_semantics = [#tpu.dimension_semantics<arbitrary>], iteration_bounds = array<i64: 2>, scalar_prefetch = 0 : i64, scratch_operands = 1 : i64, tpu.core_type = #tpu.core_type<tc>, window_params = [{transform_indices = @transform_0, window_bounds = array<i64: 16, 9216>}, {transform_indices = @transform_1, window_bounds = array<i64: 9216, 128>}, {pipeline_mode = #tpu.pipeline_mode<synchronous>, transform_indices = @transform_2, window_bounds = array<i64: 1, 128>}, {pipeline_mode = #tpu.pipeline_mode<synchronous>, transform_indices = @transform_3, window_bounds = array<i64: 24, 128>}, {pipeline_mode = #tpu.pipeline_mode<synchronous>, transform_indices = @transform_4, window_bounds = array<i64: 1, 128>}, {pipeline_mode = #tpu.pipeline_mode<synchronous>, transform_indices = @transform_5, window_bounds = array<i64: 16, 128>}]} {
    %c0_i32 = arith.constant 0 : i32
    %0 = arith.cmpi eq, %arg0, %c0_i32 : i32
    %1 = arith.extui %0 : i1 to i32
    %c0_i32_0 = arith.constant 0 : i32
    %2 = arith.cmpi ne, %1, %c0_i32_0 : i32
    scf.if %2 {
      %cst_9 = arith.constant 0.000000e+00 : f32
      %12 = vector.broadcast %cst_9 : f32 to vector<16x128xf32>
      %c0_10 = arith.constant 0 : index
      %c0_11 = arith.constant 0 : index
      %13 = vector.load %arg7[%c0_10, %c0_11] : memref<16x128xf32, #tpu.memory_space<vmem>>, vector<16x128xf32>
      tpu.vector_store %arg7[%c0_10, %c0_11], %12 {strides = array<i32>} : memref<16x128xf32, #tpu.memory_space<vmem>>, vector<16x128xf32>,
    } else {
    }
    %c0 = arith.constant 0 : index
    %c0_1 = arith.constant 0 : index
    %3 = vector.load %arg7[%c0, %c0_1] : memref<16x128xf32, #tpu.memory_space<vmem>>, vector<16x128xf32>
    %c0_2 = arith.constant 0 : index
    %c0_3 = arith.constant 0 : index
    %4 = vector.load %arg1[%c0_2, %c0_3] : memref<16x9216xbf16, #tpu.memory_space<vmem>>, vector<16x9216xbf16>
    %c0_4 = arith.constant 0 : index
    %c0_5 = arith.constant 0 : index
    %5 = vector.load %arg2[%c0_4, %c0_5] : memref<9216x128xbf16, #tpu.memory_space<vmem>>, vector<9216x128xbf16>
    %cst = arith.constant dense<0.000000e+00> : vector<16x128xf32>
    %6 = tpu.matmul %4, %5, %cst {dimension_numbers = #tpu.dot_dimension_numbers<[1], [0], [0], [1], [0, 0, 1, 1], [], []>} : vector<16x9216xbf16>, vector<9216x128xbf16>, vector<16x128xf32> -> vector<16x128xf32>
    %7 = arith.addf %3, %6 : vector<16x128xf32>
    %c0_6 = arith.constant 0 : index
    %c0_7 = arith.constant 0 : index
    %8 = vector.load %arg7[%c0_6, %c0_7] : memref<16x128xf32, #tpu.memory_space<vmem>>, vector<16x128xf32>
    tpu.vector_store %arg7[%c0_6, %c0_7], %7 {strides = array<i32>} : memref<16x128xf32, #tpu.memory_space<vmem>>, vector<16x128xf32>,
    %c1_i32 = arith.constant 1 : i32
    %9 = arith.cmpi eq, %arg0, %c1_i32 : i32
    %10 = arith.extui %9 : i1 to i32
    %c0_i32_8 = arith.constant 0 : i32
    %11 = arith.cmpi ne, %10, %c0_i32_8 : i32
    scf.if %11 {
      %c0_9 = arith.constant 0 : index
      %c0_10 = arith.constant 0 : index
      %12 = vector.load %arg7[%c0_9, %c0_10] : memref<16x128xf32, #tpu.memory_space<vmem>>, vector<16x128xf32>
      %c0_11 = arith.constant 0 : index
      %c0_12 = arith.constant 0 : index
      %13 = vector.load %arg3[%c0_11, %c0_12] : memref<1x128xf32, #tpu.memory_space<vmem>>, vector<1x128xf32>
      %14 = vector.broadcast %13 : vector<1x128xf32> to vector<16x128xf32>
      %15 = arith.addf %12, %14 : vector<16x128xf32>
      %16 = vector.extract_strided_slice %15 {offsets = [0, 0], sizes = [16, 24], strides = [1, 1]} : vector<16x128xf32> to vector<16x24xf32>
      %17 = vector.extract_strided_slice %15 {offsets = [0, 24], sizes = [16, 24], strides = [1, 1]} : vector<16x128xf32> to vector<16x24xf32>
      %18 = arith.maximumf %16, %17 : vector<16x24xf32>
      %19 = vector.extract_strided_slice %15 {offsets = [0, 48], sizes = [16, 24], strides = [1, 1]} : vector<16x128xf32> to vector<16x24xf32>
      %20 = arith.maximumf %18, %19 : vector<16x24xf32>
      %21 = vector.extract_strided_slice %15 {offsets = [0, 72], sizes = [16, 24], strides = [1, 1]} : vector<16x128xf32> to vector<16x24xf32>
      %22 = arith.maximumf %20, %21 : vector<16x24xf32>
      %23 = vector.extract_strided_slice %15 {offsets = [0, 96], sizes = [16, 24], strides = [1, 1]} : vector<16x128xf32> to vector<16x24xf32>
      %24 = arith.maximumf %22, %23 : vector<16x24xf32>
      %c0_13 = arith.constant 0 : index
      %c0_14 = arith.constant 0 : index
      %25 = vector.load %arg4[%c0_13, %c0_14] : memref<24x128xf32, #tpu.memory_space<vmem>>, vector<24x128xf32>
      %cst_15 = arith.constant dense<0.000000e+00> : vector<16x128xf32>
      %26 = tpu.matmul %24, %25, %cst_15 {dimension_numbers = #tpu.dot_dimension_numbers<[1], [0], [0], [1], [0, 0, 1, 1], [], []>} : vector<16x24xf32>, vector<24x128xf32>, vector<16x128xf32> -> vector<16x128xf32>
      %c0_16 = arith.constant 0 : index
      %c0_17 = arith.constant 0 : index
      %27 = vector.load %arg5[%c0_16, %c0_17] : memref<1x128xf32, #tpu.memory_space<vmem>>, vector<1x128xf32>
      %28 = vector.broadcast %27 : vector<1x128xf32> to vector<16x128xf32>
      %29 = arith.addf %26, %28 : vector<16x128xf32>
      %cst_18 = arith.constant dense<0xFF800000> : vector<16xf32>
      %30 = vector.multi_reduction <maximumf>, %29, %cst_18 [1] : vector<16x128xf32> to vector<16xf32>
      %31 = vector.shape_cast %30 : vector<16xf32> to vector<16x1xf32>
      %32 = vector.broadcast %31 : vector<16x1xf32> to vector<16x128xf32>
      %33 = arith.subf %29, %32 : vector<16x128xf32>
      %34 = math.exp %33 : vector<16x128xf32>
      %cst_19 = arith.constant dense<0.000000e+00> : vector<16xf32>
      %35 = vector.multi_reduction <add>, %34, %cst_19 [1] : vector<16x128xf32> to vector<16xf32>
      %36 = vector.shape_cast %35 : vector<16xf32> to vector<16x1xf32>
      %37 = tpu.reciprocal %36 {approx = true} : vector<16x1xf32> -> vector<16x1xf32>
      %38 = vector.broadcast %37 : vector<16x1xf32> to vector<16x128xf32>
      %39 = arith.mulf %34, %38 : vector<16x128xf32>
      %c0_20 = arith.constant 0 : index
      %c0_21 = arith.constant 0 : index
      %40 = vector.load %arg6[%c0_20, %c0_21] : memref<16x128xf32, #tpu.memory_space<vmem>>, vector<16x128xf32>
      tpu.vector_store %arg6[%c0_20, %c0_21], %39 {strides = array<i32>} : memref<16x128xf32, #tpu.memory_space<vmem>>, vector<16x128xf32>,
    } else {
    }
    return
  }
  func.func @transform_0(%arg0: i32) -> (i32, i32) {
    %c0_i32 = arith.constant 0 : i32
    %c0_i32_0 = arith.constant 0 : i32
    return %c0_i32, %arg0 : i32, i32
  }
  func.func @transform_1(%arg0: i32) -> (i32, i32) {
    %c0_i32 = arith.constant 0 : i32
    %c0_i32_0 = arith.constant 0 : i32
    return %arg0, %c0_i32 : i32, i32
  }
  func.func @transform_2(%arg0: i32) -> (i32, i32) {
    %c0_i32 = arith.constant 0 : i32
    %c0_i32_0 = arith.constant 0 : i32
    %c0_i32_1 = arith.constant 0 : i32
    return %c0_i32, %c0_i32_0 : i32, i32
  }
  func.func @transform_3(%arg0: i32) -> (i32, i32) {
    %c0_i32 = arith.constant 0 : i32
    %c0_i32_0 = arith.constant 0 : i32
    %c0_i32_1 = arith.constant 0 : i32
    return %c0_i32, %c0_i32_0 : i32, i32
  }
  func.func @transform_4(%arg0: i32) -> (i32, i32) {
    %c0_i32 = arith.constant 0 : i32
    %c0_i32_0 = arith.constant 0 : i32
    %c0_i32_1 = arith.constant 0 : i32
    return %c0_i32, %c0_i32_0 : i32, i32
  }
  func.func @transform_5(%arg0: i32) -> (i32, i32) {
    %c0_i32 = arith.constant 0 : i32
    %c0_i32_0 = arith.constant 0 : i32
    %c0_i32_1 = arith.constant 0 : i32
    return %c0_i32, %c0_i32_0 : i32, i32
  }
}

</mosaic_0001>

<llo_original>
// kernel: forward.3
$region0: #{forward.3}
  #allocation0 [shape = 'u32[]', space=smem, size = 0x4, offset = 0x4, fixed_abs, tag = 'smem constant byte address 0x4 - core index']
  #allocation1 [shape = 'u32[144,128]{1,0:T(1,128)}', space=vmem, size = 0x12000, scoped, tag = 'internal scratch']
  %s0 = inlined_call_operand.vmem [shape: bf16[1568,75], index: 0, kind: input, shape index: {}]
  %s1 = inlined_call_operand.vmem [shape: bf16[5,75,128], index: 1, kind: input, shape index: {}]
  %s2 = inlined_call_operand.vmem [shape: f32[5,1,128], index: 2, kind: input, shape index: {}]
  %s3 = inlined_call_operand.vmem [shape: bf16[1568,128], index: 3, kind: output, shape index: {}]
  %s4 = sld [smem:[#allocation0]]
  $region45: #{forward.3} parent=0
    _
  %s6 = ssub.s32 1, %s4
  %s7 = scalar_select 0, %s6, %s4
  loop: start=0, step=1, limit=6
  $region2: #{forward.3} parent=0 // loop_pre_header
    _
  $region3: #{forward.3} parent=0 // loop_header
    %s9 = sphi 0, %s13
    %p10 = scmp.ge.s32.totalorder %s9, 6
    %s19 = sphi 0, %s21
    %s22 = sphi 0, %s19
    %s23 = sphi 0, %s22
    %s39 = sphi 0, %s23
    %s43 = sphi 0, %s43
    %s45 = sphi 0, %s43
    %s46 = sphi 0, %s45
    %s60 = sphi 0, %s46
    %s64 = sphi 0, %s64
    %s66 = sphi 0, %s64
    %s67 = sphi 0, %s66
    %s81 = sphi 0, %s67
    %s87 = sphi 0, %s89
    %s90 = sphi 0, %s87
    %s91 = sphi 0, %s90
    %s107 = sphi 0, %s91
  $region4: #{forward.3} parent=0 // loop_header_branch
    %12 = sbr.rel (%p10) target = $region8
  $region5: #{forward.3} parent=0 // loop_body
    %s14 = ssub.s32 %s9, 1
    %s15 = ssub.s32 %s9, 2
    %s16 = sadd.s32 %s9, 1
    %s17 = ssub.s32 %s9, %s16
    %p18 = scmp.eq.s32.totalorder %s17, 0
    %s20 = sadd.s32 %s19, 1
    %s21 = scalar_select %p18, %s19, %s20
    %p24 = pneg %p18
    %p25 = scmp.eq.s32.totalorder %s9, 3
    %p26 = por %p24, %p25
    %p27 = scmp.ne.s32.totalorder %s19, %s22
    %p28 = scmp.eq.s32.totalorder %s9, 0
    %p29 = por %p27, %p28
    %p30 = scmp.ne.s32.totalorder %s19, %s22
    %p31 = scmp.eq.s32.totalorder %s14, 3
    %p32 = por %p30, %p31
    %p33 = scmp.ne.s32.totalorder %s22, %s23
    %p34 = scmp.eq.s32.totalorder %s14, 0
    %p35 = por %p33, %p34
    %p36 = scmp.ne.s32.totalorder %s22, %s23
    %p37 = scmp.eq.s32.totalorder %s15, 3
    %p38 = por %p36, %p37
    %p40 = scmp.ne.s32.totalorder %s23, %s39
    %p41 = scmp.eq.s32.totalorder %s15, 0
    %p42 = por %p40, %p41
    %s44 = sadd.s32 %s43, 1
    %p47 = scmp.eq.s32.totalorder %s9, 3
    %p48 = scmp.ne.s32.totalorder %s43, %s45
    %p49 = scmp.eq.s32.totalorder %s9, 0
    %p50 = por %p48, %p49
    %p51 = scmp.ne.s32.totalorder %s43, %s45
    %p52 = scmp.eq.s32.totalorder %s14, 3
    %p53 = por %p51, %p52
    %p54 = scmp.ne.s32.totalorder %s45, %s46
    %p55 = scmp.eq.s32.totalorder %s14, 0
    %p56 = por %p54, %p55
    %p57 = scmp.ne.s32.totalorder %s45, %s46
    %p58 = scmp.eq.s32.totalorder %s15, 3
    %p59 = por %p57, %p58
    %p61 = scmp.ne.s32.totalorder %s46, %s60
    %p62 = scmp.eq.s32.totalorder %s15, 0
    %p63 = por %p61, %p62
    %s65 = sadd.s32 %s64, 1
    %p68 = scmp.eq.s32.totalorder %s9, 3
    %p69 = scmp.ne.s32.totalorder %s64, %s66
    %p70 = scmp.eq.s32.totalorder %s9, 0
    %p71 = por %p69, %p70
    %p72 = scmp.ne.s32.totalorder %s64, %s66
    %p73 = scmp.eq.s32.totalorder %s14, 3
    %p74 = por %p72, %p73
    %p75 = scmp.ne.s32.totalorder %s66, %s67
    %p76 = scmp.eq.s32.totalorder %s14, 0
    %p77 = por %p75, %p76
    %p78 = scmp.ne.s32.totalorder %s66, %s67
    %p79 = scmp.eq.s32.totalorder %s15, 3
    %p80 = por %p78, %p79
    %p82 = scmp.ne.s32.totalorder %s67, %s81
    %p83 = scmp.eq.s32.totalorder %s15, 0
    %p84 = por %p82, %p83
    %s85 = ssub.s32 %s9, %s16
    %p86 = scmp.eq.s32.totalorder %s85, 0
    %s88 = sadd.s32 %s87, 1
    %s89 = scalar_select %p86, %s87, %s88
    %p92 = pneg %p86
    %p93 = scmp.eq.s32.totalorder %s9, 3
    %p94 = por %p92, %p93
    %p95 = scmp.ne.s32.totalorder %s87, %s90
    %p96 = scmp.eq.s32.totalorder %s9, 0
    %p97 = por %p95, %p96
    %p98 = scmp.ne.s32.totalorder %s87, %s90
    %p99 = scmp.eq.s32.totalorder %s14, 3
    %p100 = por %p98, %p99
    %p101 = scmp.ne.s32.totalorder %s90, %s91
    %p102 = scmp.eq.s32.totalorder %s14, 0
    %p103 = por %p101, %p102
    %p104 = scmp.ne.s32.totalorder %s90, %s91
    %p105 = scmp.eq.s32.totalorder %s15, 3
    %p106 = por %p104, %p105
    %p108 = scmp.ne.s32.totalorder %s91, %s107
    %p109 = scmp.eq.s32.totalorder %s15, 0
    %p110 = por %p108, %p109
    %p111 = scmp.le.s32.totalorder 1, %s9
    %p112 = scmp.lt.s32.totalorder %s9, 5
    %p113 = pnand %p111, %p112
    %p114 = pneg %p113
    // Predicated region
    $region9: #{forward.3} parent=5 // pred_check
      _
    $region10: #{forward.3} parent=5 // pred_check_branch
      %116 = sbr.rel (%p113) target = $region12
    $region11: #{forward.3} parent=5 // pred_region
      %s117 = ssub.s32 %s9, 1
      // Predicated region
      $region13: #{forward.3} parent=11 // pred_check
        %p118 = pneg %p56
      $region14: #{forward.3} parent=11 // pred_check_branch
        %120 = sbr.rel (%p118) target = $region16
      $region15: #{forward.3} parent=11 // pred_region
        _
      $region16: #{forward.3} parent=11 // pred_fallthru
        _
      // Predicated region
      $region17: #{forward.3} parent=11 // pred_check
        %p121 = pneg %p77
      $region18: #{forward.3} parent=11 // pred_check_branch
        %123 = sbr.rel (%p121) target = $region20
      $region19: #{forward.3} parent=11 // pred_region
        _
      $region20: #{forward.3} parent=11 // pred_fallthru
        _
    $region12: #{forward.3} parent=5 // pred_fallthru
      _
    %p124 = scmp.lt.s32.totalorder %s9, 4
    // Predicated region
    $region21: #{forward.3} parent=5 // pred_check
      %p125 = pneg %p124
    $region22: #{forward.3} parent=5 // pred_check_branch
      %127 = sbr.rel (%p125) target = $region24
    $region23: #{forward.3} parent=5 // pred_region
      // Predicated region
      $region25: #{forward.3} parent=23 // pred_check
        %p128 = pneg %p29
      $region26: #{forward.3} parent=23 // pred_check_branch
        %130 = sbr.rel (%p128) target = $region28
      $region27: #{forward.3} parent=23 // pred_region
        %s131 = smul.u32 49, %s9
        %p132 = scmp.lt.s32.totalorder %s131, 195
        %s133 = scalar_select %p132, %s131, 195
        %s134 = smul.addr %s133, 4
        %s135 = scalar_lea.vmem %s0, %s134
        %s136 = smul.u32 49, %s9
      $region28: #{forward.3} parent=23 // pred_fallthru
        _
    $region24: #{forward.3} parent=5 // pred_fallthru
      _
    %p137 = scmp.le.s32.totalorder 1, %s9
    %p138 = scmp.lt.s32.totalorder %s9, 5
    %p139 = pnand %p137, %p138
    %p140 = pneg %p139
    // Predicated region
    $region29: #{forward.3} parent=5 // pred_check
      _
    $region30: #{forward.3} parent=5 // pred_check_branch
      %142 = sbr.rel (%p139) target = $region32
    $region31: #{forward.3} parent=5 // pred_region
      %s143 = ssub.s32 %s9, 1
      %s144 = smul.u32 49, %s14
      %p145 = scmp.lt.s32.totalorder %s144, 195
      %s146 = scalar_select %p145, %s144, 195
      %s147 = smul.addr %s146, 4
      %s148 = scalar_lea.vmem %s0, %s147
      %p149 = pneg %p35
      %p150 = pneg %p32
      %p151 = pneg %p56
      %p152 = pneg %p53
      %p153 = pneg %p77
      %p154 = pneg %p74
      %p155 = pneg %p103
      %p156 = pneg %p100
      %s157 = smul.u32 49, %s14
      %p158 = scmp.lt.s32.totalorder %s157, 195
      %s159 = scalar_select %p158, %s157, 195
      %s160 = smul.addr %s159, 4
      %s161 = scalar_lea.vmem %s3, %s160
      %s162 = smul.u32 49, %s14
      %p163 = scmp.lt.s32.totalorder %s162, 195
      %s164 = scalar_select %p163, %s162, 195
      %s165 = smul.addr %s164, 4
      %s166 = scalar_lea.vmem %s0, %s165
      %s167 = smul.u32 49, %s14
      %s168 = smul.u32 49, %s14
      %p169 = scmp.lt.s32.totalorder %s168, 195
      %s170 = scalar_select %p169, %s168, 195
      %s171 = smul.addr %s170, 4
      %s172 = scalar_lea.vmem %s3, %s171
      %s173 = smul.u32 49, %s14
      %v175 = vld [vmem:[%s166] sm:$0xf]
      %v176 = vld [vmem:[%s166 + $0x4] sm:$0xf]
      %v177 = vld [vmem:[%s166 + $0x8] sm:$0xf]
      %v178 = vld [vmem:[%s166 + $0xc] sm:$0xf]
      %v179 = vld [vmem:[%s166 + $0x10] sm:$0xf]
      %v180 = vld [vmem:[%s166 + $0x14] sm:$0xf]
      %v181 = vld [vmem:[%s166 + $0x18] sm:$0xf]
      %v182 = vld [vmem:[%s166 + $0x1c] sm:$0xf]
      %v183 = vld [vmem:[%s166 + $0x20] sm:$0xf]
      %v184 = vld [vmem:[%s166 + $0x24] sm:$0xf]
      %v185 = vld [vmem:[%s166 + $0x28] sm:$0xf]
      %v186 = vld [vmem:[%s166 + $0x2c] sm:$0xf]
      %v187 = vld [vmem:[%s166 + $0x30] sm:$0xf]
      %v188 = vld [vmem:[%s166 + $0x34] sm:$0xf]
      %v189 = vld [vmem:[%s166 + $0x38] sm:$0xf]
      %v190 = vld [vmem:[%s166 + $0x3c] sm:$0xf]
      %v191 = vld [vmem:[%s166 + $0x40] sm:$0xf]
      %v192 = vld [vmem:[%s166 + $0x44] sm:$0xf]
      %v193 = vld [vmem:[%s166 + $0x48] sm:$0xf]
      %v194 = vld [vmem:[%s166 + $0x4c] sm:$0xf]
      %v195 = vld [vmem:[%s166 + $0x50] sm:$0xf]
      %v196 = vld [vmem:[%s166 + $0x54] sm:$0xf]
      %v197 = vld [vmem:[%s166 + $0x58] sm:$0xf]
      %v198 = vld [vmem:[%s166 + $0x5c] sm:$0xf]
      %v199 = vld [vmem:[%s166 + $0x60] sm:$0xf]
      %v200 = vld [vmem:[%s166 + $0x64] sm:$0xf]
      %v201 = vld [vmem:[%s166 + $0x68] sm:$0xf]
      %v202 = vld [vmem:[%s166 + $0x6c] sm:$0xf]
      %v203 = vld [vmem:[%s166 + $0x70] sm:$0xf]
      %v204 = vld [vmem:[%s166 + $0x74] sm:$0xf]
      %v205 = vld [vmem:[%s166 + $0x78] sm:$0xf]
      %v206 = vld [vmem:[%s166 + $0x7c] sm:$0xf]
      %v207 = vld [vmem:[%s166 + $0x80] sm:$0xf]
      %v208 = vld [vmem:[%s166 + $0x84] sm:$0xf]
      %v209 = vld [vmem:[%s166 + $0x88] sm:$0xf]
      %v210 = vld [vmem:[%s166 + $0x8c] sm:$0xf]
      %v211 = vld [vmem:[%s166 + $0x90] sm:$0xf]
      %v212 = vld [vmem:[%s166 + $0x94] sm:$0xf]
      %v213 = vld [vmem:[%s166 + $0x98] sm:$0xf]
      %v214 = vld [vmem:[%s166 + $0x9c] sm:$0xf]
      %v215 = vld [vmem:[%s166 + $0xa0] sm:$0xf]
      %v216 = vld [vmem:[%s166 + $0xa4] sm:$0xf]
      %v217 = vld [vmem:[%s166 + $0xa8] sm:$0xf]
      %v218 = vld [vmem:[%s166 + $0xac] sm:$0xf]
      %v219 = vld [vmem:[%s166 + $0xb0] sm:$0xf]
      %v220 = vld [vmem:[%s166 + $0xb4] sm:$0xf]
      %v221 = vld [vmem:[%s166 + $0xb8] sm:$0xf]
      %v222 = vld [vmem:[%s166 + $0xbc] sm:$0xf]
      %v223 = vld [vmem:[%s166 + $0xc0] sm:$0xf]
      %v224 = vld [vmem:[%s1] sm:$0xf]
      %v225 = vld [vmem:[%s1 + $0x4] sm:$0xf]
      %v226 = vld [vmem:[%s1 + $0x8] sm:$0xf]
      %v227 = vld [vmem:[%s1 + $0xc] sm:$0xf]
      %v228 = vld [vmem:[%s1 + $0x10] sm:$0xf]
      %v229 = vld [vmem:[%s1 + $0x14] sm:$0xf]
      %v230 = vld [vmem:[%s1 + $0x18] sm:$0xf]
      %v231 = vld [vmem:[%s1 + $0x1c] sm:$0xf]
      %v232 = vld [vmem:[%s1 + $0x20] sm:$0xf]
      %v233 = vld [vmem:[%s1 + $0x24] sm:$0x3]
      %v234 = vld [vmem:[%s2] sm:$0x1]
      %v236 = vlaneseq
      %v237 = vshrl.u32 %v236, 7
      %v238 = vsub.s32 0, %v237
      %v239 = vrot.slane %v234, %v238
      %v290 = vunpack.c.l.b16 %v175
      %v291 = vunpack.c.l.b16 %v176
      %v292 = vunpack.c.l.b16 %v177
      %v293 = vunpack.c.l.b16 %v178
      %v294 = vunpack.c.l.b16 %v179
      %v295 = vunpack.c.l.b16 %v180
      %v296 = vunpack.c.l.b16 %v181
      %v297 = vunpack.c.l.b16 %v182
      %v298 = vunpack.c.l.b16 %v183
      %v299 = vunpack.c.l.b16 %v184
      %v300 = vunpack.c.l.b16 %v185
      %v301 = vunpack.c.l.b16 %v186
      %v302 = vunpack.c.l.b16 %v187
      %v303 = vunpack.c.l.b16 %v188
      %v304 = vunpack.c.l.b16 %v189
      %v305 = vunpack.c.l.b16 %v190
      %v306 = vunpack.c.l.b16 %v191
      %v307 = vunpack.c.l.b16 %v192
      %v308 = vunpack.c.l.b16 %v193
      %v309 = vunpack.c.l.b16 %v194
      %v310 = vunpack.c.l.b16 %v195
      %v311 = vunpack.c.l.b16 %v196
      %v312 = vunpack.c.l.b16 %v197
      %v313 = vunpack.c.l.b16 %v198
      %v314 = vunpack.c.l.b16 %v199
      %v315 = vunpack.c.l.b16 %v200
      %v316 = vunpack.c.l.b16 %v201
      %v317 = vunpack.c.l.b16 %v202
      %v318 = vunpack.c.l.b16 %v203
      %v319 = vunpack.c.l.b16 %v204
      %v320 = vunpack.c.l.b16 %v205
      %v321 = vunpack.c.l.b16 %v206
      %v322 = vunpack.c.l.b16 %v207
      %v323 = vunpack.c.l.b16 %v208
      %v324 = vunpack.c.l.b16 %v209
      %v325 = vunpack.c.l.b16 %v210
      %v326 = vunpack.c.l.b16 %v211
      %v327 = vunpack.c.l.b16 %v212
      %v328 = vunpack.c.l.b16 %v213
      %v329 = vunpack.c.l.b16 %v214
      %v330 = vunpack.c.l.b16 %v215
      %v331 = vunpack.c.l.b16 %v216
      %v332 = vunpack.c.l.b16 %v217
      %v333 = vunpack.c.l.b16 %v218
      %v334 = vunpack.c.l.b16 %v219
      %v335 = vunpack.c.l.b16 %v220
      %v336 = vunpack.c.l.b16 %v221
      %v337 = vunpack.c.l.b16 %v222
      %v338 = vunpack.c.l.b16 %v223
      %v339 = vpack.c.b16 %v291, %v290
      %v340 = vpack.c.b16 %v293, %v292
      %v341 = vpack.c.b16 %v295, %v294
      %v342 = vpack.c.b16 %v297, %v296
      %v343 = vpack.c.b16 %v299, %v298
      %v344 = vpack.c.b16 %v301, %v300
      %v345 = vpack.c.b16 %v303, %v302
      %v346 = vpack.c.b16 %v305, %v304
      %v347 = vpack.c.b16 %v307, %v306
      %v348 = vpack.c.b16 %v309, %v308
      %v349 = vpack.c.b16 %v311, %v310
      %v350 = vpack.c.b16 %v313, %v312
      %v351 = vpack.c.b16 %v315, %v314
      %v352 = vpack.c.b16 %v317, %v316
      %v353 = vpack.c.b16 %v319, %v318
      %v354 = vpack.c.b16 %v321, %v320
      %v355 = vpack.c.b16 %v323, %v322
      %v356 = vpack.c.b16 %v325, %v324
      %v357 = vpack.c.b16 %v327, %v326
      %v358 = vpack.c.b16 %v329, %v328
      %v359 = vpack.c.b16 %v331, %v330
      %v360 = vpack.c.b16 %v333, %v332
      %v361 = vpack.c.b16 %v335, %v334
      %v362 = vpack.c.b16 %v337, %v336
      %v363 = vpack.c.b16 %v338, %v338
      %v374 = vunpack.c.l.b16 %v224
      %v375 = vunpack.c.l.b16 %v225
      %v376 = vunpack.c.l.b16 %v226
      %v377 = vunpack.c.l.b16 %v227
      %v378 = vunpack.c.l.b16 %v228
      %v379 = vunpack.c.l.b16 %v229
      %v380 = vunpack.c.l.b16 %v230
      %v381 = vunpack.c.l.b16 %v231
      %v382 = vunpack.c.l.b16 %v232
      %v383 = vunpack.c.l.b16 %v233
      %v384 = vpack.c.b16 %v375, %v374
      %v385 = vpack.c.b16 %v377, %v376
      %v386 = vpack.c.b16 %v379, %v378
      %v387 = vpack.c.b16 %v381, %v380
      %v388 = vpack.c.b16 %v383, %v382
      %vm393 = vcmask 613376
      %v395 = vsel %vm393, %v339, 0
      %v398 = vsel %vm393, %v340, 0
      %v401 = vsel %vm393, %v341, 0
      %v404 = vsel %vm393, %v342, 0
      %v407 = vsel %vm393, %v343, 0
      %v410 = vsel %vm393, %v344, 0
      %v413 = vsel %vm393, %v345, 0
      %v416 = vsel %vm393, %v346, 0
      %v419 = vsel %vm393, %v347, 0
      %v422 = vsel %vm393, %v348, 0
      %v425 = vsel %vm393, %v349, 0
      %v428 = vsel %vm393, %v350, 0
      %v431 = vsel %vm393, %v351, 0
      %v434 = vsel %vm393, %v352, 0
      %v437 = vsel %vm393, %v353, 0
      %v440 = vsel %vm393, %v354, 0
      %v443 = vsel %vm393, %v355, 0
      %v446 = vsel %vm393, %v356, 0
      %v449 = vsel %vm393, %v357, 0
      %v452 = vsel %vm393, %v358, 0
      %v455 = vsel %vm393, %v359, 0
      %v458 = vsel %vm393, %v360, 0
      %v461 = vsel %vm393, %v361, 0
      %v464 = vsel %vm393, %v362, 0
      %v467 = vsel %vm393, %v363, 0
      %vm469 = vcmask 1044480
      %vm470 = vcmask 1045504
      %v471 = vsel %vm469, 4294967295, 65535
      %v472 = vsel %vm470, %v471, 0
      %v474 = vand.u32 %v388, %v472
      %476 = vmatprep.subr.bf16.mxu0 0
      %477 = vmatpush1.bf16.msra.mxu0 %v384
      %478 = vmatprep.subr.bf16.mxu0 0
      %479 = vmatpush1.bf16.msra.mxu0 %v385
      %480 = vmatprep.subr.bf16.mxu0 0
      %481 = vmatpush1.bf16.msra.mxu0 %v386
      %482 = vmatprep.subr.bf16.mxu0 0
      %483 = vmatpush1.bf16.msra.mxu0 %v387
      %484 = vmatprep.subr.bf16.mxu0 0
      %485 = vmatpush1.bf16.msra.mxu0 %v474
      %486 = vmatprep.subr.bf16.mxu0 0
      %487 = vmatpush1.bf16.msra.mxu0 0
      %488 = vmatprep.subr.bf16.mxu0 0
      %489 = vmatpush1.bf16.msra.mxu0 0
      %490 = vmatprep.subr.bf16.mxu0 0
      %491 = vmatpush1.bf16.msra.mxu0 0
      %492 = vmatprep.subr.bf16.mxu0 0
      %493 = vmatpush1.bf16.msra.mxu0 0
      %494 = vmatprep.subr.bf16.mxu0 0
      %495 = vmatpush1.bf16.msra.mxu0 0
      %496 = vmatprep.subr.bf16.mxu0 0
      %497 = vmatpush1.bf16.msra.mxu0 0
      %498 = vmatprep.subr.bf16.mxu0 0
      %499 = vmatpush1.bf16.msra.mxu0 0
      %500 = vmatprep.subr.bf16.mxu0 0
      %501 = vmatpush1.bf16.msra.mxu0 0
      %502 = vmatprep.subr.bf16.mxu0 0
      %503 = vmatpush1.bf16.msra.mxu0 0
      %504 = vmatprep.subr.bf16.mxu0 0
      %505 = vmatpush1.bf16.msra.mxu0 0
      %506 = vmatprep.subr.bf16.mxu0 0
      %507 = vmatpush1.bf16.msra.mxu0 0
      %508 = vmatprep.mubr.bf16.mxu0 0
      %509 = vmatmul.mubr.bf16.gmra.mrb[0].mxu0 %v395
      %v510 = vpop.f32.mrb[0].mxu0
      %v511 = vadd.f32 %v239, %v510
      %v512 = vpop.f32.mrb[0].mxu0
      %v513 = vpop.f32.mrb[0].mxu0
      %v514 = vadd.f32 %v239, %v513
      %v515 = vpop.f32.mrb[0].mxu0
      %516 = vmatprep.mubr.bf16.mxu0 0
      %517 = vmatmul.mubr.bf16.gmra.mrb[0].mxu0 %v398
      %v518 = vpop.f32.mrb[0].mxu0
      %v519 = vadd.f32 %v239, %v518
      %v520 = vpop.f32.mrb[0].mxu0
      %v521 = vpop.f32.mrb[0].mxu0
      %v522 = vadd.f32 %v239, %v521
      %v523 = vpop.f32.mrb[0].mxu0
      %524 = vmatprep.mubr.bf16.mxu0 0
      %525 = vmatmul.mubr.bf16.gmra.mrb[0].mxu0 %v401
      %v526 = vpop.f32.mrb[0].mxu0
      %v527 = vadd.f32 %v239, %v526
      %v528 = vpop.f32.mrb[0].mxu0
      %v529 = vpop.f32.mrb[0].mxu0
      %v530 = vadd.f32 %v239, %v529
      %v531 = vpop.f32.mrb[0].mxu0
      %532 = vmatprep.mubr.bf16.mxu0 0
      %533 = vmatmul.mubr.bf16.gmra.mrb[0].mxu0 %v404
      %v534 = vpop.f32.mrb[0].mxu0
      %v535 = vadd.f32 %v239, %v534
      %v536 = vpop.f32.mrb[0].mxu0
      %v537 = vpop.f32.mrb[0].mxu0
      %v538 = vadd.f32 %v239, %v537
      %v539 = vpop.f32.mrb[0].mxu0
      %540 = vmatprep.mubr.bf16.mxu0 0
      %541 = vmatmul.mubr.bf16.gmra.mrb[0].mxu0 %v407
      %v542 = vpop.f32.mrb[0].mxu0
      %v543 = vadd.f32 %v239, %v542
      %v544 = vpop.f32.mrb[0].mxu0
      %v545 = vpop.f32.mrb[0].mxu0
      %v546 = vadd.f32 %v239, %v545
      %v547 = vpop.f32.mrb[0].mxu0
      %548 = vmatprep.mubr.bf16.mxu0 0
      %549 = vmatmul.mubr.bf16.gmra.mrb[0].mxu0 %v410
      %v550 = vpop.f32.mrb[0].mxu0
      %v551 = vadd.f32 %v239, %v550
      %v552 = vpop.f32.mrb[0].mxu0
      %v553 = vpop.f32.mrb[0].mxu0
      %v554 = vadd.f32 %v239, %v553
      %v555 = vpop.f32.mrb[0].mxu0
      %556 = vmatprep.mubr.bf16.mxu0 0
      %557 = vmatmul.mubr.bf16.gmra.mrb[0].mxu0 %v413
      %v558 = vpop.f32.mrb[0].mxu0
      %v559 = vadd.f32 %v239, %v558
      %v560 = vpop.f32.mrb[0].mxu0
      %v561 = vpop.f32.mrb[0].mxu0
      %v562 = vadd.f32 %v239, %v561
      %v563 = vpop.f32.mrb[0].mxu0
      %564 = vmatprep.mubr.bf16.mxu0 0
      %565 = vmatmul.mubr.bf16.gmra.mrb[0].mxu0 %v416
      %v566 = vpop.f32.mrb[0].mxu0
      %v567 = vadd.f32 %v239, %v566
      %v568 = vpop.f32.mrb[0].mxu0
      %v569 = vpop.f32.mrb[0].mxu0
      %v570 = vadd.f32 %v239, %v569
      %v571 = vpop.f32.mrb[0].mxu0
      %572 = vmatprep.mubr.bf16.mxu0 0
      %573 = vmatmul.mubr.bf16.gmra.mrb[0].mxu0 %v419
      %v574 = vpop.f32.mrb[0].mxu0
      %v575 = vadd.f32 %v239, %v574
      %v576 = vpop.f32.mrb[0].mxu0
      %v577 = vpop.f32.mrb[0].mxu0
      %v578 = vadd.f32 %v239, %v577
      %v579 = vpop.f32.mrb[0].mxu0
      %580 = vmatprep.mubr.bf16.mxu0 0
      %581 = vmatmul.mubr.bf16.gmra.mrb[0].mxu0 %v422
      %v582 = vpop.f32.mrb[0].mxu0
      %v583 = vadd.f32 %v239, %v582
      %v584 = vpop.f32.mrb[0].mxu0
      %v585 = vpop.f32.mrb[0].mxu0
      %v586 = vadd.f32 %v239, %v585
      %v587 = vpop.f32.mrb[0].mxu0
      %588 = vmatprep.mubr.bf16.mxu0 0
      %589 = vmatmul.mubr.bf16.gmra.mrb[0].mxu0 %v425
      %v590 = vpop.f32.mrb[0].mxu0
      %v591 = vadd.f32 %v239, %v590
      %v592 = vpop.f32.mrb[0].mxu0
      %v593 = vpop.f32.mrb[0].mxu0
      %v594 = vadd.f32 %v239, %v593
      %v595 = vpop.f32.mrb[0].mxu0
      %596 = vmatprep.mubr.bf16.mxu0 0
      %597 = vmatmul.mubr.bf16.gmra.mrb[0].mxu0 %v428
      %v598 = vpop.f32.mrb[0].mxu0
      %v599 = vadd.f32 %v239, %v598
      %v600 = vpop.f32.mrb[0].mxu0
      %v601 = vpop.f32.mrb[0].mxu0
      %v602 = vadd.f32 %v239, %v601
      %v603 = vpop.f32.mrb[0].mxu0
      %604 = vmatprep.mubr.bf16.mxu0 0
      %605 = vmatmul.mubr.bf16.gmra.mrb[0].mxu0 %v431
      %v606 = vpop.f32.mrb[0].mxu0
      %v607 = vadd.f32 %v239, %v606
      %v608 = vpop.f32.mrb[0].mxu0
      %v609 = vpop.f32.mrb[0].mxu0
      %v610 = vadd.f32 %v239, %v609
      %v611 = vpop.f32.mrb[0].mxu0
      %612 = vmatprep.mubr.bf16.mxu0 0
      %613 = vmatmul.mubr.bf16.gmra.mrb[0].mxu0 %v434
      %v614 = vpop.f32.mrb[0].mxu0
      %v615 = vadd.f32 %v239, %v614
      %v616 = vpop.f32.mrb[0].mxu0
      %v617 = vpop.f32.mrb[0].mxu0
      %v618 = vadd.f32 %v239, %v617
      %v619 = vpop.f32.mrb[0].mxu0
      %620 = vmatprep.mubr.bf16.mxu0 0
      %621 = vmatmul.mubr.bf16.gmra.mrb[0].mxu0 %v437
      %v622 = vpop.f32.mrb[0].mxu0
      %v623 = vadd.f32 %v239, %v622
      %v624 = vpop.f32.mrb[0].mxu0
      %v625 = vpop.f32.mrb[0].mxu0
      %v626 = vadd.f32 %v239, %v625
      %v627 = vpop.f32.mrb[0].mxu0
      %628 = vmatprep.mubr.bf16.mxu0 0
      %629 = vmatmul.mubr.bf16.gmra.mrb[0].mxu0 %v440
      %v630 = vpop.f32.mrb[0].mxu0
      %v631 = vadd.f32 %v239, %v630
      %v632 = vpop.f32.mrb[0].mxu0
      %v633 = vpop.f32.mrb[0].mxu0
      %v634 = vadd.f32 %v239, %v633
      %v635 = vpop.f32.mrb[0].mxu0
      %636 = vmatprep.mubr.bf16.mxu0 0
      %637 = vmatmul.mubr.bf16.gmra.mrb[0].mxu0 %v443
      %v638 = vpop.f32.mrb[0].mxu0
      %v639 = vadd.f32 %v239, %v638
      %v640 = vpop.f32.mrb[0].mxu0
      %v641 = vpop.f32.mrb[0].mxu0
      %v642 = vadd.f32 %v239, %v641
      %v643 = vpop.f32.mrb[0].mxu0
      %644 = vmatprep.mubr.bf16.mxu0 0
      %645 = vmatmul.mubr.bf16.gmra.mrb[0].mxu0 %v446
      %v646 = vpop.f32.mrb[0].mxu0
      %v647 = vadd.f32 %v239, %v646
      %v648 = vpop.f32.mrb[0].mxu0
      %v649 = vpop.f32.mrb[0].mxu0
      %v650 = vadd.f32 %v239, %v649
      %v651 = vpop.f32.mrb[0].mxu0
      %652 = vmatprep.mubr.bf16.mxu0 0
      %653 = vmatmul.mubr.bf16.gmra.mrb[0].mxu0 %v449
      %v654 = vpop.f32.mrb[0].mxu0
      %v655 = vadd.f32 %v239, %v654
      %v656 = vpop.f32.mrb[0].mxu0
      %v657 = vpop.f32.mrb[0].mxu0
      %v658 = vadd.f32 %v239, %v657
      %v659 = vpop.f32.mrb[0].mxu0
      %660 = vmatprep.mubr.bf16.mxu0 0
      %661 = vmatmul.mubr.bf16.gmra.mrb[0].mxu0 %v452
      %v662 = vpop.f32.mrb[0].mxu0
      %v663 = vadd.f32 %v239, %v662
      %v664 = vpop.f32.mrb[0].mxu0
      %v665 = vpop.f32.mrb[0].mxu0
      %v666 = vadd.f32 %v239, %v665
      %v667 = vpop.f32.mrb[0].mxu0
      %668 = vmatprep.mubr.bf16.mxu0 0
      %669 = vmatmul.mubr.bf16.gmra.mrb[0].mxu0 %v455
      %v670 = vpop.f32.mrb[0].mxu0
      %v671 = vadd.f32 %v239, %v670
      %v672 = vpop.f32.mrb[0].mxu0
      %v673 = vpop.f32.mrb[0].mxu0
      %v674 = vadd.f32 %v239, %v673
      %v675 = vpop.f32.mrb[0].mxu0
      %676 = vmatprep.mubr.bf16.mxu0 0
      %677 = vmatmul.mubr.bf16.gmra.mrb[0].mxu0 %v458
      %v678 = vpop.f32.mrb[0].mxu0
      %v679 = vadd.f32 %v239, %v678
      %v680 = vpop.f32.mrb[0].mxu0
      %v681 = vpop.f32.mrb[0].mxu0
      %v682 = vadd.f32 %v239, %v681
      %v683 = vpop.f32.mrb[0].mxu0
      %684 = vmatprep.mubr.bf16.mxu0 0
      %685 = vmatmul.mubr.bf16.gmra.mrb[0].mxu0 %v461
      %v686 = vpop.f32.mrb[0].mxu0
      %v687 = vadd.f32 %v239, %v686
      %v688 = vpop.f32.mrb[0].mxu0
      %v689 = vpop.f32.mrb[0].mxu0
      %v690 = vadd.f32 %v239, %v689
      %v691 = vpop.f32.mrb[0].mxu0
      %692 = vmatprep.mubr.bf16.mxu0 0
      %693 = vmatmul.mubr.bf16.gmra.mrb[0].mxu0 %v464
      %v694 = vpop.f32.mrb[0].mxu0
      %v695 = vadd.f32 %v239, %v694
      %v696 = vpop.f32.mrb[0].mxu0
      %v697 = vpop.f32.mrb[0].mxu0
      %v698 = vadd.f32 %v239, %v697
      %v699 = vpop.f32.mrb[0].mxu0
      %700 = vmatprep.mubr.bf16.mxu0 0
      %701 = vmatmul.mubr.bf16.gmra.mrb[0].mxu0 %v467
      %v702 = vpop.f32.mrb[0].mxu0
      %v703 = vadd.f32 %v239, %v702
      %v704 = vpop.f32.mrb[0].mxu0
      %v705 = vpop.f32.mrb[0].mxu0
      %v706 = vpop.f32.mrb[0].mxu0
      %707 = vdwg.mxu0
      %s708 = scalar_lea.vmem %s1, 40
      %v709 = vld [vmem:[%s708] sm:$0xf]
      %v710 = vld [vmem:[%s708 + $0x4] sm:$0xf]
      %v711 = vld [vmem:[%s708 + $0x8] sm:$0xf]
      %v712 = vld [vmem:[%s708 + $0xc] sm:$0xf]
      %v713 = vld [vmem:[%s708 + $0x10] sm:$0xf]
      %v714 = vld [vmem:[%s708 + $0x14] sm:$0xf]
      %v715 = vld [vmem:[%s708 + $0x18] sm:$0xf]
      %v716 = vld [vmem:[%s708 + $0x1c] sm:$0xf]
      %v717 = vld [vmem:[%s708 + $0x20] sm:$0xf]
      %v718 = vld [vmem:[%s708 + $0x24] sm:$0x3]
      %s719 = scalar_lea.vmem %s2, 1
      %v720 = vld [vmem:[%s719] sm:$0x1]
      %v722 = vlaneseq
      %v723 = vshrl.u32 %v722, 7
      %v724 = vsub.s32 0, %v723
      %v725 = vrot.slane %v720, %v724
      %v737 = vunpack.c.l.b16 %v709
      %v738 = vunpack.c.l.b16 %v710
      %v739 = vunpack.c.l.b16 %v711
      %v740 = vunpack.c.l.b16 %v712
      %v741 = vunpack.c.l.b16 %v713
      %v742 = vunpack.c.l.b16 %v714
      %v743 = vunpack.c.l.b16 %v715
      %v744 = vunpack.c.l.b16 %v716
      %v745 = vunpack.c.l.b16 %v717
      %v746 = vunpack.c.l.b16 %v718
      %v747 = vpack.c.b16 %v738, %v737
      %v748 = vpack.c.b16 %v740, %v739
      %v749 = vpack.c.b16 %v742, %v741
      %v750 = vpack.c.b16 %v744, %v743
      %v751 = vpack.c.b16 %v746, %v745
      %v757 = vand.u32 %v751, %v472
      %759 = vmatprep.subr.bf16.mxu0 0
      %760 = vmatpush1.bf16.msra.mxu0 %v747
      %761 = vmatprep.subr.bf16.mxu0 0
      %762 = vmatpush1.bf16.msra.mxu0 %v748
      %763 = vmatprep.subr.bf16.mxu0 0
      %764 = vmatpush1.bf16.msra.mxu0 %v749
      %765 = vmatprep.subr.bf16.mxu0 0
      %766 = vmatpush1.bf16.msra.mxu0 %v750
      %767 = vmatprep.subr.bf16.mxu0 0
      %768 = vmatpush1.bf16.msra.mxu0 %v757
      %769 = vmatprep.subr.bf16.mxu0 0
      %770 = vmatpush1.bf16.msra.mxu0 0
      %771 = vmatprep.subr.bf16.mxu0 0
      %772 = vmatpush1.bf16.msra.mxu0 0
      %773 = vmatprep.subr.bf16.mxu0 0
      %774 = vmatpush1.bf16.msra.mxu0 0
      %775 = vmatprep.subr.bf16.mxu0 0
      %776 = vmatpush1.bf16.msra.mxu0 0
      %777 = vmatprep.subr.bf16.mxu0 0
      %778 = vmatpush1.bf16.msra.mxu0 0
      %779 = vmatprep.subr.bf16.mxu0 0
      %780 = vmatpush1.bf16.msra.mxu0 0
      %781 = vmatprep.subr.bf16.mxu0 0
      %782 = vmatpush1.bf16.msra.mxu0 0
      %783 = vmatprep.subr.bf16.mxu0 0
      %784 = vmatpush1.bf16.msra.mxu0 0
      %785 = vmatprep.subr.bf16.mxu0 0
      %786 = vmatpush1.bf16.msra.mxu0 0
      %787 = vmatprep.subr.bf16.mxu0 0
      %788 = vmatpush1.bf16.msra.mxu0 0
      %789 = vmatprep.subr.bf16.mxu0 0
      %790 = vmatpush1.bf16.msra.mxu0 0
      %791 = vmatprep.mubr.bf16.mxu0 0
      %792 = vmatmul.mubr.bf16.gmra.mrb[0].mxu0 %v395
      %v793 = vpop.f32.mrb[0].mxu0
      %v794 = vadd.f32 %v725, %v793
      %v795 = vpop.f32.mrb[0].mxu0
      %v796 = vpop.f32.mrb[0].mxu0
      %v797 = vadd.f32 %v725, %v796
      %v798 = vpop.f32.mrb[0].mxu0
      %799 = vmatprep.mubr.bf16.mxu0 0
      %800 = vmatmul.mubr.bf16.gmra.mrb[0].mxu0 %v398
      %v801 = vpop.f32.mrb[0].mxu0
      %v802 = vadd.f32 %v725, %v801
      %v803 = vpop.f32.mrb[0].mxu0
      %v804 = vpop.f32.mrb[0].mxu0
      %v805 = vadd.f32 %v725, %v804
      %v806 = vpop.f32.mrb[0].mxu0
      %807 = vmatprep.mubr.bf16.mxu0 0
      %808 = vmatmul.mubr.bf16.gmra.mrb[0].mxu0 %v401
      %v809 = vpop.f32.mrb[0].mxu0
      %v810 = vadd.f32 %v725, %v809
      %v811 = vpop.f32.mrb[0].mxu0
      %v812 = vpop.f32.mrb[0].mxu0
      %v813 = vadd.f32 %v725, %v812
      %v814 = vpop.f32.mrb[0].mxu0
      %815 = vmatprep.mubr.bf16.mxu0 0
      %816 = vmatmul.mubr.bf16.gmra.mrb[0].mxu0 %v404
      %v817 = vpop.f32.mrb[0].mxu0
      %v818 = vadd.f32 %v725, %v817
      %v819 = vpop.f32.mrb[0].mxu0
      %v820 = vpop.f32.mrb[0].mxu0
      %v821 = vadd.f32 %v725, %v820
      %v822 = vpop.f32.mrb[0].mxu0
      %823 = vmatprep.mubr.bf16.mxu0 0
      %824 = vmatmul.mubr.bf16.gmra.mrb[0].mxu0 %v407
      %v825 = vpop.f32.mrb[0].mxu0
      %v826 = vadd.f32 %v725, %v825
      %v827 = vpop.f32.mrb[0].mxu0
      %v828 = vpop.f32.mrb[0].mxu0
      %v829 = vadd.f32 %v725, %v828
      %v830 = vpop.f32.mrb[0].mxu0
      %831 = vmatprep.mubr.bf16.mxu0 0
      %832 = vmatmul.mubr.bf16.gmra.mrb[0].mxu0 %v410
      %v833 = vpop.f32.mrb[0].mxu0
      %v834 = vadd.f32 %v725, %v833
      %v835 = vpop.f32.mrb[0].mxu0
      %v836 = vpop.f32.mrb[0].mxu0
      %v837 = vadd.f32 %v725, %v836
      %v838 = vpop.f32.mrb[0].mxu0
      %839 = vmatprep.mubr.bf16.mxu0 0
      %840 = vmatmul.mubr.bf16.gmra.mrb[0].mxu0 %v413
      %v841 = vpop.f32.mrb[0].mxu0
      %v842 = vadd.f32 %v725, %v841
      %v843 = vpop.f32.mrb[0].mxu0
      %v844 = vpop.f32.mrb[0].mxu0
      %v845 = vadd.f32 %v725, %v844
      %v846 = vpop.f32.mrb[0].mxu0
      %847 = vmatprep.mubr.bf16.mxu0 0
      %848 = vmatmul.mubr.bf16.gmra.mrb[0].mxu0 %v416
      %v849 = vpop.f32.mrb[0].mxu0
      %v850 = vadd.f32 %v725, %v849
      %v851 = vpop.f32.mrb[0].mxu0
      %v852 = vpop.f32.mrb[0].mxu0
      %v853 = vadd.f32 %v725, %v852
      %v854 = vpop.f32.mrb[0].mxu0
      %855 = vmatprep.mubr.bf16.mxu0 0
      %856 = vmatmul.mubr.bf16.gmra.mrb[0].mxu0 %v419
      %v857 = vpop.f32.mrb[0].mxu0
      %v858 = vadd.f32 %v725, %v857
      %v859 = vpop.f32.mrb[0].mxu0
      %v860 = vpop.f32.mrb[0].mxu0
      %v861 = vadd.f32 %v725, %v860
      %v862 = vpop.f32.mrb[0].mxu0
      %863 = vmatprep.mubr.bf16.mxu0 0
      %864 = vmatmul.mubr.bf16.gmra.mrb[0].mxu0 %v422
      %v865 = vpop.f32.mrb[0].mxu0
      %v866 = vadd.f32 %v725, %v865
      %v867 = vpop.f32.mrb[0].mxu0
      %v868 = vpop.f32.mrb[0].mxu0
      %v869 = vadd.f32 %v725, %v868
      %v870 = vpop.f32.mrb[0].mxu0
      %871 = vmatprep.mubr.bf16.mxu0 0
      %872 = vmatmul.mubr.bf16.gmra.mrb[0].mxu0 %v425
      %v873 = vpop.f32.mrb[0].mxu0
      %v874 = vadd.f32 %v725, %v873
      %v875 = vpop.f32.mrb[0].mxu0
      %v876 = vpop.f32.mrb[0].mxu0
      %v877 = vadd.f32 %v725, %v876
      %v878 = vpop.f32.mrb[0].mxu0
      %879 = vmatprep.mubr.bf16.mxu0 0
      %880 = vmatmul.mubr.bf16.gmra.mrb[0].mxu0 %v428
      %v881 = vpop.f32.mrb[0].mxu0
      %v882 = vadd.f32 %v725, %v881
      %v883 = vpop.f32.mrb[0].mxu0
      %v884 = vpop.f32.mrb[0].mxu0
      %v885 = vadd.f32 %v725, %v884
      %v886 = vpop.f32.mrb[0].mxu0
      %887 = vmatprep.mubr.bf16.mxu0 0
      %888 = vmatmul.mubr.bf16.gmra.mrb[0].mxu0 %v431
      %v889 = vpop.f32.mrb[0].mxu0
      %v890 = vadd.f32 %v725, %v889
      %v891 = vpop.f32.mrb[0].mxu0
      %v892 = vpop.f32.mrb[0].mxu0
      %v893 = vadd.f32 %v725, %v892
      %v894 = vpop.f32.mrb[0].mxu0
      %895 = vmatprep.mubr.bf16.mxu0 0
      %896 = vmatmul.mubr.bf16.gmra.mrb[0].mxu0 %v434
      %v897 = vpop.f32.mrb[0].mxu0
      %v898 = vadd.f32 %v725, %v897
      %v899 = vpop.f32.mrb[0].mxu0
      %v900 = vpop.f32.mrb[0].mxu0
      %v901 = vadd.f32 %v725, %v900
      %v902 = vpop.f32.mrb[0].mxu0
      %903 = vmatprep.mubr.bf16.mxu0 0
      %904 = vmatmul.mubr.bf16.gmra.mrb[0].mxu0 %v437
      %v905 = vpop.f32.mrb[0].mxu0
      %v906 = vadd.f32 %v725, %v905
      %v907 = vpop.f32.mrb[0].mxu0
      %v908 = vpop.f32.mrb[0].mxu0
      %v909 = vadd.f32 %v725, %v908
      %v910 = vpop.f32.mrb[0].mxu0
      %911 = vmatprep.mubr.bf16.mxu0 0
      %912 = vmatmul.mubr.bf16.gmra.mrb[0].mxu0 %v440
      %v913 = vpop.f32.mrb[0].mxu0
      %v914 = vadd.f32 %v725, %v913
      %v915 = vpop.f32.mrb[0].mxu0
      %v916 = vpop.f32.mrb[0].mxu0
      %v917 = vadd.f32 %v725, %v916
      %v918 = vpop.f32.mrb[0].mxu0
      %919 = vmatprep.mubr.bf16.mxu0 0
      %920 = vmatmul.mubr.bf16.gmra.mrb[0].mxu0 %v443
      %v921 = vpop.f32.mrb[0].mxu0
      %v922 = vadd.f32 %v725, %v921
      %v923 = vpop.f32.mrb[0].mxu0
      %v924 = vpop.f32.mrb[0].mxu0
      %v925 = vadd.f32 %v725, %v924
      %v926 = vpop.f32.mrb[0].mxu0
      %927 = vmatprep.mubr.bf16.mxu0 0
      %928 = vmatmul.mubr.bf16.gmra.mrb[0].mxu0 %v446
      %v929 = vpop.f32.mrb[0].mxu0
      %v930 = vadd.f32 %v725, %v929
      %v931 = vpop.f32.mrb[0].mxu0
      %v932 = vpop.f32.mrb[0].mxu0
      %v933 = vadd.f32 %v725, %v932
      %v934 = vpop.f32.mrb[0].mxu0
      %935 = vmatprep.mubr.bf16.mxu0 0
      %936 = vmatmul.mubr.bf16.gmra.mrb[0].mxu0 %v449
      %v937 = vpop.f32.mrb[0].mxu0
      %v938 = vadd.f32 %v725, %v937
      %v939 = vpop.f32.mrb[0].mxu0
      %v940 = vpop.f32.mrb[0].mxu0
      %v941 = vadd.f32 %v725, %v940
      %v942 = vpop.f32.mrb[0].mxu0
      %943 = vmatprep.mubr.bf16.mxu0 0
      %944 = vmatmul.mubr.bf16.gmra.mrb[0].mxu0 %v452
      %v945 = vpop.f32.mrb[0].mxu0
      %v946 = vadd.f32 %v725, %v945
      %v947 = vpop.f32.mrb[0].mxu0
      %v948 = vpop.f32.mrb[0].mxu0
      %v949 = vadd.f32 %v725, %v948
      %v950 = vpop.f32.mrb[0].mxu0
      %951 = vmatprep.mubr.bf16.mxu0 0
      %952 = vmatmul.mubr.bf16.gmra.mrb[0].mxu0 %v455
      %v953 = vpop.f32.mrb[0].mxu0
      %v954 = vadd.f32 %v725, %v953
      %v955 = vpop.f32.mrb[0].mxu0
      %v956 = vpop.f32.mrb[0].mxu0
      %v957 = vadd.f32 %v725, %v956
      %v958 = vpop.f32.mrb[0].mxu0
      %959 = vmatprep.mubr.bf16.mxu0 0
      %960 = vmatmul.mubr.bf16.gmra.mrb[0].mxu0 %v458
      %v961 = vpop.f32.mrb[0].mxu0
      %v962 = vadd.f32 %v725, %v961
      %v963 = vpop.f32.mrb[0].mxu0
      %v964 = vpop.f32.mrb[0].mxu0
      %v965 = vadd.f32 %v725, %v964
      %v966 = vpop.f32.mrb[0].mxu0
      %967 = vmatprep.mubr.bf16.mxu0 0
      %968 = vmatmul.mubr.bf16.gmra.mrb[0].mxu0 %v461
      %v969 = vpop.f32.mrb[0].mxu0
      %v970 = vadd.f32 %v725, %v969
      %v971 = vpop.f32.mrb[0].mxu0
      %v972 = vpop.f32.mrb[0].mxu0
      %v973 = vadd.f32 %v725, %v972
      %v974 = vpop.f32.mrb[0].mxu0
      %975 = vmatprep.mubr.bf16.mxu0 0
      %976 = vmatmul.mubr.bf16.gmra.mrb[0].mxu0 %v464
      %v977 = vpop.f32.mrb[0].mxu0
      %v978 = vadd.f32 %v725, %v977
      %v979 = vpop.f32.mrb[0].mxu0
      %v980 = vpop.f32.mrb[0].mxu0
      %v981 = vadd.f32 %v725, %v980
      %v982 = vpop.f32.mrb[0].mxu0
      %983 = vmatprep.mubr.bf16.mxu0 0
      %984 = vmatmul.mubr.bf16.gmra.mrb[0].mxu0 %v467
      %v985 = vpop.f32.mrb[0].mxu0
      %v986 = vadd.f32 %v725, %v985
      %v987 = vpop.f32.mrb[0].mxu0
      %v988 = vpop.f32.mrb[0].mxu0
      %v989 = vpop.f32.mrb[0].mxu0
      %990 = vdwg.mxu0
      %v991 = vmax.f32 %v511, %v794
      %v992 = vmax.f32 %v514, %v797
      %v993 = vmax.f32 %v519, %v802
      %v994 = vmax.f32 %v522, %v805
      %v995 = vmax.f32 %v527, %v810
      %v996 = vmax.f32 %v530, %v813
      %v997 = vmax.f32 %v535, %v818
      %v998 = vmax.f32 %v538, %v821
      %v999 = vmax.f32 %v543, %v826
      %v1000 = vmax.f32 %v546, %v829
      %v1001 = vmax.f32 %v551, %v834
      %v1002 = vmax.f32 %v554, %v837
      %v1003 = vmax.f32 %v559, %v842
      %v1004 = vmax.f32 %v562, %v845
      %v1005 = vmax.f32 %v567, %v850
      %v1006 = vmax.f32 %v570, %v853
      %v1007 = vmax.f32 %v575, %v858
      %v1008 = vmax.f32 %v578, %v861
      %v1009 = vmax.f32 %v583, %v866
      %v1010 = vmax.f32 %v586, %v869
      %v1011 = vmax.f32 %v591, %v874
      %v1012 = vmax.f32 %v594, %v877
      %v1013 = vmax.f32 %v599, %v882
      %v1014 = vmax.f32 %v602, %v885
      %v1015 = vmax.f32 %v607, %v890
      %v1016 = vmax.f32 %v610, %v893
      %v1017 = vmax.f32 %v615, %v898
      %v1018 = vmax.f32 %v618, %v901
      %v1019 = vmax.f32 %v623, %v906
      %v1020 = vmax.f32 %v626, %v909
      %v1021 = vmax.f32 %v631, %v914
      %v1022 = vmax.f32 %v634, %v917
      %v1023 = vmax.f32 %v639, %v922
      %v1024 = vmax.f32 %v642, %v925
      %v1025 = vmax.f32 %v647, %v930
      %v1026 = vmax.f32 %v650, %v933
      %v1027 = vmax.f32 %v655, %v938
      %v1028 = vmax.f32 %v658, %v941
      %v1029 = vmax.f32 %v663, %v946
      %v1030 = vmax.f32 %v666, %v949
      %v1031 = vmax.f32 %v671, %v954
      %v1032 = vmax.f32 %v674, %v957
      %v1033 = vmax.f32 %v679, %v962
      %v1034 = vmax.f32 %v682, %v965
      %v1035 = vmax.f32 %v687, %v970
      %v1036 = vmax.f32 %v690, %v973
      %v1037 = vmax.f32 %v695, %v978
      %v1038 = vmax.f32 %v698, %v981
      %v1039 = vmax.f32 %v703, %v986
      %s1040 = scalar_lea.vmem %s1, 80
      %v1041 = vld [vmem:[%s1040] sm:$0xf]
      %v1042 = vld [vmem:[%s1040 + $0x4] sm:$0xf]
      %v1043 = vld [vmem:[%s1040 + $0x8] sm:$0xf]
      %v1044 = vld [vmem:[%s1040 + $0xc] sm:$0xf]
      %v1045 = vld [vmem:[%s1040 + $0x10] sm:$0xf]
      %v1046 = vld [vmem:[%s1040 + $0x14] sm:$0xf]
      %v1047 = vld [vmem:[%s1040 + $0x18] sm:$0xf]
      %v1048 = vld [vmem:[%s1040 + $0x1c] sm:$0xf]
      %v1049 = vld [vmem:[%s1040 + $0x20] sm:$0xf]
      %v1050 = vld [vmem:[%s1040 + $0x24] sm:$0x3]
      %s1051 = scalar_lea.vmem %s2, 2
      %v1052 = vld [vmem:[%s1051] sm:$0x1]
      %v1054 = vlaneseq
      %v1055 = vshrl.u32 %v1054, 7
      %v1056 = vsub.s32 0, %v1055
      %v1057 = vrot.slane %v1052, %v1056
      %v1069 = vunpack.c.l.b16 %v1041
      %v1070 = vunpack.c.l.b16 %v1042
      %v1071 = vunpack.c.l.b16 %v1043
      %v1072 = vunpack.c.l.b16 %v1044
      %v1073 = vunpack.c.l.b16 %v1045
      %v1074 = vunpack.c.l.b16 %v1046
      %v1075 = vunpack.c.l.b16 %v1047
      %v1076 = vunpack.c.l.b16 %v1048
      %v1077 = vunpack.c.l.b16 %v1049
      %v1078 = vunpack.c.l.b16 %v1050
      %v1079 = vpack.c.b16 %v1070, %v1069
      %v1080 = vpack.c.b16 %v1072, %v1071
      %v1081 = vpack.c.b16 %v1074, %v1073
      %v1082 = vpack.c.b16 %v1076, %v1075
      %v1083 = vpack.c.b16 %v1078, %v1077
      %v1089 = vand.u32 %v1083, %v472
      %1091 = vmatprep.subr.bf16.mxu0 0
      %1092 = vmatpush1.bf16.msra.mxu0 %v1079
      %1093 = vmatprep.subr.bf16.mxu0 0
      %1094 = vmatpush1.bf16.msra.mxu0 %v1080
      %1095 = vmatprep.subr.bf16.mxu0 0
      %1096 = vmatpush1.bf16.msra.mxu0 %v1081
      %1097 = vmatprep.subr.bf16.mxu0 0
      %1098 = vmatpush1.bf16.msra.mxu0 %v1082
      %1099 = vmatprep.subr.bf16.mxu0 0
      %1100 = vmatpush1.bf16.msra.mxu0 %v1089
      %1101 = vmatprep.subr.bf16.mxu0 0
      %1102 = vmatpush1.bf16.msra.mxu0 0
      %1103 = vmatprep.subr.bf16.mxu0 0
      %1104 = vmatpush1.bf16.msra.mxu0 0
      %1105 = vmatprep.subr.bf16.mxu0 0
      %1106 = vmatpush1.bf16.msra.mxu0 0
      %1107 = vmatprep.subr.bf16.mxu0 0
      %1108 = vmatpush1.bf16.msra.mxu0 0
      %1109 = vmatprep.subr.bf16.mxu0 0
      %1110 = vmatpush1.bf16.msra.mxu0 0
      %1111 = vmatprep.subr.bf16.mxu0 0
      %1112 = vmatpush1.bf16.msra.mxu0 0
      %1113 = vmatprep.subr.bf16.mxu0 0
      %1114 = vmatpush1.bf16.msra.mxu0 0
      %1115 = vmatprep.subr.bf16.mxu0 0
      %1116 = vmatpush1.bf16.msra.mxu0 0
      %1117 = vmatprep.subr.bf16.mxu0 0
      %1118 = vmatpush1.bf16.msra.mxu0 0
      %1119 = vmatprep.subr.bf16.mxu0 0
      %1120 = vmatpush1.bf16.msra.mxu0 0
      %1121 = vmatprep.subr.bf16.mxu0 0
      %1122 = vmatpush1.bf16.msra.mxu0 0
      %1123 = vmatprep.mubr.bf16.mxu0 0
      %1124 = vmatmul.mubr.bf16.gmra.mrb[0].mxu0 %v395
      %v1125 = vpop.f32.mrb[0].mxu0
      %v1126 = vadd.f32 %v1057, %v1125
      %v1127 = vpop.f32.mrb[0].mxu0
      %v1128 = vpop.f32.mrb[0].mxu0
      %v1129 = vadd.f32 %v1057, %v1128
      %v1130 = vpop.f32.mrb[0].mxu0
      %1131 = vmatprep.mubr.bf16.mxu0 0
      %1132 = vmatmul.mubr.bf16.gmra.mrb[0].mxu0 %v398
      %v1133 = vpop.f32.mrb[0].mxu0
      %v1134 = vadd.f32 %v1057, %v1133
      %v1135 = vpop.f32.mrb[0].mxu0
      %v1136 = vpop.f32.mrb[0].mxu0
      %v1137 = vadd.f32 %v1057, %v1136
      %v1138 = vpop.f32.mrb[0].mxu0
      %1139 = vmatprep.mubr.bf16.mxu0 0
      %1140 = vmatmul.mubr.bf16.gmra.mrb[0].mxu0 %v401
      %v1141 = vpop.f32.mrb[0].mxu0
      %v1142 = vadd.f32 %v1057, %v1141
      %v1143 = vpop.f32.mrb[0].mxu0
      %v1144 = vpop.f32.mrb[0].mxu0
      %v1145 = vadd.f32 %v1057, %v1144
      %v1146 = vpop.f32.mrb[0].mxu0
      %1147 = vmatprep.mubr.bf16.mxu0 0
      %1148 = vmatmul.mubr.bf16.gmra.mrb[0].mxu0 %v404
      %v1149 = vpop.f32.mrb[0].mxu0
      %v1150 = vadd.f32 %v1057, %v1149
      %v1151 = vpop.f32.mrb[0].mxu0
      %v1152 = vpop.f32.mrb[0].mxu0
      %v1153 = vadd.f32 %v1057, %v1152
      %v1154 = vpop.f32.mrb[0].mxu0
      %1155 = vmatprep.mubr.bf16.mxu0 0
      %1156 = vmatmul.mubr.bf16.gmra.mrb[0].mxu0 %v407
      %v1157 = vpop.f32.mrb[0].mxu0
      %v1158 = vadd.f32 %v1057, %v1157
      %v1159 = vpop.f32.mrb[0].mxu0
      %v1160 = vpop.f32.mrb[0].mxu0
      %v1161 = vadd.f32 %v1057, %v1160
      %v1162 = vpop.f32.mrb[0].mxu0
      %1163 = vmatprep.mubr.bf16.mxu0 0
      %1164 = vmatmul.mubr.bf16.gmra.mrb[0].mxu0 %v410
      %v1165 = vpop.f32.mrb[0].mxu0
      %v1166 = vadd.f32 %v1057, %v1165
      %v1167 = vpop.f32.mrb[0].mxu0
      %v1168 = vpop.f32.mrb[0].mxu0
      %v1169 = vadd.f32 %v1057, %v1168
      %v1170 = vpop.f32.mrb[0].mxu0
      %1171 = vmatprep.mubr.bf16.mxu0 0
      %1172 = vmatmul.mubr.bf16.gmra.mrb[0].mxu0 %v413
      %v1173 = vpop.f32.mrb[0].mxu0
      %v1174 = vadd.f32 %v1057, %v1173
      %v1175 = vpop.f32.mrb[0].mxu0
      %v1176 = vpop.f32.mrb[0].mxu0
      %v1177 = vadd.f32 %v1057, %v1176
      %v1178 = vpop.f32.mrb[0].mxu0
      %1179 = vmatprep.mubr.bf16.mxu0 0
      %1180 = vmatmul.mubr.bf16.gmra.mrb[0].mxu0 %v416
      %v1181 = vpop.f32.mrb[0].mxu0
      %v1182 = vadd.f32 %v1057, %v1181
      %v1183 = vpop.f32.mrb[0].mxu0
      %v1184 = vpop.f32.mrb[0].mxu0
      %v1185 = vadd.f32 %v1057, %v1184
      %v1186 = vpop.f32.mrb[0].mxu0
      %1187 = vmatprep.mubr.bf16.mxu0 0
      %1188 = vmatmul.mubr.bf16.gmra.mrb[0].mxu0 %v419
      %v1189 = vpop.f32.mrb[0].mxu0
      %v1190 = vadd.f32 %v1057, %v1189
      %v1191 = vpop.f32.mrb[0].mxu0
      %v1192 = vpop.f32.mrb[0].mxu0
      %v1193 = vadd.f32 %v1057, %v1192
      %v1194 = vpop.f32.mrb[0].mxu0
      %1195 = vmatprep.mubr.bf16.mxu0 0
      %1196 = vmatmul.mubr.bf16.gmra.mrb[0].mxu0 %v422
      %v1197 = vpop.f32.mrb[0].mxu0
      %v1198 = vadd.f32 %v1057, %v1197
      %v1199 = vpop.f32.mrb[0].mxu0
      %v1200 = vpop.f32.mrb[0].mxu0
      %v1201 = vadd.f32 %v1057, %v1200
      %v1202 = vpop.f32.mrb[0].mxu0
      %1203 = vmatprep.mubr.bf16.mxu0 0
      %1204 = vmatmul.mubr.bf16.gmra.mrb[0].mxu0 %v425
      %v1205 = vpop.f32.mrb[0].mxu0
      %v1206 = vadd.f32 %v1057, %v1205
      %v1207 = vpop.f32.mrb[0].mxu0
      %v1208 = vpop.f32.mrb[0].mxu0
      %v1209 = vadd.f32 %v1057, %v1208
      %v1210 = vpop.f32.mrb[0].mxu0
      %1211 = vmatprep.mubr.bf16.mxu0 0
      %1212 = vmatmul.mubr.bf16.gmra.mrb[0].mxu0 %v428
      %v1213 = vpop.f32.mrb[0].mxu0
      %v1214 = vadd.f32 %v1057, %v1213
      %v1215 = vpop.f32.mrb[0].mxu0
      %v1216 = vpop.f32.mrb[0].mxu0
      %v1217 = vadd.f32 %v1057, %v1216
      %v1218 = vpop.f32.mrb[0].mxu0
      %1219 = vmatprep.mubr.bf16.mxu0 0
      %1220 = vmatmul.mubr.bf16.gmra.mrb[0].mxu0 %v431
      %v1221 = vpop.f32.mrb[0].mxu0
      %v1222 = vadd.f32 %v1057, %v1221
      %v1223 = vpop.f32.mrb[0].mxu0
      %v1224 = vpop.f32.mrb[0].mxu0
      %v1225 = vadd.f32 %v1057, %v1224
      %v1226 = vpop.f32.mrb[0].mxu0
      %1227 = vmatprep.mubr.bf16.mxu0 0
      %1228 = vmatmul.mubr.bf16.gmra.mrb[0].mxu0 %v434
      %v1229 = vpop.f32.mrb[0].mxu0
      %v1230 = vadd.f32 %v1057, %v1229
      %v1231 = vpop.f32.mrb[0].mxu0
      %v1232 = vpop.f32.mrb[0].mxu0
      %v1233 = vadd.f32 %v1057, %v1232
      %v1234 = vpop.f32.mrb[0].mxu0
      %1235 = vmatprep.mubr.bf16.mxu0 0
      %1236 = vmatmul.mubr.bf16.gmra.mrb[0].mxu0 %v437
      %v1237 = vpop.f32.mrb[0].mxu0
      %v1238 = vadd.f32 %v1057, %v1237
      %v1239 = vpop.f32.mrb[0].mxu0
      %v1240 = vpop.f32.mrb[0].mxu0
      %v1241 = vadd.f32 %v1057, %v1240
      %v1242 = vpop.f32.mrb[0].mxu0
      %1243 = vmatprep.mubr.bf16.mxu0 0
      %1244 = vmatmul.mubr.bf16.gmra.mrb[0].mxu0 %v440
      %v1245 = vpop.f32.mrb[0].mxu0
      %v1246 = vadd.f32 %v1057, %v1245
      %v1247 = vpop.f32.mrb[0].mxu0
      %v1248 = vpop.f32.mrb[0].mxu0
      %v1249 = vadd.f32 %v1057, %v1248
      %v1250 = vpop.f32.mrb[0].mxu0
      %1251 = vmatprep.mubr.bf16.mxu0 0
      %1252 = vmatmul.mubr.bf16.gmra.mrb[0].mxu0 %v443
      %v1253 = vpop.f32.mrb[0].mxu0
      %v1254 = vadd.f32 %v1057, %v1253
      %v1255 = vpop.f32.mrb[0].mxu0
      %v1256 = vpop.f32.mrb[0].mxu0
      %v1257 = vadd.f32 %v1057, %v1256
      %v1258 = vpop.f32.mrb[0].mxu0
      %1259 = vmatprep.mubr.bf16.mxu0 0
      %1260 = vmatmul.mubr.bf16.gmra.mrb[0].mxu0 %v446
      %v1261 = vpop.f32.mrb[0].mxu0
      %v1262 = vadd.f32 %v1057, %v1261
      %v1263 = vpop.f32.mrb[0].mxu0
      %v1264 = vpop.f32.mrb[0].mxu0
      %v1265 = vadd.f32 %v1057, %v1264
      %v1266 = vpop.f32.mrb[0].mxu0
      %1267 = vmatprep.mubr.bf16.mxu0 0
      %1268 = vmatmul.mubr.bf16.gmra.mrb[0].mxu0 %v449
      %v1269 = vpop.f32.mrb[0].mxu0
      %v1270 = vadd.f32 %v1057, %v1269
      %v1271 = vpop.f32.mrb[0].mxu0
      %v1272 = vpop.f32.mrb[0].mxu0
      %v1273 = vadd.f32 %v1057, %v1272
      %v1274 = vpop.f32.mrb[0].mxu0
      %1275 = vmatprep.mubr.bf16.mxu0 0
      %1276 = vmatmul.mubr.bf16.gmra.mrb[0].mxu0 %v452
      %v1277 = vpop.f32.mrb[0].mxu0
      %v1278 = vadd.f32 %v1057, %v1277
      %v1279 = vpop.f32.mrb[0].mxu0
      %v1280 = vpop.f32.mrb[0].mxu0
      %v1281 = vadd.f32 %v1057, %v1280
      %v1282 = vpop.f32.mrb[0].mxu0
      %1283 = vmatprep.mubr.bf16.mxu0 0
      %1284 = vmatmul.mubr.bf16.gmra.mrb[0].mxu0 %v455
      %v1285 = vpop.f32.mrb[0].mxu0
      %v1286 = vadd.f32 %v1057, %v1285
      %v1287 = vpop.f32.mrb[0].mxu0
      %v1288 = vpop.f32.mrb[0].mxu0
      %v1289 = vadd.f32 %v1057, %v1288
      %v1290 = vpop.f32.mrb[0].mxu0
      %1291 = vmatprep.mubr.bf16.mxu0 0
      %1292 = vmatmul.mubr.bf16.gmra.mrb[0].mxu0 %v458
      %v1293 = vpop.f32.mrb[0].mxu0
      %v1294 = vadd.f32 %v1057, %v1293
      %v1295 = vpop.f32.mrb[0].mxu0
      %v1296 = vpop.f32.mrb[0].mxu0
      %v1297 = vadd.f32 %v1057, %v1296
      %v1298 = vpop.f32.mrb[0].mxu0
      %1299 = vmatprep.mubr.bf16.mxu0 0
      %1300 = vmatmul.mubr.bf16.gmra.mrb[0].mxu0 %v461
      %v1301 = vpop.f32.mrb[0].mxu0
      %v1302 = vadd.f32 %v1057, %v1301
      %v1303 = vpop.f32.mrb[0].mxu0
      %v1304 = vpop.f32.mrb[0].mxu0
      %v1305 = vadd.f32 %v1057, %v1304
      %v1306 = vpop.f32.mrb[0].mxu0
      %1307 = vmatprep.mubr.bf16.mxu0 0
      %1308 = vmatmul.mubr.bf16.gmra.mrb[0].mxu0 %v464
      %v1309 = vpop.f32.mrb[0].mxu0
      %v1310 = vadd.f32 %v1057, %v1309
      %v1311 = vpop.f32.mrb[0].mxu0
      %v1312 = vpop.f32.mrb[0].mxu0
      %v1313 = vadd.f32 %v1057, %v1312
      %v1314 = vpop.f32.mrb[0].mxu0
      %1315 = vmatprep.mubr.bf16.mxu0 0
      %1316 = vmatmul.mubr.bf16.gmra.mrb[0].mxu0 %v467
      %v1317 = vpop.f32.mrb[0].mxu0
      %v1318 = vadd.f32 %v1057, %v1317
      %v1319 = vpop.f32.mrb[0].mxu0
      %v1320 = vpop.f32.mrb[0].mxu0
      %v1321 = vpop.f32.mrb[0].mxu0
      %1322 = vdwg.mxu0
      %v1323 = vmax.f32 %v991, %v1126
      %v1324 = vmax.f32 %v992, %v1129
      %v1325 = vmax.f32 %v993, %v1134
      %v1326 = vmax.f32 %v994, %v1137
      %v1327 = vmax.f32 %v995, %v1142
      %v1328 = vmax.f32 %v996, %v1145
      %v1329 = vmax.f32 %v997, %v1150
      %v1330 = vmax.f32 %v998, %v1153
      %v1331 = vmax.f32 %v999, %v1158
      %v1332 = vmax.f32 %v1000, %v1161
      %v1333 = vmax.f32 %v1001, %v1166
      %v1334 = vmax.f32 %v1002, %v1169
      %v1335 = vmax.f32 %v1003, %v1174
      %v1336 = vmax.f32 %v1004, %v1177
      %v1337 = vmax.f32 %v1005, %v1182
      %v1338 = vmax.f32 %v1006, %v1185
      %v1339 = vmax.f32 %v1007, %v1190
      %v1340 = vmax.f32 %v1008, %v1193
      %v1341 = vmax.f32 %v1009, %v1198
      %v1342 = vmax.f32 %v1010, %v1201
      %v1343 = vmax.f32 %v1011, %v1206
      %v1344 = vmax.f32 %v1012, %v1209
      %v1345 = vmax.f32 %v1013, %v1214
      %v1346 = vmax.f32 %v1014, %v1217
      %v1347 = vmax.f32 %v1015, %v1222
      %v1348 = vmax.f32 %v1016, %v1225
      %v1349 = vmax.f32 %v1017, %v1230
      %v1350 = vmax.f32 %v1018, %v1233
      %v1351 = vmax.f32 %v1019, %v1238
      %v1352 = vmax.f32 %v1020, %v1241
      %v1353 = vmax.f32 %v1021, %v1246
      %v1354 = vmax.f32 %v1022, %v1249
      %v1355 = vmax.f32 %v1023, %v1254
      %v1356 = vmax.f32 %v1024, %v1257
      %v1357 = vmax.f32 %v1025, %v1262
      %v1358 = vmax.f32 %v1026, %v1265
      %v1359 = vmax.f32 %v1027, %v1270
      %v1360 = vmax.f32 %v1028, %v1273
      %v1361 = vmax.f32 %v1029, %v1278
      %v1362 = vmax.f32 %v1030, %v1281
      %v1363 = vmax.f32 %v1031, %v1286
      %v1364 = vmax.f32 %v1032, %v1289
      %v1365 = vmax.f32 %v1033, %v1294
      %v1366 = vmax.f32 %v1034, %v1297
      %v1367 = vmax.f32 %v1035, %v1302
      %v1368 = vmax.f32 %v1036, %v1305
      %v1369 = vmax.f32 %v1037, %v1310
      %v1370 = vmax.f32 %v1038, %v1313
      %v1371 = vmax.f32 %v1039, %v1318
      %s1372 = scalar_lea.vmem %s1, 120
      %v1373 = vld [vmem:[%s1372] sm:$0xf]
      %v1374 = vld [vmem:[%s1372 + $0x4] sm:$0xf]
      %v1375 = vld [vmem:[%s1372 + $0x8] sm:$0xf]
      %v1376 = vld [vmem:[%s1372 + $0xc] sm:$0xf]
      %v1377 = vld [vmem:[%s1372 + $0x10] sm:$0xf]
      %v1378 = vld [vmem:[%s1372 + $0x14] sm:$0xf]
      %v1379 = vld [vmem:[%s1372 + $0x18] sm:$0xf]
      %v1380 = vld [vmem:[%s1372 + $0x1c] sm:$0xf]
      %v1381 = vld [vmem:[%s1372 + $0x20] sm:$0xf]
      %v1382 = vld [vmem:[%s1372 + $0x24] sm:$0x3]
      %s1383 = scalar_lea.vmem %s2, 3
      %v1384 = vld [vmem:[%s1383] sm:$0x1]
      %v1386 = vlaneseq
      %v1387 = vshrl.u32 %v1386, 7
      %v1388 = vsub.s32 0, %v1387
      %v1389 = vrot.slane %v1384, %v1388
      %v1401 = vunpack.c.l.b16 %v1373
      %v1402 = vunpack.c.l.b16 %v1374
      %v1403 = vunpack.c.l.b16 %v1375
      %v1404 = vunpack.c.l.b16 %v1376
      %v1405 = vunpack.c.l.b16 %v1377
      %v1406 = vunpack.c.l.b16 %v1378
      %v1407 = vunpack.c.l.b16 %v1379
      %v1408 = vunpack.c.l.b16 %v1380
      %v1409 = vunpack.c.l.b16 %v1381
      %v1410 = vunpack.c.l.b16 %v1382
      %v1411 = vpack.c.b16 %v1402, %v1401
      %v1412 = vpack.c.b16 %v1404, %v1403
      %v1413 = vpack.c.b16 %v1406, %v1405
      %v1414 = vpack.c.b16 %v1408, %v1407
      %v1415 = vpack.c.b16 %v1410, %v1409
      %v1421 = vand.u32 %v1415, %v472
      %1423 = vmatprep.subr.bf16.mxu0 0
      %1424 = vmatpush1.bf16.msra.mxu0 %v1411
      %1425 = vmatprep.subr.bf16.mxu0 0
      %1426 = vmatpush1.bf16.msra.mxu0 %v1412
      %1427 = vmatprep.subr.bf16.mxu0 0
      %1428 = vmatpush1.bf16.msra.mxu0 %v1413
      %1429 = vmatprep.subr.bf16.mxu0 0
      %1430 = vmatpush1.bf16.msra.mxu0 %v1414
      %1431 = vmatprep.subr.bf16.mxu0 0
      %1432 = vmatpush1.bf16.msra.mxu0 %v1421
      %1433 = vmatprep.subr.bf16.mxu0 0
      %1434 = vmatpush1.bf16.msra.mxu0 0
      %1435 = vmatprep.subr.bf16.mxu0 0
      %1436 = vmatpush1.bf16.msra.mxu0 0
      %1437 = vmatprep.subr.bf16.mxu0 0
      %1438 = vmatpush1.bf16.msra.mxu0 0
      %1439 = vmatprep.subr.bf16.mxu0 0
      %1440 = vmatpush1.bf16.msra.mxu0 0
      %1441 = vmatprep.subr.bf16.mxu0 0
      %1442 = vmatpush1.bf16.msra.mxu0 0
      %1443 = vmatprep.subr.bf16.mxu0 0
      %1444 = vmatpush1.bf16.msra.mxu0 0
      %1445 = vmatprep.subr.bf16.mxu0 0
      %1446 = vmatpush1.bf16.msra.mxu0 0
      %1447 = vmatprep.subr.bf16.mxu0 0
      %1448 = vmatpush1.bf16.msra.mxu0 0
      %1449 = vmatprep.subr.bf16.mxu0 0
      %1450 = vmatpush1.bf16.msra.mxu0 0
      %1451 = vmatprep.subr.bf16.mxu0 0
      %1452 = vmatpush1.bf16.msra.mxu0 0
      %1453 = vmatprep.subr.bf16.mxu0 0
      %1454 = vmatpush1.bf16.msra.mxu0 0
      %1455 = vmatprep.mubr.bf16.mxu0 0
      %1456 = vmatmul.mubr.bf16.gmra.mrb[0].mxu0 %v395
      %v1457 = vpop.f32.mrb[0].mxu0
      %v1458 = vadd.f32 %v1389, %v1457
      %v1459 = vpop.f32.mrb[0].mxu0
      %v1460 = vpop.f32.mrb[0].mxu0
      %v1461 = vadd.f32 %v1389, %v1460
      %v1462 = vpop.f32.mrb[0].mxu0
      %1463 = vmatprep.mubr.bf16.mxu0 0
      %1464 = vmatmul.mubr.bf16.gmra.mrb[0].mxu0 %v398
      %v1465 = vpop.f32.mrb[0].mxu0
      %v1466 = vadd.f32 %v1389, %v1465
      %v1467 = vpop.f32.mrb[0].mxu0
      %v1468 = vpop.f32.mrb[0].mxu0
      %v1469 = vadd.f32 %v1389, %v1468
      %v1470 = vpop.f32.mrb[0].mxu0
      %1471 = vmatprep.mubr.bf16.mxu0 0
      %1472 = vmatmul.mubr.bf16.gmra.mrb[0].mxu0 %v401
      %v1473 = vpop.f32.mrb[0].mxu0
      %v1474 = vadd.f32 %v1389, %v1473
      %v1475 = vpop.f32.mrb[0].mxu0
      %v1476 = vpop.f32.mrb[0].mxu0
      %v1477 = vadd.f32 %v1389, %v1476
      %v1478 = vpop.f32.mrb[0].mxu0
      %1479 = vmatprep.mubr.bf16.mxu0 0
      %1480 = vmatmul.mubr.bf16.gmra.mrb[0].mxu0 %v404
      %v1481 = vpop.f32.mrb[0].mxu0
      %v1482 = vadd.f32 %v1389, %v1481
      %v1483 = vpop.f32.mrb[0].mxu0
      %v1484 = vpop.f32.mrb[0].mxu0
      %v1485 = vadd.f32 %v1389, %v1484
      %v1486 = vpop.f32.mrb[0].mxu0
      %1487 = vmatprep.mubr.bf16.mxu0 0
      %1488 = vmatmul.mubr.bf16.gmra.mrb[0].mxu0 %v407
      %v1489 = vpop.f32.mrb[0].mxu0
      %v1490 = vadd.f32 %v1389, %v1489
      %v1491 = vpop.f32.mrb[0].mxu0
      %v1492 = vpop.f32.mrb[0].mxu0
      %v1493 = vadd.f32 %v1389, %v1492
      %v1494 = vpop.f32.mrb[0].mxu0
      %1495 = vmatprep.mubr.bf16.mxu0 0
      %1496 = vmatmul.mubr.bf16.gmra.mrb[0].mxu0 %v410
      %v1497 = vpop.f32.mrb[0].mxu0
      %v1498 = vadd.f32 %v1389, %v1497
      %v1499 = vpop.f32.mrb[0].mxu0
      %v1500 = vpop.f32.mrb[0].mxu0
      %v1501 = vadd.f32 %v1389, %v1500
      %v1502 = vpop.f32.mrb[0].mxu0
      %1503 = vmatprep.mubr.bf16.mxu0 0
      %1504 = vmatmul.mubr.bf16.gmra.mrb[0].mxu0 %v413
      %v1505 = vpop.f32.mrb[0].mxu0
      %v1506 = vadd.f32 %v1389, %v1505
      %v1507 = vpop.f32.mrb[0].mxu0
      %v1508 = vpop.f32.mrb[0].mxu0
      %v1509 = vadd.f32 %v1389, %v1508
      %v1510 = vpop.f32.mrb[0].mxu0
      %1511 = vmatprep.mubr.bf16.mxu0 0
      %1512 = vmatmul.mubr.bf16.gmra.mrb[0].mxu0 %v416
      %v1513 = vpop.f32.mrb[0].mxu0
      %v1514 = vadd.f32 %v1389, %v1513
      %v1515 = vpop.f32.mrb[0].mxu0
      %v1516 = vpop.f32.mrb[0].mxu0
      %v1517 = vadd.f32 %v1389, %v1516
      %v1518 = vpop.f32.mrb[0].mxu0
      %1519 = vmatprep.mubr.bf16.mxu0 0
      %1520 = vmatmul.mubr.bf16.gmra.mrb[0].mxu0 %v419
      %v1521 = vpop.f32.mrb[0].mxu0
      %v1522 = vadd.f32 %v1389, %v1521
      %v1523 = vpop.f32.mrb[0].mxu0
      %v1524 = vpop.f32.mrb[0].mxu0
      %v1525 = vadd.f32 %v1389, %v1524
      %v1526 = vpop.f32.mrb[0].mxu0
      %1527 = vmatprep.mubr.bf16.mxu0 0
      %1528 = vmatmul.mubr.bf16.gmra.mrb[0].mxu0 %v422
      %v1529 = vpop.f32.mrb[0].mxu0
      %v1530 = vadd.f32 %v1389, %v1529
      %v1531 = vpop.f32.mrb[0].mxu0
      %v1532 = vpop.f32.mrb[0].mxu0
      %v1533 = vadd.f32 %v1389, %v1532
      %v1534 = vpop.f32.mrb[0].mxu0
      %1535 = vmatprep.mubr.bf16.mxu0 0
      %1536 = vmatmul.mubr.bf16.gmra.mrb[0].mxu0 %v425
      %v1537 = vpop.f32.mrb[0].mxu0
      %v1538 = vadd.f32 %v1389, %v1537
      %v1539 = vpop.f32.mrb[0].mxu0
      %v1540 = vpop.f32.mrb[0].mxu0
      %v1541 = vadd.f32 %v1389, %v1540
      %v1542 = vpop.f32.mrb[0].mxu0
      %1543 = vmatprep.mubr.bf16.mxu0 0
      %1544 = vmatmul.mubr.bf16.gmra.mrb[0].mxu0 %v428
      %v1545 = vpop.f32.mrb[0].mxu0
      %v1546 = vadd.f32 %v1389, %v1545
      %v1547 = vpop.f32.mrb[0].mxu0
      %v1548 = vpop.f32.mrb[0].mxu0
      %v1549 = vadd.f32 %v1389, %v1548
      %v1550 = vpop.f32.mrb[0].mxu0
      %1551 = vmatprep.mubr.bf16.mxu0 0
      %1552 = vmatmul.mubr.bf16.gmra.mrb[0].mxu0 %v431
      %v1553 = vpop.f32.mrb[0].mxu0
      %v1554 = vadd.f32 %v1389, %v1553
      %v1555 = vpop.f32.mrb[0].mxu0
      %v1556 = vpop.f32.mrb[0].mxu0
      %v1557 = vadd.f32 %v1389, %v1556
      %v1558 = vpop.f32.mrb[0].mxu0
      %1559 = vmatprep.mubr.bf16.mxu0 0
      %1560 = vmatmul.mubr.bf16.gmra.mrb[0].mxu0 %v434
      %v1561 = vpop.f32.mrb[0].mxu0
      %v1562 = vadd.f32 %v1389, %v1561
      %v1563 = vpop.f32.mrb[0].mxu0
      %v1564 = vpop.f32.mrb[0].mxu0
      %v1565 = vadd.f32 %v1389, %v1564
      %v1566 = vpop.f32.mrb[0].mxu0
      %1567 = vmatprep.mubr.bf16.mxu0 0
      %1568 = vmatmul.mubr.bf16.gmra.mrb[0].mxu0 %v437
      %v1569 = vpop.f32.mrb[0].mxu0
      %v1570 = vadd.f32 %v1389, %v1569
      %v1571 = vpop.f32.mrb[0].mxu0
      %v1572 = vpop.f32.mrb[0].mxu0
      %v1573 = vadd.f32 %v1389, %v1572
      %v1574 = vpop.f32.mrb[0].mxu0
      %1575 = vmatprep.mubr.bf16.mxu0 0
      %1576 = vmatmul.mubr.bf16.gmra.mrb[0].mxu0 %v440
      %v1577 = vpop.f32.mrb[0].mxu0
      %v1578 = vadd.f32 %v1389, %v1577
      %v1579 = vpop.f32.mrb[0].mxu0
      %v1580 = vpop.f32.mrb[0].mxu0
      %v1581 = vadd.f32 %v1389, %v1580
      %v1582 = vpop.f32.mrb[0].mxu0
      %1583 = vmatprep.mubr.bf16.mxu0 0
      %1584 = vmatmul.mubr.bf16.gmra.mrb[0].mxu0 %v443
      %v1585 = vpop.f32.mrb[0].mxu0
      %v1586 = vadd.f32 %v1389, %v1585
      %v1587 = vpop.f32.mrb[0].mxu0
      %v1588 = vpop.f32.mrb[0].mxu0
      %v1589 = vadd.f32 %v1389, %v1588
      %v1590 = vpop.f32.mrb[0].mxu0
      %1591 = vmatprep.mubr.bf16.mxu0 0
      %1592 = vmatmul.mubr.bf16.gmra.mrb[0].mxu0 %v446
      %v1593 = vpop.f32.mrb[0].mxu0
      %v1594 = vadd.f32 %v1389, %v1593
      %v1595 = vpop.f32.mrb[0].mxu0
      %v1596 = vpop.f32.mrb[0].mxu0
      %v1597 = vadd.f32 %v1389, %v1596
      %v1598 = vpop.f32.mrb[0].mxu0
      %1599 = vmatprep.mubr.bf16.mxu0 0
      %1600 = vmatmul.mubr.bf16.gmra.mrb[0].mxu0 %v449
      %v1601 = vpop.f32.mrb[0].mxu0
      %v1602 = vadd.f32 %v1389, %v1601
      %v1603 = vpop.f32.mrb[0].mxu0
      %v1604 = vpop.f32.mrb[0].mxu0
      %v1605 = vadd.f32 %v1389, %v1604
      %v1606 = vpop.f32.mrb[0].mxu0
      %1607 = vmatprep.mubr.bf16.mxu0 0
      %1608 = vmatmul.mubr.bf16.gmra.mrb[0].mxu0 %v452
      %v1609 = vpop.f32.mrb[0].mxu0
      %v1610 = vadd.f32 %v1389, %v1609
      %v1611 = vpop.f32.mrb[0].mxu0
      %v1612 = vpop.f32.mrb[0].mxu0
      %v1613 = vadd.f32 %v1389, %v1612
      %v1614 = vpop.f32.mrb[0].mxu0
      %1615 = vmatprep.mubr.bf16.mxu0 0
      %1616 = vmatmul.mubr.bf16.gmra.mrb[0].mxu0 %v455
      %v1617 = vpop.f32.mrb[0].mxu0
      %v1618 = vadd.f32 %v1389, %v1617
      %v1619 = vpop.f32.mrb[0].mxu0
      %v1620 = vpop.f32.mrb[0].mxu0
      %v1621 = vadd.f32 %v1389, %v1620
      %v1622 = vpop.f32.mrb[0].mxu0
      %1623 = vmatprep.mubr.bf16.mxu0 0
      %1624 = vmatmul.mubr.bf16.gmra.mrb[0].mxu0 %v458
      %v1625 = vpop.f32.mrb[0].mxu0
      %v1626 = vadd.f32 %v1389, %v1625
      %v1627 = vpop.f32.mrb[0].mxu0
      %v1628 = vpop.f32.mrb[0].mxu0
      %v1629 = vadd.f32 %v1389, %v1628
      %v1630 = vpop.f32.mrb[0].mxu0
      %1631 = vmatprep.mubr.bf16.mxu0 0
      %1632 = vmatmul.mubr.bf16.gmra.mrb[0].mxu0 %v461
      %v1633 = vpop.f32.mrb[0].mxu0
      %v1634 = vadd.f32 %v1389, %v1633
      %v1635 = vpop.f32.mrb[0].mxu0
      %v1636 = vpop.f32.mrb[0].mxu0
      %v1637 = vadd.f32 %v1389, %v1636
      %v1638 = vpop.f32.mrb[0].mxu0
      %1639 = vmatprep.mubr.bf16.mxu0 0
      %1640 = vmatmul.mubr.bf16.gmra.mrb[0].mxu0 %v464
      %v1641 = vpop.f32.mrb[0].mxu0
      %v1642 = vadd.f32 %v1389, %v1641
      %v1643 = vpop.f32.mrb[0].mxu0
      %v1644 = vpop.f32.mrb[0].mxu0
      %v1645 = vadd.f32 %v1389, %v1644
      %v1646 = vpop.f32.mrb[0].mxu0
      %1647 = vmatprep.mubr.bf16.mxu0 0
      %1648 = vmatmul.mubr.bf16.gmra.mrb[0].mxu0 %v467
      %v1649 = vpop.f32.mrb[0].mxu0
      %v1650 = vadd.f32 %v1389, %v1649
      %v1651 = vpop.f32.mrb[0].mxu0
      %v1652 = vpop.f32.mrb[0].mxu0
      %v1653 = vpop.f32.mrb[0].mxu0
      %1654 = vdwg.mxu0
      %v1655 = vmax.f32 %v1323, %v1458
      %v1656 = vmax.f32 %v1324, %v1461
      %v1657 = vmax.f32 %v1325, %v1466
      %v1658 = vmax.f32 %v1326, %v1469
      %v1659 = vmax.f32 %v1327, %v1474
      %v1660 = vmax.f32 %v1328, %v1477
      %v1661 = vmax.f32 %v1329, %v1482
      %v1662 = vmax.f32 %v1330, %v1485
      %v1663 = vmax.f32 %v1331, %v1490
      %v1664 = vmax.f32 %v1332, %v1493
      %v1665 = vmax.f32 %v1333, %v1498
      %v1666 = vmax.f32 %v1334, %v1501
      %v1667 = vmax.f32 %v1335, %v1506
      %v1668 = vmax.f32 %v1336, %v1509
      %v1669 = vmax.f32 %v1337, %v1514
      %v1670 = vmax.f32 %v1338, %v1517
      %v1671 = vmax.f32 %v1339, %v1522
      %v1672 = vmax.f32 %v1340, %v1525
      %v1673 = vmax.f32 %v1341, %v1530
      %v1674 = vmax.f32 %v1342, %v1533
      %v1675 = vmax.f32 %v1343, %v1538
      %v1676 = vmax.f32 %v1344, %v1541
      %v1677 = vmax.f32 %v1345, %v1546
      %v1678 = vmax.f32 %v1346, %v1549
      %v1679 = vmax.f32 %v1347, %v1554
      %v1680 = vmax.f32 %v1348, %v1557
      %v1681 = vmax.f32 %v1349, %v1562
      %v1682 = vmax.f32 %v1350, %v1565
      %v1683 = vmax.f32 %v1351, %v1570
      %v1684 = vmax.f32 %v1352, %v1573
      %v1685 = vmax.f32 %v1353, %v1578
      %v1686 = vmax.f32 %v1354, %v1581
      %v1687 = vmax.f32 %v1355, %v1586
      %v1688 = vmax.f32 %v1356, %v1589
      %v1689 = vmax.f32 %v1357, %v1594
      %v1690 = vmax.f32 %v1358, %v1597
      %v1691 = vmax.f32 %v1359, %v1602
      %v1692 = vmax.f32 %v1360, %v1605
      %v1693 = vmax.f32 %v1361, %v1610
      %v1694 = vmax.f32 %v1362, %v1613
      %v1695 = vmax.f32 %v1363, %v1618
      %v1696 = vmax.f32 %v1364, %v1621
      %v1697 = vmax.f32 %v1365, %v1626
      %v1698 = vmax.f32 %v1366, %v1629
      %v1699 = vmax.f32 %v1367, %v1634
      %v1700 = vmax.f32 %v1368, %v1637
      %v1701 = vmax.f32 %v1369, %v1642
      %v1702 = vmax.f32 %v1370, %v1645
      %v1703 = vmax.f32 %v1371, %v1650
      %s1704 = scalar_lea.vmem %s1, 160
      %v1705 = vld [vmem:[%s1704] sm:$0xf]
      %v1706 = vld [vmem:[%s1704 + $0x4] sm:$0xf]
      %v1707 = vld [vmem:[%s1704 + $0x8] sm:$0xf]
      %v1708 = vld [vmem:[%s1704 + $0xc] sm:$0xf]
      %v1709 = vld [vmem:[%s1704 + $0x10] sm:$0xf]
      %v1710 = vld [vmem:[%s1704 + $0x14] sm:$0xf]
      %v1711 = vld [vmem:[%s1704 + $0x18] sm:$0xf]
      %v1712 = vld [vmem:[%s1704 + $0x1c] sm:$0xf]
      %v1713 = vld [vmem:[%s1704 + $0x20] sm:$0xf]
      %v1714 = vld [vmem:[%s1704 + $0x24] sm:$0x3]
      %s1715 = scalar_lea.vmem %s2, 4
      %v1716 = vld [vmem:[%s1715] sm:$0x1]
      %v1718 = vlaneseq
      %v1719 = vshrl.u32 %v1718, 7
      %v1720 = vsub.s32 0, %v1719
      %v1721 = vrot.slane %v1716, %v1720
      %v1733 = vunpack.c.l.b16 %v1705
      %v1734 = vunpack.c.l.b16 %v1706
      %v1735 = vunpack.c.l.b16 %v1707
      %v1736 = vunpack.c.l.b16 %v1708
      %v1737 = vunpack.c.l.b16 %v1709
      %v1738 = vunpack.c.l.b16 %v1710
      %v1739 = vunpack.c.l.b16 %v1711
      %v1740 = vunpack.c.l.b16 %v1712
      %v1741 = vunpack.c.l.b16 %v1713
      %v1742 = vunpack.c.l.b16 %v1714
      %v1743 = vpack.c.b16 %v1734, %v1733
      %v1744 = vpack.c.b16 %v1736, %v1735
      %v1745 = vpack.c.b16 %v1738, %v1737
      %v1746 = vpack.c.b16 %v1740, %v1739
      %v1747 = vpack.c.b16 %v1742, %v1741
      %v1753 = vand.u32 %v1747, %v472
      %1755 = vmatprep.subr.bf16.mxu0 0
      %1756 = vmatpush1.bf16.msra.mxu0 %v1743
      %1757 = vmatprep.subr.bf16.mxu0 0
      %1758 = vmatpush1.bf16.msra.mxu0 %v1744
      %1759 = vmatprep.subr.bf16.mxu0 0
      %1760 = vmatpush1.bf16.msra.mxu0 %v1745
      %1761 = vmatprep.subr.bf16.mxu0 0
      %1762 = vmatpush1.bf16.msra.mxu0 %v1746
      %1763 = vmatprep.subr.bf16.mxu0 0
      %1764 = vmatpush1.bf16.msra.mxu0 %v1753
      %1765 = vmatprep.subr.bf16.mxu0 0
      %1766 = vmatpush1.bf16.msra.mxu0 0
      %1767 = vmatprep.subr.bf16.mxu0 0
      %1768 = vmatpush1.bf16.msra.mxu0 0
      %1769 = vmatprep.subr.bf16.mxu0 0
      %1770 = vmatpush1.bf16.msra.mxu0 0
      %1771 = vmatprep.subr.bf16.mxu0 0
      %1772 = vmatpush1.bf16.msra.mxu0 0
      %1773 = vmatprep.subr.bf16.mxu0 0
      %1774 = vmatpush1.bf16.msra.mxu0 0
      %1775 = vmatprep.subr.bf16.mxu0 0
      %1776 = vmatpush1.bf16.msra.mxu0 0
      %1777 = vmatprep.subr.bf16.mxu0 0
      %1778 = vmatpush1.bf16.msra.mxu0 0
      %1779 = vmatprep.subr.bf16.mxu0 0
      %1780 = vmatpush1.bf16.msra.mxu0 0
      %1781 = vmatprep.subr.bf16.mxu0 0
      %1782 = vmatpush1.bf16.msra.mxu0 0
      %1783 = vmatprep.subr.bf16.mxu0 0
      %1784 = vmatpush1.bf16.msra.mxu0 0
      %1785 = vmatprep.subr.bf16.mxu0 0
      %1786 = vmatpush1.bf16.msra.mxu0 0
      %1787 = vmatprep.mubr.bf16.mxu0 0
      %1788 = vmatmul.mubr.bf16.gmra.mrb[0].mxu0 %v395
      %v1789 = vpop.f32.mrb[0].mxu0
      %v1790 = vadd.f32 %v1721, %v1789
      %v1791 = vpop.f32.mrb[0].mxu0
      %v1792 = vpop.f32.mrb[0].mxu0
      %v1793 = vadd.f32 %v1721, %v1792
      %v1794 = vpop.f32.mrb[0].mxu0
      %1795 = vmatprep.mubr.bf16.mxu0 0
      %1796 = vmatmul.mubr.bf16.gmra.mrb[0].mxu0 %v398
      %v1797 = vpop.f32.mrb[0].mxu0
      %v1798 = vadd.f32 %v1721, %v1797
      %v1799 = vpop.f32.mrb[0].mxu0
      %v1800 = vpop.f32.mrb[0].mxu0
      %v1801 = vadd.f32 %v1721, %v1800
      %v1802 = vpop.f32.mrb[0].mxu0
      %1803 = vmatprep.mubr.bf16.mxu0 0
      %1804 = vmatmul.mubr.bf16.gmra.mrb[0].mxu0 %v401
      %v1805 = vpop.f32.mrb[0].mxu0
      %v1806 = vadd.f32 %v1721, %v1805
      %v1807 = vpop.f32.mrb[0].mxu0
      %v1808 = vpop.f32.mrb[0].mxu0
      %v1809 = vadd.f32 %v1721, %v1808
      %v1810 = vpop.f32.mrb[0].mxu0
      %1811 = vmatprep.mubr.bf16.mxu0 0
      %1812 = vmatmul.mubr.bf16.gmra.mrb[0].mxu0 %v404
      %v1813 = vpop.f32.mrb[0].mxu0
      %v1814 = vadd.f32 %v1721, %v1813
      %v1815 = vpop.f32.mrb[0].mxu0
      %v1816 = vpop.f32.mrb[0].mxu0
      %v1817 = vadd.f32 %v1721, %v1816
      %v1818 = vpop.f32.mrb[0].mxu0
      %1819 = vmatprep.mubr.bf16.mxu0 0
      %1820 = vmatmul.mubr.bf16.gmra.mrb[0].mxu0 %v407
      %v1821 = vpop.f32.mrb[0].mxu0
      %v1822 = vadd.f32 %v1721, %v1821
      %v1823 = vpop.f32.mrb[0].mxu0
      %v1824 = vpop.f32.mrb[0].mxu0
      %v1825 = vadd.f32 %v1721, %v1824
      %v1826 = vpop.f32.mrb[0].mxu0
      %1827 = vmatprep.mubr.bf16.mxu0 0
      %1828 = vmatmul.mubr.bf16.gmra.mrb[0].mxu0 %v410
      %v1829 = vpop.f32.mrb[0].mxu0
      %v1830 = vadd.f32 %v1721, %v1829
      %v1831 = vpop.f32.mrb[0].mxu0
      %v1832 = vpop.f32.mrb[0].mxu0
      %v1833 = vadd.f32 %v1721, %v1832
      %v1834 = vpop.f32.mrb[0].mxu0
      %1835 = vmatprep.mubr.bf16.mxu0 0
      %1836 = vmatmul.mubr.bf16.gmra.mrb[0].mxu0 %v413
      %v1837 = vpop.f32.mrb[0].mxu0
      %v1838 = vadd.f32 %v1721, %v1837
      %v1839 = vpop.f32.mrb[0].mxu0
      %v1840 = vpop.f32.mrb[0].mxu0
      %v1841 = vadd.f32 %v1721, %v1840
      %v1842 = vpop.f32.mrb[0].mxu0
      %1843 = vmatprep.mubr.bf16.mxu0 0
      %1844 = vmatmul.mubr.bf16.gmra.mrb[0].mxu0 %v416
      %v1845 = vpop.f32.mrb[0].mxu0
      %v1846 = vadd.f32 %v1721, %v1845
      %v1847 = vpop.f32.mrb[0].mxu0
      %v1848 = vpop.f32.mrb[0].mxu0
      %v1849 = vadd.f32 %v1721, %v1848
      %v1850 = vpop.f32.mrb[0].mxu0
      %1851 = vmatprep.mubr.bf16.mxu0 0
      %1852 = vmatmul.mubr.bf16.gmra.mrb[0].mxu0 %v419
      %v1853 = vpop.f32.mrb[0].mxu0
      %v1854 = vadd.f32 %v1721, %v1853
      %v1855 = vpop.f32.mrb[0].mxu0
      %v1856 = vpop.f32.mrb[0].mxu0
      %v1857 = vadd.f32 %v1721, %v1856
      %v1858 = vpop.f32.mrb[0].mxu0
      %1859 = vmatprep.mubr.bf16.mxu0 0
      %1860 = vmatmul.mubr.bf16.gmra.mrb[0].mxu0 %v422
      %v1861 = vpop.f32.mrb[0].mxu0
      %v1862 = vadd.f32 %v1721, %v1861
      %v1863 = vpop.f32.mrb[0].mxu0
      %v1864 = vpop.f32.mrb[0].mxu0
      %v1865 = vadd.f32 %v1721, %v1864
      %v1866 = vpop.f32.mrb[0].mxu0
      %1867 = vmatprep.mubr.bf16.mxu0 0
      %1868 = vmatmul.mubr.bf16.gmra.mrb[0].mxu0 %v425
      %v1869 = vpop.f32.mrb[0].mxu0
      %v1870 = vadd.f32 %v1721, %v1869
      %v1871 = vpop.f32.mrb[0].mxu0
      %v1872 = vpop.f32.mrb[0].mxu0
      %v1873 = vadd.f32 %v1721, %v1872
      %v1874 = vpop.f32.mrb[0].mxu0
      %1875 = vmatprep.mubr.bf16.mxu0 0
      %1876 = vmatmul.mubr.bf16.gmra.mrb[0].mxu0 %v428
      %v1877 = vpop.f32.mrb[0].mxu0
      %v1878 = vadd.f32 %v1721, %v1877
      %v1879 = vpop.f32.mrb[0].mxu0
      %v1880 = vpop.f32.mrb[0].mxu0
      %v1881 = vadd.f32 %v1721, %v1880
      %v1882 = vpop.f32.mrb[0].mxu0
      %1883 = vmatprep.mubr.bf16.mxu0 0
      %1884 = vmatmul.mubr.bf16.gmra.mrb[0].mxu0 %v431
      %v1885 = vpop.f32.mrb[0].mxu0
      %v1886 = vadd.f32 %v1721, %v1885
      %v1887 = vpop.f32.mrb[0].mxu0
      %v1888 = vpop.f32.mrb[0].mxu0
      %v1889 = vadd.f32 %v1721, %v1888
      %v1890 = vpop.f32.mrb[0].mxu0
      %1891 = vmatprep.mubr.bf16.mxu0 0
      %1892 = vmatmul.mubr.bf16.gmra.mrb[0].mxu0 %v434
      %v1893 = vpop.f32.mrb[0].mxu0
      %v1894 = vadd.f32 %v1721, %v1893
      %v1895 = vpop.f32.mrb[0].mxu0
      %v1896 = vpop.f32.mrb[0].mxu0
      %v1897 = vadd.f32 %v1721, %v1896
      %v1898 = vpop.f32.mrb[0].mxu0
      %1899 = vmatprep.mubr.bf16.mxu0 0
      %1900 = vmatmul.mubr.bf16.gmra.mrb[0].mxu0 %v437
      %v1901 = vpop.f32.mrb[0].mxu0
      %v1902 = vadd.f32 %v1721, %v1901
      %v1903 = vpop.f32.mrb[0].mxu0
      %v1904 = vpop.f32.mrb[0].mxu0
      %v1905 = vadd.f32 %v1721, %v1904
      %v1906 = vpop.f32.mrb[0].mxu0
      %1907 = vmatprep.mubr.bf16.mxu0 0
      %1908 = vmatmul.mubr.bf16.gmra.mrb[0].mxu0 %v440
      %v1909 = vpop.f32.mrb[0].mxu0
      %v1910 = vadd.f32 %v1721, %v1909
      %v1911 = vpop.f32.mrb[0].mxu0
      %v1912 = vpop.f32.mrb[0].mxu0
      %v1913 = vadd.f32 %v1721, %v1912
      %v1914 = vpop.f32.mrb[0].mxu0
      %1915 = vmatprep.mubr.bf16.mxu0 0
      %1916 = vmatmul.mubr.bf16.gmra.mrb[0].mxu0 %v443
      %v1917 = vpop.f32.mrb[0].mxu0
      %v1918 = vadd.f32 %v1721, %v1917
      %v1919 = vpop.f32.mrb[0].mxu0
      %v1920 = vpop.f32.mrb[0].mxu0
      %v1921 = vadd.f32 %v1721, %v1920
      %v1922 = vpop.f32.mrb[0].mxu0
      %1923 = vmatprep.mubr.bf16.mxu0 0
      %1924 = vmatmul.mubr.bf16.gmra.mrb[0].mxu0 %v446
      %v1925 = vpop.f32.mrb[0].mxu0
      %v1926 = vadd.f32 %v1721, %v1925
      %v1927 = vpop.f32.mrb[0].mxu0
      %v1928 = vpop.f32.mrb[0].mxu0
      %v1929 = vadd.f32 %v1721, %v1928
      %v1930 = vpop.f32.mrb[0].mxu0
      %1931 = vmatprep.mubr.bf16.mxu0 0
      %1932 = vmatmul.mubr.bf16.gmra.mrb[0].mxu0 %v449
      %v1933 = vpop.f32.mrb[0].mxu0
      %v1934 = vadd.f32 %v1721, %v1933
      %v1935 = vpop.f32.mrb[0].mxu0
      %v1936 = vpop.f32.mrb[0].mxu0
      %v1937 = vadd.f32 %v1721, %v1936
      %v1938 = vpop.f32.mrb[0].mxu0
      %1939 = vmatprep.mubr.bf16.mxu0 0
      %1940 = vmatmul.mubr.bf16.gmra.mrb[0].mxu0 %v452
      %v1941 = vpop.f32.mrb[0].mxu0
      %v1942 = vadd.f32 %v1721, %v1941
      %v1943 = vpop.f32.mrb[0].mxu0
      %v1944 = vpop.f32.mrb[0].mxu0
      %v1945 = vadd.f32 %v1721, %v1944
      %v1946 = vpop.f32.mrb[0].mxu0
      %1947 = vmatprep.mubr.bf16.mxu0 0
      %1948 = vmatmul.mubr.bf16.gmra.mrb[0].mxu0 %v455
      %v1949 = vpop.f32.mrb[0].mxu0
      %v1950 = vadd.f32 %v1721, %v1949
      %v1951 = vpop.f32.mrb[0].mxu0
      %v1952 = vpop.f32.mrb[0].mxu0
      %v1953 = vadd.f32 %v1721, %v1952
      %v1954 = vpop.f32.mrb[0].mxu0
      %1955 = vmatprep.mubr.bf16.mxu0 0
      %1956 = vmatmul.mubr.bf16.gmra.mrb[0].mxu0 %v458
      %v1957 = vpop.f32.mrb[0].mxu0
      %v1958 = vadd.f32 %v1721, %v1957
      %v1959 = vpop.f32.mrb[0].mxu0
      %v1960 = vpop.f32.mrb[0].mxu0
      %v1961 = vadd.f32 %v1721, %v1960
      %v1962 = vpop.f32.mrb[0].mxu0
      %1963 = vmatprep.mubr.bf16.mxu0 0
      %1964 = vmatmul.mubr.bf16.gmra.mrb[0].mxu0 %v461
      %v1965 = vpop.f32.mrb[0].mxu0
      %v1966 = vadd.f32 %v1721, %v1965
      %v1967 = vpop.f32.mrb[0].mxu0
      %v1968 = vpop.f32.mrb[0].mxu0
      %v1969 = vadd.f32 %v1721, %v1968
      %v1970 = vpop.f32.mrb[0].mxu0
      %1971 = vmatprep.mubr.bf16.mxu0 0
      %1972 = vmatmul.mubr.bf16.gmra.mrb[0].mxu0 %v464
      %v1973 = vpop.f32.mrb[0].mxu0
      %v1974 = vadd.f32 %v1721, %v1973
      %v1975 = vpop.f32.mrb[0].mxu0
      %v1976 = vpop.f32.mrb[0].mxu0
      %v1977 = vadd.f32 %v1721, %v1976
      %v1978 = vpop.f32.mrb[0].mxu0
      %1979 = vmatprep.mubr.bf16.mxu0 0
      %1980 = vmatmul.mubr.bf16.gmra.mrb[0].mxu0 %v467
      %v1981 = vpop.f32.mrb[0].mxu0
      %v1982 = vadd.f32 %v1721, %v1981
      %v1983 = vpop.f32.mrb[0].mxu0
      %v1984 = vpop.f32.mrb[0].mxu0
      %v1985 = vpop.f32.mrb[0].mxu0
      %1986 = vdwg.mxu0
      %v1987 = vmax.f32 %v1655, %v1790
      %v1988 = vmax.f32 %v1656, %v1793
      %v1989 = vmax.f32 %v1657, %v1798
      %v1990 = vmax.f32 %v1658, %v1801
      %v1991 = vmax.f32 %v1659, %v1806
      %v1992 = vmax.f32 %v1660, %v1809
      %v1993 = vmax.f32 %v1661, %v1814
      %v1994 = vmax.f32 %v1662, %v1817
      %v1995 = vmax.f32 %v1663, %v1822
      %v1996 = vmax.f32 %v1664, %v1825
      %v1997 = vmax.f32 %v1665, %v1830
      %v1998 = vmax.f32 %v1666, %v1833
      %v1999 = vmax.f32 %v1667, %v1838
      %v2000 = vmax.f32 %v1668, %v1841
      %v2001 = vmax.f32 %v1669, %v1846
      %v2002 = vmax.f32 %v1670, %v1849
      %v2003 = vmax.f32 %v1671, %v1854
      %v2004 = vmax.f32 %v1672, %v1857
      %v2005 = vmax.f32 %v1673, %v1862
      %v2006 = vmax.f32 %v1674, %v1865
      %v2007 = vmax.f32 %v1675, %v1870
      %v2008 = vmax.f32 %v1676, %v1873
      %v2009 = vmax.f32 %v1677, %v1878
      %v2010 = vmax.f32 %v1678, %v1881
      %v2011 = vmax.f32 %v1679, %v1886
      %v2012 = vmax.f32 %v1680, %v1889
      %v2013 = vmax.f32 %v1681, %v1894
      %v2014 = vmax.f32 %v1682, %v1897
      %v2015 = vmax.f32 %v1683, %v1902
      %v2016 = vmax.f32 %v1684, %v1905
      %v2017 = vmax.f32 %v1685, %v1910
      %v2018 = vmax.f32 %v1686, %v1913
      %v2019 = vmax.f32 %v1687, %v1918
      %v2020 = vmax.f32 %v1688, %v1921
      %v2021 = vmax.f32 %v1689, %v1926
      %v2022 = vmax.f32 %v1690, %v1929
      %v2023 = vmax.f32 %v1691, %v1934
      %v2024 = vmax.f32 %v1692, %v1937
      %v2025 = vmax.f32 %v1693, %v1942
      %v2026 = vmax.f32 %v1694, %v1945
      %v2027 = vmax.f32 %v1695, %v1950
      %v2028 = vmax.f32 %v1696, %v1953
      %v2029 = vmax.f32 %v1697, %v1958
      %v2030 = vmax.f32 %v1698, %v1961
      %v2031 = vmax.f32 %v1699, %v1966
      %v2032 = vmax.f32 %v1700, %v1969
      %v2033 = vmax.f32 %v1701, %v1974
      %v2034 = vmax.f32 %v1702, %v1977
      %v2035 = vmax.f32 %v1703, %v1982
      %v2036 = vpack.c.bf16 %v1988, %v1987
      %v2037 = vpack.c.bf16 %v1990, %v1989
      %v2038 = vpack.c.bf16 %v1992, %v1991
      %v2039 = vpack.c.bf16 %v1994, %v1993
      %v2040 = vpack.c.bf16 %v1996, %v1995
      %v2041 = vpack.c.bf16 %v1998, %v1997
      %v2042 = vpack.c.bf16 %v2000, %v1999
      %v2043 = vpack.c.bf16 %v2002, %v2001
      %v2044 = vpack.c.bf16 %v2004, %v2003
      %v2045 = vpack.c.bf16 %v2006, %v2005
      %v2046 = vpack.c.bf16 %v2008, %v2007
      %v2047 = vpack.c.bf16 %v2010, %v2009
      %v2048 = vpack.c.bf16 %v2012, %v2011
      %v2049 = vpack.c.bf16 %v2014, %v2013
      %v2050 = vpack.c.bf16 %v2016, %v2015
      %v2051 = vpack.c.bf16 %v2018, %v2017
      %v2052 = vpack.c.bf16 %v2020, %v2019
      %v2053 = vpack.c.bf16 %v2022, %v2021
      %v2054 = vpack.c.bf16 %v2024, %v2023
      %v2055 = vpack.c.bf16 %v2026, %v2025
      %v2056 = vpack.c.bf16 %v2028, %v2027
      %v2057 = vpack.c.bf16 %v2030, %v2029
      %v2058 = vpack.c.bf16 %v2032, %v2031
      %v2059 = vpack.c.bf16 %v2034, %v2033
      %v2060 = vpack.c.bf16 %v2035, %v2035
      %v2086 = vunpack.c.l.b16 %v2036
      %v2087 = vunpack.c.h.b16 %v2036
      %v2088 = vunpack.c.l.b16 %v2037
      %v2089 = vunpack.c.h.b16 %v2037
      %v2090 = vunpack.c.l.b16 %v2038
      %v2091 = vunpack.c.h.b16 %v2038
      %v2092 = vunpack.c.l.b16 %v2039
      %v2093 = vunpack.c.h.b16 %v2039
      %v2094 = vunpack.c.l.b16 %v2040
      %v2095 = vunpack.c.h.b16 %v2040
      %v2096 = vunpack.c.l.b16 %v2041
      %v2097 = vunpack.c.h.b16 %v2041
      %v2098 = vunpack.c.l.b16 %v2042
      %v2099 = vunpack.c.h.b16 %v2042
      %v2100 = vunpack.c.l.b16 %v2043
      %v2101 = vunpack.c.h.b16 %v2043
      %v2102 = vunpack.c.l.b16 %v2044
      %v2103 = vunpack.c.h.b16 %v2044
      %v2104 = vunpack.c.l.b16 %v2045
      %v2105 = vunpack.c.h.b16 %v2045
      %v2106 = vunpack.c.l.b16 %v2046
      %v2107 = vunpack.c.h.b16 %v2046
      %v2108 = vunpack.c.l.b16 %v2047
      %v2109 = vunpack.c.h.b16 %v2047
      %v2110 = vunpack.c.l.b16 %v2048
      %v2111 = vunpack.c.h.b16 %v2048
      %v2112 = vunpack.c.l.b16 %v2049
      %v2113 = vunpack.c.h.b16 %v2049
      %v2114 = vunpack.c.l.b16 %v2050
      %v2115 = vunpack.c.h.b16 %v2050
      %v2116 = vunpack.c.l.b16 %v2051
      %v2117 = vunpack.c.h.b16 %v2051
      %v2118 = vunpack.c.l.b16 %v2052
      %v2119 = vunpack.c.h.b16 %v2052
      %v2120 = vunpack.c.l.b16 %v2053
      %v2121 = vunpack.c.h.b16 %v2053
      %v2122 = vunpack.c.l.b16 %v2054
      %v2123 = vunpack.c.h.b16 %v2054
      %v2124 = vunpack.c.l.b16 %v2055
      %v2125 = vunpack.c.h.b16 %v2055
      %v2126 = vunpack.c.l.b16 %v2056
      %v2127 = vunpack.c.h.b16 %v2056
      %v2128 = vunpack.c.l.b16 %v2057
      %v2129 = vunpack.c.h.b16 %v2057
      %v2130 = vunpack.c.l.b16 %v2058
      %v2131 = vunpack.c.h.b16 %v2058
      %v2132 = vunpack.c.l.b16 %v2059
      %v2133 = vunpack.c.h.b16 %v2059
      %v2134 = vunpack.c.l.b16 %v2060
      %v2135 = vpack.c.b16 %v2086, %v2086
      %v2136 = vpack.c.b16 %v2087, %v2087
      %v2137 = vpack.c.b16 %v2088, %v2088
      %v2138 = vpack.c.b16 %v2089, %v2089
      %v2139 = vpack.c.b16 %v2090, %v2090
      %v2140 = vpack.c.b16 %v2091, %v2091
      %v2141 = vpack.c.b16 %v2092, %v2092
      %v2142 = vpack.c.b16 %v2093, %v2093
      %v2143 = vpack.c.b16 %v2094, %v2094
      %v2144 = vpack.c.b16 %v2095, %v2095
      %v2145 = vpack.c.b16 %v2096, %v2096
      %v2146 = vpack.c.b16 %v2097, %v2097
      %v2147 = vpack.c.b16 %v2098, %v2098
      %v2148 = vpack.c.b16 %v2099, %v2099
      %v2149 = vpack.c.b16 %v2100, %v2100
      %v2150 = vpack.c.b16 %v2101, %v2101
      %v2151 = vpack.c.b16 %v2102, %v2102
      %v2152 = vpack.c.b16 %v2103, %v2103
      %v2153 = vpack.c.b16 %v2104, %v2104
      %v2154 = vpack.c.b16 %v2105, %v2105
      %v2155 = vpack.c.b16 %v2106, %v2106
      %v2156 = vpack.c.b16 %v2107, %v2107
      %v2157 = vpack.c.b16 %v2108, %v2108
      %v2158 = vpack.c.b16 %v2109, %v2109
      %v2159 = vpack.c.b16 %v2110, %v2110
      %v2160 = vpack.c.b16 %v2111, %v2111
      %v2161 = vpack.c.b16 %v2112, %v2112
      %v2162 = vpack.c.b16 %v2113, %v2113
      %v2163 = vpack.c.b16 %v2114, %v2114
      %v2164 = vpack.c.b16 %v2115, %v2115
      %v2165 = vpack.c.b16 %v2116, %v2116
      %v2166 = vpack.c.b16 %v2117, %v2117
      %v2167 = vpack.c.b16 %v2118, %v2118
      %v2168 = vpack.c.b16 %v2119, %v2119
      %v2169 = vpack.c.b16 %v2120, %v2120
      %v2170 = vpack.c.b16 %v2121, %v2121
      %v2171 = vpack.c.b16 %v2122, %v2122
      %v2172 = vpack.c.b16 %v2123, %v2123
      %v2173 = vpack.c.b16 %v2124, %v2124
      %v2174 = vpack.c.b16 %v2125, %v2125
      %v2175 = vpack.c.b16 %v2126, %v2126
      %v2176 = vpack.c.b16 %v2127, %v2127
      %v2177 = vpack.c.b16 %v2128, %v2128
      %v2178 = vpack.c.b16 %v2129, %v2129
      %v2179 = vpack.c.b16 %v2130, %v2130
      %v2180 = vpack.c.b16 %v2131, %v2131
      %v2181 = vpack.c.b16 %v2132, %v2132
      %v2182 = vpack.c.b16 %v2133, %v2133
      %v2183 = vpack.c.b16 %v2134, %v2134
      %2233 = vst [vmem:[%s172] sm:$0xf] %v2135
      %2234 = vst [vmem:[%s172 + $0x4] sm:$0xf] %v2136
      %2235 = vst [vmem:[%s172 + $0x8] sm:$0xf] %v2137
      %2236 = vst [vmem:[%s172 + $0xc] sm:$0xf] %v2138
      %2237 = vst [vmem:[%s172 + $0x10] sm:$0xf] %v2139
      %2238 = vst [vmem:[%s172 + $0x14] sm:$0xf] %v2140
      %2239 = vst [vmem:[%s172 + $0x18] sm:$0xf] %v2141
      %2240 = vst [vmem:[%s172 + $0x1c] sm:$0xf] %v2142
      %2241 = vst [vmem:[%s172 + $0x20] sm:$0xf] %v2143
      %2242 = vst [vmem:[%s172 + $0x24] sm:$0xf] %v2144
      %2243 = vst [vmem:[%s172 + $0x28] sm:$0xf] %v2145
      %2244 = vst [vmem:[%s172 + $0x2c] sm:$0xf] %v2146
      %2245 = vst [vmem:[%s172 + $0x30] sm:$0xf] %v2147
      %2246 = vst [vmem:[%s172 + $0x34] sm:$0xf] %v2148
      %2247 = vst [vmem:[%s172 + $0x38] sm:$0xf] %v2149
      %2248 = vst [vmem:[%s172 + $0x3c] sm:$0xf] %v2150
      %2249 = vst [vmem:[%s172 + $0x40] sm:$0xf] %v2151
      %2250 = vst [vmem:[%s172 + $0x44] sm:$0xf] %v2152
      %2251 = vst [vmem:[%s172 + $0x48] sm:$0xf] %v2153
      %2252 = vst [vmem:[%s172 + $0x4c] sm:$0xf] %v2154
      %2253 = vst [vmem:[%s172 + $0x50] sm:$0xf] %v2155
      %2254 = vst [vmem:[%s172 + $0x54] sm:$0xf] %v2156
      %2255 = vst [vmem:[%s172 + $0x58] sm:$0xf] %v2157
      %2256 = vst [vmem:[%s172 + $0x5c] sm:$0xf] %v2158
      %2257 = vst [vmem:[%s172 + $0x60] sm:$0xf] %v2159
      %2258 = vst [vmem:[%s172 + $0x64] sm:$0xf] %v2160
      %2259 = vst [vmem:[%s172 + $0x68] sm:$0xf] %v2161
      %2260 = vst [vmem:[%s172 + $0x6c] sm:$0xf] %v2162
      %2261 = vst [vmem:[%s172 + $0x70] sm:$0xf] %v2163
      %2262 = vst [vmem:[%s172 + $0x74] sm:$0xf] %v2164
      %2263 = vst [vmem:[%s172 + $0x78] sm:$0xf] %v2165
      %2264 = vst [vmem:[%s172 + $0x7c] sm:$0xf] %v2166
      %2265 = vst [vmem:[%s172 + $0x80] sm:$0xf] %v2167
      %2266 = vst [vmem:[%s172 + $0x84] sm:$0xf] %v2168
      %2267 = vst [vmem:[%s172 + $0x88] sm:$0xf] %v2169
      %2268 = vst [vmem:[%s172 + $0x8c] sm:$0xf] %v2170
      %2269 = vst [vmem:[%s172 + $0x90] sm:$0xf] %v2171
      %2270 = vst [vmem:[%s172 + $0x94] sm:$0xf] %v2172
      %2271 = vst [vmem:[%s172 + $0x98] sm:$0xf] %v2173
      %2272 = vst [vmem:[%s172 + $0x9c] sm:$0xf] %v2174
      %2273 = vst [vmem:[%s172 + $0xa0] sm:$0xf] %v2175
      %2274 = vst [vmem:[%s172 + $0xa4] sm:$0xf] %v2176
      %2275 = vst [vmem:[%s172 + $0xa8] sm:$0xf] %v2177
      %2276 = vst [vmem:[%s172 + $0xac] sm:$0xf] %v2178
      %2277 = vst [vmem:[%s172 + $0xb0] sm:$0xf] %v2179
      %2278 = vst [vmem:[%s172 + $0xb4] sm:$0xf] %v2180
      %2279 = vst [vmem:[%s172 + $0xb8] sm:$0xf] %v2181
      %2280 = vst [vmem:[%s172 + $0xbc] sm:$0xf] %v2182
      %2281 = vst [vmem:[%s172 + $0xc0] sm:$0xf] %v2183
      %s2282 = smul.u32 49, %s14
      %p2283 = scmp.lt.s32.totalorder %s2282, 195
      %s2284 = scalar_select %p2283, %s2282, 195
      %s2285 = smul.addr %s2284, 4
      %s2286 = scalar_lea.vmem %s3, %s2285
      // Predicated region
      $region33: #{forward.3} parent=31 // pred_check
        %p2287 = pneg %p100
      $region34: #{forward.3} parent=31 // pred_check_branch
        %2289 = sbr.rel (%p2287) target = $region36
      $region35: #{forward.3} parent=31 // pred_region
        %s2290 = smul.u32 49, %s14
      $region36: #{forward.3} parent=31 // pred_fallthru
        _
    $region32: #{forward.3} parent=5 // pred_fallthru
      _
    %p2291 = scmp.le.s32.totalorder 2, %s9
    // Predicated region
    $region37: #{forward.3} parent=5 // pred_check
      %p2292 = pneg %p2291
    $region38: #{forward.3} parent=5 // pred_check_branch
      %2294 = sbr.rel (%p2292) target = $region40
    $region39: #{forward.3} parent=5 // pred_region
      %s2295 = ssub.s32 %s9, 2
      // Predicated region
      $region41: #{forward.3} parent=39 // pred_check
        %p2296 = pneg %p106
      $region42: #{forward.3} parent=39 // pred_check_branch
        %2298 = sbr.rel (%p2296) target = $region44
      $region43: #{forward.3} parent=39 // pred_region
        %s2299 = smul.u32 49, %s15
        %p2300 = scmp.lt.s32.totalorder %s2299, 195
        %s2301 = scalar_select %p2300, %s2299, 195
        %s2302 = smul.addr %s2301, 4
        %s2303 = scalar_lea.vmem %s3, %s2302
      $region44: #{forward.3} parent=39 // pred_fallthru
        _
    $region40: #{forward.3} parent=5 // pred_fallthru
      _
  $region6: #{forward.3} parent=0 // loop_footer
    %s13 = sadd.s32 1, %s9
  $region7: #{forward.3} parent=0 // loop_footer_branch
    %8 = sbr.rel target = $region3
  $region8: #{forward.3} parent=0 // loop_exit
    _

// kernel: forward.4
$region0: #{forward.4}
  #allocation0 [shape = 'u32[]', space=smem, size = 0x4, offset = 0x4, fixed_abs, tag = 'smem constant byte address 0x4 - core index']
  #allocation1 [shape = 'u32[144,128]{1,0:T(1,128)}', space=vmem, size = 0x12000, scoped, tag = 'internal scratch']
  %s0 = inlined_call_operand.vmem [shape: bf16[1152,300], index: 0, kind: input, shape index: {}]
  %s1 = inlined_call_operand.vmem [shape: bf16[5,300,128], index: 1, kind: input, shape index: {}]
  %s2 = inlined_call_operand.vmem [shape: f32[5,1,128], index: 2, kind: input, shape index: {}]
  %s3 = inlined_call_operand.vmem [shape: bf16[1152,128], index: 3, kind: output, shape index: {}]
  %s4 = sld [smem:[#allocation0]]
  $region45: #{forward.4} parent=0
    _
  %s6 = ssub.s32 1, %s4
  %s7 = scalar_select 0, %s6, %s4
  loop: start=0, step=1, limit=6
  $region2: #{forward.4} parent=0 // loop_pre_header
    _
  $region3: #{forward.4} parent=0 // loop_header
    %s9 = sphi 0, %s13
    %p10 = scmp.ge.s32.totalorder %s9, 6
    %s19 = sphi 0, %s21
    %s22 = sphi 0, %s19
    %s23 = sphi 0, %s22
    %s39 = sphi 0, %s23
    %s43 = sphi 0, %s43
    %s45 = sphi 0, %s43
    %s46 = sphi 0, %s45
    %s60 = sphi 0, %s46
    %s64 = sphi 0, %s64
    %s66 = sphi 0, %s64
    %s67 = sphi 0, %s66
    %s81 = sphi 0, %s67
    %s87 = sphi 0, %s89
    %s90 = sphi 0, %s87
    %s91 = sphi 0, %s90
    %s107 = sphi 0, %s91
  $region4: #{forward.4} parent=0 // loop_header_branch
    %12 = sbr.rel (%p10) target = $region8
  $region5: #{forward.4} parent=0 // loop_body
    %s14 = ssub.s32 %s9, 1
    %s15 = ssub.s32 %s9, 2
    %s16 = sadd.s32 %s9, 1
    %s17 = ssub.s32 %s9, %s16
    %p18 = scmp.eq.s32.totalorder %s17, 0
    %s20 = sadd.s32 %s19, 1
    %s21 = scalar_select %p18, %s19, %s20
    %p24 = pneg %p18
    %p25 = scmp.eq.s32.totalorder %s9, 3
    %p26 = por %p24, %p25
    %p27 = scmp.ne.s32.totalorder %s19, %s22
    %p28 = scmp.eq.s32.totalorder %s9, 0
    %p29 = por %p27, %p28
    %p30 = scmp.ne.s32.totalorder %s19, %s22
    %p31 = scmp.eq.s32.totalorder %s14, 3
    %p32 = por %p30, %p31
    %p33 = scmp.ne.s32.totalorder %s22, %s23
    %p34 = scmp.eq.s32.totalorder %s14, 0
    %p35 = por %p33, %p34
    %p36 = scmp.ne.s32.totalorder %s22, %s23
    %p37 = scmp.eq.s32.totalorder %s15, 3
    %p38 = por %p36, %p37
    %p40 = scmp.ne.s32.totalorder %s23, %s39
    %p41 = scmp.eq.s32.totalorder %s15, 0
    %p42 = por %p40, %p41
    %s44 = sadd.s32 %s43, 1
    %p47 = scmp.eq.s32.totalorder %s9, 3
    %p48 = scmp.ne.s32.totalorder %s43, %s45
    %p49 = scmp.eq.s32.totalorder %s9, 0
    %p50 = por %p48, %p49
    %p51 = scmp.ne.s32.totalorder %s43, %s45
    %p52 = scmp.eq.s32.totalorder %s14, 3
    %p53 = por %p51, %p52
    %p54 = scmp.ne.s32.totalorder %s45, %s46
    %p55 = scmp.eq.s32.totalorder %s14, 0
    %p56 = por %p54, %p55
    %p57 = scmp.ne.s32.totalorder %s45, %s46
    %p58 = scmp.eq.s32.totalorder %s15, 3
    %p59 = por %p57, %p58
    %p61 = scmp.ne.s32.totalorder %s46, %s60
    %p62 = scmp.eq.s32.totalorder %s15, 0
    %p63 = por %p61, %p62
    %s65 = sadd.s32 %s64, 1
    %p68 = scmp.eq.s32.totalorder %s9, 3
    %p69 = scmp.ne.s32.totalorder %s64, %s66
    %p70 = scmp.eq.s32.totalorder %s9, 0
    %p71 = por %p69, %p70
    %p72 = scmp.ne.s32.totalorder %s64, %s66
    %p73 = scmp.eq.s32.totalorder %s14, 3
    %p74 = por %p72, %p73
    %p75 = scmp.ne.s32.totalorder %s66, %s67
    %p76 = scmp.eq.s32.totalorder %s14, 0
    %p77 = por %p75, %p76
    %p78 = scmp.ne.s32.totalorder %s66, %s67
    %p79 = scmp.eq.s32.totalorder %s15, 3
    %p80 = por %p78, %p79
    %p82 = scmp.ne.s32.totalorder %s67, %s81
    %p83 = scmp.eq.s32.totalorder %s15, 0
    %p84 = por %p82, %p83
    %s85 = ssub.s32 %s9, %s16
    %p86 = scmp.eq.s32.totalorder %s85, 0
    %s88 = sadd.s32 %s87, 1
    %s89 = scalar_select %p86, %s87, %s88
    %p92 = pneg %p86
    %p93 = scmp.eq.s32.totalorder %s9, 3
    %p94 = por %p92, %p93
    %p95 = scmp.ne.s32.totalorder %s87, %s90
    %p96 = scmp.eq.s32.totalorder %s9, 0
    %p97 = por %p95, %p96
    %p98 = scmp.ne.s32.totalorder %s87, %s90
    %p99 = scmp.eq.s32.totalorder %s14, 3
    %p100 = por %p98, %p99
    %p101 = scmp.ne.s32.totalorder %s90, %s91
    %p102 = scmp.eq.s32.totalorder %s14, 0
    %p103 = por %p101, %p102
    %p104 = scmp.ne.s32.totalorder %s90, %s91
    %p105 = scmp.eq.s32.totalorder %s15, 3
    %p106 = por %p104, %p105
    %p108 = scmp.ne.s32.totalorder %s91, %s107
    %p109 = scmp.eq.s32.totalorder %s15, 0
    %p110 = por %p108, %p109
    %p111 = scmp.le.s32.totalorder 1, %s9
    %p112 = scmp.lt.s32.totalorder %s9, 5
    %p113 = pnand %p111, %p112
    %p114 = pneg %p113
    // Predicated region
    $region9: #{forward.4} parent=5 // pred_check
      _
    $region10: #{forward.4} parent=5 // pred_check_branch
      %116 = sbr.rel (%p113) target = $region12
    $region11: #{forward.4} parent=5 // pred_region
      %s117 = ssub.s32 %s9, 1
      // Predicated region
      $region13: #{forward.4} parent=11 // pred_check
        %p118 = pneg %p56
      $region14: #{forward.4} parent=11 // pred_check_branch
        %120 = sbr.rel (%p118) target = $region16
      $region15: #{forward.4} parent=11 // pred_region
        _
      $region16: #{forward.4} parent=11 // pred_fallthru
        _
      // Predicated region
      $region17: #{forward.4} parent=11 // pred_check
        %p121 = pneg %p77
      $region18: #{forward.4} parent=11 // pred_check_branch
        %123 = sbr.rel (%p121) target = $region20
      $region19: #{forward.4} parent=11 // pred_region
        _
      $region20: #{forward.4} parent=11 // pred_fallthru
        _
    $region12: #{forward.4} parent=5 // pred_fallthru
      _
    %p124 = scmp.lt.s32.totalorder %s9, 4
    // Predicated region
    $region21: #{forward.4} parent=5 // pred_check
      %p125 = pneg %p124
    $region22: #{forward.4} parent=5 // pred_check_branch
      %127 = sbr.rel (%p125) target = $region24
    $region23: #{forward.4} parent=5 // pred_region
      // Predicated region
      $region25: #{forward.4} parent=23 // pred_check
        %p128 = pneg %p29
      $region26: #{forward.4} parent=23 // pred_check_branch
        %130 = sbr.rel (%p128) target = $region28
      $region27: #{forward.4} parent=23 // pred_region
        %s131 = smul.u32 36, %s9
        %p132 = scmp.lt.s32.totalorder %s131, 143
        %s133 = scalar_select %p132, %s131, 143
        %s134 = smul.addr %s133, 3
        %s135 = smul.addr %s134, 4
        %s136 = scalar_lea.vmem %s0, %s135
        %s137 = smul.u32 36, %s9
      $region28: #{forward.4} parent=23 // pred_fallthru
        _
    $region24: #{forward.4} parent=5 // pred_fallthru
      _
    %p138 = scmp.le.s32.totalorder 1, %s9
    %p139 = scmp.lt.s32.totalorder %s9, 5
    %p140 = pnand %p138, %p139
    %p141 = pneg %p140
    // Predicated region
    $region29: #{forward.4} parent=5 // pred_check
      _
    $region30: #{forward.4} parent=5 // pred_check_branch
      %143 = sbr.rel (%p140) target = $region32
    $region31: #{forward.4} parent=5 // pred_region
      %s144 = ssub.s32 %s9, 1
      %s145 = smul.u32 36, %s14
      %p146 = scmp.lt.s32.totalorder %s145, 143
      %s147 = scalar_select %p146, %s145, 143
      %s148 = smul.addr %s147, 3
      %s149 = smul.addr %s148, 4
      %s150 = scalar_lea.vmem %s0, %s149
      %p151 = pneg %p35
      %p152 = pneg %p32
      %p153 = pneg %p56
      %p154 = pneg %p53
      %p155 = pneg %p77
      %p156 = pneg %p74
      %p157 = pneg %p103
      %p158 = pneg %p100
      %s159 = smul.u32 36, %s14
      %p160 = scmp.lt.s32.totalorder %s159, 143
      %s161 = scalar_select %p160, %s159, 143
      %s162 = smul.addr %s161, 4
      %s163 = scalar_lea.vmem %s3, %s162
      %s164 = smul.u32 36, %s14
      %p165 = scmp.lt.s32.totalorder %s164, 143
      %s166 = scalar_select %p165, %s164, 143
      %s167 = smul.addr %s166, 3
      %s168 = smul.addr %s167, 4
      %s169 = scalar_lea.vmem %s0, %s168
      %s170 = smul.u32 36, %s14
      %s171 = smul.u32 36, %s14
      %p172 = scmp.lt.s32.totalorder %s171, 143
      %s173 = scalar_select %p172, %s171, 143
      %s174 = smul.addr %s173, 4
      %s175 = scalar_lea.vmem %s3, %s174
      %s176 = smul.u32 36, %s14
      %v178 = vld [vmem:[%s169] sm:$0xff]
      %v179 = vld [vmem:[%s169 + $0x8] sm:$0xf]
      %v180 = vld [vmem:[%s169 + $0xc] sm:$0xff]
      %v181 = vld [vmem:[%s169 + $0x14] sm:$0xf]
      %v182 = vld [vmem:[%s169 + $0x18] sm:$0xff]
      %v183 = vld [vmem:[%s169 + $0x20] sm:$0xf]
      %v184 = vld [vmem:[%s169 + $0x24] sm:$0xff]
      %v185 = vld [vmem:[%s169 + $0x2c] sm:$0xf]
      %v186 = vld [vmem:[%s169 + $0x30] sm:$0xff]
      %v187 = vld [vmem:[%s169 + $0x38] sm:$0xf]
      %v188 = vld [vmem:[%s169 + $0x3c] sm:$0xff]
      %v189 = vld [vmem:[%s169 + $0x44] sm:$0xf]
      %v190 = vld [vmem:[%s169 + $0x48] sm:$0xff]
      %v191 = vld [vmem:[%s169 + $0x50] sm:$0xf]
      %v192 = vld [vmem:[%s169 + $0x54] sm:$0xff]
      %v193 = vld [vmem:[%s169 + $0x5c] sm:$0xf]
      %v194 = vld [vmem:[%s169 + $0x60] sm:$0xff]
      %v195 = vld [vmem:[%s169 + $0x68] sm:$0xf]
      %v196 = vld [vmem:[%s169 + $0x6c] sm:$0xff]
      %v197 = vld [vmem:[%s169 + $0x74] sm:$0xf]
      %v198 = vld [vmem:[%s169 + $0x78] sm:$0xff]
      %v199 = vld [vmem:[%s169 + $0x80] sm:$0xf]
      %v200 = vld [vmem:[%s169 + $0x84] sm:$0xff]
      %v201 = vld [vmem:[%s169 + $0x8c] sm:$0xf]
      %v202 = vld [vmem:[%s169 + $0x90] sm:$0xff]
      %v203 = vld [vmem:[%s169 + $0x98] sm:$0xf]
      %v204 = vld [vmem:[%s169 + $0x9c] sm:$0xff]
      %v205 = vld [vmem:[%s169 + $0xa4] sm:$0xf]
      %v206 = vld [vmem:[%s169 + $0xa8] sm:$0xff]
      %v207 = vld [vmem:[%s169 + $0xb0] sm:$0xf]
      %v208 = vld [vmem:[%s169 + $0xb4] sm:$0xff]
      %v209 = vld [vmem:[%s169 + $0xbc] sm:$0xf]
      %v210 = vld [vmem:[%s169 + $0xc0] sm:$0xff]
      %v211 = vld [vmem:[%s169 + $0xc8] sm:$0xf]
      %v212 = vld [vmem:[%s169 + $0xcc] sm:$0xff]
      %v213 = vld [vmem:[%s169 + $0xd4] sm:$0xf]
      %v214 = vld [vmem:[%s169 + $0xd8] sm:$0xff]
      %v215 = vld [vmem:[%s169 + $0xe0] sm:$0xf]
      %v216 = vld [vmem:[%s169 + $0xe4] sm:$0xff]
      %v217 = vld [vmem:[%s169 + $0xec] sm:$0xf]
      %v218 = vld [vmem:[%s169 + $0xf0] sm:$0xff]
      %v219 = vld [vmem:[%s169 + $0xf8] sm:$0xf]
      %v220 = vld [vmem:[%s169 + $0xfc] sm:$0xff]
      %v221 = vld [vmem:[%s169 + $0x104] sm:$0xf]
      %v222 = vld [vmem:[%s169 + $0x108] sm:$0xff]
      %v223 = vld [vmem:[%s169 + $0x110] sm:$0xf]
      %v224 = vld [vmem:[%s169 + $0x114] sm:$0xff]
      %v225 = vld [vmem:[%s169 + $0x11c] sm:$0xf]
      %v226 = vld [vmem:[%s169 + $0x120] sm:$0xff]
      %v227 = vld [vmem:[%s169 + $0x128] sm:$0xf]
      %v228 = vld [vmem:[%s169 + $0x12c] sm:$0xff]
      %v229 = vld [vmem:[%s169 + $0x134] sm:$0xf]
      %v230 = vld [vmem:[%s169 + $0x138] sm:$0xff]
      %v231 = vld [vmem:[%s169 + $0x140] sm:$0xf]
      %v232 = vld [vmem:[%s169 + $0x144] sm:$0xff]
      %v233 = vld [vmem:[%s169 + $0x14c] sm:$0xf]
      %v234 = vld [vmem:[%s169 + $0x150] sm:$0xff]
      %v235 = vld [vmem:[%s169 + $0x158] sm:$0xf]
      %v236 = vld [vmem:[%s169 + $0x15c] sm:$0xff]
      %v237 = vld [vmem:[%s169 + $0x164] sm:$0xf]
      %v238 = vld [vmem:[%s169 + $0x168] sm:$0xff]
      %v239 = vld [vmem:[%s169 + $0x170] sm:$0xf]
      %v240 = vld [vmem:[%s169 + $0x174] sm:$0xff]
      %v241 = vld [vmem:[%s169 + $0x17c] sm:$0xf]
      %v242 = vld [vmem:[%s169 + $0x180] sm:$0xff]
      %v243 = vld [vmem:[%s169 + $0x188] sm:$0xf]
      %v244 = vld [vmem:[%s169 + $0x18c] sm:$0xff]
      %v245 = vld [vmem:[%s169 + $0x194] sm:$0xf]
      %v246 = vld [vmem:[%s169 + $0x198] sm:$0xff]
      %v247 = vld [vmem:[%s169 + $0x1a0] sm:$0xf]
      %v248 = vld [vmem:[%s169 + $0x1a4] sm:$0xff]
      %v249 = vld [vmem:[%s169 + $0x1ac] sm:$0xf]
      %v250 = vld [vmem:[%s1] sm:$0xf]
      %v251 = vld [vmem:[%s1 + $0x4] sm:$0xf]
      %v252 = vld [vmem:[%s1 + $0x8] sm:$0xf]
      %v253 = vld [vmem:[%s1 + $0xc] sm:$0xf]
      %v254 = vld [vmem:[%s1 + $0x10] sm:$0xf]
      %v255 = vld [vmem:[%s1 + $0x14] sm:$0xf]
      %v256 = vld [vmem:[%s1 + $0x18] sm:$0xf]
      %v257 = vld [vmem:[%s1 + $0x1c] sm:$0xf]
      %v258 = vld [vmem:[%s1 + $0x20] sm:$0xf]
      %v259 = vld [vmem:[%s1 + $0x24] sm:$0xf]
      %v260 = vld [vmem:[%s1 + $0x28] sm:$0xf]
      %v261 = vld [vmem:[%s1 + $0x2c] sm:$0xf]
      %v262 = vld [vmem:[%s1 + $0x30] sm:$0xf]
      %v263 = vld [vmem:[%s1 + $0x34] sm:$0xf]
      %v264 = vld [vmem:[%s1 + $0x38] sm:$0xf]
      %v265 = vld [vmem:[%s1 + $0x3c] sm:$0xf]
      %v266 = vld [vmem:[%s1 + $0x40] sm:$0xf]
      %v267 = vld [vmem:[%s1 + $0x44] sm:$0xf]
      %v268 = vld [vmem:[%s1 + $0x48] sm:$0xf]
      %v269 = vld [vmem:[%s1 + $0x4c] sm:$0xf]
      %v270 = vld [vmem:[%s1 + $0x50] sm:$0xf]
      %v271 = vld [vmem:[%s1 + $0x54] sm:$0xf]
      %v272 = vld [vmem:[%s1 + $0x58] sm:$0xf]
      %v273 = vld [vmem:[%s1 + $0x5c] sm:$0xf]
      %v274 = vld [vmem:[%s1 + $0x60] sm:$0xf]
      %v275 = vld [vmem:[%s1 + $0x64] sm:$0xf]
      %v276 = vld [vmem:[%s1 + $0x68] sm:$0xf]
      %v277 = vld [vmem:[%s1 + $0x6c] sm:$0xf]
      %v278 = vld [vmem:[%s1 + $0x70] sm:$0xf]
      %v279 = vld [vmem:[%s1 + $0x74] sm:$0xf]
      %v280 = vld [vmem:[%s1 + $0x78] sm:$0xf]
      %v281 = vld [vmem:[%s1 + $0x7c] sm:$0xf]
      %v282 = vld [vmem:[%s1 + $0x80] sm:$0xf]
      %v283 = vld [vmem:[%s1 + $0x84] sm:$0xf]
      %v284 = vld [vmem:[%s1 + $0x88] sm:$0xf]
      %v285 = vld [vmem:[%s1 + $0x8c] sm:$0xf]
      %v286 = vld [vmem:[%s1 + $0x90] sm:$0xf]
      %v287 = vld [vmem:[%s1 + $0x94] sm:$0x3]
      %v288 = vld [vmem:[%s2] sm:$0x1]
      %v290 = vlaneseq
      %v291 = vshrl.u32 %v290, 7
      %v292 = vsub.s32 0, %v291
      %v293 = vrot.slane %v288, %v292
      %v367 = vunpack.c.l.b16 %v178
      %v368 = vunpack.c.h.b16 %v178
      %v369 = vunpack.c.l.b16 %v179
      %v370 = vunpack.c.l.b16 %v180
      %v371 = vunpack.c.h.b16 %v180
      %v372 = vunpack.c.l.b16 %v181
      %v373 = vunpack.c.l.b16 %v182
      %v374 = vunpack.c.h.b16 %v182
      %v375 = vunpack.c.l.b16 %v183
      %v376 = vunpack.c.l.b16 %v184
      %v377 = vunpack.c.h.b16 %v184
      %v378 = vunpack.c.l.b16 %v185
      %v379 = vunpack.c.l.b16 %v186
      %v380 = vunpack.c.h.b16 %v186
      %v381 = vunpack.c.l.b16 %v187
      %v382 = vunpack.c.l.b16 %v188
      %v383 = vunpack.c.h.b16 %v188
      %v384 = vunpack.c.l.b16 %v189
      %v385 = vunpack.c.l.b16 %v190
      %v386 = vunpack.c.h.b16 %v190
      %v387 = vunpack.c.l.b16 %v191
      %v388 = vunpack.c.l.b16 %v192
      %v389 = vunpack.c.h.b16 %v192
      %v390 = vunpack.c.l.b16 %v193
      %v391 = vunpack.c.l.b16 %v194
      %v392 = vunpack.c.h.b16 %v194
      %v393 = vunpack.c.l.b16 %v195
      %v394 = vunpack.c.l.b16 %v196
      %v395 = vunpack.c.h.b16 %v196
      %v396 = vunpack.c.l.b16 %v197
      %v397 = vunpack.c.l.b16 %v198
      %v398 = vunpack.c.h.b16 %v198
      %v399 = vunpack.c.l.b16 %v199
      %v400 = vunpack.c.l.b16 %v200
      %v401 = vunpack.c.h.b16 %v200
      %v402 = vunpack.c.l.b16 %v201
      %v403 = vunpack.c.l.b16 %v202
      %v404 = vunpack.c.h.b16 %v202
      %v405 = vunpack.c.l.b16 %v203
      %v406 = vunpack.c.l.b16 %v204
      %v407 = vunpack.c.h.b16 %v204
      %v408 = vunpack.c.l.b16 %v205
      %v409 = vunpack.c.l.b16 %v206
      %v410 = vunpack.c.h.b16 %v206
      %v411 = vunpack.c.l.b16 %v207
      %v412 = vunpack.c.l.b16 %v208
      %v413 = vunpack.c.h.b16 %v208
      %v414 = vunpack.c.l.b16 %v209
      %v415 = vunpack.c.l.b16 %v210
      %v416 = vunpack.c.h.b16 %v210
      %v417 = vunpack.c.l.b16 %v211
      %v418 = vunpack.c.l.b16 %v212
      %v419 = vunpack.c.h.b16 %v212
      %v420 = vunpack.c.l.b16 %v213
      %v421 = vunpack.c.l.b16 %v214
      %v422 = vunpack.c.h.b16 %v214
      %v423 = vunpack.c.l.b16 %v215
      %v424 = vunpack.c.l.b16 %v216
      %v425 = vunpack.c.h.b16 %v216
      %v426 = vunpack.c.l.b16 %v217
      %v427 = vunpack.c.l.b16 %v218
      %v428 = vunpack.c.h.b16 %v218
      %v429 = vunpack.c.l.b16 %v219
      %v430 = vunpack.c.l.b16 %v220
      %v431 = vunpack.c.h.b16 %v220
      %v432 = vunpack.c.l.b16 %v221
      %v433 = vunpack.c.l.b16 %v222
      %v434 = vunpack.c.h.b16 %v222
      %v435 = vunpack.c.l.b16 %v223
      %v436 = vunpack.c.l.b16 %v224
      %v437 = vunpack.c.h.b16 %v224
      %v438 = vunpack.c.l.b16 %v225
      %v439 = vunpack.c.l.b16 %v226
      %v440 = vunpack.c.h.b16 %v226
      %v441 = vunpack.c.l.b16 %v227
      %v442 = vunpack.c.l.b16 %v228
      %v443 = vunpack.c.h.b16 %v228
      %v444 = vunpack.c.l.b16 %v229
      %v445 = vunpack.c.l.b16 %v230
      %v446 = vunpack.c.h.b16 %v230
      %v447 = vunpack.c.l.b16 %v231
      %v448 = vunpack.c.l.b16 %v232
      %v449 = vunpack.c.h.b16 %v232
      %v450 = vunpack.c.l.b16 %v233
      %v451 = vunpack.c.l.b16 %v234
      %v452 = vunpack.c.h.b16 %v234
      %v453 = vunpack.c.l.b16 %v235
      %v454 = vunpack.c.l.b16 %v236
      %v455 = vunpack.c.h.b16 %v236
      %v456 = vunpack.c.l.b16 %v237
      %v457 = vunpack.c.l.b16 %v238
      %v458 = vunpack.c.h.b16 %v238
      %v459 = vunpack.c.l.b16 %v239
      %v460 = vunpack.c.l.b16 %v240
      %v461 = vunpack.c.h.b16 %v240
      %v462 = vunpack.c.l.b16 %v241
      %v463 = vunpack.c.l.b16 %v242
      %v464 = vunpack.c.h.b16 %v242
      %v465 = vunpack.c.l.b16 %v243
      %v466 = vunpack.c.l.b16 %v244
      %v467 = vunpack.c.h.b16 %v244
      %v468 = vunpack.c.l.b16 %v245
      %v469 = vunpack.c.l.b16 %v246
      %v470 = vunpack.c.h.b16 %v246
      %v471 = vunpack.c.l.b16 %v247
      %v472 = vunpack.c.l.b16 %v248
      %v473 = vunpack.c.h.b16 %v248
      %v474 = vunpack.c.l.b16 %v249
      %v475 = vpack.c.b16 %v370, %v367
      %v476 = vpack.c.b16 %v371, %v368
      %v477 = vpack.c.b16 %v372, %v369
      %v478 = vpack.c.b16 %v376, %v373
      %v479 = vpack.c.b16 %v377, %v374
      %v480 = vpack.c.b16 %v378, %v375
      %v481 = vpack.c.b16 %v382, %v379
      %v482 = vpack.c.b16 %v383, %v380
      %v483 = vpack.c.b16 %v384, %v381
      %v484 = vpack.c.b16 %v388, %v385
      %v485 = vpack.c.b16 %v389, %v386
      %v486 = vpack.c.b16 %v390, %v387
      %v487 = vpack.c.b16 %v394, %v391
      %v488 = vpack.c.b16 %v395, %v392
      %v489 = vpack.c.b16 %v396, %v393
      %v490 = vpack.c.b16 %v400, %v397
      %v491 = vpack.c.b16 %v401, %v398
      %v492 = vpack.c.b16 %v402, %v399
      %v493 = vpack.c.b16 %v406, %v403
      %v494 = vpack.c.b16 %v407, %v404
      %v495 = vpack.c.b16 %v408, %v405
      %v496 = vpack.c.b16 %v412, %v409
      %v497 = vpack.c.b16 %v413, %v410
      %v498 = vpack.c.b16 %v414, %v411
      %v499 = vpack.c.b16 %v418, %v415
      %v500 = vpack.c.b16 %v419, %v416
      %v501 = vpack.c.b16 %v420, %v417
      %v502 = vpack.c.b16 %v424, %v421
      %v503 = vpack.c.b16 %v425, %v422
      %v504 = vpack.c.b16 %v426, %v423
      %v505 = vpack.c.b16 %v430, %v427
      %v506 = vpack.c.b16 %v431, %v428
      %v507 = vpack.c.b16 %v432, %v429
      %v508 = vpack.c.b16 %v436, %v433
      %v509 = vpack.c.b16 %v437, %v434
      %v510 = vpack.c.b16 %v438, %v435
      %v511 = vpack.c.b16 %v442, %v439
      %v512 = vpack.c.b16 %v443, %v440
      %v513 = vpack.c.b16 %v444, %v441
      %v514 = vpack.c.b16 %v448, %v445
      %v515 = vpack.c.b16 %v449, %v446
      %v516 = vpack.c.b16 %v450, %v447
      %v517 = vpack.c.b16 %v454, %v451
      %v518 = vpack.c.b16 %v455, %v452
      %v519 = vpack.c.b16 %v456, %v453
      %v520 = vpack.c.b16 %v460, %v457
      %v521 = vpack.c.b16 %v461, %v458
      %v522 = vpack.c.b16 %v462, %v459
      %v523 = vpack.c.b16 %v466, %v463
      %v524 = vpack.c.b16 %v467, %v464
      %v525 = vpack.c.b16 %v468, %v465
      %v526 = vpack.c.b16 %v472, %v469
      %v527 = vpack.c.b16 %v473, %v470
      %v528 = vpack.c.b16 %v474, %v471
      %v603 = vunpack.c.l.b16 %v250
      %v604 = vunpack.c.l.b16 %v251
      %v605 = vunpack.c.l.b16 %v252
      %v606 = vunpack.c.l.b16 %v253
      %v607 = vunpack.c.l.b16 %v254
      %v608 = vunpack.c.l.b16 %v255
      %v609 = vunpack.c.l.b16 %v256
      %v610 = vunpack.c.l.b16 %v257
      %v611 = vunpack.c.l.b16 %v258
      %v612 = vunpack.c.l.b16 %v259
      %v613 = vunpack.c.l.b16 %v260
      %v614 = vunpack.c.l.b16 %v261
      %v615 = vunpack.c.l.b16 %v262
      %v616 = vunpack.c.l.b16 %v263
      %v617 = vunpack.c.l.b16 %v264
      %v618 = vunpack.c.l.b16 %v265
      %v619 = vunpack.c.l.b16 %v266
      %v620 = vunpack.c.l.b16 %v267
      %v621 = vunpack.c.l.b16 %v268
      %v622 = vunpack.c.l.b16 %v269
      %v623 = vunpack.c.l.b16 %v270
      %v624 = vunpack.c.l.b16 %v271
      %v625 = vunpack.c.l.b16 %v272
      %v626 = vunpack.c.l.b16 %v273
      %v627 = vunpack.c.l.b16 %v274
      %v628 = vunpack.c.l.b16 %v275
      %v629 = vunpack.c.l.b16 %v276
      %v630 = vunpack.c.l.b16 %v277
      %v631 = vunpack.c.l.b16 %v278
      %v632 = vunpack.c.l.b16 %v279
      %v633 = vunpack.c.l.b16 %v280
      %v634 = vunpack.c.l.b16 %v281
      %v635 = vunpack.c.l.b16 %v282
      %v636 = vunpack.c.l.b16 %v283
      %v637 = vunpack.c.l.b16 %v284
      %v638 = vunpack.c.l.b16 %v285
      %v639 = vunpack.c.l.b16 %v286
      %v640 = vunpack.c.l.b16 %v287
      %v641 = vpack.c.b16 %v604, %v603
      %v642 = vpack.c.b16 %v606, %v605
      %v643 = vpack.c.b16 %v608, %v607
      %v644 = vpack.c.b16 %v610, %v609
      %v645 = vpack.c.b16 %v612, %v611
      %v646 = vpack.c.b16 %v614, %v613
      %v647 = vpack.c.b16 %v616, %v615
      %v648 = vpack.c.b16 %v618, %v617
      %v649 = vpack.c.b16 %v620, %v619
      %v650 = vpack.c.b16 %v622, %v621
      %v651 = vpack.c.b16 %v624, %v623
      %v652 = vpack.c.b16 %v626, %v625
      %v653 = vpack.c.b16 %v628, %v627
      %v654 = vpack.c.b16 %v630, %v629
      %v655 = vpack.c.b16 %v632, %v631
      %v656 = vpack.c.b16 %v634, %v633
      %v657 = vpack.c.b16 %v636, %v635
      %v658 = vpack.c.b16 %v638, %v637
      %v659 = vpack.c.b16 %v640, %v639
      %vm678 = vcmask 359424
      %v680 = vsel %vm678, %v477, 0
      %v683 = vsel %vm678, %v480, 0
      %v686 = vsel %vm678, %v483, 0
      %v689 = vsel %vm678, %v486, 0
      %v692 = vsel %vm678, %v489, 0
      %v695 = vsel %vm678, %v492, 0
      %v698 = vsel %vm678, %v495, 0
      %v701 = vsel %vm678, %v498, 0
      %v704 = vsel %vm678, %v501, 0
      %v707 = vsel %vm678, %v504, 0
      %v710 = vsel %vm678, %v507, 0
      %v713 = vsel %vm678, %v510, 0
      %v716 = vsel %vm678, %v513, 0
      %v719 = vsel %vm678, %v516, 0
      %v722 = vsel %vm678, %v519, 0
      %v725 = vsel %vm678, %v522, 0
      %v728 = vsel %vm678, %v525, 0
      %v731 = vsel %vm678, %v528, 0
      %vm733 = vcmask 1045504
      %v735 = vsel %vm733, %v659, 0
      %737 = vmatprep.subr.bf16.mxu0 0
      %738 = vmatpush1.bf16.msra.mxu0 %v641
      %739 = vmatprep.subr.bf16.mxu0 0
      %740 = vmatpush1.bf16.msra.mxu0 %v642
      %741 = vmatprep.subr.bf16.mxu0 0
      %742 = vmatpush1.bf16.msra.mxu0 %v643
      %743 = vmatprep.subr.bf16.mxu0 0
      %744 = vmatpush1.bf16.msra.mxu0 %v644
      %745 = vmatprep.subr.bf16.mxu0 0
      %746 = vmatpush1.bf16.msra.mxu0 %v645
      %747 = vmatprep.subr.bf16.mxu0 0
      %748 = vmatpush1.bf16.msra.mxu0 %v646
      %749 = vmatprep.subr.bf16.mxu0 0
      %750 = vmatpush1.bf16.msra.mxu0 %v647
      %751 = vmatprep.subr.bf16.mxu0 0
      %752 = vmatpush1.bf16.msra.mxu0 %v648
      %753 = vmatprep.subr.bf16.mxu0 0
      %754 = vmatpush1.bf16.msra.mxu0 %v649
      %755 = vmatprep.subr.bf16.mxu0 0
      %756 = vmatpush1.bf16.msra.mxu0 %v650
      %757 = vmatprep.subr.bf16.mxu0 0
      %758 = vmatpush1.bf16.msra.mxu0 %v651
      %759 = vmatprep.subr.bf16.mxu0 0
      %760 = vmatpush1.bf16.msra.mxu0 %v652
      %761 = vmatprep.subr.bf16.mxu0 0
      %762 = vmatpush1.bf16.msra.mxu0 %v653
      %763 = vmatprep.subr.bf16.mxu0 0
      %764 = vmatpush1.bf16.msra.mxu0 %v654
      %765 = vmatprep.subr.bf16.mxu0 0
      %766 = vmatpush1.bf16.msra.mxu0 %v655
      %767 = vmatprep.subr.bf16.mxu0 0
      %768 = vmatpush1.bf16.msra.mxu0 %v656
      %769 = vmatprep.mubr.bf16.mxu0 %v476
      %770 = vmatmul.mubr.bf16.gmra.mrb[0].mxu0 %v475
      %v771 = vpop.f32.mrb[0].mxu0
      %v772 = vadd.f32 %v293, %v771
      %v773 = vpop.f32.mrb[0].mxu0
      %v774 = vpop.f32.mrb[0].mxu0
      %v775 = vadd.f32 %v293, %v774
      %v776 = vpop.f32.mrb[0].mxu0
      %777 = vmatprep.mubr.bf16.mxu0 %v479
      %778 = vmatmul.mubr.bf16.gmra.mrb[0].mxu0 %v478
      %v779 = vpop.f32.mrb[0].mxu0
      %v780 = vadd.f32 %v293, %v779
      %v781 = vpop.f32.mrb[0].mxu0
      %v782 = vpop.f32.mrb[0].mxu0
      %v783 = vadd.f32 %v293, %v782
      %v784 = vpop.f32.mrb[0].mxu0
      %785 = vmatprep.mubr.bf16.mxu0 %v482
      %786 = vmatmul.mubr.bf16.gmra.mrb[0].mxu0 %v481
      %v787 = vpop.f32.mrb[0].mxu0
      %v788 = vadd.f32 %v293, %v787
      %v789 = vpop.f32.mrb[0].mxu0
      %v790 = vpop.f32.mrb[0].mxu0
      %v791 = vadd.f32 %v293, %v790
      %v792 = vpop.f32.mrb[0].mxu0
      %793 = vmatprep.mubr.bf16.mxu0 %v485
      %794 = vmatmul.mubr.bf16.gmra.mrb[0].mxu0 %v484
      %v795 = vpop.f32.mrb[0].mxu0
      %v796 = vadd.f32 %v293, %v795
      %v797 = vpop.f32.mrb[0].mxu0
      %v798 = vpop.f32.mrb[0].mxu0
      %v799 = vadd.f32 %v293, %v798
      %v800 = vpop.f32.mrb[0].mxu0
      %801 = vmatprep.mubr.bf16.mxu0 %v488
      %802 = vmatmul.mubr.bf16.gmra.mrb[0].mxu0 %v487
      %v803 = vpop.f32.mrb[0].mxu0
      %v804 = vadd.f32 %v293, %v803
      %v805 = vpop.f32.mrb[0].mxu0
      %v806 = vpop.f32.mrb[0].mxu0
      %v807 = vadd.f32 %v293, %v806
      %v808 = vpop.f32.mrb[0].mxu0
      %809 = vmatprep.mubr.bf16.mxu0 %v491
      %810 = vmatmul.mubr.bf16.gmra.mrb[0].mxu0 %v490
      %v811 = vpop.f32.mrb[0].mxu0
      %v812 = vadd.f32 %v293, %v811
      %v813 = vpop.f32.mrb[0].mxu0
      %v814 = vpop.f32.mrb[0].mxu0
      %v815 = vadd.f32 %v293, %v814
      %v816 = vpop.f32.mrb[0].mxu0
      %817 = vmatprep.mubr.bf16.mxu0 %v494
      %818 = vmatmul.mubr.bf16.gmra.mrb[0].mxu0 %v493
      %v819 = vpop.f32.mrb[0].mxu0
      %v820 = vadd.f32 %v293, %v819
      %v821 = vpop.f32.mrb[0].mxu0
      %v822 = vpop.f32.mrb[0].mxu0
      %v823 = vadd.f32 %v293, %v822
      %v824 = vpop.f32.mrb[0].mxu0
      %825 = vmatprep.mubr.bf16.mxu0 %v497
      %826 = vmatmul.mubr.bf16.gmra.mrb[0].mxu0 %v496
      %v827 = vpop.f32.mrb[0].mxu0
      %v828 = vadd.f32 %v293, %v827
      %v829 = vpop.f32.mrb[0].mxu0
      %v830 = vpop.f32.mrb[0].mxu0
      %v831 = vadd.f32 %v293, %v830
      %v832 = vpop.f32.mrb[0].mxu0
      %833 = vmatprep.mubr.bf16.mxu0 %v500
      %834 = vmatmul.mubr.bf16.gmra.mrb[0].mxu0 %v499
      %v835 = vpop.f32.mrb[0].mxu0
      %v836 = vadd.f32 %v293, %v835
      %v837 = vpop.f32.mrb[0].mxu0
      %v838 = vpop.f32.mrb[0].mxu0
      %v839 = vadd.f32 %v293, %v838
      %v840 = vpop.f32.mrb[0].mxu0
      %841 = vmatprep.mubr.bf16.mxu0 %v503
      %842 = vmatmul.mubr.bf16.gmra.mrb[0].mxu0 %v502
      %v843 = vpop.f32.mrb[0].mxu0
      %v844 = vadd.f32 %v293, %v843
      %v845 = vpop.f32.mrb[0].mxu0
      %v846 = vpop.f32.mrb[0].mxu0
      %v847 = vadd.f32 %v293, %v846
      %v848 = vpop.f32.mrb[0].mxu0
      %849 = vmatprep.mubr.bf16.mxu0 %v506
      %850 = vmatmul.mubr.bf16.gmra.mrb[0].mxu0 %v505
      %v851 = vpop.f32.mrb[0].mxu0
      %v852 = vadd.f32 %v293, %v851
      %v853 = vpop.f32.mrb[0].mxu0
      %v854 = vpop.f32.mrb[0].mxu0
      %v855 = vadd.f32 %v293, %v854
      %v856 = vpop.f32.mrb[0].mxu0
      %857 = vmatprep.mubr.bf16.mxu0 %v509
      %858 = vmatmul.mubr.bf16.gmra.mrb[0].mxu0 %v508
      %v859 = vpop.f32.mrb[0].mxu0
      %v860 = vadd.f32 %v293, %v859
      %v861 = vpop.f32.mrb[0].mxu0
      %v862 = vpop.f32.mrb[0].mxu0
      %v863 = vadd.f32 %v293, %v862
      %v864 = vpop.f32.mrb[0].mxu0
      %865 = vmatprep.mubr.bf16.mxu0 %v512
      %866 = vmatmul.mubr.bf16.gmra.mrb[0].mxu0 %v511
      %v867 = vpop.f32.mrb[0].mxu0
      %v868 = vadd.f32 %v293, %v867
      %v869 = vpop.f32.mrb[0].mxu0
      %v870 = vpop.f32.mrb[0].mxu0
      %v871 = vadd.f32 %v293, %v870
      %v872 = vpop.f32.mrb[0].mxu0
      %873 = vmatprep.mubr.bf16.mxu0 %v515
      %874 = vmatmul.mubr.bf16.gmra.mrb[0].mxu0 %v514
      %v875 = vpop.f32.mrb[0].mxu0
      %v876 = vadd.f32 %v293, %v875
      %v877 = vpop.f32.mrb[0].mxu0
      %v878 = vpop.f32.mrb[0].mxu0
      %v879 = vadd.f32 %v293, %v878
      %v880 = vpop.f32.mrb[0].mxu0
      %881 = vmatprep.mubr.bf16.mxu0 %v518
      %882 = vmatmul.mubr.bf16.gmra.mrb[0].mxu0 %v517
      %v883 = vpop.f32.mrb[0].mxu0
      %v884 = vadd.f32 %v293, %v883
      %v885 = vpop.f32.mrb[0].mxu0
      %v886 = vpop.f32.mrb[0].mxu0
      %v887 = vadd.f32 %v293, %v886
      %v888 = vpop.f32.mrb[0].mxu0
      %889 = vmatprep.mubr.bf16.mxu0 %v521
      %890 = vmatmul.mubr.bf16.gmra.mrb[0].mxu0 %v520
      %v891 = vpop.f32.mrb[0].mxu0
      %v892 = vadd.f32 %v293, %v891
      %v893 = vpop.f32.mrb[0].mxu0
      %v894 = vpop.f32.mrb[0].mxu0
      %v895 = vadd.f32 %v293, %v894
      %v896 = vpop.f32.mrb[0].mxu0
      %897 = vmatprep.mubr.bf16.mxu0 %v524
      %898 = vmatmul.mubr.bf16.gmra.mrb[0].mxu0 %v523
      %v899 = vpop.f32.mrb[0].mxu0
      %v900 = vadd.f32 %v293, %v899
      %v901 = vpop.f32.mrb[0].mxu0
      %v902 = vpop.f32.mrb[0].mxu0
      %v903 = vadd.f32 %v293, %v902
      %v904 = vpop.f32.mrb[0].mxu0
      %905 = vmatprep.mubr.bf16.mxu0 %v527
      %906 = vmatmul.mubr.bf16.gmra.mrb[0].mxu0 %v526
      %v907 = vpop.f32.mrb[0].mxu0
      %v908 = vadd.f32 %v293, %v907
      %v909 = vpop.f32.mrb[0].mxu0
      %v910 = vpop.f32.mrb[0].mxu0
      %v911 = vadd.f32 %v293, %v910
      %v912 = vpop.f32.mrb[0].mxu0
      %913 = vdwg.mxu0
      %914 = vmatprep.subr.bf16.mxu0 0
      %915 = vmatpush1.bf16.msra.mxu0 %v657
      %916 = vmatprep.subr.bf16.mxu0 0
      %917 = vmatpush1.bf16.msra.mxu0 %v658
      %918 = vmatprep.subr.bf16.mxu0 0
      %919 = vmatpush1.bf16.msra.mxu0 %v735
      %920 = vmatprep.subr.bf16.mxu0 0
      %921 = vmatpush1.bf16.msra.mxu0 0
      %922 = vmatprep.subr.bf16.mxu0 0
      %923 = vmatpush1.bf16.msra.mxu0 0
      %924 = vmatprep.subr.bf16.mxu0 0
      %925 = vmatpush1.bf16.msra.mxu0 0
      %926 = vmatprep.subr.bf16.mxu0 0
      %927 = vmatpush1.bf16.msra.mxu0 0
      %928 = vmatprep.subr.bf16.mxu0 0
      %929 = vmatpush1.bf16.msra.mxu0 0
      %930 = vmatprep.subr.bf16.mxu0 0
      %931 = vmatpush1.bf16.msra.mxu0 0
      %932 = vmatprep.subr.bf16.mxu0 0
      %933 = vmatpush1.bf16.msra.mxu0 0
      %934 = vmatprep.subr.bf16.mxu0 0
      %935 = vmatpush1.bf16.msra.mxu0 0
      %936 = vmatprep.subr.bf16.mxu0 0
      %937 = vmatpush1.bf16.msra.mxu0 0
      %938 = vmatprep.subr.bf16.mxu0 0
      %939 = vmatpush1.bf16.msra.mxu0 0
      %940 = vmatprep.subr.bf16.mxu0 0
      %941 = vmatpush1.bf16.msra.mxu0 0
      %942 = vmatprep.subr.bf16.mxu0 0
      %943 = vmatpush1.bf16.msra.mxu0 0
      %944 = vmatprep.subr.bf16.mxu0 0
      %945 = vmatpush1.bf16.msra.mxu0 0
      %946 = vmatprep.mubr.bf16.mxu0 0
      %947 = vmatmul.mubr.bf16.gmra.mrb[0].mxu0 %v680
      %v948 = vpop.f32.mrb[0].mxu0
      %v949 = vadd.f32 %v772, %v948
      %v950 = vpop.f32.mrb[0].mxu0
      %v951 = vpop.f32.mrb[0].mxu0
      %v952 = vadd.f32 %v775, %v951
      %v953 = vpop.f32.mrb[0].mxu0
      %954 = vmatprep.mubr.bf16.mxu0 0
      %955 = vmatmul.mubr.bf16.gmra.mrb[0].mxu0 %v683
      %v956 = vpop.f32.mrb[0].mxu0
      %v957 = vadd.f32 %v780, %v956
      %v958 = vpop.f32.mrb[0].mxu0
      %v959 = vpop.f32.mrb[0].mxu0
      %v960 = vadd.f32 %v783, %v959
      %v961 = vpop.f32.mrb[0].mxu0
      %962 = vmatprep.mubr.bf16.mxu0 0
      %963 = vmatmul.mubr.bf16.gmra.mrb[0].mxu0 %v686
      %v964 = vpop.f32.mrb[0].mxu0
      %v965 = vadd.f32 %v788, %v964
      %v966 = vpop.f32.mrb[0].mxu0
      %v967 = vpop.f32.mrb[0].mxu0
      %v968 = vadd.f32 %v791, %v967
      %v969 = vpop.f32.mrb[0].mxu0
      %970 = vmatprep.mubr.bf16.mxu0 0
      %971 = vmatmul.mubr.bf16.gmra.mrb[0].mxu0 %v689
      %v972 = vpop.f32.mrb[0].mxu0
      %v973 = vadd.f32 %v796, %v972
      %v974 = vpop.f32.mrb[0].mxu0
      %v975 = vpop.f32.mrb[0].mxu0
      %v976 = vadd.f32 %v799, %v975
      %v977 = vpop.f32.mrb[0].mxu0
      %978 = vmatprep.mubr.bf16.mxu0 0
      %979 = vmatmul.mubr.bf16.gmra.mrb[0].mxu0 %v692
      %v980 = vpop.f32.mrb[0].mxu0
      %v981 = vadd.f32 %v804, %v980
      %v982 = vpop.f32.mrb[0].mxu0
      %v983 = vpop.f32.mrb[0].mxu0
      %v984 = vadd.f32 %v807, %v983
      %v985 = vpop.f32.mrb[0].mxu0
      %986 = vmatprep.mubr.bf16.mxu0 0
      %987 = vmatmul.mubr.bf16.gmra.mrb[0].mxu0 %v695
      %v988 = vpop.f32.mrb[0].mxu0
      %v989 = vadd.f32 %v812, %v988
      %v990 = vpop.f32.mrb[0].mxu0
      %v991 = vpop.f32.mrb[0].mxu0
      %v992 = vadd.f32 %v815, %v991
      %v993 = vpop.f32.mrb[0].mxu0
      %994 = vmatprep.mubr.bf16.mxu0 0
      %995 = vmatmul.mubr.bf16.gmra.mrb[0].mxu0 %v698
      %v996 = vpop.f32.mrb[0].mxu0
      %v997 = vadd.f32 %v820, %v996
      %v998 = vpop.f32.mrb[0].mxu0
      %v999 = vpop.f32.mrb[0].mxu0
      %v1000 = vadd.f32 %v823, %v999
      %v1001 = vpop.f32.mrb[0].mxu0
      %1002 = vmatprep.mubr.bf16.mxu0 0
      %1003 = vmatmul.mubr.bf16.gmra.mrb[0].mxu0 %v701
      %v1004 = vpop.f32.mrb[0].mxu0
      %v1005 = vadd.f32 %v828, %v1004
      %v1006 = vpop.f32.mrb[0].mxu0
      %v1007 = vpop.f32.mrb[0].mxu0
      %v1008 = vadd.f32 %v831, %v1007
      %v1009 = vpop.f32.mrb[0].mxu0
      %1010 = vmatprep.mubr.bf16.mxu0 0
      %1011 = vmatmul.mubr.bf16.gmra.mrb[0].mxu0 %v704
      %v1012 = vpop.f32.mrb[0].mxu0
      %v1013 = vadd.f32 %v836, %v1012
      %v1014 = vpop.f32.mrb[0].mxu0
      %v1015 = vpop.f32.mrb[0].mxu0
      %v1016 = vadd.f32 %v839, %v1015
      %v1017 = vpop.f32.mrb[0].mxu0
      %1018 = vmatprep.mubr.bf16.mxu0 0
      %1019 = vmatmul.mubr.bf16.gmra.mrb[0].mxu0 %v707
      %v1020 = vpop.f32.mrb[0].mxu0
      %v1021 = vadd.f32 %v844, %v1020
      %v1022 = vpop.f32.mrb[0].mxu0
      %v1023 = vpop.f32.mrb[0].mxu0
      %v1024 = vadd.f32 %v847, %v1023
      %v1025 = vpop.f32.mrb[0].mxu0
      %1026 = vmatprep.mubr.bf16.mxu0 0
      %1027 = vmatmul.mubr.bf16.gmra.mrb[0].mxu0 %v710
      %v1028 = vpop.f32.mrb[0].mxu0
      %v1029 = vadd.f32 %v852, %v1028
      %v1030 = vpop.f32.mrb[0].mxu0
      %v1031 = vpop.f32.mrb[0].mxu0
      %v1032 = vadd.f32 %v855, %v1031
      %v1033 = vpop.f32.mrb[0].mxu0
      %1034 = vmatprep.mubr.bf16.mxu0 0
      %1035 = vmatmul.mubr.bf16.gmra.mrb[0].mxu0 %v713
      %v1036 = vpop.f32.mrb[0].mxu0
      %v1037 = vadd.f32 %v860, %v1036
      %v1038 = vpop.f32.mrb[0].mxu0
      %v1039 = vpop.f32.mrb[0].mxu0
      %v1040 = vadd.f32 %v863, %v1039
      %v1041 = vpop.f32.mrb[0].mxu0
      %1042 = vmatprep.mubr.bf16.mxu0 0
      %1043 = vmatmul.mubr.bf16.gmra.mrb[0].mxu0 %v716
      %v1044 = vpop.f32.mrb[0].mxu0
      %v1045 = vadd.f32 %v868, %v1044
      %v1046 = vpop.f32.mrb[0].mxu0
      %v1047 = vpop.f32.mrb[0].mxu0
      %v1048 = vadd.f32 %v871, %v1047
      %v1049 = vpop.f32.mrb[0].mxu0
      %1050 = vmatprep.mubr.bf16.mxu0 0
      %1051 = vmatmul.mubr.bf16.gmra.mrb[0].mxu0 %v719
      %v1052 = vpop.f32.mrb[0].mxu0
      %v1053 = vadd.f32 %v876, %v1052
      %v1054 = vpop.f32.mrb[0].mxu0
      %v1055 = vpop.f32.mrb[0].mxu0
      %v1056 = vadd.f32 %v879, %v1055
      %v1057 = vpop.f32.mrb[0].mxu0
      %1058 = vmatprep.mubr.bf16.mxu0 0
      %1059 = vmatmul.mubr.bf16.gmra.mrb[0].mxu0 %v722
      %v1060 = vpop.f32.mrb[0].mxu0
      %v1061 = vadd.f32 %v884, %v1060
      %v1062 = vpop.f32.mrb[0].mxu0
      %v1063 = vpop.f32.mrb[0].mxu0
      %v1064 = vadd.f32 %v887, %v1063
      %v1065 = vpop.f32.mrb[0].mxu0
      %1066 = vmatprep.mubr.bf16.mxu0 0
      %1067 = vmatmul.mubr.bf16.gmra.mrb[0].mxu0 %v725
      %v1068 = vpop.f32.mrb[0].mxu0
      %v1069 = vadd.f32 %v892, %v1068
      %v1070 = vpop.f32.mrb[0].mxu0
      %v1071 = vpop.f32.mrb[0].mxu0
      %v1072 = vadd.f32 %v895, %v1071
      %v1073 = vpop.f32.mrb[0].mxu0
      %1074 = vmatprep.mubr.bf16.mxu0 0
      %1075 = vmatmul.mubr.bf16.gmra.mrb[0].mxu0 %v728
      %v1076 = vpop.f32.mrb[0].mxu0
      %v1077 = vadd.f32 %v900, %v1076
      %v1078 = vpop.f32.mrb[0].mxu0
      %v1079 = vpop.f32.mrb[0].mxu0
      %v1080 = vadd.f32 %v903, %v1079
      %v1081 = vpop.f32.mrb[0].mxu0
      %1082 = vmatprep.mubr.bf16.mxu0 0
      %1083 = vmatmul.mubr.bf16.gmra.mrb[0].mxu0 %v731
      %v1084 = vpop.f32.mrb[0].mxu0
      %v1085 = vadd.f32 %v908, %v1084
      %v1086 = vpop.f32.mrb[0].mxu0
      %v1087 = vpop.f32.mrb[0].mxu0
      %v1088 = vadd.f32 %v911, %v1087
      %v1089 = vpop.f32.mrb[0].mxu0
      %1090 = vdwg.mxu0
      %s1091 = scalar_lea.vmem %s1, 152
      %v1092 = vld [vmem:[%s1091] sm:$0xf]
      %v1093 = vld [vmem:[%s1091 + $0x4] sm:$0xf]
      %v1094 = vld [vmem:[%s1091 + $0x8] sm:$0xf]
      %v1095 = vld [vmem:[%s1091 + $0xc] sm:$0xf]
      %v1096 = vld [vmem:[%s1091 + $0x10] sm:$0xf]
      %v1097 = vld [vmem:[%s1091 + $0x14] sm:$0xf]
      %v1098 = vld [vmem:[%s1091 + $0x18] sm:$0xf]
      %v1099 = vld [vmem:[%s1091 + $0x1c] sm:$0xf]
      %v1100 = vld [vmem:[%s1091 + $0x20] sm:$0xf]
      %v1101 = vld [vmem:[%s1091 + $0x24] sm:$0xf]
      %v1102 = vld [vmem:[%s1091 + $0x28] sm:$0xf]
      %v1103 = vld [vmem:[%s1091 + $0x2c] sm:$0xf]
      %v1104 = vld [vmem:[%s1091 + $0x30] sm:$0xf]
      %v1105 = vld [vmem:[%s1091 + $0x34] sm:$0xf]
      %v1106 = vld [vmem:[%s1091 + $0x38] sm:$0xf]
      %v1107 = vld [vmem:[%s1091 + $0x3c] sm:$0xf]
      %v1108 = vld [vmem:[%s1091 + $0x40] sm:$0xf]
      %v1109 = vld [vmem:[%s1091 + $0x44] sm:$0xf]
      %v1110 = vld [vmem:[%s1091 + $0x48] sm:$0xf]
      %v1111 = vld [vmem:[%s1091 + $0x4c] sm:$0xf]
      %v1112 = vld [vmem:[%s1091 + $0x50] sm:$0xf]
      %v1113 = vld [vmem:[%s1091 + $0x54] sm:$0xf]
      %v1114 = vld [vmem:[%s1091 + $0x58] sm:$0xf]
      %v1115 = vld [vmem:[%s1091 + $0x5c] sm:$0xf]
      %v1116 = vld [vmem:[%s1091 + $0x60] sm:$0xf]
      %v1117 = vld [vmem:[%s1091 + $0x64] sm:$0xf]
      %v1118 = vld [vmem:[%s1091 + $0x68] sm:$0xf]
      %v1119 = vld [vmem:[%s1091 + $0x6c] sm:$0xf]
      %v1120 = vld [vmem:[%s1091 + $0x70] sm:$0xf]
      %v1121 = vld [vmem:[%s1091 + $0x74] sm:$0xf]
      %v1122 = vld [vmem:[%s1091 + $0x78] sm:$0xf]
      %v1123 = vld [vmem:[%s1091 + $0x7c] sm:$0xf]
      %v1124 = vld [vmem:[%s1091 + $0x80] sm:$0xf]
      %v1125 = vld [vmem:[%s1091 + $0x84] sm:$0xf]
      %v1126 = vld [vmem:[%s1091 + $0x88] sm:$0xf]
      %v1127 = vld [vmem:[%s1091 + $0x8c] sm:$0xf]
      %v1128 = vld [vmem:[%s1091 + $0x90] sm:$0xf]
      %v1129 = vld [vmem:[%s1091 + $0x94] sm:$0x3]
      %s1130 = scalar_lea.vmem %s2, 1
      %v1131 = vld [vmem:[%s1130] sm:$0x1]
      %v1133 = vlaneseq
      %v1134 = vshrl.u32 %v1133, 7
      %v1135 = vsub.s32 0, %v1134
      %v1136 = vrot.slane %v1131, %v1135
      %v1176 = vunpack.c.l.b16 %v1092
      %v1177 = vunpack.c.l.b16 %v1093
      %v1178 = vunpack.c.l.b16 %v1094
      %v1179 = vunpack.c.l.b16 %v1095
      %v1180 = vunpack.c.l.b16 %v1096
      %v1181 = vunpack.c.l.b16 %v1097
      %v1182 = vunpack.c.l.b16 %v1098
      %v1183 = vunpack.c.l.b16 %v1099
      %v1184 = vunpack.c.l.b16 %v1100
      %v1185 = vunpack.c.l.b16 %v1101
      %v1186 = vunpack.c.l.b16 %v1102
      %v1187 = vunpack.c.l.b16 %v1103
      %v1188 = vunpack.c.l.b16 %v1104
      %v1189 = vunpack.c.l.b16 %v1105
      %v1190 = vunpack.c.l.b16 %v1106
      %v1191 = vunpack.c.l.b16 %v1107
      %v1192 = vunpack.c.l.b16 %v1108
      %v1193 = vunpack.c.l.b16 %v1109
      %v1194 = vunpack.c.l.b16 %v1110
      %v1195 = vunpack.c.l.b16 %v1111
      %v1196 = vunpack.c.l.b16 %v1112
      %v1197 = vunpack.c.l.b16 %v1113
      %v1198 = vunpack.c.l.b16 %v1114
      %v1199 = vunpack.c.l.b16 %v1115
      %v1200 = vunpack.c.l.b16 %v1116
      %v1201 = vunpack.c.l.b16 %v1117
      %v1202 = vunpack.c.l.b16 %v1118
      %v1203 = vunpack.c.l.b16 %v1119
      %v1204 = vunpack.c.l.b16 %v1120
      %v1205 = vunpack.c.l.b16 %v1121
      %v1206 = vunpack.c.l.b16 %v1122
      %v1207 = vunpack.c.l.b16 %v1123
      %v1208 = vunpack.c.l.b16 %v1124
      %v1209 = vunpack.c.l.b16 %v1125
      %v1210 = vunpack.c.l.b16 %v1126
      %v1211 = vunpack.c.l.b16 %v1127
      %v1212 = vunpack.c.l.b16 %v1128
      %v1213 = vunpack.c.l.b16 %v1129
      %v1214 = vpack.c.b16 %v1177, %v1176
      %v1215 = vpack.c.b16 %v1179, %v1178
      %v1216 = vpack.c.b16 %v1181, %v1180
      %v1217 = vpack.c.b16 %v1183, %v1182
      %v1218 = vpack.c.b16 %v1185, %v1184
      %v1219 = vpack.c.b16 %v1187, %v1186
      %v1220 = vpack.c.b16 %v1189, %v1188
      %v1221 = vpack.c.b16 %v1191, %v1190
      %v1222 = vpack.c.b16 %v1193, %v1192
      %v1223 = vpack.c.b16 %v1195, %v1194
      %v1224 = vpack.c.b16 %v1197, %v1196
      %v1225 = vpack.c.b16 %v1199, %v1198
      %v1226 = vpack.c.b16 %v1201, %v1200
      %v1227 = vpack.c.b16 %v1203, %v1202
      %v1228 = vpack.c.b16 %v1205, %v1204
      %v1229 = vpack.c.b16 %v1207, %v1206
      %v1230 = vpack.c.b16 %v1209, %v1208
      %v1231 = vpack.c.b16 %v1211, %v1210
      %v1232 = vpack.c.b16 %v1213, %v1212
      %v1252 = vsel %vm733, %v1232, 0
      %1254 = vmatprep.subr.bf16.mxu0 0
      %1255 = vmatpush1.bf16.msra.mxu0 %v1214
      %1256 = vmatprep.subr.bf16.mxu0 0
      %1257 = vmatpush1.bf16.msra.mxu0 %v1215
      %1258 = vmatprep.subr.bf16.mxu0 0
      %1259 = vmatpush1.bf16.msra.mxu0 %v1216
      %1260 = vmatprep.subr.bf16.mxu0 0
      %1261 = vmatpush1.bf16.msra.mxu0 %v1217
      %1262 = vmatprep.subr.bf16.mxu0 0
      %1263 = vmatpush1.bf16.msra.mxu0 %v1218
      %1264 = vmatprep.subr.bf16.mxu0 0
      %1265 = vmatpush1.bf16.msra.mxu0 %v1219
      %1266 = vmatprep.subr.bf16.mxu0 0
      %1267 = vmatpush1.bf16.msra.mxu0 %v1220
      %1268 = vmatprep.subr.bf16.mxu0 0
      %1269 = vmatpush1.bf16.msra.mxu0 %v1221
      %1270 = vmatprep.subr.bf16.mxu0 0
      %1271 = vmatpush1.bf16.msra.mxu0 %v1222
      %1272 = vmatprep.subr.bf16.mxu0 0
      %1273 = vmatpush1.bf16.msra.mxu0 %v1223
      %1274 = vmatprep.subr.bf16.mxu0 0
      %1275 = vmatpush1.bf16.msra.mxu0 %v1224
      %1276 = vmatprep.subr.bf16.mxu0 0
      %1277 = vmatpush1.bf16.msra.mxu0 %v1225
      %1278 = vmatprep.subr.bf16.mxu0 0
      %1279 = vmatpush1.bf16.msra.mxu0 %v1226
      %1280 = vmatprep.subr.bf16.mxu0 0
      %1281 = vmatpush1.bf16.msra.mxu0 %v1227
      %1282 = vmatprep.subr.bf16.mxu0 0
      %1283 = vmatpush1.bf16.msra.mxu0 %v1228
      %1284 = vmatprep.subr.bf16.mxu0 0
      %1285 = vmatpush1.bf16.msra.mxu0 %v1229
      %1286 = vmatprep.mubr.bf16.mxu0 %v476
      %1287 = vmatmul.mubr.bf16.gmra.mrb[0].mxu0 %v475
      %v1288 = vpop.f32.mrb[0].mxu0
      %v1289 = vadd.f32 %v1136, %v1288
      %v1290 = vpop.f32.mrb[0].mxu0
      %v1291 = vpop.f32.mrb[0].mxu0
      %v1292 = vadd.f32 %v1136, %v1291
      %v1293 = vpop.f32.mrb[0].mxu0
      %1294 = vmatprep.mubr.bf16.mxu0 %v479
      %1295 = vmatmul.mubr.bf16.gmra.mrb[0].mxu0 %v478
      %v1296 = vpop.f32.mrb[0].mxu0
      %v1297 = vadd.f32 %v1136, %v1296
      %v1298 = vpop.f32.mrb[0].mxu0
      %v1299 = vpop.f32.mrb[0].mxu0
      %v1300 = vadd.f32 %v1136, %v1299
      %v1301 = vpop.f32.mrb[0].mxu0
      %1302 = vmatprep.mubr.bf16.mxu0 %v482
      %1303 = vmatmul.mubr.bf16.gmra.mrb[0].mxu0 %v481
      %v1304 = vpop.f32.mrb[0].mxu0
      %v1305 = vadd.f32 %v1136, %v1304
      %v1306 = vpop.f32.mrb[0].mxu0
      %v1307 = vpop.f32.mrb[0].mxu0
      %v1308 = vadd.f32 %v1136, %v1307
      %v1309 = vpop.f32.mrb[0].mxu0
      %1310 = vmatprep.mubr.bf16.mxu0 %v485
      %1311 = vmatmul.mubr.bf16.gmra.mrb[0].mxu0 %v484
      %v1312 = vpop.f32.mrb[0].mxu0
      %v1313 = vadd.f32 %v1136, %v1312
      %v1314 = vpop.f32.mrb[0].mxu0
      %v1315 = vpop.f32.mrb[0].mxu0
      %v1316 = vadd.f32 %v1136, %v1315
      %v1317 = vpop.f32.mrb[0].mxu0
      %1318 = vmatprep.mubr.bf16.mxu0 %v488
      %1319 = vmatmul.mubr.bf16.gmra.mrb[0].mxu0 %v487
      %v1320 = vpop.f32.mrb[0].mxu0
      %v1321 = vadd.f32 %v1136, %v1320
      %v1322 = vpop.f32.mrb[0].mxu0
      %v1323 = vpop.f32.mrb[0].mxu0
      %v1324 = vadd.f32 %v1136, %v1323
      %v1325 = vpop.f32.mrb[0].mxu0
      %1326 = vmatprep.mubr.bf16.mxu0 %v491
      %1327 = vmatmul.mubr.bf16.gmra.mrb[0].mxu0 %v490
      %v1328 = vpop.f32.mrb[0].mxu0
      %v1329 = vadd.f32 %v1136, %v1328
      %v1330 = vpop.f32.mrb[0].mxu0
      %v1331 = vpop.f32.mrb[0].mxu0
      %v1332 = vadd.f32 %v1136, %v1331
      %v1333 = vpop.f32.mrb[0].mxu0
      %1334 = vmatprep.mubr.bf16.mxu0 %v494
      %1335 = vmatmul.mubr.bf16.gmra.mrb[0].mxu0 %v493
      %v1336 = vpop.f32.mrb[0].mxu0
      %v1337 = vadd.f32 %v1136, %v1336
      %v1338 = vpop.f32.mrb[0].mxu0
      %v1339 = vpop.f32.mrb[0].mxu0
      %v1340 = vadd.f32 %v1136, %v1339
      %v1341 = vpop.f32.mrb[0].mxu0
      %1342 = vmatprep.mubr.bf16.mxu0 %v497
      %1343 = vmatmul.mubr.bf16.gmra.mrb[0].mxu0 %v496
      %v1344 = vpop.f32.mrb[0].mxu0
      %v1345 = vadd.f32 %v1136, %v1344
      %v1346 = vpop.f32.mrb[0].mxu0
      %v1347 = vpop.f32.mrb[0].mxu0
      %v1348 = vadd.f32 %v1136, %v1347
      %v1349 = vpop.f32.mrb[0].mxu0
      %1350 = vmatprep.mubr.bf16.mxu0 %v500
      %1351 = vmatmul.mubr.bf16.gmra.mrb[0].mxu0 %v499
      %v1352 = vpop.f32.mrb[0].mxu0
      %v1353 = vadd.f32 %v1136, %v1352
      %v1354 = vpop.f32.mrb[0].mxu0
      %v1355 = vpop.f32.mrb[0].mxu0
      %v1356 = vadd.f32 %v1136, %v1355
      %v1357 = vpop.f32.mrb[0].mxu0
      %1358 = vmatprep.mubr.bf16.mxu0 %v503
      %1359 = vmatmul.mubr.bf16.gmra.mrb[0].mxu0 %v502
      %v1360 = vpop.f32.mrb[0].mxu0
      %v1361 = vadd.f32 %v1136, %v1360
      %v1362 = vpop.f32.mrb[0].mxu0
      %v1363 = vpop.f32.mrb[0].mxu0
      %v1364 = vadd.f32 %v1136, %v1363
      %v1365 = vpop.f32.mrb[0].mxu0
      %1366 = vmatprep.mubr.bf16.mxu0 %v506
      %1367 = vmatmul.mubr.bf16.gmra.mrb[0].mxu0 %v505
      %v1368 = vpop.f32.mrb[0].mxu0
      %v1369 = vadd.f32 %v1136, %v1368
      %v1370 = vpop.f32.mrb[0].mxu0
      %v1371 = vpop.f32.mrb[0].mxu0
      %v1372 = vadd.f32 %v1136, %v1371
      %v1373 = vpop.f32.mrb[0].mxu0
      %1374 = vmatprep.mubr.bf16.mxu0 %v509
      %1375 = vmatmul.mubr.bf16.gmra.mrb[0].mxu0 %v508
      %v1376 = vpop.f32.mrb[0].mxu0
      %v1377 = vadd.f32 %v1136, %v1376
      %v1378 = vpop.f32.mrb[0].mxu0
      %v1379 = vpop.f32.mrb[0].mxu0
      %v1380 = vadd.f32 %v1136, %v1379
      %v1381 = vpop.f32.mrb[0].mxu0
      %1382 = vmatprep.mubr.bf16.mxu0 %v512
      %1383 = vmatmul.mubr.bf16.gmra.mrb[0].mxu0 %v511
      %v1384 = vpop.f32.mrb[0].mxu0
      %v1385 = vadd.f32 %v1136, %v1384
      %v1386 = vpop.f32.mrb[0].mxu0
      %v1387 = vpop.f32.mrb[0].mxu0
      %v1388 = vadd.f32 %v1136, %v1387
      %v1389 = vpop.f32.mrb[0].mxu0
      %1390 = vmatprep.mubr.bf16.mxu0 %v515
      %1391 = vmatmul.mubr.bf16.gmra.mrb[0].mxu0 %v514
      %v1392 = vpop.f32.mrb[0].mxu0
      %v1393 = vadd.f32 %v1136, %v1392
      %v1394 = vpop.f32.mrb[0].mxu0
      %v1395 = vpop.f32.mrb[0].mxu0
      %v1396 = vadd.f32 %v1136, %v1395
      %v1397 = vpop.f32.mrb[0].mxu0
      %1398 = vmatprep.mubr.bf16.mxu0 %v518
      %1399 = vmatmul.mubr.bf16.gmra.mrb[0].mxu0 %v517
      %v1400 = vpop.f32.mrb[0].mxu0
      %v1401 = vadd.f32 %v1136, %v1400
      %v1402 = vpop.f32.mrb[0].mxu0
      %v1403 = vpop.f32.mrb[0].mxu0
      %v1404 = vadd.f32 %v1136, %v1403
      %v1405 = vpop.f32.mrb[0].mxu0
      %1406 = vmatprep.mubr.bf16.mxu0 %v521
      %1407 = vmatmul.mubr.bf16.gmra.mrb[0].mxu0 %v520
      %v1408 = vpop.f32.mrb[0].mxu0
      %v1409 = vadd.f32 %v1136, %v1408
      %v1410 = vpop.f32.mrb[0].mxu0
      %v1411 = vpop.f32.mrb[0].mxu0
      %v1412 = vadd.f32 %v1136, %v1411
      %v1413 = vpop.f32.mrb[0].mxu0
      %1414 = vmatprep.mubr.bf16.mxu0 %v524
      %1415 = vmatmul.mubr.bf16.gmra.mrb[0].mxu0 %v523
      %v1416 = vpop.f32.mrb[0].mxu0
      %v1417 = vadd.f32 %v1136, %v1416
      %v1418 = vpop.f32.mrb[0].mxu0
      %v1419 = vpop.f32.mrb[0].mxu0
      %v1420 = vadd.f32 %v1136, %v1419
      %v1421 = vpop.f32.mrb[0].mxu0
      %1422 = vmatprep.mubr.bf16.mxu0 %v527
      %1423 = vmatmul.mubr.bf16.gmra.mrb[0].mxu0 %v526
      %v1424 = vpop.f32.mrb[0].mxu0
      %v1425 = vadd.f32 %v1136, %v1424
      %v1426 = vpop.f32.mrb[0].mxu0
      %v1427 = vpop.f32.mrb[0].mxu0
      %v1428 = vadd.f32 %v1136, %v1427
      %v1429 = vpop.f32.mrb[0].mxu0
      %1430 = vdwg.mxu0
      %1431 = vmatprep.subr.bf16.mxu0 0
      %1432 = vmatpush1.bf16.msra.mxu0 %v1230
      %1433 = vmatprep.subr.bf16.mxu0 0
      %1434 = vmatpush1.bf16.msra.mxu0 %v1231
      %1435 = vmatprep.subr.bf16.mxu0 0
      %1436 = vmatpush1.bf16.msra.mxu0 %v1252
      %1437 = vmatprep.subr.bf16.mxu0 0
      %1438 = vmatpush1.bf16.msra.mxu0 0
      %1439 = vmatprep.subr.bf16.mxu0 0
      %1440 = vmatpush1.bf16.msra.mxu0 0
      %1441 = vmatprep.subr.bf16.mxu0 0
      %1442 = vmatpush1.bf16.msra.mxu0 0
      %1443 = vmatprep.subr.bf16.mxu0 0
      %1444 = vmatpush1.bf16.msra.mxu0 0
      %1445 = vmatprep.subr.bf16.mxu0 0
      %1446 = vmatpush1.bf16.msra.mxu0 0
      %1447 = vmatprep.subr.bf16.mxu0 0
      %1448 = vmatpush1.bf16.msra.mxu0 0
      %1449 = vmatprep.subr.bf16.mxu0 0
      %1450 = vmatpush1.bf16.msra.mxu0 0
      %1451 = vmatprep.subr.bf16.mxu0 0
      %1452 = vmatpush1.bf16.msra.mxu0 0
      %1453 = vmatprep.subr.bf16.mxu0 0
      %1454 = vmatpush1.bf16.msra.mxu0 0
      %1455 = vmatprep.subr.bf16.mxu0 0
      %1456 = vmatpush1.bf16.msra.mxu0 0
      %1457 = vmatprep.subr.bf16.mxu0 0
      %1458 = vmatpush1.bf16.msra.mxu0 0
      %1459 = vmatprep.subr.bf16.mxu0 0
      %1460 = vmatpush1.bf16.msra.mxu0 0
      %1461 = vmatprep.subr.bf16.mxu0 0
      %1462 = vmatpush1.bf16.msra.mxu0 0
      %1463 = vmatprep.mubr.bf16.mxu0 0
      %1464 = vmatmul.mubr.bf16.gmra.mrb[0].mxu0 %v680
      %v1465 = vpop.f32.mrb[0].mxu0
      %v1466 = vadd.f32 %v1289, %v1465
      %v1467 = vpop.f32.mrb[0].mxu0
      %v1468 = vpop.f32.mrb[0].mxu0
      %v1469 = vadd.f32 %v1292, %v1468
      %v1470 = vpop.f32.mrb[0].mxu0
      %1471 = vmatprep.mubr.bf16.mxu0 0
      %1472 = vmatmul.mubr.bf16.gmra.mrb[0].mxu0 %v683
      %v1473 = vpop.f32.mrb[0].mxu0
      %v1474 = vadd.f32 %v1297, %v1473
      %v1475 = vpop.f32.mrb[0].mxu0
      %v1476 = vpop.f32.mrb[0].mxu0
      %v1477 = vadd.f32 %v1300, %v1476
      %v1478 = vpop.f32.mrb[0].mxu0
      %1479 = vmatprep.mubr.bf16.mxu0 0
      %1480 = vmatmul.mubr.bf16.gmra.mrb[0].mxu0 %v686
      %v1481 = vpop.f32.mrb[0].mxu0
      %v1482 = vadd.f32 %v1305, %v1481
      %v1483 = vpop.f32.mrb[0].mxu0
      %v1484 = vpop.f32.mrb[0].mxu0
      %v1485 = vadd.f32 %v1308, %v1484
      %v1486 = vpop.f32.mrb[0].mxu0
      %1487 = vmatprep.mubr.bf16.mxu0 0
      %1488 = vmatmul.mubr.bf16.gmra.mrb[0].mxu0 %v689
      %v1489 = vpop.f32.mrb[0].mxu0
      %v1490 = vadd.f32 %v1313, %v1489
      %v1491 = vpop.f32.mrb[0].mxu0
      %v1492 = vpop.f32.mrb[0].mxu0
      %v1493 = vadd.f32 %v1316, %v1492
      %v1494 = vpop.f32.mrb[0].mxu0
      %1495 = vmatprep.mubr.bf16.mxu0 0
      %1496 = vmatmul.mubr.bf16.gmra.mrb[0].mxu0 %v692
      %v1497 = vpop.f32.mrb[0].mxu0
      %v1498 = vadd.f32 %v1321, %v1497
      %v1499 = vpop.f32.mrb[0].mxu0
      %v1500 = vpop.f32.mrb[0].mxu0
      %v1501 = vadd.f32 %v1324, %v1500
      %v1502 = vpop.f32.mrb[0].mxu0
      %1503 = vmatprep.mubr.bf16.mxu0 0
      %1504 = vmatmul.mubr.bf16.gmra.mrb[0].mxu0 %v695
      %v1505 = vpop.f32.mrb[0].mxu0
      %v1506 = vadd.f32 %v1329, %v1505
      %v1507 = vpop.f32.mrb[0].mxu0
      %v1508 = vpop.f32.mrb[0].mxu0
      %v1509 = vadd.f32 %v1332, %v1508
      %v1510 = vpop.f32.mrb[0].mxu0
      %1511 = vmatprep.mubr.bf16.mxu0 0
      %1512 = vmatmul.mubr.bf16.gmra.mrb[0].mxu0 %v698
      %v1513 = vpop.f32.mrb[0].mxu0
      %v1514 = vadd.f32 %v1337, %v1513
      %v1515 = vpop.f32.mrb[0].mxu0
      %v1516 = vpop.f32.mrb[0].mxu0
      %v1517 = vadd.f32 %v1340, %v1516
      %v1518 = vpop.f32.mrb[0].mxu0
      %1519 = vmatprep.mubr.bf16.mxu0 0
      %1520 = vmatmul.mubr.bf16.gmra.mrb[0].mxu0 %v701
      %v1521 = vpop.f32.mrb[0].mxu0
      %v1522 = vadd.f32 %v1345, %v1521
      %v1523 = vpop.f32.mrb[0].mxu0
      %v1524 = vpop.f32.mrb[0].mxu0
      %v1525 = vadd.f32 %v1348, %v1524
      %v1526 = vpop.f32.mrb[0].mxu0
      %1527 = vmatprep.mubr.bf16.mxu0 0
      %1528 = vmatmul.mubr.bf16.gmra.mrb[0].mxu0 %v704
      %v1529 = vpop.f32.mrb[0].mxu0
      %v1530 = vadd.f32 %v1353, %v1529
      %v1531 = vpop.f32.mrb[0].mxu0
      %v1532 = vpop.f32.mrb[0].mxu0
      %v1533 = vadd.f32 %v1356, %v1532
      %v1534 = vpop.f32.mrb[0].mxu0
      %1535 = vmatprep.mubr.bf16.mxu0 0
      %1536 = vmatmul.mubr.bf16.gmra.mrb[0].mxu0 %v707
      %v1537 = vpop.f32.mrb[0].mxu0
      %v1538 = vadd.f32 %v1361, %v1537
      %v1539 = vpop.f32.mrb[0].mxu0
      %v1540 = vpop.f32.mrb[0].mxu0
      %v1541 = vadd.f32 %v1364, %v1540
      %v1542 = vpop.f32.mrb[0].mxu0
      %1543 = vmatprep.mubr.bf16.mxu0 0
      %1544 = vmatmul.mubr.bf16.gmra.mrb[0].mxu0 %v710
      %v1545 = vpop.f32.mrb[0].mxu0
      %v1546 = vadd.f32 %v1369, %v1545
      %v1547 = vpop.f32.mrb[0].mxu0
      %v1548 = vpop.f32.mrb[0].mxu0
      %v1549 = vadd.f32 %v1372, %v1548
      %v1550 = vpop.f32.mrb[0].mxu0
      %1551 = vmatprep.mubr.bf16.mxu0 0
      %1552 = vmatmul.mubr.bf16.gmra.mrb[0].mxu0 %v713
      %v1553 = vpop.f32.mrb[0].mxu0
      %v1554 = vadd.f32 %v1377, %v1553
      %v1555 = vpop.f32.mrb[0].mxu0
      %v1556 = vpop.f32.mrb[0].mxu0
      %v1557 = vadd.f32 %v1380, %v1556
      %v1558 = vpop.f32.mrb[0].mxu0
      %1559 = vmatprep.mubr.bf16.mxu0 0
      %1560 = vmatmul.mubr.bf16.gmra.mrb[0].mxu0 %v716
      %v1561 = vpop.f32.mrb[0].mxu0
      %v1562 = vadd.f32 %v1385, %v1561
      %v1563 = vpop.f32.mrb[0].mxu0
      %v1564 = vpop.f32.mrb[0].mxu0
      %v1565 = vadd.f32 %v1388, %v1564
      %v1566 = vpop.f32.mrb[0].mxu0
      %1567 = vmatprep.mubr.bf16.mxu0 0
      %1568 = vmatmul.mubr.bf16.gmra.mrb[0].mxu0 %v719
      %v1569 = vpop.f32.mrb[0].mxu0
      %v1570 = vadd.f32 %v1393, %v1569
      %v1571 = vpop.f32.mrb[0].mxu0
      %v1572 = vpop.f32.mrb[0].mxu0
      %v1573 = vadd.f32 %v1396, %v1572
      %v1574 = vpop.f32.mrb[0].mxu0
      %1575 = vmatprep.mubr.bf16.mxu0 0
      %1576 = vmatmul.mubr.bf16.gmra.mrb[0].mxu0 %v722
      %v1577 = vpop.f32.mrb[0].mxu0
      %v1578 = vadd.f32 %v1401, %v1577
      %v1579 = vpop.f32.mrb[0].mxu0
      %v1580 = vpop.f32.mrb[0].mxu0
      %v1581 = vadd.f32 %v1404, %v1580
      %v1582 = vpop.f32.mrb[0].mxu0
      %1583 = vmatprep.mubr.bf16.mxu0 0
      %1584 = vmatmul.mubr.bf16.gmra.mrb[0].mxu0 %v725
      %v1585 = vpop.f32.mrb[0].mxu0
      %v1586 = vadd.f32 %v1409, %v1585
      %v1587 = vpop.f32.mrb[0].mxu0
      %v1588 = vpop.f32.mrb[0].mxu0
      %v1589 = vadd.f32 %v1412, %v1588
      %v1590 = vpop.f32.mrb[0].mxu0
      %1591 = vmatprep.mubr.bf16.mxu0 0
      %1592 = vmatmul.mubr.bf16.gmra.mrb[0].mxu0 %v728
      %v1593 = vpop.f32.mrb[0].mxu0
      %v1594 = vadd.f32 %v1417, %v1593
      %v1595 = vpop.f32.mrb[0].mxu0
      %v1596 = vpop.f32.mrb[0].mxu0
      %v1597 = vadd.f32 %v1420, %v1596
      %v1598 = vpop.f32.mrb[0].mxu0
      %1599 = vmatprep.mubr.bf16.mxu0 0
      %1600 = vmatmul.mubr.bf16.gmra.mrb[0].mxu0 %v731
      %v1601 = vpop.f32.mrb[0].mxu0
      %v1602 = vadd.f32 %v1425, %v1601
      %v1603 = vpop.f32.mrb[0].mxu0
      %v1604 = vpop.f32.mrb[0].mxu0
      %v1605 = vadd.f32 %v1428, %v1604
      %v1606 = vpop.f32.mrb[0].mxu0
      %1607 = vdwg.mxu0
      %v1608 = vmax.f32 %v949, %v1466
      %v1609 = vmax.f32 %v952, %v1469
      %v1610 = vmax.f32 %v957, %v1474
      %v1611 = vmax.f32 %v960, %v1477
      %v1612 = vmax.f32 %v965, %v1482
      %v1613 = vmax.f32 %v968, %v1485
      %v1614 = vmax.f32 %v973, %v1490
      %v1615 = vmax.f32 %v976, %v1493
      %v1616 = vmax.f32 %v981, %v1498
      %v1617 = vmax.f32 %v984, %v1501
      %v1618 = vmax.f32 %v989, %v1506
      %v1619 = vmax.f32 %v992, %v1509
      %v1620 = vmax.f32 %v997, %v1514
      %v1621 = vmax.f32 %v1000, %v1517
      %v1622 = vmax.f32 %v1005, %v1522
      %v1623 = vmax.f32 %v1008, %v1525
      %v1624 = vmax.f32 %v1013, %v1530
      %v1625 = vmax.f32 %v1016, %v1533
      %v1626 = vmax.f32 %v1021, %v1538
      %v1627 = vmax.f32 %v1024, %v1541
      %v1628 = vmax.f32 %v1029, %v1546
      %v1629 = vmax.f32 %v1032, %v1549
      %v1630 = vmax.f32 %v1037, %v1554
      %v1631 = vmax.f32 %v1040, %v1557
      %v1632 = vmax.f32 %v1045, %v1562
      %v1633 = vmax.f32 %v1048, %v1565
      %v1634 = vmax.f32 %v1053, %v1570
      %v1635 = vmax.f32 %v1056, %v1573
      %v1636 = vmax.f32 %v1061, %v1578
      %v1637 = vmax.f32 %v1064, %v1581
      %v1638 = vmax.f32 %v1069, %v1586
      %v1639 = vmax.f32 %v1072, %v1589
      %v1640 = vmax.f32 %v1077, %v1594
      %v1641 = vmax.f32 %v1080, %v1597
      %v1642 = vmax.f32 %v1085, %v1602
      %v1643 = vmax.f32 %v1088, %v1605
      %s1644 = scalar_lea.vmem %s1, 304
      %v1645 = vld [vmem:[%s1644] sm:$0xf]
      %v1646 = vld [vmem:[%s1644 + $0x4] sm:$0xf]
      %v1647 = vld [vmem:[%s1644 + $0x8] sm:$0xf]
      %v1648 = vld [vmem:[%s1644 + $0xc] sm:$0xf]
      %v1649 = vld [vmem:[%s1644 + $0x10] sm:$0xf]
      %v1650 = vld [vmem:[%s1644 + $0x14] sm:$0xf]
      %v1651 = vld [vmem:[%s1644 + $0x18] sm:$0xf]
      %v1652 = vld [vmem:[%s1644 + $0x1c] sm:$0xf]
      %v1653 = vld [vmem:[%s1644 + $0x20] sm:$0xf]
      %v1654 = vld [vmem:[%s1644 + $0x24] sm:$0xf]
      %v1655 = vld [vmem:[%s1644 + $0x28] sm:$0xf]
      %v1656 = vld [vmem:[%s1644 + $0x2c] sm:$0xf]
      %v1657 = vld [vmem:[%s1644 + $0x30] sm:$0xf]
      %v1658 = vld [vmem:[%s1644 + $0x34] sm:$0xf]
      %v1659 = vld [vmem:[%s1644 + $0x38] sm:$0xf]
      %v1660 = vld [vmem:[%s1644 + $0x3c] sm:$0xf]
      %v1661 = vld [vmem:[%s1644 + $0x40] sm:$0xf]
      %v1662 = vld [vmem:[%s1644 + $0x44] sm:$0xf]
      %v1663 = vld [vmem:[%s1644 + $0x48] sm:$0xf]
      %v1664 = vld [vmem:[%s1644 + $0x4c] sm:$0xf]
      %v1665 = vld [vmem:[%s1644 + $0x50] sm:$0xf]
      %v1666 = vld [vmem:[%s1644 + $0x54] sm:$0xf]
      %v1667 = vld [vmem:[%s1644 + $0x58] sm:$0xf]
      %v1668 = vld [vmem:[%s1644 + $0x5c] sm:$0xf]
      %v1669 = vld [vmem:[%s1644 + $0x60] sm:$0xf]
      %v1670 = vld [vmem:[%s1644 + $0x64] sm:$0xf]
      %v1671 = vld [vmem:[%s1644 + $0x68] sm:$0xf]
      %v1672 = vld [vmem:[%s1644 + $0x6c] sm:$0xf]
      %v1673 = vld [vmem:[%s1644 + $0x70] sm:$0xf]
      %v1674 = vld [vmem:[%s1644 + $0x74] sm:$0xf]
      %v1675 = vld [vmem:[%s1644 + $0x78] sm:$0xf]
      %v1676 = vld [vmem:[%s1644 + $0x7c] sm:$0xf]
      %v1677 = vld [vmem:[%s1644 + $0x80] sm:$0xf]
      %v1678 = vld [vmem:[%s1644 + $0x84] sm:$0xf]
      %v1679 = vld [vmem:[%s1644 + $0x88] sm:$0xf]
      %v1680 = vld [vmem:[%s1644 + $0x8c] sm:$0xf]
      %v1681 = vld [vmem:[%s1644 + $0x90] sm:$0xf]
      %v1682 = vld [vmem:[%s1644 + $0x94] sm:$0x3]
      %s1683 = scalar_lea.vmem %s2, 2
      %v1684 = vld [vmem:[%s1683] sm:$0x1]
      %v1686 = vlaneseq
      %v1687 = vshrl.u32 %v1686, 7
      %v1688 = vsub.s32 0, %v1687
      %v1689 = vrot.slane %v1684, %v1688
      %v1729 = vunpack.c.l.b16 %v1645
      %v1730 = vunpack.c.l.b16 %v1646
      %v1731 = vunpack.c.l.b16 %v1647
      %v1732 = vunpack.c.l.b16 %v1648
      %v1733 = vunpack.c.l.b16 %v1649
      %v1734 = vunpack.c.l.b16 %v1650
      %v1735 = vunpack.c.l.b16 %v1651
      %v1736 = vunpack.c.l.b16 %v1652
      %v1737 = vunpack.c.l.b16 %v1653
      %v1738 = vunpack.c.l.b16 %v1654
      %v1739 = vunpack.c.l.b16 %v1655
      %v1740 = vunpack.c.l.b16 %v1656
      %v1741 = vunpack.c.l.b16 %v1657
      %v1742 = vunpack.c.l.b16 %v1658
      %v1743 = vunpack.c.l.b16 %v1659
      %v1744 = vunpack.c.l.b16 %v1660
      %v1745 = vunpack.c.l.b16 %v1661
      %v1746 = vunpack.c.l.b16 %v1662
      %v1747 = vunpack.c.l.b16 %v1663
      %v1748 = vunpack.c.l.b16 %v1664
      %v1749 = vunpack.c.l.b16 %v1665
      %v1750 = vunpack.c.l.b16 %v1666
      %v1751 = vunpack.c.l.b16 %v1667
      %v1752 = vunpack.c.l.b16 %v1668
      %v1753 = vunpack.c.l.b16 %v1669
      %v1754 = vunpack.c.l.b16 %v1670
      %v1755 = vunpack.c.l.b16 %v1671
      %v1756 = vunpack.c.l.b16 %v1672
      %v1757 = vunpack.c.l.b16 %v1673
      %v1758 = vunpack.c.l.b16 %v1674
      %v1759 = vunpack.c.l.b16 %v1675
      %v1760 = vunpack.c.l.b16 %v1676
      %v1761 = vunpack.c.l.b16 %v1677
      %v1762 = vunpack.c.l.b16 %v1678
      %v1763 = vunpack.c.l.b16 %v1679
      %v1764 = vunpack.c.l.b16 %v1680
      %v1765 = vunpack.c.l.b16 %v1681
      %v1766 = vunpack.c.l.b16 %v1682
      %v1767 = vpack.c.b16 %v1730, %v1729
      %v1768 = vpack.c.b16 %v1732, %v1731
      %v1769 = vpack.c.b16 %v1734, %v1733
      %v1770 = vpack.c.b16 %v1736, %v1735
      %v1771 = vpack.c.b16 %v1738, %v1737
      %v1772 = vpack.c.b16 %v1740, %v1739
      %v1773 = vpack.c.b16 %v1742, %v1741
      %v1774 = vpack.c.b16 %v1744, %v1743
      %v1775 = vpack.c.b16 %v1746, %v1745
      %v1776 = vpack.c.b16 %v1748, %v1747
      %v1777 = vpack.c.b16 %v1750, %v1749
      %v1778 = vpack.c.b16 %v1752, %v1751
      %v1779 = vpack.c.b16 %v1754, %v1753
      %v1780 = vpack.c.b16 %v1756, %v1755
      %v1781 = vpack.c.b16 %v1758, %v1757
      %v1782 = vpack.c.b16 %v1760, %v1759
      %v1783 = vpack.c.b16 %v1762, %v1761
      %v1784 = vpack.c.b16 %v1764, %v1763
      %v1785 = vpack.c.b16 %v1766, %v1765
      %v1805 = vsel %vm733, %v1785, 0
      %1807 = vmatprep.subr.bf16.mxu0 0
      %1808 = vmatpush1.bf16.msra.mxu0 %v1767
      %1809 = vmatprep.subr.bf16.mxu0 0
      %1810 = vmatpush1.bf16.msra.mxu0 %v1768
      %1811 = vmatprep.subr.bf16.mxu0 0
      %1812 = vmatpush1.bf16.msra.mxu0 %v1769
      %1813 = vmatprep.subr.bf16.mxu0 0
      %1814 = vmatpush1.bf16.msra.mxu0 %v1770
      %1815 = vmatprep.subr.bf16.mxu0 0
      %1816 = vmatpush1.bf16.msra.mxu0 %v1771
      %1817 = vmatprep.subr.bf16.mxu0 0
      %1818 = vmatpush1.bf16.msra.mxu0 %v1772
      %1819 = vmatprep.subr.bf16.mxu0 0
      %1820 = vmatpush1.bf16.msra.mxu0 %v1773
      %1821 = vmatprep.subr.bf16.mxu0 0
      %1822 = vmatpush1.bf16.msra.mxu0 %v1774
      %1823 = vmatprep.subr.bf16.mxu0 0
      %1824 = vmatpush1.bf16.msra.mxu0 %v1775
      %1825 = vmatprep.subr.bf16.mxu0 0
      %1826 = vmatpush1.bf16.msra.mxu0 %v1776
      %1827 = vmatprep.subr.bf16.mxu0 0
      %1828 = vmatpush1.bf16.msra.mxu0 %v1777
      %1829 = vmatprep.subr.bf16.mxu0 0
      %1830 = vmatpush1.bf16.msra.mxu0 %v1778
      %1831 = vmatprep.subr.bf16.mxu0 0
      %1832 = vmatpush1.bf16.msra.mxu0 %v1779
      %1833 = vmatprep.subr.bf16.mxu0 0
      %1834 = vmatpush1.bf16.msra.mxu0 %v1780
      %1835 = vmatprep.subr.bf16.mxu0 0
      %1836 = vmatpush1.bf16.msra.mxu0 %v1781
      %1837 = vmatprep.subr.bf16.mxu0 0
      %1838 = vmatpush1.bf16.msra.mxu0 %v1782
      %1839 = vmatprep.mubr.bf16.mxu0 %v476
      %1840 = vmatmul.mubr.bf16.gmra.mrb[0].mxu0 %v475
      %v1841 = vpop.f32.mrb[0].mxu0
      %v1842 = vadd.f32 %v1689, %v1841
      %v1843 = vpop.f32.mrb[0].mxu0
      %v1844 = vpop.f32.mrb[0].mxu0
      %v1845 = vadd.f32 %v1689, %v1844
      %v1846 = vpop.f32.mrb[0].mxu0
      %1847 = vmatprep.mubr.bf16.mxu0 %v479
      %1848 = vmatmul.mubr.bf16.gmra.mrb[0].mxu0 %v478
      %v1849 = vpop.f32.mrb[0].mxu0
      %v1850 = vadd.f32 %v1689, %v1849
      %v1851 = vpop.f32.mrb[0].mxu0
      %v1852 = vpop.f32.mrb[0].mxu0
      %v1853 = vadd.f32 %v1689, %v1852
      %v1854 = vpop.f32.mrb[0].mxu0
      %1855 = vmatprep.mubr.bf16.mxu0 %v482
      %1856 = vmatmul.mubr.bf16.gmra.mrb[0].mxu0 %v481
      %v1857 = vpop.f32.mrb[0].mxu0
      %v1858 = vadd.f32 %v1689, %v1857
      %v1859 = vpop.f32.mrb[0].mxu0
      %v1860 = vpop.f32.mrb[0].mxu0
      %v1861 = vadd.f32 %v1689, %v1860
      %v1862 = vpop.f32.mrb[0].mxu0
      %1863 = vmatprep.mubr.bf16.mxu0 %v485
      %1864 = vmatmul.mubr.bf16.gmra.mrb[0].mxu0 %v484
      %v1865 = vpop.f32.mrb[0].mxu0
      %v1866 = vadd.f32 %v1689, %v1865
      %v1867 = vpop.f32.mrb[0].mxu0
      %v1868 = vpop.f32.mrb[0].mxu0
      %v1869 = vadd.f32 %v1689, %v1868
      %v1870 = vpop.f32.mrb[0].mxu0
      %1871 = vmatprep.mubr.bf16.mxu0 %v488
      %1872 = vmatmul.mubr.bf16.gmra.mrb[0].mxu0 %v487
      %v1873 = vpop.f32.mrb[0].mxu0
      %v1874 = vadd.f32 %v1689, %v1873
      %v1875 = vpop.f32.mrb[0].mxu0
      %v1876 = vpop.f32.mrb[0].mxu0
      %v1877 = vadd.f32 %v1689, %v1876
      %v1878 = vpop.f32.mrb[0].mxu0
      %1879 = vmatprep.mubr.bf16.mxu0 %v491
      %1880 = vmatmul.mubr.bf16.gmra.mrb[0].mxu0 %v490
      %v1881 = vpop.f32.mrb[0].mxu0
      %v1882 = vadd.f32 %v1689, %v1881
      %v1883 = vpop.f32.mrb[0].mxu0
      %v1884 = vpop.f32.mrb[0].mxu0
      %v1885 = vadd.f32 %v1689, %v1884
      %v1886 = vpop.f32.mrb[0].mxu0
      %1887 = vmatprep.mubr.bf16.mxu0 %v494
      %1888 = vmatmul.mubr.bf16.gmra.mrb[0].mxu0 %v493
      %v1889 = vpop.f32.mrb[0].mxu0
      %v1890 = vadd.f32 %v1689, %v1889
      %v1891 = vpop.f32.mrb[0].mxu0
      %v1892 = vpop.f32.mrb[0].mxu0
      %v1893 = vadd.f32 %v1689, %v1892
      %v1894 = vpop.f32.mrb[0].mxu0
      %1895 = vmatprep.mubr.bf16.mxu0 %v497
      %1896 = vmatmul.mubr.bf16.gmra.mrb[0].mxu0 %v496
      %v1897 = vpop.f32.mrb[0].mxu0
      %v1898 = vadd.f32 %v1689, %v1897
      %v1899 = vpop.f32.mrb[0].mxu0
      %v1900 = vpop.f32.mrb[0].mxu0
      %v1901 = vadd.f32 %v1689, %v1900
      %v1902 = vpop.f32.mrb[0].mxu0
      %1903 = vmatprep.mubr.bf16.mxu0 %v500
      %1904 = vmatmul.mubr.bf16.gmra.mrb[0].mxu0 %v499
      %v1905 = vpop.f32.mrb[0].mxu0
      %v1906 = vadd.f32 %v1689, %v1905
      %v1907 = vpop.f32.mrb[0].mxu0
      %v1908 = vpop.f32.mrb[0].mxu0
      %v1909 = vadd.f32 %v1689, %v1908
      %v1910 = vpop.f32.mrb[0].mxu0
      %1911 = vmatprep.mubr.bf16.mxu0 %v503
      %1912 = vmatmul.mubr.bf16.gmra.mrb[0].mxu0 %v502
      %v1913 = vpop.f32.mrb[0].mxu0
      %v1914 = vadd.f32 %v1689, %v1913
      %v1915 = vpop.f32.mrb[0].mxu0
      %v1916 = vpop.f32.mrb[0].mxu0
      %v1917 = vadd.f32 %v1689, %v1916
      %v1918 = vpop.f32.mrb[0].mxu0
      %1919 = vmatprep.mubr.bf16.mxu0 %v506
      %1920 = vmatmul.mubr.bf16.gmra.mrb[0].mxu0 %v505
      %v1921 = vpop.f32.mrb[0].mxu0
      %v1922 = vadd.f32 %v1689, %v1921
      %v1923 = vpop.f32.mrb[0].mxu0
      %v1924 = vpop.f32.mrb[0].mxu0
      %v1925 = vadd.f32 %v1689, %v1924
      %v1926 = vpop.f32.mrb[0].mxu0
      %1927 = vmatprep.mubr.bf16.mxu0 %v509
      %1928 = vmatmul.mubr.bf16.gmra.mrb[0].mxu0 %v508
      %v1929 = vpop.f32.mrb[0].mxu0
      %v1930 = vadd.f32 %v1689, %v1929
      %v1931 = vpop.f32.mrb[0].mxu0
      %v1932 = vpop.f32.mrb[0].mxu0
      %v1933 = vadd.f32 %v1689, %v1932
      %v1934 = vpop.f32.mrb[0].mxu0
      %1935 = vmatprep.mubr.bf16.mxu0 %v512
      %1936 = vmatmul.mubr.bf16.gmra.mrb[0].mxu0 %v511
      %v1937 = vpop.f32.mrb[0].mxu0
      %v1938 = vadd.f32 %v1689, %v1937
      %v1939 = vpop.f32.mrb[0].mxu0
      %v1940 = vpop.f32.mrb[0].mxu0
      %v1941 = vadd.f32 %v1689, %v1940
      %v1942 = vpop.f32.mrb[0].mxu0
      %1943 = vmatprep.mubr.bf16.mxu0 %v515
      %1944 = vmatmul.mubr.bf16.gmra.mrb[0].mxu0 %v514
      %v1945 = vpop.f32.mrb[0].mxu0
      %v1946 = vadd.f32 %v1689, %v1945
      %v1947 = vpop.f32.mrb[0].mxu0
      %v1948 = vpop.f32.mrb[0].mxu0
      %v1949 = vadd.f32 %v1689, %v1948
      %v1950 = vpop.f32.mrb[0].mxu0
      %1951 = vmatprep.mubr.bf16.mxu0 %v518
      %1952 = vmatmul.mubr.bf16.gmra.mrb[0].mxu0 %v517
      %v1953 = vpop.f32.mrb[0].mxu0
      %v1954 = vadd.f32 %v1689, %v1953
      %v1955 = vpop.f32.mrb[0].mxu0
      %v1956 = vpop.f32.mrb[0].mxu0
      %v1957 = vadd.f32 %v1689, %v1956
      %v1958 = vpop.f32.mrb[0].mxu0
      %1959 = vmatprep.mubr.bf16.mxu0 %v521
      %1960 = vmatmul.mubr.bf16.gmra.mrb[0].mxu0 %v520
      %v1961 = vpop.f32.mrb[0].mxu0
      %v1962 = vadd.f32 %v1689, %v1961
      %v1963 = vpop.f32.mrb[0].mxu0
      %v1964 = vpop.f32.mrb[0].mxu0
      %v1965 = vadd.f32 %v1689, %v1964
      %v1966 = vpop.f32.mrb[0].mxu0
      %1967 = vmatprep.mubr.bf16.mxu0 %v524
      %1968 = vmatmul.mubr.bf16.gmra.mrb[0].mxu0 %v523
      %v1969 = vpop.f32.mrb[0].mxu0
      %v1970 = vadd.f32 %v1689, %v1969
      %v1971 = vpop.f32.mrb[0].mxu0
      %v1972 = vpop.f32.mrb[0].mxu0
      %v1973 = vadd.f32 %v1689, %v1972
      %v1974 = vpop.f32.mrb[0].mxu0
      %1975 = vmatprep.mubr.bf16.mxu0 %v527
      %1976 = vmatmul.mubr.bf16.gmra.mrb[0].mxu0 %v526
      %v1977 = vpop.f32.mrb[0].mxu0
      %v1978 = vadd.f32 %v1689, %v1977
      %v1979 = vpop.f32.mrb[0].mxu0
      %v1980 = vpop.f32.mrb[0].mxu0
      %v1981 = vadd.f32 %v1689, %v1980
      %v1982 = vpop.f32.mrb[0].mxu0
      %1983 = vdwg.mxu0
      %1984 = vmatprep.subr.bf16.mxu0 0
      %1985 = vmatpush1.bf16.msra.mxu0 %v1783
      %1986 = vmatprep.subr.bf16.mxu0 0
      %1987 = vmatpush1.bf16.msra.mxu0 %v1784
      %1988 = vmatprep.subr.bf16.mxu0 0
      %1989 = vmatpush1.bf16.msra.mxu0 %v1805
      %1990 = vmatprep.subr.bf16.mxu0 0
      %1991 = vmatpush1.bf16.msra.mxu0 0
      %1992 = vmatprep.subr.bf16.mxu0 0
      %1993 = vmatpush1.bf16.msra.mxu0 0
      %1994 = vmatprep.subr.bf16.mxu0 0
      %1995 = vmatpush1.bf16.msra.mxu0 0
      %1996 = vmatprep.subr.bf16.mxu0 0
      %1997 = vmatpush1.bf16.msra.mxu0 0
      %1998 = vmatprep.subr.bf16.mxu0 0
      %1999 = vmatpush1.bf16.msra.mxu0 0
      %2000 = vmatprep.subr.bf16.mxu0 0
      %2001 = vmatpush1.bf16.msra.mxu0 0
      %2002 = vmatprep.subr.bf16.mxu0 0
      %2003 = vmatpush1.bf16.msra.mxu0 0
      %2004 = vmatprep.subr.bf16.mxu0 0
      %2005 = vmatpush1.bf16.msra.mxu0 0
      %2006 = vmatprep.subr.bf16.mxu0 0
      %2007 = vmatpush1.bf16.msra.mxu0 0
      %2008 = vmatprep.subr.bf16.mxu0 0
      %2009 = vmatpush1.bf16.msra.mxu0 0
      %2010 = vmatprep.subr.bf16.mxu0 0
      %2011 = vmatpush1.bf16.msra.mxu0 0
      %2012 = vmatprep.subr.bf16.mxu0 0
      %2013 = vmatpush1.bf16.msra.mxu0 0
      %2014 = vmatprep.subr.bf16.mxu0 0
      %2015 = vmatpush1.bf16.msra.mxu0 0
      %2016 = vmatprep.mubr.bf16.mxu0 0
      %2017 = vmatmul.mubr.bf16.gmra.mrb[0].mxu0 %v680
      %v2018 = vpop.f32.mrb[0].mxu0
      %v2019 = vadd.f32 %v1842, %v2018
      %v2020 = vpop.f32.mrb[0].mxu0
      %v2021 = vpop.f32.mrb[0].mxu0
      %v2022 = vadd.f32 %v1845, %v2021
      %v2023 = vpop.f32.mrb[0].mxu0
      %2024 = vmatprep.mubr.bf16.mxu0 0
      %2025 = vmatmul.mubr.bf16.gmra.mrb[0].mxu0 %v683
      %v2026 = vpop.f32.mrb[0].mxu0
      %v2027 = vadd.f32 %v1850, %v2026
      %v2028 = vpop.f32.mrb[0].mxu0
      %v2029 = vpop.f32.mrb[0].mxu0
      %v2030 = vadd.f32 %v1853, %v2029
      %v2031 = vpop.f32.mrb[0].mxu0
      %2032 = vmatprep.mubr.bf16.mxu0 0
      %2033 = vmatmul.mubr.bf16.gmra.mrb[0].mxu0 %v686
      %v2034 = vpop.f32.mrb[0].mxu0
      %v2035 = vadd.f32 %v1858, %v2034
      %v2036 = vpop.f32.mrb[0].mxu0
      %v2037 = vpop.f32.mrb[0].mxu0
      %v2038 = vadd.f32 %v1861, %v2037
      %v2039 = vpop.f32.mrb[0].mxu0
      %2040 = vmatprep.mubr.bf16.mxu0 0
      %2041 = vmatmul.mubr.bf16.gmra.mrb[0].mxu0 %v689
      %v2042 = vpop.f32.mrb[0].mxu0
      %v2043 = vadd.f32 %v1866, %v2042
      %v2044 = vpop.f32.mrb[0].mxu0
      %v2045 = vpop.f32.mrb[0].mxu0
      %v2046 = vadd.f32 %v1869, %v2045
      %v2047 = vpop.f32.mrb[0].mxu0
      %2048 = vmatprep.mubr.bf16.mxu0 0
      %2049 = vmatmul.mubr.bf16.gmra.mrb[0].mxu0 %v692
      %v2050 = vpop.f32.mrb[0].mxu0
      %v2051 = vadd.f32 %v1874, %v2050
      %v2052 = vpop.f32.mrb[0].mxu0
      %v2053 = vpop.f32.mrb[0].mxu0
      %v2054 = vadd.f32 %v1877, %v2053
      %v2055 = vpop.f32.mrb[0].mxu0
      %2056 = vmatprep.mubr.bf16.mxu0 0
      %2057 = vmatmul.mubr.bf16.gmra.mrb[0].mxu0 %v695
      %v2058 = vpop.f32.mrb[0].mxu0
      %v2059 = vadd.f32 %v1882, %v2058
      %v2060 = vpop.f32.mrb[0].mxu0
      %v2061 = vpop.f32.mrb[0].mxu0
      %v2062 = vadd.f32 %v1885, %v2061
      %v2063 = vpop.f32.mrb[0].mxu0
      %2064 = vmatprep.mubr.bf16.mxu0 0
      %2065 = vmatmul.mubr.bf16.gmra.mrb[0].mxu0 %v698
      %v2066 = vpop.f32.mrb[0].mxu0
      %v2067 = vadd.f32 %v1890, %v2066
      %v2068 = vpop.f32.mrb[0].mxu0
      %v2069 = vpop.f32.mrb[0].mxu0
      %v2070 = vadd.f32 %v1893, %v2069
      %v2071 = vpop.f32.mrb[0].mxu0
      %2072 = vmatprep.mubr.bf16.mxu0 0
      %2073 = vmatmul.mubr.bf16.gmra.mrb[0].mxu0 %v701
      %v2074 = vpop.f32.mrb[0].mxu0
      %v2075 = vadd.f32 %v1898, %v2074
      %v2076 = vpop.f32.mrb[0].mxu0
      %v2077 = vpop.f32.mrb[0].mxu0
      %v2078 = vadd.f32 %v1901, %v2077
      %v2079 = vpop.f32.mrb[0].mxu0
      %2080 = vmatprep.mubr.bf16.mxu0 0
      %2081 = vmatmul.mubr.bf16.gmra.mrb[0].mxu0 %v704
      %v2082 = vpop.f32.mrb[0].mxu0
      %v2083 = vadd.f32 %v1906, %v2082
      %v2084 = vpop.f32.mrb[0].mxu0
      %v2085 = vpop.f32.mrb[0].mxu0
      %v2086 = vadd.f32 %v1909, %v2085
      %v2087 = vpop.f32.mrb[0].mxu0
      %2088 = vmatprep.mubr.bf16.mxu0 0
      %2089 = vmatmul.mubr.bf16.gmra.mrb[0].mxu0 %v707
      %v2090 = vpop.f32.mrb[0].mxu0
      %v2091 = vadd.f32 %v1914, %v2090
      %v2092 = vpop.f32.mrb[0].mxu0
      %v2093 = vpop.f32.mrb[0].mxu0
      %v2094 = vadd.f32 %v1917, %v2093
      %v2095 = vpop.f32.mrb[0].mxu0
      %2096 = vmatprep.mubr.bf16.mxu0 0
      %2097 = vmatmul.mubr.bf16.gmra.mrb[0].mxu0 %v710
      %v2098 = vpop.f32.mrb[0].mxu0
      %v2099 = vadd.f32 %v1922, %v2098
      %v2100 = vpop.f32.mrb[0].mxu0
      %v2101 = vpop.f32.mrb[0].mxu0
      %v2102 = vadd.f32 %v1925, %v2101
      %v2103 = vpop.f32.mrb[0].mxu0
      %2104 = vmatprep.mubr.bf16.mxu0 0
      %2105 = vmatmul.mubr.bf16.gmra.mrb[0].mxu0 %v713
      %v2106 = vpop.f32.mrb[0].mxu0
      %v2107 = vadd.f32 %v1930, %v2106
      %v2108 = vpop.f32.mrb[0].mxu0
      %v2109 = vpop.f32.mrb[0].mxu0
      %v2110 = vadd.f32 %v1933, %v2109
      %v2111 = vpop.f32.mrb[0].mxu0
      %2112 = vmatprep.mubr.bf16.mxu0 0
      %2113 = vmatmul.mubr.bf16.gmra.mrb[0].mxu0 %v716
      %v2114 = vpop.f32.mrb[0].mxu0
      %v2115 = vadd.f32 %v1938, %v2114
      %v2116 = vpop.f32.mrb[0].mxu0
      %v2117 = vpop.f32.mrb[0].mxu0
      %v2118 = vadd.f32 %v1941, %v2117
      %v2119 = vpop.f32.mrb[0].mxu0
      %2120 = vmatprep.mubr.bf16.mxu0 0
      %2121 = vmatmul.mubr.bf16.gmra.mrb[0].mxu0 %v719
      %v2122 = vpop.f32.mrb[0].mxu0
      %v2123 = vadd.f32 %v1946, %v2122
      %v2124 = vpop.f32.mrb[0].mxu0
      %v2125 = vpop.f32.mrb[0].mxu0
      %v2126 = vadd.f32 %v1949, %v2125
      %v2127 = vpop.f32.mrb[0].mxu0
      %2128 = vmatprep.mubr.bf16.mxu0 0
      %2129 = vmatmul.mubr.bf16.gmra.mrb[0].mxu0 %v722
      %v2130 = vpop.f32.mrb[0].mxu0
      %v2131 = vadd.f32 %v1954, %v2130
      %v2132 = vpop.f32.mrb[0].mxu0
      %v2133 = vpop.f32.mrb[0].mxu0
      %v2134 = vadd.f32 %v1957, %v2133
      %v2135 = vpop.f32.mrb[0].mxu0
      %2136 = vmatprep.mubr.bf16.mxu0 0
      %2137 = vmatmul.mubr.bf16.gmra.mrb[0].mxu0 %v725
      %v2138 = vpop.f32.mrb[0].mxu0
      %v2139 = vadd.f32 %v1962, %v2138
      %v2140 = vpop.f32.mrb[0].mxu0
      %v2141 = vpop.f32.mrb[0].mxu0
      %v2142 = vadd.f32 %v1965, %v2141
      %v2143 = vpop.f32.mrb[0].mxu0
      %2144 = vmatprep.mubr.bf16.mxu0 0
      %2145 = vmatmul.mubr.bf16.gmra.mrb[0].mxu0 %v728
      %v2146 = vpop.f32.mrb[0].mxu0
      %v2147 = vadd.f32 %v1970, %v2146
      %v2148 = vpop.f32.mrb[0].mxu0
      %v2149 = vpop.f32.mrb[0].mxu0
      %v2150 = vadd.f32 %v1973, %v2149
      %v2151 = vpop.f32.mrb[0].mxu0
      %2152 = vmatprep.mubr.bf16.mxu0 0
      %2153 = vmatmul.mubr.bf16.gmra.mrb[0].mxu0 %v731
      %v2154 = vpop.f32.mrb[0].mxu0
      %v2155 = vadd.f32 %v1978, %v2154
      %v2156 = vpop.f32.mrb[0].mxu0
      %v2157 = vpop.f32.mrb[0].mxu0
      %v2158 = vadd.f32 %v1981, %v2157
      %v2159 = vpop.f32.mrb[0].mxu0
      %2160 = vdwg.mxu0
      %v2161 = vmax.f32 %v1608, %v2019
      %v2162 = vmax.f32 %v1609, %v2022
      %v2163 = vmax.f32 %v1610, %v2027
      %v2164 = vmax.f32 %v1611, %v2030
      %v2165 = vmax.f32 %v1612, %v2035
      %v2166 = vmax.f32 %v1613, %v2038
      %v2167 = vmax.f32 %v1614, %v2043
      %v2168 = vmax.f32 %v1615, %v2046
      %v2169 = vmax.f32 %v1616, %v2051
      %v2170 = vmax.f32 %v1617, %v2054
      %v2171 = vmax.f32 %v1618, %v2059
      %v2172 = vmax.f32 %v1619, %v2062
      %v2173 = vmax.f32 %v1620, %v2067
      %v2174 = vmax.f32 %v1621, %v2070
      %v2175 = vmax.f32 %v1622, %v2075
      %v2176 = vmax.f32 %v1623, %v2078
      %v2177 = vmax.f32 %v1624, %v2083
      %v2178 = vmax.f32 %v1625, %v2086
      %v2179 = vmax.f32 %v1626, %v2091
      %v2180 = vmax.f32 %v1627, %v2094
      %v2181 = vmax.f32 %v1628, %v2099
      %v2182 = vmax.f32 %v1629, %v2102
      %v2183 = vmax.f32 %v1630, %v2107
      %v2184 = vmax.f32 %v1631, %v2110
      %v2185 = vmax.f32 %v1632, %v2115
      %v2186 = vmax.f32 %v1633, %v2118
      %v2187 = vmax.f32 %v1634, %v2123
      %v2188 = vmax.f32 %v1635, %v2126
      %v2189 = vmax.f32 %v1636, %v2131
      %v2190 = vmax.f32 %v1637, %v2134
      %v2191 = vmax.f32 %v1638, %v2139
      %v2192 = vmax.f32 %v1639, %v2142
      %v2193 = vmax.f32 %v1640, %v2147
      %v2194 = vmax.f32 %v1641, %v2150
      %v2195 = vmax.f32 %v1642, %v2155
      %v2196 = vmax.f32 %v1643, %v2158
      %s2197 = scalar_lea.vmem %s1, 456
      %v2198 = vld [vmem:[%s2197] sm:$0xf]
      %v2199 = vld [vmem:[%s2197 + $0x4] sm:$0xf]
      %v2200 = vld [vmem:[%s2197 + $0x8] sm:$0xf]
      %v2201 = vld [vmem:[%s2197 + $0xc] sm:$0xf]
      %v2202 = vld [vmem:[%s2197 + $0x10] sm:$0xf]
      %v2203 = vld [vmem:[%s2197 + $0x14] sm:$0xf]
      %v2204 = vld [vmem:[%s2197 + $0x18] sm:$0xf]
      %v2205 = vld [vmem:[%s2197 + $0x1c] sm:$0xf]
      %v2206 = vld [vmem:[%s2197 + $0x20] sm:$0xf]
      %v2207 = vld [vmem:[%s2197 + $0x24] sm:$0xf]
      %v2208 = vld [vmem:[%s2197 + $0x28] sm:$0xf]
      %v2209 = vld [vmem:[%s2197 + $0x2c] sm:$0xf]
      %v2210 = vld [vmem:[%s2197 + $0x30] sm:$0xf]
      %v2211 = vld [vmem:[%s2197 + $0x34] sm:$0xf]
      %v2212 = vld [vmem:[%s2197 + $0x38] sm:$0xf]
      %v2213 = vld [vmem:[%s2197 + $0x3c] sm:$0xf]
      %v2214 = vld [vmem:[%s2197 + $0x40] sm:$0xf]
      %v2215 = vld [vmem:[%s2197 + $0x44] sm:$0xf]
      %v2216 = vld [vmem:[%s2197 + $0x48] sm:$0xf]
      %v2217 = vld [vmem:[%s2197 + $0x4c] sm:$0xf]
      %v2218 = vld [vmem:[%s2197 + $0x50] sm:$0xf]
      %v2219 = vld [vmem:[%s2197 + $0x54] sm:$0xf]
      %v2220 = vld [vmem:[%s2197 + $0x58] sm:$0xf]
      %v2221 = vld [vmem:[%s2197 + $0x5c] sm:$0xf]
      %v2222 = vld [vmem:[%s2197 + $0x60] sm:$0xf]
      %v2223 = vld [vmem:[%s2197 + $0x64] sm:$0xf]
      %v2224 = vld [vmem:[%s2197 + $0x68] sm:$0xf]
      %v2225 = vld [vmem:[%s2197 + $0x6c] sm:$0xf]
      %v2226 = vld [vmem:[%s2197 + $0x70] sm:$0xf]
      %v2227 = vld [vmem:[%s2197 + $0x74] sm:$0xf]
      %v2228 = vld [vmem:[%s2197 + $0x78] sm:$0xf]
      %v2229 = vld [vmem:[%s2197 + $0x7c] sm:$0xf]
      %v2230 = vld [vmem:[%s2197 + $0x80] sm:$0xf]
      %v2231 = vld [vmem:[%s2197 + $0x84] sm:$0xf]
      %v2232 = vld [vmem:[%s2197 + $0x88] sm:$0xf]
      %v2233 = vld [vmem:[%s2197 + $0x8c] sm:$0xf]
      %v2234 = vld [vmem:[%s2197 + $0x90] sm:$0xf]
      %v2235 = vld [vmem:[%s2197 + $0x94] sm:$0x3]
      %s2236 = scalar_lea.vmem %s2, 3
      %v2237 = vld [vmem:[%s2236] sm:$0x1]
      %v2239 = vlaneseq
      %v2240 = vshrl.u32 %v2239, 7
      %v2241 = vsub.s32 0, %v2240
      %v2242 = vrot.slane %v2237, %v2241
      %v2282 = vunpack.c.l.b16 %v2198
      %v2283 = vunpack.c.l.b16 %v2199
      %v2284 = vunpack.c.l.b16 %v2200
      %v2285 = vunpack.c.l.b16 %v2201
      %v2286 = vunpack.c.l.b16 %v2202
      %v2287 = vunpack.c.l.b16 %v2203
      %v2288 = vunpack.c.l.b16 %v2204
      %v2289 = vunpack.c.l.b16 %v2205
      %v2290 = vunpack.c.l.b16 %v2206
      %v2291 = vunpack.c.l.b16 %v2207
      %v2292 = vunpack.c.l.b16 %v2208
      %v2293 = vunpack.c.l.b16 %v2209
      %v2294 = vunpack.c.l.b16 %v2210
      %v2295 = vunpack.c.l.b16 %v2211
      %v2296 = vunpack.c.l.b16 %v2212
      %v2297 = vunpack.c.l.b16 %v2213
      %v2298 = vunpack.c.l.b16 %v2214
      %v2299 = vunpack.c.l.b16 %v2215
      %v2300 = vunpack.c.l.b16 %v2216
      %v2301 = vunpack.c.l.b16 %v2217
      %v2302 = vunpack.c.l.b16 %v2218
      %v2303 = vunpack.c.l.b16 %v2219
      %v2304 = vunpack.c.l.b16 %v2220
      %v2305 = vunpack.c.l.b16 %v2221
      %v2306 = vunpack.c.l.b16 %v2222
      %v2307 = vunpack.c.l.b16 %v2223
      %v2308 = vunpack.c.l.b16 %v2224
      %v2309 = vunpack.c.l.b16 %v2225
      %v2310 = vunpack.c.l.b16 %v2226
      %v2311 = vunpack.c.l.b16 %v2227
      %v2312 = vunpack.c.l.b16 %v2228
      %v2313 = vunpack.c.l.b16 %v2229
      %v2314 = vunpack.c.l.b16 %v2230
      %v2315 = vunpack.c.l.b16 %v2231
      %v2316 = vunpack.c.l.b16 %v2232
      %v2317 = vunpack.c.l.b16 %v2233
      %v2318 = vunpack.c.l.b16 %v2234
      %v2319 = vunpack.c.l.b16 %v2235
      %v2320 = vpack.c.b16 %v2283, %v2282
      %v2321 = vpack.c.b16 %v2285, %v2284
      %v2322 = vpack.c.b16 %v2287, %v2286
      %v2323 = vpack.c.b16 %v2289, %v2288
      %v2324 = vpack.c.b16 %v2291, %v2290
      %v2325 = vpack.c.b16 %v2293, %v2292
      %v2326 = vpack.c.b16 %v2295, %v2294
      %v2327 = vpack.c.b16 %v2297, %v2296
      %v2328 = vpack.c.b16 %v2299, %v2298
      %v2329 = vpack.c.b16 %v2301, %v2300
      %v2330 = vpack.c.b16 %v2303, %v2302
      %v2331 = vpack.c.b16 %v2305, %v2304
      %v2332 = vpack.c.b16 %v2307, %v2306
      %v2333 = vpack.c.b16 %v2309, %v2308
      %v2334 = vpack.c.b16 %v2311, %v2310
      %v2335 = vpack.c.b16 %v2313, %v2312
      %v2336 = vpack.c.b16 %v2315, %v2314
      %v2337 = vpack.c.b16 %v2317, %v2316
      %v2338 = vpack.c.b16 %v2319, %v2318
      %v2358 = vsel %vm733, %v2338, 0
      %2360 = vmatprep.subr.bf16.mxu0 0
      %2361 = vmatpush1.bf16.msra.mxu0 %v2320
      %2362 = vmatprep.subr.bf16.mxu0 0
      %2363 = vmatpush1.bf16.msra.mxu0 %v2321
      %2364 = vmatprep.subr.bf16.mxu0 0
      %2365 = vmatpush1.bf16.msra.mxu0 %v2322
      %2366 = vmatprep.subr.bf16.mxu0 0
      %2367 = vmatpush1.bf16.msra.mxu0 %v2323
      %2368 = vmatprep.subr.bf16.mxu0 0
      %2369 = vmatpush1.bf16.msra.mxu0 %v2324
      %2370 = vmatprep.subr.bf16.mxu0 0
      %2371 = vmatpush1.bf16.msra.mxu0 %v2325
      %2372 = vmatprep.subr.bf16.mxu0 0
      %2373 = vmatpush1.bf16.msra.mxu0 %v2326
      %2374 = vmatprep.subr.bf16.mxu0 0
      %2375 = vmatpush1.bf16.msra.mxu0 %v2327
      %2376 = vmatprep.subr.bf16.mxu0 0
      %2377 = vmatpush1.bf16.msra.mxu0 %v2328
      %2378 = vmatprep.subr.bf16.mxu0 0
      %2379 = vmatpush1.bf16.msra.mxu0 %v2329
      %2380 = vmatprep.subr.bf16.mxu0 0
      %2381 = vmatpush1.bf16.msra.mxu0 %v2330
      %2382 = vmatprep.subr.bf16.mxu0 0
      %2383 = vmatpush1.bf16.msra.mxu0 %v2331
      %2384 = vmatprep.subr.bf16.mxu0 0
      %2385 = vmatpush1.bf16.msra.mxu0 %v2332
      %2386 = vmatprep.subr.bf16.mxu0 0
      %2387 = vmatpush1.bf16.msra.mxu0 %v2333
      %2388 = vmatprep.subr.bf16.mxu0 0
      %2389 = vmatpush1.bf16.msra.mxu0 %v2334
      %2390 = vmatprep.subr.bf16.mxu0 0
      %2391 = vmatpush1.bf16.msra.mxu0 %v2335
      %2392 = vmatprep.mubr.bf16.mxu0 %v476
      %2393 = vmatmul.mubr.bf16.gmra.mrb[0].mxu0 %v475
      %v2394 = vpop.f32.mrb[0].mxu0
      %v2395 = vadd.f32 %v2242, %v2394
      %v2396 = vpop.f32.mrb[0].mxu0
      %v2397 = vpop.f32.mrb[0].mxu0
      %v2398 = vadd.f32 %v2242, %v2397
      %v2399 = vpop.f32.mrb[0].mxu0
      %2400 = vmatprep.mubr.bf16.mxu0 %v479
      %2401 = vmatmul.mubr.bf16.gmra.mrb[0].mxu0 %v478
      %v2402 = vpop.f32.mrb[0].mxu0
      %v2403 = vadd.f32 %v2242, %v2402
      %v2404 = vpop.f32.mrb[0].mxu0
      %v2405 = vpop.f32.mrb[0].mxu0
      %v2406 = vadd.f32 %v2242, %v2405
      %v2407 = vpop.f32.mrb[0].mxu0
      %2408 = vmatprep.mubr.bf16.mxu0 %v482
      %2409 = vmatmul.mubr.bf16.gmra.mrb[0].mxu0 %v481
      %v2410 = vpop.f32.mrb[0].mxu0
      %v2411 = vadd.f32 %v2242, %v2410
      %v2412 = vpop.f32.mrb[0].mxu0
      %v2413 = vpop.f32.mrb[0].mxu0
      %v2414 = vadd.f32 %v2242, %v2413
      %v2415 = vpop.f32.mrb[0].mxu0
      %2416 = vmatprep.mubr.bf16.mxu0 %v485
      %2417 = vmatmul.mubr.bf16.gmra.mrb[0].mxu0 %v484
      %v2418 = vpop.f32.mrb[0].mxu0
      %v2419 = vadd.f32 %v2242, %v2418
      %v2420 = vpop.f32.mrb[0].mxu0
      %v2421 = vpop.f32.mrb[0].mxu0
      %v2422 = vadd.f32 %v2242, %v2421
      %v2423 = vpop.f32.mrb[0].mxu0
      %2424 = vmatprep.mubr.bf16.mxu0 %v488
      %2425 = vmatmul.mubr.bf16.gmra.mrb[0].mxu0 %v487
      %v2426 = vpop.f32.mrb[0].mxu0
      %v2427 = vadd.f32 %v2242, %v2426
      %v2428 = vpop.f32.mrb[0].mxu0
      %v2429 = vpop.f32.mrb[0].mxu0
      %v2430 = vadd.f32 %v2242, %v2429
      %v2431 = vpop.f32.mrb[0].mxu0
      %2432 = vmatprep.mubr.bf16.mxu0 %v491
      %2433 = vmatmul.mubr.bf16.gmra.mrb[0].mxu0 %v490
      %v2434 = vpop.f32.mrb[0].mxu0
      %v2435 = vadd.f32 %v2242, %v2434
      %v2436 = vpop.f32.mrb[0].mxu0
      %v2437 = vpop.f32.mrb[0].mxu0
      %v2438 = vadd.f32 %v2242, %v2437
      %v2439 = vpop.f32.mrb[0].mxu0
      %2440 = vmatprep.mubr.bf16.mxu0 %v494
      %2441 = vmatmul.mubr.bf16.gmra.mrb[0].mxu0 %v493
      %v2442 = vpop.f32.mrb[0].mxu0
      %v2443 = vadd.f32 %v2242, %v2442
      %v2444 = vpop.f32.mrb[0].mxu0
      %v2445 = vpop.f32.mrb[0].mxu0
      %v2446 = vadd.f32 %v2242, %v2445
      %v2447 = vpop.f32.mrb[0].mxu0
      %2448 = vmatprep.mubr.bf16.mxu0 %v497
      %2449 = vmatmul.mubr.bf16.gmra.mrb[0].mxu0 %v496
      %v2450 = vpop.f32.mrb[0].mxu0
      %v2451 = vadd.f32 %v2242, %v2450
      %v2452 = vpop.f32.mrb[0].mxu0
      %v2453 = vpop.f32.mrb[0].mxu0
      %v2454 = vadd.f32 %v2242, %v2453
      %v2455 = vpop.f32.mrb[0].mxu0
      %2456 = vmatprep.mubr.bf16.mxu0 %v500
      %2457 = vmatmul.mubr.bf16.gmra.mrb[0].mxu0 %v499
      %v2458 = vpop.f32.mrb[0].mxu0
      %v2459 = vadd.f32 %v2242, %v2458
      %v2460 = vpop.f32.mrb[0].mxu0
      %v2461 = vpop.f32.mrb[0].mxu0
      %v2462 = vadd.f32 %v2242, %v2461
      %v2463 = vpop.f32.mrb[0].mxu0
      %2464 = vmatprep.mubr.bf16.mxu0 %v503
      %2465 = vmatmul.mubr.bf16.gmra.mrb[0].mxu0 %v502
      %v2466 = vpop.f32.mrb[0].mxu0
      %v2467 = vadd.f32 %v2242, %v2466
      %v2468 = vpop.f32.mrb[0].mxu0
      %v2469 = vpop.f32.mrb[0].mxu0
      %v2470 = vadd.f32 %v2242, %v2469
      %v2471 = vpop.f32.mrb[0].mxu0
      %2472 = vmatprep.mubr.bf16.mxu0 %v506
      %2473 = vmatmul.mubr.bf16.gmra.mrb[0].mxu0 %v505
      %v2474 = vpop.f32.mrb[0].mxu0
      %v2475 = vadd.f32 %v2242, %v2474
      %v2476 = vpop.f32.mrb[0].mxu0
      %v2477 = vpop.f32.mrb[0].mxu0
      %v2478 = vadd.f32 %v2242, %v2477
      %v2479 = vpop.f32.mrb[0].mxu0
      %2480 = vmatprep.mubr.bf16.mxu0 %v509
      %2481 = vmatmul.mubr.bf16.gmra.mrb[0].mxu0 %v508
      %v2482 = vpop.f32.mrb[0].mxu0
      %v2483 = vadd.f32 %v2242, %v2482
      %v2484 = vpop.f32.mrb[0].mxu0
      %v2485 = vpop.f32.mrb[0].mxu0
      %v2486 = vadd.f32 %v2242, %v2485
      %v2487 = vpop.f32.mrb[0].mxu0
      %2488 = vmatprep.mubr.bf16.mxu0 %v512
      %2489 = vmatmul.mubr.bf16.gmra.mrb[0].mxu0 %v511
      %v2490 = vpop.f32.mrb[0].mxu0
      %v2491 = vadd.f32 %v2242, %v2490
      %v2492 = vpop.f32.mrb[0].mxu0
      %v2493 = vpop.f32.mrb[0].mxu0
      %v2494 = vadd.f32 %v2242, %v2493
      %v2495 = vpop.f32.mrb[0].mxu0
      %2496 = vmatprep.mubr.bf16.mxu0 %v515
      %2497 = vmatmul.mubr.bf16.gmra.mrb[0].mxu0 %v514
      %v2498 = vpop.f32.mrb[0].mxu0
      %v2499 = vadd.f32 %v2242, %v2498
      %v2500 = vpop.f32.mrb[0].mxu0
      %v2501 = vpop.f32.mrb[0].mxu0
      %v2502 = vadd.f32 %v2242, %v2501
      %v2503 = vpop.f32.mrb[0].mxu0
      %2504 = vmatprep.mubr.bf16.mxu0 %v518
      %2505 = vmatmul.mubr.bf16.gmra.mrb[0].mxu0 %v517
      %v2506 = vpop.f32.mrb[0].mxu0
      %v2507 = vadd.f32 %v2242, %v2506
      %v2508 = vpop.f32.mrb[0].mxu0
      %v2509 = vpop.f32.mrb[0].mxu0
      %v2510 = vadd.f32 %v2242, %v2509
      %v2511 = vpop.f32.mrb[0].mxu0
      %2512 = vmatprep.mubr.bf16.mxu0 %v521
      %2513 = vmatmul.mubr.bf16.gmra.mrb[0].mxu0 %v520
      %v2514 = vpop.f32.mrb[0].mxu0
      %v2515 = vadd.f32 %v2242, %v2514
      %v2516 = vpop.f32.mrb[0].mxu0
      %v2517 = vpop.f32.mrb[0].mxu0
      %v2518 = vadd.f32 %v2242, %v2517
      %v2519 = vpop.f32.mrb[0].mxu0
      %2520 = vmatprep.mubr.bf16.mxu0 %v524
      %2521 = vmatmul.mubr.bf16.gmra.mrb[0].mxu0 %v523
      %v2522 = vpop.f32.mrb[0].mxu0
      %v2523 = vadd.f32 %v2242, %v2522
      %v2524 = vpop.f32.mrb[0].mxu0
      %v2525 = vpop.f32.mrb[0].mxu0
      %v2526 = vadd.f32 %v2242, %v2525
      %v2527 = vpop.f32.mrb[0].mxu0
      %2528 = vmatprep.mubr.bf16.mxu0 %v527
      %2529 = vmatmul.mubr.bf16.gmra.mrb[0].mxu0 %v526
      %v2530 = vpop.f32.mrb[0].mxu0
      %v2531 = vadd.f32 %v2242, %v2530
      %v2532 = vpop.f32.mrb[0].mxu0
      %v2533 = vpop.f32.mrb[0].mxu0
      %v2534 = vadd.f32 %v2242, %v2533
      %v2535 = vpop.f32.mrb[0].mxu0
      %2536 = vdwg.mxu0
      %2537 = vmatprep.subr.bf16.mxu0 0
      %2538 = vmatpush1.bf16.msra.mxu0 %v2336
      %2539 = vmatprep.subr.bf16.mxu0 0
      %2540 = vmatpush1.bf16.msra.mxu0 %v2337
      %2541 = vmatprep.subr.bf16.mxu0 0
      %2542 = vmatpush1.bf16.msra.mxu0 %v2358
      %2543 = vmatprep.subr.bf16.mxu0 0
      %2544 = vmatpush1.bf16.msra.mxu0 0
      %2545 = vmatprep.subr.bf16.mxu0 0
      %2546 = vmatpush1.bf16.msra.mxu0 0
      %2547 = vmatprep.subr.bf16.mxu0 0
      %2548 = vmatpush1.bf16.msra.mxu0 0
      %2549 = vmatprep.subr.bf16.mxu0 0
      %2550 = vmatpush1.bf16.msra.mxu0 0
      %2551 = vmatprep.subr.bf16.mxu0 0
      %2552 = vmatpush1.bf16.msra.mxu0 0
      %2553 = vmatprep.subr.bf16.mxu0 0
      %2554 = vmatpush1.bf16.msra.mxu0 0
      %2555 = vmatprep.subr.bf16.mxu0 0
      %2556 = vmatpush1.bf16.msra.mxu0 0
      %2557 = vmatprep.subr.bf16.mxu0 0
      %2558 = vmatpush1.bf16.msra.mxu0 0
      %2559 = vmatprep.subr.bf16.mxu0 0
      %2560 = vmatpush1.bf16.msra.mxu0 0
      %2561 = vmatprep.subr.bf16.mxu0 0
      %2562 = vmatpush1.bf16.msra.mxu0 0
      %2563 = vmatprep.subr.bf16.mxu0 0
      %2564 = vmatpush1.bf16.msra.mxu0 0
      %2565 = vmatprep.subr.bf16.mxu0 0
      %2566 = vmatpush1.bf16.msra.mxu0 0
      %2567 = vmatprep.subr.bf16.mxu0 0
      %2568 = vmatpush1.bf16.msra.mxu0 0
      %2569 = vmatprep.mubr.bf16.mxu0 0
      %2570 = vmatmul.mubr.bf16.gmra.mrb[0].mxu0 %v680
      %v2571 = vpop.f32.mrb[0].mxu0
      %v2572 = vadd.f32 %v2395, %v2571
      %v2573 = vpop.f32.mrb[0].mxu0
      %v2574 = vpop.f32.mrb[0].mxu0
      %v2575 = vadd.f32 %v2398, %v2574
      %v2576 = vpop.f32.mrb[0].mxu0
      %2577 = vmatprep.mubr.bf16.mxu0 0
      %2578 = vmatmul.mubr.bf16.gmra.mrb[0].mxu0 %v683
      %v2579 = vpop.f32.mrb[0].mxu0
      %v2580 = vadd.f32 %v2403, %v2579
      %v2581 = vpop.f32.mrb[0].mxu0
      %v2582 = vpop.f32.mrb[0].mxu0
      %v2583 = vadd.f32 %v2406, %v2582
      %v2584 = vpop.f32.mrb[0].mxu0
      %2585 = vmatprep.mubr.bf16.mxu0 0
      %2586 = vmatmul.mubr.bf16.gmra.mrb[0].mxu0 %v686
      %v2587 = vpop.f32.mrb[0].mxu0
      %v2588 = vadd.f32 %v2411, %v2587
      %v2589 = vpop.f32.mrb[0].mxu0
      %v2590 = vpop.f32.mrb[0].mxu0
      %v2591 = vadd.f32 %v2414, %v2590
      %v2592 = vpop.f32.mrb[0].mxu0
      %2593 = vmatprep.mubr.bf16.mxu0 0
      %2594 = vmatmul.mubr.bf16.gmra.mrb[0].mxu0 %v689
      %v2595 = vpop.f32.mrb[0].mxu0
      %v2596 = vadd.f32 %v2419, %v2595
      %v2597 = vpop.f32.mrb[0].mxu0
      %v2598 = vpop.f32.mrb[0].mxu0
      %v2599 = vadd.f32 %v2422, %v2598
      %v2600 = vpop.f32.mrb[0].mxu0
      %2601 = vmatprep.mubr.bf16.mxu0 0
      %2602 = vmatmul.mubr.bf16.gmra.mrb[0].mxu0 %v692
      %v2603 = vpop.f32.mrb[0].mxu0
      %v2604 = vadd.f32 %v2427, %v2603
      %v2605 = vpop.f32.mrb[0].mxu0
      %v2606 = vpop.f32.mrb[0].mxu0
      %v2607 = vadd.f32 %v2430, %v2606
      %v2608 = vpop.f32.mrb[0].mxu0
      %2609 = vmatprep.mubr.bf16.mxu0 0
      %2610 = vmatmul.mubr.bf16.gmra.mrb[0].mxu0 %v695
      %v2611 = vpop.f32.mrb[0].mxu0
      %v2612 = vadd.f32 %v2435, %v2611
      %v2613 = vpop.f32.mrb[0].mxu0
      %v2614 = vpop.f32.mrb[0].mxu0
      %v2615 = vadd.f32 %v2438, %v2614
      %v2616 = vpop.f32.mrb[0].mxu0
      %2617 = vmatprep.mubr.bf16.mxu0 0
      %2618 = vmatmul.mubr.bf16.gmra.mrb[0].mxu0 %v698
      %v2619 = vpop.f32.mrb[0].mxu0
      %v2620 = vadd.f32 %v2443, %v2619
      %v2621 = vpop.f32.mrb[0].mxu0
      %v2622 = vpop.f32.mrb[0].mxu0
      %v2623 = vadd.f32 %v2446, %v2622
      %v2624 = vpop.f32.mrb[0].mxu0
      %2625 = vmatprep.mubr.bf16.mxu0 0
      %2626 = vmatmul.mubr.bf16.gmra.mrb[0].mxu0 %v701
      %v2627 = vpop.f32.mrb[0].mxu0
      %v2628 = vadd.f32 %v2451, %v2627
      %v2629 = vpop.f32.mrb[0].mxu0
      %v2630 = vpop.f32.mrb[0].mxu0
      %v2631 = vadd.f32 %v2454, %v2630
      %v2632 = vpop.f32.mrb[0].mxu0
      %2633 = vmatprep.mubr.bf16.mxu0 0
      %2634 = vmatmul.mubr.bf16.gmra.mrb[0].mxu0 %v704
      %v2635 = vpop.f32.mrb[0].mxu0
      %v2636 = vadd.f32 %v2459, %v2635
      %v2637 = vpop.f32.mrb[0].mxu0
      %v2638 = vpop.f32.mrb[0].mxu0
      %v2639 = vadd.f32 %v2462, %v2638
      %v2640 = vpop.f32.mrb[0].mxu0
      %2641 = vmatprep.mubr.bf16.mxu0 0
      %2642 = vmatmul.mubr.bf16.gmra.mrb[0].mxu0 %v707
      %v2643 = vpop.f32.mrb[0].mxu0
      %v2644 = vadd.f32 %v2467, %v2643
      %v2645 = vpop.f32.mrb[0].mxu0
      %v2646 = vpop.f32.mrb[0].mxu0
      %v2647 = vadd.f32 %v2470, %v2646
      %v2648 = vpop.f32.mrb[0].mxu0
      %2649 = vmatprep.mubr.bf16.mxu0 0
      %2650 = vmatmul.mubr.bf16.gmra.mrb[0].mxu0 %v710
      %v2651 = vpop.f32.mrb[0].mxu0
      %v2652 = vadd.f32 %v2475, %v2651
      %v2653 = vpop.f32.mrb[0].mxu0
      %v2654 = vpop.f32.mrb[0].mxu0
      %v2655 = vadd.f32 %v2478, %v2654
      %v2656 = vpop.f32.mrb[0].mxu0
      %2657 = vmatprep.mubr.bf16.mxu0 0
      %2658 = vmatmul.mubr.bf16.gmra.mrb[0].mxu0 %v713
      %v2659 = vpop.f32.mrb[0].mxu0
      %v2660 = vadd.f32 %v2483, %v2659
      %v2661 = vpop.f32.mrb[0].mxu0
      %v2662 = vpop.f32.mrb[0].mxu0
      %v2663 = vadd.f32 %v2486, %v2662
      %v2664 = vpop.f32.mrb[0].mxu0
      %2665 = vmatprep.mubr.bf16.mxu0 0
      %2666 = vmatmul.mubr.bf16.gmra.mrb[0].mxu0 %v716
      %v2667 = vpop.f32.mrb[0].mxu0
      %v2668 = vadd.f32 %v2491, %v2667
      %v2669 = vpop.f32.mrb[0].mxu0
      %v2670 = vpop.f32.mrb[0].mxu0
      %v2671 = vadd.f32 %v2494, %v2670
      %v2672 = vpop.f32.mrb[0].mxu0
      %2673 = vmatprep.mubr.bf16.mxu0 0
      %2674 = vmatmul.mubr.bf16.gmra.mrb[0].mxu0 %v719
      %v2675 = vpop.f32.mrb[0].mxu0
      %v2676 = vadd.f32 %v2499, %v2675
      %v2677 = vpop.f32.mrb[0].mxu0
      %v2678 = vpop.f32.mrb[0].mxu0
      %v2679 = vadd.f32 %v2502, %v2678
      %v2680 = vpop.f32.mrb[0].mxu0
      %2681 = vmatprep.mubr.bf16.mxu0 0
      %2682 = vmatmul.mubr.bf16.gmra.mrb[0].mxu0 %v722
      %v2683 = vpop.f32.mrb[0].mxu0
      %v2684 = vadd.f32 %v2507, %v2683
      %v2685 = vpop.f32.mrb[0].mxu0
      %v2686 = vpop.f32.mrb[0].mxu0
      %v2687 = vadd.f32 %v2510, %v2686
      %v2688 = vpop.f32.mrb[0].mxu0
      %2689 = vmatprep.mubr.bf16.mxu0 0
      %2690 = vmatmul.mubr.bf16.gmra.mrb[0].mxu0 %v725
      %v2691 = vpop.f32.mrb[0].mxu0
      %v2692 = vadd.f32 %v2515, %v2691
      %v2693 = vpop.f32.mrb[0].mxu0
      %v2694 = vpop.f32.mrb[0].mxu0
      %v2695 = vadd.f32 %v2518, %v2694
      %v2696 = vpop.f32.mrb[0].mxu0
      %2697 = vmatprep.mubr.bf16.mxu0 0
      %2698 = vmatmul.mubr.bf16.gmra.mrb[0].mxu0 %v728
      %v2699 = vpop.f32.mrb[0].mxu0
      %v2700 = vadd.f32 %v2523, %v2699
      %v2701 = vpop.f32.mrb[0].mxu0
      %v2702 = vpop.f32.mrb[0].mxu0
      %v2703 = vadd.f32 %v2526, %v2702
      %v2704 = vpop.f32.mrb[0].mxu0
      %2705 = vmatprep.mubr.bf16.mxu0 0
      %2706 = vmatmul.mubr.bf16.gmra.mrb[0].mxu0 %v731
      %v2707 = vpop.f32.mrb[0].mxu0
      %v2708 = vadd.f32 %v2531, %v2707
      %v2709 = vpop.f32.mrb[0].mxu0
      %v2710 = vpop.f32.mrb[0].mxu0
      %v2711 = vadd.f32 %v2534, %v2710
      %v2712 = vpop.f32.mrb[0].mxu0
      %2713 = vdwg.mxu0
      %v2714 = vmax.f32 %v2161, %v2572
      %v2715 = vmax.f32 %v2162, %v2575
      %v2716 = vmax.f32 %v2163, %v2580
      %v2717 = vmax.f32 %v2164, %v2583
      %v2718 = vmax.f32 %v2165, %v2588
      %v2719 = vmax.f32 %v2166, %v2591
      %v2720 = vmax.f32 %v2167, %v2596
      %v2721 = vmax.f32 %v2168, %v2599
      %v2722 = vmax.f32 %v2169, %v2604
      %v2723 = vmax.f32 %v2170, %v2607
      %v2724 = vmax.f32 %v2171, %v2612
      %v2725 = vmax.f32 %v2172, %v2615
      %v2726 = vmax.f32 %v2173, %v2620
      %v2727 = vmax.f32 %v2174, %v2623
      %v2728 = vmax.f32 %v2175, %v2628
      %v2729 = vmax.f32 %v2176, %v2631
      %v2730 = vmax.f32 %v2177, %v2636
      %v2731 = vmax.f32 %v2178, %v2639
      %v2732 = vmax.f32 %v2179, %v2644
      %v2733 = vmax.f32 %v2180, %v2647
      %v2734 = vmax.f32 %v2181, %v2652
      %v2735 = vmax.f32 %v2182, %v2655
      %v2736 = vmax.f32 %v2183, %v2660
      %v2737 = vmax.f32 %v2184, %v2663
      %v2738 = vmax.f32 %v2185, %v2668
      %v2739 = vmax.f32 %v2186, %v2671
      %v2740 = vmax.f32 %v2187, %v2676
      %v2741 = vmax.f32 %v2188, %v2679
      %v2742 = vmax.f32 %v2189, %v2684
      %v2743 = vmax.f32 %v2190, %v2687
      %v2744 = vmax.f32 %v2191, %v2692
      %v2745 = vmax.f32 %v2192, %v2695
      %v2746 = vmax.f32 %v2193, %v2700
      %v2747 = vmax.f32 %v2194, %v2703
      %v2748 = vmax.f32 %v2195, %v2708
      %v2749 = vmax.f32 %v2196, %v2711
      %s2750 = scalar_lea.vmem %s1, 608
      %v2751 = vld [vmem:[%s2750] sm:$0xf]
      %v2752 = vld [vmem:[%s2750 + $0x4] sm:$0xf]
      %v2753 = vld [vmem:[%s2750 + $0x8] sm:$0xf]
      %v2754 = vld [vmem:[%s2750 + $0xc] sm:$0xf]
      %v2755 = vld [vmem:[%s2750 + $0x10] sm:$0xf]
      %v2756 = vld [vmem:[%s2750 + $0x14] sm:$0xf]
      %v2757 = vld [vmem:[%s2750 + $0x18] sm:$0xf]
      %v2758 = vld [vmem:[%s2750 + $0x1c] sm:$0xf]
      %v2759 = vld [vmem:[%s2750 + $0x20] sm:$0xf]
      %v2760 = vld [vmem:[%s2750 + $0x24] sm:$0xf]
      %v2761 = vld [vmem:[%s2750 + $0x28] sm:$0xf]
      %v2762 = vld [vmem:[%s2750 + $0x2c] sm:$0xf]
      %v2763 = vld [vmem:[%s2750 + $0x30] sm:$0xf]
      %v2764 = vld [vmem:[%s2750 + $0x34] sm:$0xf]
      %v2765 = vld [vmem:[%s2750 + $0x38] sm:$0xf]
      %v2766 = vld [vmem:[%s2750 + $0x3c] sm:$0xf]
      %v2767 = vld [vmem:[%s2750 + $0x40] sm:$0xf]
      %v2768 = vld [vmem:[%s2750 + $0x44] sm:$0xf]
      %v2769 = vld [vmem:[%s2750 + $0x48] sm:$0xf]
      %v2770 = vld [vmem:[%s2750 + $0x4c] sm:$0xf]
      %v2771 = vld [vmem:[%s2750 + $0x50] sm:$0xf]
      %v2772 = vld [vmem:[%s2750 + $0x54] sm:$0xf]
      %v2773 = vld [vmem:[%s2750 + $0x58] sm:$0xf]
      %v2774 = vld [vmem:[%s2750 + $0x5c] sm:$0xf]
      %v2775 = vld [vmem:[%s2750 + $0x60] sm:$0xf]
      %v2776 = vld [vmem:[%s2750 + $0x64] sm:$0xf]
      %v2777 = vld [vmem:[%s2750 + $0x68] sm:$0xf]
      %v2778 = vld [vmem:[%s2750 + $0x6c] sm:$0xf]
      %v2779 = vld [vmem:[%s2750 + $0x70] sm:$0xf]
      %v2780 = vld [vmem:[%s2750 + $0x74] sm:$0xf]
      %v2781 = vld [vmem:[%s2750 + $0x78] sm:$0xf]
      %v2782 = vld [vmem:[%s2750 + $0x7c] sm:$0xf]
      %v2783 = vld [vmem:[%s2750 + $0x80] sm:$0xf]
      %v2784 = vld [vmem:[%s2750 + $0x84] sm:$0xf]
      %v2785 = vld [vmem:[%s2750 + $0x88] sm:$0xf]
      %v2786 = vld [vmem:[%s2750 + $0x8c] sm:$0xf]
      %v2787 = vld [vmem:[%s2750 + $0x90] sm:$0xf]
      %v2788 = vld [vmem:[%s2750 + $0x94] sm:$0x3]
      %s2789 = scalar_lea.vmem %s2, 4
      %v2790 = vld [vmem:[%s2789] sm:$0x1]
      %v2792 = vlaneseq
      %v2793 = vshrl.u32 %v2792, 7
      %v2794 = vsub.s32 0, %v2793
      %v2795 = vrot.slane %v2790, %v2794
      %v2835 = vunpack.c.l.b16 %v2751
      %v2836 = vunpack.c.l.b16 %v2752
      %v2837 = vunpack.c.l.b16 %v2753
      %v2838 = vunpack.c.l.b16 %v2754
      %v2839 = vunpack.c.l.b16 %v2755
      %v2840 = vunpack.c.l.b16 %v2756
      %v2841 = vunpack.c.l.b16 %v2757
      %v2842 = vunpack.c.l.b16 %v2758
      %v2843 = vunpack.c.l.b16 %v2759
      %v2844 = vunpack.c.l.b16 %v2760
      %v2845 = vunpack.c.l.b16 %v2761
      %v2846 = vunpack.c.l.b16 %v2762
      %v2847 = vunpack.c.l.b16 %v2763
      %v2848 = vunpack.c.l.b16 %v2764
      %v2849 = vunpack.c.l.b16 %v2765
      %v2850 = vunpack.c.l.b16 %v2766
      %v2851 = vunpack.c.l.b16 %v2767
      %v2852 = vunpack.c.l.b16 %v2768
      %v2853 = vunpack.c.l.b16 %v2769
      %v2854 = vunpack.c.l.b16 %v2770
      %v2855 = vunpack.c.l.b16 %v2771
      %v2856 = vunpack.c.l.b16 %v2772
      %v2857 = vunpack.c.l.b16 %v2773
      %v2858 = vunpack.c.l.b16 %v2774
      %v2859 = vunpack.c.l.b16 %v2775
      %v2860 = vunpack.c.l.b16 %v2776
      %v2861 = vunpack.c.l.b16 %v2777
      %v2862 = vunpack.c.l.b16 %v2778
      %v2863 = vunpack.c.l.b16 %v2779
      %v2864 = vunpack.c.l.b16 %v2780
      %v2865 = vunpack.c.l.b16 %v2781
      %v2866 = vunpack.c.l.b16 %v2782
      %v2867 = vunpack.c.l.b16 %v2783
      %v2868 = vunpack.c.l.b16 %v2784
      %v2869 = vunpack.c.l.b16 %v2785
      %v2870 = vunpack.c.l.b16 %v2786
      %v2871 = vunpack.c.l.b16 %v2787
      %v2872 = vunpack.c.l.b16 %v2788
      %v2873 = vpack.c.b16 %v2836, %v2835
      %v2874 = vpack.c.b16 %v2838, %v2837
      %v2875 = vpack.c.b16 %v2840, %v2839
      %v2876 = vpack.c.b16 %v2842, %v2841
      %v2877 = vpack.c.b16 %v2844, %v2843
      %v2878 = vpack.c.b16 %v2846, %v2845
      %v2879 = vpack.c.b16 %v2848, %v2847
      %v2880 = vpack.c.b16 %v2850, %v2849
      %v2881 = vpack.c.b16 %v2852, %v2851
      %v2882 = vpack.c.b16 %v2854, %v2853
      %v2883 = vpack.c.b16 %v2856, %v2855
      %v2884 = vpack.c.b16 %v2858, %v2857
      %v2885 = vpack.c.b16 %v2860, %v2859
      %v2886 = vpack.c.b16 %v2862, %v2861
      %v2887 = vpack.c.b16 %v2864, %v2863
      %v2888 = vpack.c.b16 %v2866, %v2865
      %v2889 = vpack.c.b16 %v2868, %v2867
      %v2890 = vpack.c.b16 %v2870, %v2869
      %v2891 = vpack.c.b16 %v2872, %v2871
      %v2911 = vsel %vm733, %v2891, 0
      %2913 = vmatprep.subr.bf16.mxu0 0
      %2914 = vmatpush1.bf16.msra.mxu0 %v2873
      %2915 = vmatprep.subr.bf16.mxu0 0
      %2916 = vmatpush1.bf16.msra.mxu0 %v2874
      %2917 = vmatprep.subr.bf16.mxu0 0
      %2918 = vmatpush1.bf16.msra.mxu0 %v2875
      %2919 = vmatprep.subr.bf16.mxu0 0
      %2920 = vmatpush1.bf16.msra.mxu0 %v2876
      %2921 = vmatprep.subr.bf16.mxu0 0
      %2922 = vmatpush1.bf16.msra.mxu0 %v2877
      %2923 = vmatprep.subr.bf16.mxu0 0
      %2924 = vmatpush1.bf16.msra.mxu0 %v2878
      %2925 = vmatprep.subr.bf16.mxu0 0
      %2926 = vmatpush1.bf16.msra.mxu0 %v2879
      %2927 = vmatprep.subr.bf16.mxu0 0
      %2928 = vmatpush1.bf16.msra.mxu0 %v2880
      %2929 = vmatprep.subr.bf16.mxu0 0
      %2930 = vmatpush1.bf16.msra.mxu0 %v2881
      %2931 = vmatprep.subr.bf16.mxu0 0
      %2932 = vmatpush1.bf16.msra.mxu0 %v2882
      %2933 = vmatprep.subr.bf16.mxu0 0
      %2934 = vmatpush1.bf16.msra.mxu0 %v2883
      %2935 = vmatprep.subr.bf16.mxu0 0
      %2936 = vmatpush1.bf16.msra.mxu0 %v2884
      %2937 = vmatprep.subr.bf16.mxu0 0
      %2938 = vmatpush1.bf16.msra.mxu0 %v2885
      %2939 = vmatprep.subr.bf16.mxu0 0
      %2940 = vmatpush1.bf16.msra.mxu0 %v2886
      %2941 = vmatprep.subr.bf16.mxu0 0
      %2942 = vmatpush1.bf16.msra.mxu0 %v2887
      %2943 = vmatprep.subr.bf16.mxu0 0
      %2944 = vmatpush1.bf16.msra.mxu0 %v2888
      %2945 = vmatprep.mubr.bf16.mxu0 %v476
      %2946 = vmatmul.mubr.bf16.gmra.mrb[0].mxu0 %v475
      %v2947 = vpop.f32.mrb[0].mxu0
      %v2948 = vadd.f32 %v2795, %v2947
      %v2949 = vpop.f32.mrb[0].mxu0
      %v2950 = vpop.f32.mrb[0].mxu0
      %v2951 = vadd.f32 %v2795, %v2950
      %v2952 = vpop.f32.mrb[0].mxu0
      %2953 = vmatprep.mubr.bf16.mxu0 %v479
      %2954 = vmatmul.mubr.bf16.gmra.mrb[0].mxu0 %v478
      %v2955 = vpop.f32.mrb[0].mxu0
      %v2956 = vadd.f32 %v2795, %v2955
      %v2957 = vpop.f32.mrb[0].mxu0
      %v2958 = vpop.f32.mrb[0].mxu0
      %v2959 = vadd.f32 %v2795, %v2958
      %v2960 = vpop.f32.mrb[0].mxu0
      %2961 = vmatprep.mubr.bf16.mxu0 %v482
      %2962 = vmatmul.mubr.bf16.gmra.mrb[0].mxu0 %v481
      %v2963 = vpop.f32.mrb[0].mxu0
      %v2964 = vadd.f32 %v2795, %v2963
      %v2965 = vpop.f32.mrb[0].mxu0
      %v2966 = vpop.f32.mrb[0].mxu0
      %v2967 = vadd.f32 %v2795, %v2966
      %v2968 = vpop.f32.mrb[0].mxu0
      %2969 = vmatprep.mubr.bf16.mxu0 %v485
      %2970 = vmatmul.mubr.bf16.gmra.mrb[0].mxu0 %v484
      %v2971 = vpop.f32.mrb[0].mxu0
      %v2972 = vadd.f32 %v2795, %v2971
      %v2973 = vpop.f32.mrb[0].mxu0
      %v2974 = vpop.f32.mrb[0].mxu0
      %v2975 = vadd.f32 %v2795, %v2974
      %v2976 = vpop.f32.mrb[0].mxu0
      %2977 = vmatprep.mubr.bf16.mxu0 %v488
      %2978 = vmatmul.mubr.bf16.gmra.mrb[0].mxu0 %v487
      %v2979 = vpop.f32.mrb[0].mxu0
      %v2980 = vadd.f32 %v2795, %v2979
      %v2981 = vpop.f32.mrb[0].mxu0
      %v2982 = vpop.f32.mrb[0].mxu0
      %v2983 = vadd.f32 %v2795, %v2982
      %v2984 = vpop.f32.mrb[0].mxu0
      %2985 = vmatprep.mubr.bf16.mxu0 %v491
      %2986 = vmatmul.mubr.bf16.gmra.mrb[0].mxu0 %v490
      %v2987 = vpop.f32.mrb[0].mxu0
      %v2988 = vadd.f32 %v2795, %v2987
      %v2989 = vpop.f32.mrb[0].mxu0
      %v2990 = vpop.f32.mrb[0].mxu0
      %v2991 = vadd.f32 %v2795, %v2990
      %v2992 = vpop.f32.mrb[0].mxu0
      %2993 = vmatprep.mubr.bf16.mxu0 %v494
      %2994 = vmatmul.mubr.bf16.gmra.mrb[0].mxu0 %v493
      %v2995 = vpop.f32.mrb[0].mxu0
      %v2996 = vadd.f32 %v2795, %v2995
      %v2997 = vpop.f32.mrb[0].mxu0
      %v2998 = vpop.f32.mrb[0].mxu0
      %v2999 = vadd.f32 %v2795, %v2998
      %v3000 = vpop.f32.mrb[0].mxu0
      %3001 = vmatprep.mubr.bf16.mxu0 %v497
      %3002 = vmatmul.mubr.bf16.gmra.mrb[0].mxu0 %v496
      %v3003 = vpop.f32.mrb[0].mxu0
      %v3004 = vadd.f32 %v2795, %v3003
      %v3005 = vpop.f32.mrb[0].mxu0
      %v3006 = vpop.f32.mrb[0].mxu0
      %v3007 = vadd.f32 %v2795, %v3006
      %v3008 = vpop.f32.mrb[0].mxu0
      %3009 = vmatprep.mubr.bf16.mxu0 %v500
      %3010 = vmatmul.mubr.bf16.gmra.mrb[0].mxu0 %v499
      %v3011 = vpop.f32.mrb[0].mxu0
      %v3012 = vadd.f32 %v2795, %v3011
      %v3013 = vpop.f32.mrb[0].mxu0
      %v3014 = vpop.f32.mrb[0].mxu0
      %v3015 = vadd.f32 %v2795, %v3014
      %v3016 = vpop.f32.mrb[0].mxu0
      %3017 = vmatprep.mubr.bf16.mxu0 %v503
      %3018 = vmatmul.mubr.bf16.gmra.mrb[0].mxu0 %v502
      %v3019 = vpop.f32.mrb[0].mxu0
      %v3020 = vadd.f32 %v2795, %v3019
      %v3021 = vpop.f32.mrb[0].mxu0
      %v3022 = vpop.f32.mrb[0].mxu0
      %v3023 = vadd.f32 %v2795, %v3022
      %v3024 = vpop.f32.mrb[0].mxu0
      %3025 = vmatprep.mubr.bf16.mxu0 %v506
      %3026 = vmatmul.mubr.bf16.gmra.mrb[0].mxu0 %v505
      %v3027 = vpop.f32.mrb[0].mxu0
      %v3028 = vadd.f32 %v2795, %v3027
      %v3029 = vpop.f32.mrb[0].mxu0
      %v3030 = vpop.f32.mrb[0].mxu0
      %v3031 = vadd.f32 %v2795, %v3030
      %v3032 = vpop.f32.mrb[0].mxu0
      %3033 = vmatprep.mubr.bf16.mxu0 %v509
      %3034 = vmatmul.mubr.bf16.gmra.mrb[0].mxu0 %v508
      %v3035 = vpop.f32.mrb[0].mxu0
      %v3036 = vadd.f32 %v2795, %v3035
      %v3037 = vpop.f32.mrb[0].mxu0
      %v3038 = vpop.f32.mrb[0].mxu0
      %v3039 = vadd.f32 %v2795, %v3038
      %v3040 = vpop.f32.mrb[0].mxu0
      %3041 = vmatprep.mubr.bf16.mxu0 %v512
      %3042 = vmatmul.mubr.bf16.gmra.mrb[0].mxu0 %v511
      %v3043 = vpop.f32.mrb[0].mxu0
      %v3044 = vadd.f32 %v2795, %v3043
      %v3045 = vpop.f32.mrb[0].mxu0
      %v3046 = vpop.f32.mrb[0].mxu0
      %v3047 = vadd.f32 %v2795, %v3046
      %v3048 = vpop.f32.mrb[0].mxu0
      %3049 = vmatprep.mubr.bf16.mxu0 %v515
      %3050 = vmatmul.mubr.bf16.gmra.mrb[0].mxu0 %v514
      %v3051 = vpop.f32.mrb[0].mxu0
      %v3052 = vadd.f32 %v2795, %v3051
      %v3053 = vpop.f32.mrb[0].mxu0
      %v3054 = vpop.f32.mrb[0].mxu0
      %v3055 = vadd.f32 %v2795, %v3054
      %v3056 = vpop.f32.mrb[0].mxu0
      %3057 = vmatprep.mubr.bf16.mxu0 %v518
      %3058 = vmatmul.mubr.bf16.gmra.mrb[0].mxu0 %v517
      %v3059 = vpop.f32.mrb[0].mxu0
      %v3060 = vadd.f32 %v2795, %v3059
      %v3061 = vpop.f32.mrb[0].mxu0
      %v3062 = vpop.f32.mrb[0].mxu0
      %v3063 = vadd.f32 %v2795, %v3062
      %v3064 = vpop.f32.mrb[0].mxu0
      %3065 = vmatprep.mubr.bf16.mxu0 %v521
      %3066 = vmatmul.mubr.bf16.gmra.mrb[0].mxu0 %v520
      %v3067 = vpop.f32.mrb[0].mxu0
      %v3068 = vadd.f32 %v2795, %v3067
      %v3069 = vpop.f32.mrb[0].mxu0
      %v3070 = vpop.f32.mrb[0].mxu0
      %v3071 = vadd.f32 %v2795, %v3070
      %v3072 = vpop.f32.mrb[0].mxu0
      %3073 = vmatprep.mubr.bf16.mxu0 %v524
      %3074 = vmatmul.mubr.bf16.gmra.mrb[0].mxu0 %v523
      %v3075 = vpop.f32.mrb[0].mxu0
      %v3076 = vadd.f32 %v2795, %v3075
      %v3077 = vpop.f32.mrb[0].mxu0
      %v3078 = vpop.f32.mrb[0].mxu0
      %v3079 = vadd.f32 %v2795, %v3078
      %v3080 = vpop.f32.mrb[0].mxu0
      %3081 = vmatprep.mubr.bf16.mxu0 %v527
      %3082 = vmatmul.mubr.bf16.gmra.mrb[0].mxu0 %v526
      %v3083 = vpop.f32.mrb[0].mxu0
      %v3084 = vadd.f32 %v2795, %v3083
      %v3085 = vpop.f32.mrb[0].mxu0
      %v3086 = vpop.f32.mrb[0].mxu0
      %v3087 = vadd.f32 %v2795, %v3086
      %v3088 = vpop.f32.mrb[0].mxu0
      %3089 = vdwg.mxu0
      %3090 = vmatprep.subr.bf16.mxu0 0
      %3091 = vmatpush1.bf16.msra.mxu0 %v2889
      %3092 = vmatprep.subr.bf16.mxu0 0
      %3093 = vmatpush1.bf16.msra.mxu0 %v2890
      %3094 = vmatprep.subr.bf16.mxu0 0
      %3095 = vmatpush1.bf16.msra.mxu0 %v2911
      %3096 = vmatprep.subr.bf16.mxu0 0
      %3097 = vmatpush1.bf16.msra.mxu0 0
      %3098 = vmatprep.subr.bf16.mxu0 0
      %3099 = vmatpush1.bf16.msra.mxu0 0
      %3100 = vmatprep.subr.bf16.mxu0 0
      %3101 = vmatpush1.bf16.msra.mxu0 0
      %3102 = vmatprep.subr.bf16.mxu0 0
      %3103 = vmatpush1.bf16.msra.mxu0 0
      %3104 = vmatprep.subr.bf16.mxu0 0
      %3105 = vmatpush1.bf16.msra.mxu0 0
      %3106 = vmatprep.subr.bf16.mxu0 0
      %3107 = vmatpush1.bf16.msra.mxu0 0
      %3108 = vmatprep.subr.bf16.mxu0 0
      %3109 = vmatpush1.bf16.msra.mxu0 0
      %3110 = vmatprep.subr.bf16.mxu0 0
      %3111 = vmatpush1.bf16.msra.mxu0 0
      %3112 = vmatprep.subr.bf16.mxu0 0
      %3113 = vmatpush1.bf16.msra.mxu0 0
      %3114 = vmatprep.subr.bf16.mxu0 0
      %3115 = vmatpush1.bf16.msra.mxu0 0
      %3116 = vmatprep.subr.bf16.mxu0 0
      %3117 = vmatpush1.bf16.msra.mxu0 0
      %3118 = vmatprep.subr.bf16.mxu0 0
      %3119 = vmatpush1.bf16.msra.mxu0 0
      %3120 = vmatprep.subr.bf16.mxu0 0
      %3121 = vmatpush1.bf16.msra.mxu0 0
      %3122 = vmatprep.mubr.bf16.mxu0 0
      %3123 = vmatmul.mubr.bf16.gmra.mrb[0].mxu0 %v680
      %v3124 = vpop.f32.mrb[0].mxu0
      %v3125 = vadd.f32 %v2948, %v3124
      %v3126 = vpop.f32.mrb[0].mxu0
      %v3127 = vpop.f32.mrb[0].mxu0
      %v3128 = vadd.f32 %v2951, %v3127
      %v3129 = vpop.f32.mrb[0].mxu0
      %3130 = vmatprep.mubr.bf16.mxu0 0
      %3131 = vmatmul.mubr.bf16.gmra.mrb[0].mxu0 %v683
      %v3132 = vpop.f32.mrb[0].mxu0
      %v3133 = vadd.f32 %v2956, %v3132
      %v3134 = vpop.f32.mrb[0].mxu0
      %v3135 = vpop.f32.mrb[0].mxu0
      %v3136 = vadd.f32 %v2959, %v3135
      %v3137 = vpop.f32.mrb[0].mxu0
      %3138 = vmatprep.mubr.bf16.mxu0 0
      %3139 = vmatmul.mubr.bf16.gmra.mrb[0].mxu0 %v686
      %v3140 = vpop.f32.mrb[0].mxu0
      %v3141 = vadd.f32 %v2964, %v3140
      %v3142 = vpop.f32.mrb[0].mxu0
      %v3143 = vpop.f32.mrb[0].mxu0
      %v3144 = vadd.f32 %v2967, %v3143
      %v3145 = vpop.f32.mrb[0].mxu0
      %3146 = vmatprep.mubr.bf16.mxu0 0
      %3147 = vmatmul.mubr.bf16.gmra.mrb[0].mxu0 %v689
      %v3148 = vpop.f32.mrb[0].mxu0
      %v3149 = vadd.f32 %v2972, %v3148
      %v3150 = vpop.f32.mrb[0].mxu0
      %v3151 = vpop.f32.mrb[0].mxu0
      %v3152 = vadd.f32 %v2975, %v3151
      %v3153 = vpop.f32.mrb[0].mxu0
      %3154 = vmatprep.mubr.bf16.mxu0 0
      %3155 = vmatmul.mubr.bf16.gmra.mrb[0].mxu0 %v692
      %v3156 = vpop.f32.mrb[0].mxu0
      %v3157 = vadd.f32 %v2980, %v3156
      %v3158 = vpop.f32.mrb[0].mxu0
      %v3159 = vpop.f32.mrb[0].mxu0
      %v3160 = vadd.f32 %v2983, %v3159
      %v3161 = vpop.f32.mrb[0].mxu0
      %3162 = vmatprep.mubr.bf16.mxu0 0
      %3163 = vmatmul.mubr.bf16.gmra.mrb[0].mxu0 %v695
      %v3164 = vpop.f32.mrb[0].mxu0
      %v3165 = vadd.f32 %v2988, %v3164
      %v3166 = vpop.f32.mrb[0].mxu0
      %v3167 = vpop.f32.mrb[0].mxu0
      %v3168 = vadd.f32 %v2991, %v3167
      %v3169 = vpop.f32.mrb[0].mxu0
      %3170 = vmatprep.mubr.bf16.mxu0 0
      %3171 = vmatmul.mubr.bf16.gmra.mrb[0].mxu0 %v698
      %v3172 = vpop.f32.mrb[0].mxu0
      %v3173 = vadd.f32 %v2996, %v3172
      %v3174 = vpop.f32.mrb[0].mxu0
      %v3175 = vpop.f32.mrb[0].mxu0
      %v3176 = vadd.f32 %v2999, %v3175
      %v3177 = vpop.f32.mrb[0].mxu0
      %3178 = vmatprep.mubr.bf16.mxu0 0
      %3179 = vmatmul.mubr.bf16.gmra.mrb[0].mxu0 %v701
      %v3180 = vpop.f32.mrb[0].mxu0
      %v3181 = vadd.f32 %v3004, %v3180
      %v3182 = vpop.f32.mrb[0].mxu0
      %v3183 = vpop.f32.mrb[0].mxu0
      %v3184 = vadd.f32 %v3007, %v3183
      %v3185 = vpop.f32.mrb[0].mxu0
      %3186 = vmatprep.mubr.bf16.mxu0 0
      %3187 = vmatmul.mubr.bf16.gmra.mrb[0].mxu0 %v704
      %v3188 = vpop.f32.mrb[0].mxu0
      %v3189 = vadd.f32 %v3012, %v3188
      %v3190 = vpop.f32.mrb[0].mxu0
      %v3191 = vpop.f32.mrb[0].mxu0
      %v3192 = vadd.f32 %v3015, %v3191
      %v3193 = vpop.f32.mrb[0].mxu0
      %3194 = vmatprep.mubr.bf16.mxu0 0
      %3195 = vmatmul.mubr.bf16.gmra.mrb[0].mxu0 %v707
      %v3196 = vpop.f32.mrb[0].mxu0
      %v3197 = vadd.f32 %v3020, %v3196
      %v3198 = vpop.f32.mrb[0].mxu0
      %v3199 = vpop.f32.mrb[0].mxu0
      %v3200 = vadd.f32 %v3023, %v3199
      %v3201 = vpop.f32.mrb[0].mxu0
      %3202 = vmatprep.mubr.bf16.mxu0 0
      %3203 = vmatmul.mubr.bf16.gmra.mrb[0].mxu0 %v710
      %v3204 = vpop.f32.mrb[0].mxu0
      %v3205 = vadd.f32 %v3028, %v3204
      %v3206 = vpop.f32.mrb[0].mxu0
      %v3207 = vpop.f32.mrb[0].mxu0
      %v3208 = vadd.f32 %v3031, %v3207
      %v3209 = vpop.f32.mrb[0].mxu0
      %3210 = vmatprep.mubr.bf16.mxu0 0
      %3211 = vmatmul.mubr.bf16.gmra.mrb[0].mxu0 %v713
      %v3212 = vpop.f32.mrb[0].mxu0
      %v3213 = vadd.f32 %v3036, %v3212
      %v3214 = vpop.f32.mrb[0].mxu0
      %v3215 = vpop.f32.mrb[0].mxu0
      %v3216 = vadd.f32 %v3039, %v3215
      %v3217 = vpop.f32.mrb[0].mxu0
      %3218 = vmatprep.mubr.bf16.mxu0 0
      %3219 = vmatmul.mubr.bf16.gmra.mrb[0].mxu0 %v716
      %v3220 = vpop.f32.mrb[0].mxu0
      %v3221 = vadd.f32 %v3044, %v3220
      %v3222 = vpop.f32.mrb[0].mxu0
      %v3223 = vpop.f32.mrb[0].mxu0
      %v3224 = vadd.f32 %v3047, %v3223
      %v3225 = vpop.f32.mrb[0].mxu0
      %3226 = vmatprep.mubr.bf16.mxu0 0
      %3227 = vmatmul.mubr.bf16.gmra.mrb[0].mxu0 %v719
      %v3228 = vpop.f32.mrb[0].mxu0
      %v3229 = vadd.f32 %v3052, %v3228
      %v3230 = vpop.f32.mrb[0].mxu0
      %v3231 = vpop.f32.mrb[0].mxu0
      %v3232 = vadd.f32 %v3055, %v3231
      %v3233 = vpop.f32.mrb[0].mxu0
      %3234 = vmatprep.mubr.bf16.mxu0 0
      %3235 = vmatmul.mubr.bf16.gmra.mrb[0].mxu0 %v722
      %v3236 = vpop.f32.mrb[0].mxu0
      %v3237 = vadd.f32 %v3060, %v3236
      %v3238 = vpop.f32.mrb[0].mxu0
      %v3239 = vpop.f32.mrb[0].mxu0
      %v3240 = vadd.f32 %v3063, %v3239
      %v3241 = vpop.f32.mrb[0].mxu0
      %3242 = vmatprep.mubr.bf16.mxu0 0
      %3243 = vmatmul.mubr.bf16.gmra.mrb[0].mxu0 %v725
      %v3244 = vpop.f32.mrb[0].mxu0
      %v3245 = vadd.f32 %v3068, %v3244
      %v3246 = vpop.f32.mrb[0].mxu0
      %v3247 = vpop.f32.mrb[0].mxu0
      %v3248 = vadd.f32 %v3071, %v3247
      %v3249 = vpop.f32.mrb[0].mxu0
      %3250 = vmatprep.mubr.bf16.mxu0 0
      %3251 = vmatmul.mubr.bf16.gmra.mrb[0].mxu0 %v728
      %v3252 = vpop.f32.mrb[0].mxu0
      %v3253 = vadd.f32 %v3076, %v3252
      %v3254 = vpop.f32.mrb[0].mxu0
      %v3255 = vpop.f32.mrb[0].mxu0
      %v3256 = vadd.f32 %v3079, %v3255
      %v3257 = vpop.f32.mrb[0].mxu0
      %3258 = vmatprep.mubr.bf16.mxu0 0
      %3259 = vmatmul.mubr.bf16.gmra.mrb[0].mxu0 %v731
      %v3260 = vpop.f32.mrb[0].mxu0
      %v3261 = vadd.f32 %v3084, %v3260
      %v3262 = vpop.f32.mrb[0].mxu0
      %v3263 = vpop.f32.mrb[0].mxu0
      %v3264 = vadd.f32 %v3087, %v3263
      %v3265 = vpop.f32.mrb[0].mxu0
      %3266 = vdwg.mxu0
      %v3267 = vmax.f32 %v2714, %v3125
      %v3268 = vmax.f32 %v2715, %v3128
      %v3269 = vmax.f32 %v2716, %v3133
      %v3270 = vmax.f32 %v2717, %v3136
      %v3271 = vmax.f32 %v2718, %v3141
      %v3272 = vmax.f32 %v2719, %v3144
      %v3273 = vmax.f32 %v2720, %v3149
      %v3274 = vmax.f32 %v2721, %v3152
      %v3275 = vmax.f32 %v2722, %v3157
      %v3276 = vmax.f32 %v2723, %v3160
      %v3277 = vmax.f32 %v2724, %v3165
      %v3278 = vmax.f32 %v2725, %v3168
      %v3279 = vmax.f32 %v2726, %v3173
      %v3280 = vmax.f32 %v2727, %v3176
      %v3281 = vmax.f32 %v2728, %v3181
      %v3282 = vmax.f32 %v2729, %v3184
      %v3283 = vmax.f32 %v2730, %v3189
      %v3284 = vmax.f32 %v2731, %v3192
      %v3285 = vmax.f32 %v2732, %v3197
      %v3286 = vmax.f32 %v2733, %v3200
      %v3287 = vmax.f32 %v2734, %v3205
      %v3288 = vmax.f32 %v2735, %v3208
      %v3289 = vmax.f32 %v2736, %v3213
      %v3290 = vmax.f32 %v2737, %v3216
      %v3291 = vmax.f32 %v2738, %v3221
      %v3292 = vmax.f32 %v2739, %v3224
      %v3293 = vmax.f32 %v2740, %v3229
      %v3294 = vmax.f32 %v2741, %v3232
      %v3295 = vmax.f32 %v2742, %v3237
      %v3296 = vmax.f32 %v2743, %v3240
      %v3297 = vmax.f32 %v2744, %v3245
      %v3298 = vmax.f32 %v2745, %v3248
      %v3299 = vmax.f32 %v2746, %v3253
      %v3300 = vmax.f32 %v2747, %v3256
      %v3301 = vmax.f32 %v2748, %v3261
      %v3302 = vmax.f32 %v2749, %v3264
      %v3303 = vpack.c.bf16 %v3268, %v3267
      %v3304 = vpack.c.bf16 %v3270, %v3269
      %v3305 = vpack.c.bf16 %v3272, %v3271
      %v3306 = vpack.c.bf16 %v3274, %v3273
      %v3307 = vpack.c.bf16 %v3276, %v3275
      %v3308 = vpack.c.bf16 %v3278, %v3277
      %v3309 = vpack.c.bf16 %v3280, %v3279
      %v3310 = vpack.c.bf16 %v3282, %v3281
      %v3311 = vpack.c.bf16 %v3284, %v3283
      %v3312 = vpack.c.bf16 %v3286, %v3285
      %v3313 = vpack.c.bf16 %v3288, %v3287
      %v3314 = vpack.c.bf16 %v3290, %v3289
      %v3315 = vpack.c.bf16 %v3292, %v3291
      %v3316 = vpack.c.bf16 %v3294, %v3293
      %v3317 = vpack.c.bf16 %v3296, %v3295
      %v3318 = vpack.c.bf16 %v3298, %v3297
      %v3319 = vpack.c.bf16 %v3300, %v3299
      %v3320 = vpack.c.bf16 %v3302, %v3301
      %v3339 = vunpack.c.l.b16 %v3303
      %v3340 = vunpack.c.h.b16 %v3303
      %v3341 = vunpack.c.l.b16 %v3304
      %v3342 = vunpack.c.h.b16 %v3304
      %v3343 = vunpack.c.l.b16 %v3305
      %v3344 = vunpack.c.h.b16 %v3305
      %v3345 = vunpack.c.l.b16 %v3306
      %v3346 = vunpack.c.h.b16 %v3306
      %v3347 = vunpack.c.l.b16 %v3307
      %v3348 = vunpack.c.h.b16 %v3307
      %v3349 = vunpack.c.l.b16 %v3308
      %v3350 = vunpack.c.h.b16 %v3308
      %v3351 = vunpack.c.l.b16 %v3309
      %v3352 = vunpack.c.h.b16 %v3309
      %v3353 = vunpack.c.l.b16 %v3310
      %v3354 = vunpack.c.h.b16 %v3310
      %v3355 = vunpack.c.l.b16 %v3311
      %v3356 = vunpack.c.h.b16 %v3311
      %v3357 = vunpack.c.l.b16 %v3312
      %v3358 = vunpack.c.h.b16 %v3312
      %v3359 = vunpack.c.l.b16 %v3313
      %v3360 = vunpack.c.h.b16 %v3313
      %v3361 = vunpack.c.l.b16 %v3314
      %v3362 = vunpack.c.h.b16 %v3314
      %v3363 = vunpack.c.l.b16 %v3315
      %v3364 = vunpack.c.h.b16 %v3315
      %v3365 = vunpack.c.l.b16 %v3316
      %v3366 = vunpack.c.h.b16 %v3316
      %v3367 = vunpack.c.l.b16 %v3317
      %v3368 = vunpack.c.h.b16 %v3317
      %v3369 = vunpack.c.l.b16 %v3318
      %v3370 = vunpack.c.h.b16 %v3318
      %v3371 = vunpack.c.l.b16 %v3319
      %v3372 = vunpack.c.h.b16 %v3319
      %v3373 = vunpack.c.l.b16 %v3320
      %v3374 = vunpack.c.h.b16 %v3320
      %v3375 = vpack.c.b16 %v3339, %v3339
      %v3376 = vpack.c.b16 %v3340, %v3340
      %v3377 = vpack.c.b16 %v3341, %v3341
      %v3378 = vpack.c.b16 %v3342, %v3342
      %v3379 = vpack.c.b16 %v3343, %v3343
      %v3380 = vpack.c.b16 %v3344, %v3344
      %v3381 = vpack.c.b16 %v3345, %v3345
      %v3382 = vpack.c.b16 %v3346, %v3346
      %v3383 = vpack.c.b16 %v3347, %v3347
      %v3384 = vpack.c.b16 %v3348, %v3348
      %v3385 = vpack.c.b16 %v3349, %v3349
      %v3386 = vpack.c.b16 %v3350, %v3350
      %v3387 = vpack.c.b16 %v3351, %v3351
      %v3388 = vpack.c.b16 %v3352, %v3352
      %v3389 = vpack.c.b16 %v3353, %v3353
      %v3390 = vpack.c.b16 %v3354, %v3354
      %v3391 = vpack.c.b16 %v3355, %v3355
      %v3392 = vpack.c.b16 %v3356, %v3356
      %v3393 = vpack.c.b16 %v3357, %v3357
      %v3394 = vpack.c.b16 %v3358, %v3358
      %v3395 = vpack.c.b16 %v3359, %v3359
      %v3396 = vpack.c.b16 %v3360, %v3360
      %v3397 = vpack.c.b16 %v3361, %v3361
      %v3398 = vpack.c.b16 %v3362, %v3362
      %v3399 = vpack.c.b16 %v3363, %v3363
      %v3400 = vpack.c.b16 %v3364, %v3364
      %v3401 = vpack.c.b16 %v3365, %v3365
      %v3402 = vpack.c.b16 %v3366, %v3366
      %v3403 = vpack.c.b16 %v3367, %v3367
      %v3404 = vpack.c.b16 %v3368, %v3368
      %v3405 = vpack.c.b16 %v3369, %v3369
      %v3406 = vpack.c.b16 %v3370, %v3370
      %v3407 = vpack.c.b16 %v3371, %v3371
      %v3408 = vpack.c.b16 %v3372, %v3372
      %v3409 = vpack.c.b16 %v3373, %v3373
      %v3410 = vpack.c.b16 %v3374, %v3374
      %3447 = vst [vmem:[%s175] sm:$0xf] %v3375
      %3448 = vst [vmem:[%s175 + $0x4] sm:$0xf] %v3376
      %3449 = vst [vmem:[%s175 + $0x8] sm:$0xf] %v3377
      %3450 = vst [vmem:[%s175 + $0xc] sm:$0xf] %v3378
      %3451 = vst [vmem:[%s175 + $0x10] sm:$0xf] %v3379
      %3452 = vst [vmem:[%s175 + $0x14] sm:$0xf] %v3380
      %3453 = vst [vmem:[%s175 + $0x18] sm:$0xf] %v3381
      %3454 = vst [vmem:[%s175 + $0x1c] sm:$0xf] %v3382
      %3455 = vst [vmem:[%s175 + $0x20] sm:$0xf] %v3383
      %3456 = vst [vmem:[%s175 + $0x24] sm:$0xf] %v3384
      %3457 = vst [vmem:[%s175 + $0x28] sm:$0xf] %v3385
      %3458 = vst [vmem:[%s175 + $0x2c] sm:$0xf] %v3386
      %3459 = vst [vmem:[%s175 + $0x30] sm:$0xf] %v3387
      %3460 = vst [vmem:[%s175 + $0x34] sm:$0xf] %v3388
      %3461 = vst [vmem:[%s175 + $0x38] sm:$0xf] %v3389
      %3462 = vst [vmem:[%s175 + $0x3c] sm:$0xf] %v3390
      %3463 = vst [vmem:[%s175 + $0x40] sm:$0xf] %v3391
      %3464 = vst [vmem:[%s175 + $0x44] sm:$0xf] %v3392
      %3465 = vst [vmem:[%s175 + $0x48] sm:$0xf] %v3393
      %3466 = vst [vmem:[%s175 + $0x4c] sm:$0xf] %v3394
      %3467 = vst [vmem:[%s175 + $0x50] sm:$0xf] %v3395
      %3468 = vst [vmem:[%s175 + $0x54] sm:$0xf] %v3396
      %3469 = vst [vmem:[%s175 + $0x58] sm:$0xf] %v3397
      %3470 = vst [vmem:[%s175 + $0x5c] sm:$0xf] %v3398
      %3471 = vst [vmem:[%s175 + $0x60] sm:$0xf] %v3399
      %3472 = vst [vmem:[%s175 + $0x64] sm:$0xf] %v3400
      %3473 = vst [vmem:[%s175 + $0x68] sm:$0xf] %v3401
      %3474 = vst [vmem:[%s175 + $0x6c] sm:$0xf] %v3402
      %3475 = vst [vmem:[%s175 + $0x70] sm:$0xf] %v3403
      %3476 = vst [vmem:[%s175 + $0x74] sm:$0xf] %v3404
      %3477 = vst [vmem:[%s175 + $0x78] sm:$0xf] %v3405
      %3478 = vst [vmem:[%s175 + $0x7c] sm:$0xf] %v3406
      %3479 = vst [vmem:[%s175 + $0x80] sm:$0xf] %v3407
      %3480 = vst [vmem:[%s175 + $0x84] sm:$0xf] %v3408
      %3481 = vst [vmem:[%s175 + $0x88] sm:$0xf] %v3409
      %3482 = vst [vmem:[%s175 + $0x8c] sm:$0xf] %v3410
      %s3483 = smul.u32 36, %s14
      %p3484 = scmp.lt.s32.totalorder %s3483, 143
      %s3485 = scalar_select %p3484, %s3483, 143
      %s3486 = smul.addr %s3485, 4
      %s3487 = scalar_lea.vmem %s3, %s3486
      // Predicated region
      $region33: #{forward.4} parent=31 // pred_check
        %p3488 = pneg %p100
      $region34: #{forward.4} parent=31 // pred_check_branch
        %3490 = sbr.rel (%p3488) target = $region36
      $region35: #{forward.4} parent=31 // pred_region
        %s3491 = smul.u32 36, %s14
      $region36: #{forward.4} parent=31 // pred_fallthru
        _
    $region32: #{forward.4} parent=5 // pred_fallthru
      _
    %p3492 = scmp.le.s32.totalorder 2, %s9
    // Predicated region
    $region37: #{forward.4} parent=5 // pred_check
      %p3493 = pneg %p3492
    $region38: #{forward.4} parent=5 // pred_check_branch
      %3495 = sbr.rel (%p3493) target = $region40
    $region39: #{forward.4} parent=5 // pred_region
      %s3496 = ssub.s32 %s9, 2
      // Predicated region
      $region41: #{forward.4} parent=39 // pred_check
        %p3497 = pneg %p106
      $region42: #{forward.4} parent=39 // pred_check_branch
        %3499 = sbr.rel (%p3497) target = $region44
      $region43: #{forward.4} parent=39 // pred_region
        %s3500 = smul.u32 36, %s15
        %p3501 = scmp.lt.s32.totalorder %s3500, 143
        %s3502 = scalar_select %p3501, %s3500, 143
        %s3503 = smul.addr %s3502, 4
        %s3504 = scalar_lea.vmem %s3, %s3503
      $region44: #{forward.4} parent=39 // pred_fallthru
        _
    $region40: #{forward.4} parent=5 // pred_fallthru
      _
  $region6: #{forward.4} parent=0 // loop_footer
    %s13 = sadd.s32 1, %s9
  $region7: #{forward.4} parent=0 // loop_footer_branch
    %8 = sbr.rel target = $region3
  $region8: #{forward.4} parent=0 // loop_exit
    _

// kernel: forward.5
$region0: #{forward.5}
  #allocation0 [shape = 'u32[]', space=smem, size = 0x4, offset = 0x4, fixed_abs, tag = 'smem constant byte address 0x4 - core index']
  #allocation1 [shape = 'u32[144,128]{1,0:T(1,128)}', space=vmem, size = 0x12000, scoped, tag = 'internal scratch']
  #allocation2 [shape = 'f32[16,128]{1,0:T(8,128)}', space=vmem, size = 0x2000, scoped, tag = 'scratch operand']
  %s0 = inlined_call_operand.vmem [shape: bf16[16,18432], index: 0, kind: input, shape index: {}]
  %s1 = inlined_call_operand.vmem [shape: bf16[18432,128], index: 1, kind: input, shape index: {}]
  %s2 = inlined_call_operand.vmem [shape: f32[1,128], index: 2, kind: input, shape index: {}]
  %s3 = inlined_call_operand.vmem [shape: f32[24,128], index: 3, kind: input, shape index: {}]
  %s4 = inlined_call_operand.vmem [shape: f32[1,128], index: 4, kind: input, shape index: {}]
  %s5 = inlined_call_operand.vmem [shape: f32[16,128], index: 5, kind: output, shape index: {}]
  %s6 = sld [smem:[#allocation0]]
  $region84: #{forward.5} parent=0
    _
  %s8 = ssub.s32 1, %s6
  %s9 = scalar_select 0, %s8, %s6
  $region1: #{forward.5} parent=0
    #allocation3 [shape = 'u8[589824]{0}', space=vmem, size = 0x90000, scoped, tag = 'input window, operand 0']
    loop: start=0, step=1, limit=4
    $region2: #{forward.5} parent=1 // loop_pre_header
      _
    $region3: #{forward.5} parent=1 // loop_header
      %s11 = sphi 0, %s15
      %p12 = scmp.ge.s32.totalorder %s11, 4
      %s21 = sphi 0, %s23
      %s24 = sphi 0, %s21
      %s25 = sphi 0, %s24
      %s41 = sphi 0, %s25
      %s47 = sphi 0, %s49
      %s50 = sphi 0, %s47
      %s51 = sphi 0, %s50
      %s67 = sphi 0, %s51
      %s71 = sphi 0, %s71
      %s73 = sphi 0, %s71
      %s74 = sphi 0, %s73
      %s88 = sphi 0, %s74
      %s92 = sphi 0, %s92
      %s94 = sphi 0, %s92
      %s95 = sphi 0, %s94
      %s109 = sphi 0, %s95
      %s113 = sphi 0, %s113
      %s115 = sphi 0, %s113
      %s116 = sphi 0, %s115
      %s130 = sphi 0, %s116
      %s134 = sphi 0, %s134
      %s136 = sphi 0, %s134
      %s137 = sphi 0, %s136
      %s151 = sphi 0, %s137
    $region4: #{forward.5} parent=1 // loop_header_branch
      %14 = sbr.rel (%p12) target = $region8
    $region5: #{forward.5} parent=1 // loop_body
      %s16 = ssub.s32 %s11, 1
      %s17 = ssub.s32 %s11, 2
      %s18 = sadd.s32 %s11, 1
      %s19 = ssub.s32 %s11, %s18
      %p20 = scmp.eq.s32.totalorder %s19, 0
      %s22 = sadd.s32 %s21, 1
      %s23 = scalar_select %p20, %s21, %s22
      %p26 = pneg %p20
      %p27 = scmp.eq.s32.totalorder %s11, 1
      %p28 = por %p26, %p27
      %p29 = scmp.ne.s32.totalorder %s21, %s24
      %p30 = scmp.eq.s32.totalorder %s11, 0
      %p31 = por %p29, %p30
      %p32 = scmp.ne.s32.totalorder %s21, %s24
      %p33 = scmp.eq.s32.totalorder %s16, 1
      %p34 = por %p32, %p33
      %p35 = scmp.ne.s32.totalorder %s24, %s25
      %p36 = scmp.eq.s32.totalorder %s16, 0
      %p37 = por %p35, %p36
      %p38 = scmp.ne.s32.totalorder %s24, %s25
      %p39 = scmp.eq.s32.totalorder %s17, 1
      %p40 = por %p38, %p39
      %p42 = scmp.ne.s32.totalorder %s25, %s41
      %p43 = scmp.eq.s32.totalorder %s17, 0
      %p44 = por %p42, %p43
      %s45 = ssub.s32 %s11, %s18
      %p46 = scmp.eq.s32.totalorder %s45, 0
      %s48 = sadd.s32 %s47, 1
      %s49 = scalar_select %p46, %s47, %s48
      %p52 = pneg %p46
      %p53 = scmp.eq.s32.totalorder %s11, 1
      %p54 = por %p52, %p53
      %p55 = scmp.ne.s32.totalorder %s47, %s50
      %p56 = scmp.eq.s32.totalorder %s11, 0
      %p57 = por %p55, %p56
      %p58 = scmp.ne.s32.totalorder %s47, %s50
      %p59 = scmp.eq.s32.totalorder %s16, 1
      %p60 = por %p58, %p59
      %p61 = scmp.ne.s32.totalorder %s50, %s51
      %p62 = scmp.eq.s32.totalorder %s16, 0
      %p63 = por %p61, %p62
      %p64 = scmp.ne.s32.totalorder %s50, %s51
      %p65 = scmp.eq.s32.totalorder %s17, 1
      %p66 = por %p64, %p65
      %p68 = scmp.ne.s32.totalorder %s51, %s67
      %p69 = scmp.eq.s32.totalorder %s17, 0
      %p70 = por %p68, %p69
      %s72 = sadd.s32 %s71, 1
      %p75 = scmp.eq.s32.totalorder %s11, 1
      %p76 = scmp.ne.s32.totalorder %s71, %s73
      %p77 = scmp.eq.s32.totalorder %s11, 0
      %p78 = por %p76, %p77
      %p79 = scmp.ne.s32.totalorder %s71, %s73
      %p80 = scmp.eq.s32.totalorder %s16, 1
      %p81 = por %p79, %p80
      %p82 = scmp.ne.s32.totalorder %s73, %s74
      %p83 = scmp.eq.s32.totalorder %s16, 0
      %p84 = por %p82, %p83
      %p85 = scmp.ne.s32.totalorder %s73, %s74
      %p86 = scmp.eq.s32.totalorder %s17, 1
      %p87 = por %p85, %p86
      %p89 = scmp.ne.s32.totalorder %s74, %s88
      %p90 = scmp.eq.s32.totalorder %s17, 0
      %p91 = por %p89, %p90
      %s93 = sadd.s32 %s92, 1
      %p96 = scmp.eq.s32.totalorder %s11, 1
      %p97 = scmp.ne.s32.totalorder %s92, %s94
      %p98 = scmp.eq.s32.totalorder %s11, 0
      %p99 = por %p97, %p98
      %p100 = scmp.ne.s32.totalorder %s92, %s94
      %p101 = scmp.eq.s32.totalorder %s16, 1
      %p102 = por %p100, %p101
      %p103 = scmp.ne.s32.totalorder %s94, %s95
      %p104 = scmp.eq.s32.totalorder %s16, 0
      %p105 = por %p103, %p104
      %p106 = scmp.ne.s32.totalorder %s94, %s95
      %p107 = scmp.eq.s32.totalorder %s17, 1
      %p108 = por %p106, %p107
      %p110 = scmp.ne.s32.totalorder %s95, %s109
      %p111 = scmp.eq.s32.totalorder %s17, 0
      %p112 = por %p110, %p111
      %s114 = sadd.s32 %s113, 1
      %p117 = scmp.eq.s32.totalorder %s11, 1
      %p118 = scmp.ne.s32.totalorder %s113, %s115
      %p119 = scmp.eq.s32.totalorder %s11, 0
      %p120 = por %p118, %p119
      %p121 = scmp.ne.s32.totalorder %s113, %s115
      %p122 = scmp.eq.s32.totalorder %s16, 1
      %p123 = por %p121, %p122
      %p124 = scmp.ne.s32.totalorder %s115, %s116
      %p125 = scmp.eq.s32.totalorder %s16, 0
      %p126 = por %p124, %p125
      %p127 = scmp.ne.s32.totalorder %s115, %s116
      %p128 = scmp.eq.s32.totalorder %s17, 1
      %p129 = por %p127, %p128
      %p131 = scmp.ne.s32.totalorder %s116, %s130
      %p132 = scmp.eq.s32.totalorder %s17, 0
      %p133 = por %p131, %p132
      %s135 = sadd.s32 %s134, 1
      %p138 = scmp.eq.s32.totalorder %s11, 1
      %p139 = scmp.ne.s32.totalorder %s134, %s136
      %p140 = scmp.eq.s32.totalorder %s11, 0
      %p141 = por %p139, %p140
      %p142 = scmp.ne.s32.totalorder %s134, %s136
      %p143 = scmp.eq.s32.totalorder %s16, 1
      %p144 = por %p142, %p143
      %p145 = scmp.ne.s32.totalorder %s136, %s137
      %p146 = scmp.eq.s32.totalorder %s16, 0
      %p147 = por %p145, %p146
      %p148 = scmp.ne.s32.totalorder %s136, %s137
      %p149 = scmp.eq.s32.totalorder %s17, 1
      %p150 = por %p148, %p149
      %p152 = scmp.ne.s32.totalorder %s137, %s151
      %p153 = scmp.eq.s32.totalorder %s17, 0
      %p154 = por %p152, %p153
      %p155 = scmp.le.s32.totalorder 1, %s11
      %p156 = scmp.lt.s32.totalorder %s11, 3
      %p157 = pnand %p155, %p156
      %p158 = pneg %p157
      // Predicated region
      $region9: #{forward.5} parent=5 // pred_check
        _
      $region10: #{forward.5} parent=5 // pred_check_branch
        %160 = sbr.rel (%p157) target = $region12
      $region11: #{forward.5} parent=5 // pred_region
        %s161 = ssub.s32 %s11, 1
        // Predicated region
        $region13: #{forward.5} parent=11 // pred_check
          %p162 = pneg %p84
        $region14: #{forward.5} parent=11 // pred_check_branch
          %164 = sbr.rel (%p162) target = $region16
        $region15: #{forward.5} parent=11 // pred_region
          _
        $region16: #{forward.5} parent=11 // pred_fallthru
          _
        // Predicated region
        $region17: #{forward.5} parent=11 // pred_check
          %p165 = pneg %p105
        $region18: #{forward.5} parent=11 // pred_check_branch
          %167 = sbr.rel (%p165) target = $region20
        $region19: #{forward.5} parent=11 // pred_region
          _
        $region20: #{forward.5} parent=11 // pred_fallthru
          _
        // Predicated region
        $region21: #{forward.5} parent=11 // pred_check
          %p168 = pneg %p126
        $region22: #{forward.5} parent=11 // pred_check_branch
          %170 = sbr.rel (%p168) target = $region24
        $region23: #{forward.5} parent=11 // pred_region
          _
        $region24: #{forward.5} parent=11 // pred_fallthru
          _
      $region12: #{forward.5} parent=5 // pred_fallthru
        _
      %p171 = scmp.lt.s32.totalorder %s11, 2
      // Predicated region
      $region25: #{forward.5} parent=5 // pred_check
        %p172 = pneg %p171
      $region26: #{forward.5} parent=5 // pred_check_branch
        %174 = sbr.rel (%p172) target = $region28
      $region27: #{forward.5} parent=5 // pred_region
        // Predicated region
        $region29: #{forward.5} parent=27 // pred_check
          %p175 = pneg %p31
        $region30: #{forward.5} parent=27 // pred_check_branch
          %177 = sbr.rel (%p175) target = $region32
        $region31: #{forward.5} parent=27 // pred_region
          %s178 = sand.u32 %s21, 1
          %s179 = sand.u32 %s21, 1
          %s180 = smul.addr %s179, 576
          %s181 = scalar_lea.vmem [#allocation3], %s180
          %s182 = smul.u32 72, %s11
          %s183 = smul.addr %s182, 4
          %s184 = scalar_lea.vmem %s0, %s183
          // Predicated region
          $region33: #{forward.5} parent=31 // pred_check
            _
          $region34: #{forward.5} parent=31 // pred_check_branch
            %186 = sbr.rel (0) target = $region36
          $region35: #{forward.5} parent=31 // pred_region
            // Predicated region
            $region37: #{forward.5} parent=35 // pred_check
              _
            $region38: #{forward.5} parent=35 // pred_check_branch
              %188 = sbr.rel (0) target = $region40
            $region39: #{forward.5} parent=35 // pred_region
              loop: start=0, step=1, limit=1
              $region41: #{forward.5} parent=39 // loop_pre_header
                _
              $region42: #{forward.5} parent=39 // loop_header
                %s190 = sphi 0, %s194
                %p191 = scmp.ge.s32.totalorder %s190, 1
                %s195 = sphi %s184, %s184
                %s196 = sphi %s181, %s181
              $region43: #{forward.5} parent=39 // loop_header_branch
                %193 = sbr.rel (%p191) target = $region47
              $region44: #{forward.5} parent=39 // loop_body
                %v197 = vld [vmem:[%s195] sm:$0xff]
                %198 = vst [vmem:[%s196] sm:$0xff] %v197
                %v199 = vld [vmem:[%s195 + $0x8] sm:$0xff]
                %200 = vst [vmem:[%s196 + $0x8] sm:$0xff] %v199
                %v201 = vld [vmem:[%s195 + $0x10] sm:$0xff]
                %202 = vst [vmem:[%s196 + $0x10] sm:$0xff] %v201
                %v203 = vld [vmem:[%s195 + $0x18] sm:$0xff]
                %204 = vst [vmem:[%s196 + $0x18] sm:$0xff] %v203
                %v205 = vld [vmem:[%s195 + $0x20] sm:$0xff]
                %206 = vst [vmem:[%s196 + $0x20] sm:$0xff] %v205
                %v207 = vld [vmem:[%s195 + $0x28] sm:$0xff]
                %208 = vst [vmem:[%s196 + $0x28] sm:$0xff] %v207
                %v209 = vld [vmem:[%s195 + $0x30] sm:$0xff]
                %210 = vst [vmem:[%s196 + $0x30] sm:$0xff] %v209
                %v211 = vld [vmem:[%s195 + $0x38] sm:$0xff]
                %212 = vst [vmem:[%s196 + $0x38] sm:$0xff] %v211
                %v213 = vld [vmem:[%s195 + $0x40] sm:$0xff]
                %214 = vst [vmem:[%s196 + $0x40] sm:$0xff] %v213
                %v215 = vld [vmem:[%s195 + $0x48] sm:$0xff]
                %216 = vst [vmem:[%s196 + $0x48] sm:$0xff] %v215
                %v217 = vld [vmem:[%s195 + $0x50] sm:$0xff]
                %218 = vst [vmem:[%s196 + $0x50] sm:$0xff] %v217
                %v219 = vld [vmem:[%s195 + $0x58] sm:$0xff]
                %220 = vst [vmem:[%s196 + $0x58] sm:$0xff] %v219
                %v221 = vld [vmem:[%s195 + $0x60] sm:$0xff]
                %222 = vst [vmem:[%s196 + $0x60] sm:$0xff] %v221
                %v223 = vld [vmem:[%s195 + $0x68] sm:$0xff]
                %224 = vst [vmem:[%s196 + $0x68] sm:$0xff] %v223
                %v225 = vld [vmem:[%s195 + $0x70] sm:$0xff]
                %226 = vst [vmem:[%s196 + $0x70] sm:$0xff] %v225
                %v227 = vld [vmem:[%s195 + $0x78] sm:$0xff]
                %228 = vst [vmem:[%s196 + $0x78] sm:$0xff] %v227
                %v229 = vld [vmem:[%s195 + $0x80] sm:$0xff]
                %230 = vst [vmem:[%s196 + $0x80] sm:$0xff] %v229
                %v231 = vld [vmem:[%s195 + $0x88] sm:$0xff]
                %232 = vst [vmem:[%s196 + $0x88] sm:$0xff] %v231
                %v233 = vld [vmem:[%s195 + $0x90] sm:$0xff]
                %234 = vst [vmem:[%s196 + $0x90] sm:$0xff] %v233
                %v235 = vld [vmem:[%s195 + $0x98] sm:$0xff]
                %236 = vst [vmem:[%s196 + $0x98] sm:$0xff] %v235
                %v237 = vld [vmem:[%s195 + $0xa0] sm:$0xff]
                %238 = vst [vmem:[%s196 + $0xa0] sm:$0xff] %v237
                %v239 = vld [vmem:[%s195 + $0xa8] sm:$0xff]
                %240 = vst [vmem:[%s196 + $0xa8] sm:$0xff] %v239
                %v241 = vld [vmem:[%s195 + $0xb0] sm:$0xff]
                %242 = vst [vmem:[%s196 + $0xb0] sm:$0xff] %v241
                %v243 = vld [vmem:[%s195 + $0xb8] sm:$0xff]
                %244 = vst [vmem:[%s196 + $0xb8] sm:$0xff] %v243
                %v245 = vld [vmem:[%s195 + $0xc0] sm:$0xff]
                %246 = vst [vmem:[%s196 + $0xc0] sm:$0xff] %v245
                %v247 = vld [vmem:[%s195 + $0xc8] sm:$0xff]
                %248 = vst [vmem:[%s196 + $0xc8] sm:$0xff] %v247
                %v249 = vld [vmem:[%s195 + $0xd0] sm:$0xff]
                %250 = vst [vmem:[%s196 + $0xd0] sm:$0xff] %v249
                %v251 = vld [vmem:[%s195 + $0xd8] sm:$0xff]
                %252 = vst [vmem:[%s196 + $0xd8] sm:$0xff] %v251
                %v253 = vld [vmem:[%s195 + $0xe0] sm:$0xff]
                %254 = vst [vmem:[%s196 + $0xe0] sm:$0xff] %v253
                %v255 = vld [vmem:[%s195 + $0xe8] sm:$0xff]
                %256 = vst [vmem:[%s196 + $0xe8] sm:$0xff] %v255
                %v257 = vld [vmem:[%s195 + $0xf0] sm:$0xff]
                %258 = vst [vmem:[%s196 + $0xf0] sm:$0xff] %v257
                %v259 = vld [vmem:[%s195 + $0xf8] sm:$0xff]
                %260 = vst [vmem:[%s196 + $0xf8] sm:$0xff] %v259
                %v261 = vld [vmem:[%s195 + $0x100] sm:$0xff]
                %262 = vst [vmem:[%s196 + $0x100] sm:$0xff] %v261
                %v263 = vld [vmem:[%s195 + $0x108] sm:$0xff]
                %264 = vst [vmem:[%s196 + $0x108] sm:$0xff] %v263
                %v265 = vld [vmem:[%s195 + $0x110] sm:$0xff]
                %266 = vst [vmem:[%s196 + $0x110] sm:$0xff] %v265
                %v267 = vld [vmem:[%s195 + $0x118] sm:$0xff]
                %268 = vst [vmem:[%s196 + $0x118] sm:$0xff] %v267
                %v269 = vld [vmem:[%s195 + $0x240] sm:$0xff]
                %270 = vst [vmem:[%s196 + $0x120] sm:$0xff] %v269
                %v271 = vld [vmem:[%s195 + $0x248] sm:$0xff]
                %272 = vst [vmem:[%s196 + $0x128] sm:$0xff] %v271
                %v273 = vld [vmem:[%s195 + $0x250] sm:$0xff]
                %274 = vst [vmem:[%s196 + $0x130] sm:$0xff] %v273
                %v275 = vld [vmem:[%s195 + $0x258] sm:$0xff]
                %276 = vst [vmem:[%s196 + $0x138] sm:$0xff] %v275
                %v277 = vld [vmem:[%s195 + $0x260] sm:$0xff]
                %278 = vst [vmem:[%s196 + $0x140] sm:$0xff] %v277
                %v279 = vld [vmem:[%s195 + $0x268] sm:$0xff]
                %280 = vst [vmem:[%s196 + $0x148] sm:$0xff] %v279
                %v281 = vld [vmem:[%s195 + $0x270] sm:$0xff]
                %282 = vst [vmem:[%s196 + $0x150] sm:$0xff] %v281
                %v283 = vld [vmem:[%s195 + $0x278] sm:$0xff]
                %284 = vst [vmem:[%s196 + $0x158] sm:$0xff] %v283
                %v285 = vld [vmem:[%s195 + $0x280] sm:$0xff]
                %286 = vst [vmem:[%s196 + $0x160] sm:$0xff] %v285
                %v287 = vld [vmem:[%s195 + $0x288] sm:$0xff]
                %288 = vst [vmem:[%s196 + $0x168] sm:$0xff] %v287
                %v289 = vld [vmem:[%s195 + $0x290] sm:$0xff]
                %290 = vst [vmem:[%s196 + $0x170] sm:$0xff] %v289
                %v291 = vld [vmem:[%s195 + $0x298] sm:$0xff]
                %292 = vst [vmem:[%s196 + $0x178] sm:$0xff] %v291
                %v293 = vld [vmem:[%s195 + $0x2a0] sm:$0xff]
                %294 = vst [vmem:[%s196 + $0x180] sm:$0xff] %v293
                %v295 = vld [vmem:[%s195 + $0x2a8] sm:$0xff]
                %296 = vst [vmem:[%s196 + $0x188] sm:$0xff] %v295
                %v297 = vld [vmem:[%s195 + $0x2b0] sm:$0xff]
                %298 = vst [vmem:[%s196 + $0x190] sm:$0xff] %v297
                %v299 = vld [vmem:[%s195 + $0x2b8] sm:$0xff]
                %300 = vst [vmem:[%s196 + $0x198] sm:$0xff] %v299
                %v301 = vld [vmem:[%s195 + $0x2c0] sm:$0xff]
                %302 = vst [vmem:[%s196 + $0x1a0] sm:$0xff] %v301
                %v303 = vld [vmem:[%s195 + $0x2c8] sm:$0xff]
                %304 = vst [vmem:[%s196 + $0x1a8] sm:$0xff] %v303
                %v305 = vld [vmem:[%s195 + $0x2d0] sm:$0xff]
                %306 = vst [vmem:[%s196 + $0x1b0] sm:$0xff] %v305
                %v307 = vld [vmem:[%s195 + $0x2d8] sm:$0xff]
                %308 = vst [vmem:[%s196 + $0x1b8] sm:$0xff] %v307
                %v309 = vld [vmem:[%s195 + $0x2e0] sm:$0xff]
                %310 = vst [vmem:[%s196 + $0x1c0] sm:$0xff] %v309
                %v311 = vld [vmem:[%s195 + $0x2e8] sm:$0xff]
                %312 = vst [vmem:[%s196 + $0x1c8] sm:$0xff] %v311
                %v313 = vld [vmem:[%s195 + $0x2f0] sm:$0xff]
                %314 = vst [vmem:[%s196 + $0x1d0] sm:$0xff] %v313
                %v315 = vld [vmem:[%s195 + $0x2f8] sm:$0xff]
                %316 = vst [vmem:[%s196 + $0x1d8] sm:$0xff] %v315
                %v317 = vld [vmem:[%s195 + $0x300] sm:$0xff]
                %318 = vst [vmem:[%s196 + $0x1e0] sm:$0xff] %v317
                %v319 = vld [vmem:[%s195 + $0x308] sm:$0xff]
                %320 = vst [vmem:[%s196 + $0x1e8] sm:$0xff] %v319
                %v321 = vld [vmem:[%s195 + $0x310] sm:$0xff]
                %322 = vst [vmem:[%s196 + $0x1f0] sm:$0xff] %v321
                %v323 = vld [vmem:[%s195 + $0x318] sm:$0xff]
                %324 = vst [vmem:[%s196 + $0x1f8] sm:$0xff] %v323
                %v325 = vld [vmem:[%s195 + $0x320] sm:$0xff]
                %326 = vst [vmem:[%s196 + $0x200] sm:$0xff] %v325
                %v327 = vld [vmem:[%s195 + $0x328] sm:$0xff]
                %328 = vst [vmem:[%s196 + $0x208] sm:$0xff] %v327
                %v329 = vld [vmem:[%s195 + $0x330] sm:$0xff]
                %330 = vst [vmem:[%s196 + $0x210] sm:$0xff] %v329
                %v331 = vld [vmem:[%s195 + $0x338] sm:$0xff]
                %332 = vst [vmem:[%s196 + $0x218] sm:$0xff] %v331
                %v333 = vld [vmem:[%s195 + $0x340] sm:$0xff]
                %334 = vst [vmem:[%s196 + $0x220] sm:$0xff] %v333
                %v335 = vld [vmem:[%s195 + $0x348] sm:$0xff]
                %336 = vst [vmem:[%s196 + $0x228] sm:$0xff] %v335
                %v337 = vld [vmem:[%s195 + $0x350] sm:$0xff]
                %338 = vst [vmem:[%s196 + $0x230] sm:$0xff] %v337
                %v339 = vld [vmem:[%s195 + $0x358] sm:$0xff]
                %340 = vst [vmem:[%s196 + $0x238] sm:$0xff] %v339
              $region45: #{forward.5} parent=39 // loop_footer
                %s194 = sadd.s32 1, %s190
              $region46: #{forward.5} parent=39 // loop_footer_branch
                %189 = sbr.rel target = $region42
              $region47: #{forward.5} parent=39 // loop_exit
                _
            $region40: #{forward.5} parent=35 // pred_fallthru
              _
            // Predicated region
            $region48: #{forward.5} parent=35 // pred_check
              _
            $region49: #{forward.5} parent=35 // pred_check_branch
              %342 = sbr.rel target = $region51
            $region50: #{forward.5} parent=35 // pred_region
              _
            $region51: #{forward.5} parent=35 // pred_fallthru
              _
          $region36: #{forward.5} parent=31 // pred_fallthru
            _
          %343 = vnop
        $region32: #{forward.5} parent=27 // pred_fallthru
          _
        // Predicated region
        $region52: #{forward.5} parent=27 // pred_check
          %p344 = pneg %p57
        $region53: #{forward.5} parent=27 // pred_check_branch
          %346 = sbr.rel (%p344) target = $region55
        $region54: #{forward.5} parent=27 // pred_region
          %s347 = smul.u32 1152, %s11
          %p348 = scmp.lt.s32.totalorder %s347, 2303
          %s349 = scalar_select %p348, %s347, 2303
          %s350 = smul.addr %s349, 4
          %s351 = scalar_lea.vmem %s1, %s350
          %s352 = smul.u32 1152, %s11
        $region55: #{forward.5} parent=27 // pred_fallthru
          _
      $region28: #{forward.5} parent=5 // pred_fallthru
        _
      %p353 = scmp.le.s32.totalorder 1, %s11
      %p354 = scmp.lt.s32.totalorder %s11, 3
      %p355 = pnand %p353, %p354
      %p356 = pneg %p355
      // Predicated region
      $region56: #{forward.5} parent=5 // pred_check
        _
      $region57: #{forward.5} parent=5 // pred_check_branch
        %358 = sbr.rel (%p355) target = $region59
      $region58: #{forward.5} parent=5 // pred_region
        %s359 = ssub.s32 %s11, 1
        %s360 = sand.u32 %s24, 1
        %s361 = sand.u32 %s24, 1
        %s362 = smul.addr %s361, 576
        %s363 = scalar_lea.vmem [#allocation3], %s362
        // Predicated region
        $region60: #{forward.5} parent=58 // pred_check
          %p364 = pneg %p37
        $region61: #{forward.5} parent=58 // pred_check_branch
          %366 = sbr.rel (%p364) target = $region63
        $region62: #{forward.5} parent=58 // pred_region
          _
        $region63: #{forward.5} parent=58 // pred_fallthru
          _
        %s367 = sand.u32 %s24, 1
        %s368 = sand.u32 %s24, 1
        %s369 = smul.addr %s368, 576
        %s370 = scalar_lea.vmem [#allocation3], %s369
        %p371 = pneg %p37
        %p372 = pneg %p34
        %s373 = smul.u32 1152, %s16
        %p374 = scmp.lt.s32.totalorder %s373, 2303
        %s375 = scalar_select %p374, %s373, 2303
        %s376 = smul.addr %s375, 4
        %s377 = scalar_lea.vmem %s1, %s376
        %p378 = pneg %p63
        %p379 = pneg %p60
        %p380 = pneg %p84
        %p381 = pneg %p81
        %p382 = pneg %p105
        %p383 = pneg %p102
        %p384 = pneg %p126
        %p385 = pneg %p123
        %p386 = pneg %p147
        %p387 = pneg %p144
        %s388 = smul.u32 72, %s16
        %s389 = smul.u32 1152, %s16
        %p390 = scmp.lt.s32.totalorder %s389, 2303
        %s391 = scalar_select %p390, %s389, 2303
        %s392 = smul.addr %s391, 4
        %s393 = scalar_lea.vmem %s1, %s392
        %s394 = smul.u32 1152, %s16
        %p396 = scmp.eq.s32.totalorder %s16, 0
        // Predicated region
        $region64: #{forward.5} parent=58 // pred_check
          %p397 = pneg %p396
        $region65: #{forward.5} parent=58 // pred_check_branch
          %399 = sbr.rel (%p397) target = $region67
        $region66: #{forward.5} parent=58 // pred_region
          %400 = vst [vmem:[#allocation2] sm:$0xff] 0.0
          %401 = vst [vmem:[#allocation2 + $0x8] sm:$0xff] 0.0
        $region67: #{forward.5} parent=58 // pred_fallthru
          _
        %v402 = vld [vmem:[#allocation2] sm:$0xff]
        %v403 = vld [vmem:[#allocation2 + $0x8] sm:$0xff]
        %v404 = vld [vmem:[%s363] sm:$0xff]
        %v405 = vld [vmem:[%s363 + $0x8] sm:$0xff]
        %v406 = vld [vmem:[%s363 + $0x10] sm:$0xff]
        %v407 = vld [vmem:[%s363 + $0x18] sm:$0xff]
        %v408 = vld [vmem:[%s363 + $0x20] sm:$0xff]
        %v409 = vld [vmem:[%s363 + $0x28] sm:$0xff]
        %v410 = vld [vmem:[%s363 + $0x30] sm:$0xff]
        %v411 = vld [vmem:[%s363 + $0x38] sm:$0xff]
        %v412 = vld [vmem:[%s363 + $0x40] sm:$0xff]
        %v413 = vld [vmem:[%s363 + $0x48] sm:$0xff]
        %v414 = vld [vmem:[%s363 + $0x50] sm:$0xff]
        %v415 = vld [vmem:[%s363 + $0x58] sm:$0xff]
        %v416 = vld [vmem:[%s363 + $0x60] sm:$0xff]
        %v417 = vld [vmem:[%s363 + $0x68] sm:$0xff]
        %v418 = vld [vmem:[%s363 + $0x70] sm:$0xff]
        %v419 = vld [vmem:[%s363 + $0x78] sm:$0xff]
        %v420 = vld [vmem:[%s363 + $0x80] sm:$0xff]
        %v421 = vld [vmem:[%s363 + $0x88] sm:$0xff]
        %v422 = vld [vmem:[%s363 + $0x90] sm:$0xff]
        %v423 = vld [vmem:[%s363 + $0x98] sm:$0xff]
        %v424 = vld [vmem:[%s363 + $0xa0] sm:$0xff]
        %v425 = vld [vmem:[%s363 + $0xa8] sm:$0xff]
        %v426 = vld [vmem:[%s363 + $0xb0] sm:$0xff]
        %v427 = vld [vmem:[%s363 + $0xb8] sm:$0xff]
        %v428 = vld [vmem:[%s363 + $0xc0] sm:$0xff]
        %v429 = vld [vmem:[%s363 + $0xc8] sm:$0xff]
        %v430 = vld [vmem:[%s363 + $0xd0] sm:$0xff]
        %v431 = vld [vmem:[%s363 + $0xd8] sm:$0xff]
        %v432 = vld [vmem:[%s363 + $0xe0] sm:$0xff]
        %v433 = vld [vmem:[%s363 + $0xe8] sm:$0xff]
        %v434 = vld [vmem:[%s363 + $0xf0] sm:$0xff]
        %v435 = vld [vmem:[%s363 + $0xf8] sm:$0xff]
        %v436 = vld [vmem:[%s363 + $0x100] sm:$0xff]
        %v437 = vld [vmem:[%s363 + $0x108] sm:$0xff]
        %v438 = vld [vmem:[%s363 + $0x110] sm:$0xff]
        %v439 = vld [vmem:[%s363 + $0x118] sm:$0xff]
        %v440 = vld [vmem:[%s363 + $0x120] sm:$0xff]
        %v441 = vld [vmem:[%s363 + $0x128] sm:$0xff]
        %v442 = vld [vmem:[%s363 + $0x130] sm:$0xff]
        %v443 = vld [vmem:[%s363 + $0x138] sm:$0xff]
        %v444 = vld [vmem:[%s363 + $0x140] sm:$0xff]
        %v445 = vld [vmem:[%s363 + $0x148] sm:$0xff]
        %v446 = vld [vmem:[%s363 + $0x150] sm:$0xff]
        %v447 = vld [vmem:[%s363 + $0x158] sm:$0xff]
        %v448 = vld [vmem:[%s363 + $0x160] sm:$0xff]
        %v449 = vld [vmem:[%s363 + $0x168] sm:$0xff]
        %v450 = vld [vmem:[%s363 + $0x170] sm:$0xff]
        %v451 = vld [vmem:[%s363 + $0x178] sm:$0xff]
        %v452 = vld [vmem:[%s363 + $0x180] sm:$0xff]
        %v453 = vld [vmem:[%s363 + $0x188] sm:$0xff]
        %v454 = vld [vmem:[%s363 + $0x190] sm:$0xff]
        %v455 = vld [vmem:[%s363 + $0x198] sm:$0xff]
        %v456 = vld [vmem:[%s363 + $0x1a0] sm:$0xff]
        %v457 = vld [vmem:[%s363 + $0x1a8] sm:$0xff]
        %v458 = vld [vmem:[%s363 + $0x1b0] sm:$0xff]
        %v459 = vld [vmem:[%s363 + $0x1b8] sm:$0xff]
        %v460 = vld [vmem:[%s363 + $0x1c0] sm:$0xff]
        %v461 = vld [vmem:[%s363 + $0x1c8] sm:$0xff]
        %v462 = vld [vmem:[%s363 + $0x1d0] sm:$0xff]
        %v463 = vld [vmem:[%s363 + $0x1d8] sm:$0xff]
        %v464 = vld [vmem:[%s363 + $0x1e0] sm:$0xff]
        %v465 = vld [vmem:[%s363 + $0x1e8] sm:$0xff]
        %v466 = vld [vmem:[%s363 + $0x1f0] sm:$0xff]
        %v467 = vld [vmem:[%s363 + $0x1f8] sm:$0xff]
        %v468 = vld [vmem:[%s363 + $0x200] sm:$0xff]
        %v469 = vld [vmem:[%s363 + $0x208] sm:$0xff]
        %v470 = vld [vmem:[%s363 + $0x210] sm:$0xff]
        %v471 = vld [vmem:[%s363 + $0x218] sm:$0xff]
        %v472 = vld [vmem:[%s363 + $0x220] sm:$0xff]
        %v473 = vld [vmem:[%s363 + $0x228] sm:$0xff]
        %v474 = vld [vmem:[%s363 + $0x230] sm:$0xff]
        %v475 = vld [vmem:[%s363 + $0x238] sm:$0xff]
        %v476 = vld [vmem:[%s393] sm:$0xf]
        %v477 = vld [vmem:[%s393 + $0x4] sm:$0xf]
        %v478 = vld [vmem:[%s393 + $0x8] sm:$0xf]
        %v479 = vld [vmem:[%s393 + $0xc] sm:$0xf]
        %v480 = vld [vmem:[%s393 + $0x10] sm:$0xf]
        %v481 = vld [vmem:[%s393 + $0x14] sm:$0xf]
        %v482 = vld [vmem:[%s393 + $0x18] sm:$0xf]
        %v483 = vld [vmem:[%s393 + $0x1c] sm:$0xf]
        %v484 = vld [vmem:[%s393 + $0x20] sm:$0xf]
        %v485 = vld [vmem:[%s393 + $0x24] sm:$0xf]
        %v486 = vld [vmem:[%s393 + $0x28] sm:$0xf]
        %v487 = vld [vmem:[%s393 + $0x2c] sm:$0xf]
        %v488 = vld [vmem:[%s393 + $0x30] sm:$0xf]
        %v489 = vld [vmem:[%s393 + $0x34] sm:$0xf]
        %v490 = vld [vmem:[%s393 + $0x38] sm:$0xf]
        %v491 = vld [vmem:[%s393 + $0x3c] sm:$0xf]
        %v492 = vld [vmem:[%s393 + $0x40] sm:$0xf]
        %v493 = vld [vmem:[%s393 + $0x44] sm:$0xf]
        %v494 = vld [vmem:[%s393 + $0x48] sm:$0xf]
        %v495 = vld [vmem:[%s393 + $0x4c] sm:$0xf]
        %v496 = vld [vmem:[%s393 + $0x50] sm:$0xf]
        %v497 = vld [vmem:[%s393 + $0x54] sm:$0xf]
        %v498 = vld [vmem:[%s393 + $0x58] sm:$0xf]
        %v499 = vld [vmem:[%s393 + $0x5c] sm:$0xf]
        %v500 = vld [vmem:[%s393 + $0x60] sm:$0xf]
        %v501 = vld [vmem:[%s393 + $0x64] sm:$0xf]
        %v502 = vld [vmem:[%s393 + $0x68] sm:$0xf]
        %v503 = vld [vmem:[%s393 + $0x6c] sm:$0xf]
        %v504 = vld [vmem:[%s393 + $0x70] sm:$0xf]
        %v505 = vld [vmem:[%s393 + $0x74] sm:$0xf]
        %v506 = vld [vmem:[%s393 + $0x78] sm:$0xf]
        %v507 = vld [vmem:[%s393 + $0x7c] sm:$0xf]
        %v508 = vld [vmem:[%s393 + $0x80] sm:$0xf]
        %v509 = vld [vmem:[%s393 + $0x84] sm:$0xf]
        %v510 = vld [vmem:[%s393 + $0x88] sm:$0xf]
        %v511 = vld [vmem:[%s393 + $0x8c] sm:$0xf]
        %v512 = vld [vmem:[%s393 + $0x90] sm:$0xf]
        %v513 = vld [vmem:[%s393 + $0x94] sm:$0xf]
        %v514 = vld [vmem:[%s393 + $0x98] sm:$0xf]
        %v515 = vld [vmem:[%s393 + $0x9c] sm:$0xf]
        %v516 = vld [vmem:[%s393 + $0xa0] sm:$0xf]
        %v517 = vld [vmem:[%s393 + $0xa4] sm:$0xf]
        %v518 = vld [vmem:[%s393 + $0xa8] sm:$0xf]
        %v519 = vld [vmem:[%s393 + $0xac] sm:$0xf]
        %v520 = vld [vmem:[%s393 + $0xb0] sm:$0xf]
        %v521 = vld [vmem:[%s393 + $0xb4] sm:$0xf]
        %v522 = vld [vmem:[%s393 + $0xb8] sm:$0xf]
        %v523 = vld [vmem:[%s393 + $0xbc] sm:$0xf]
        %v524 = vld [vmem:[%s393 + $0xc0] sm:$0xf]
        %v525 = vld [vmem:[%s393 + $0xc4] sm:$0xf]
        %v526 = vld [vmem:[%s393 + $0xc8] sm:$0xf]
        %v527 = vld [vmem:[%s393 + $0xcc] sm:$0xf]
        %v528 = vld [vmem:[%s393 + $0xd0] sm:$0xf]
        %v529 = vld [vmem:[%s393 + $0xd4] sm:$0xf]
        %v530 = vld [vmem:[%s393 + $0xd8] sm:$0xf]
        %v531 = vld [vmem:[%s393 + $0xdc] sm:$0xf]
        %v532 = vld [vmem:[%s393 + $0xe0] sm:$0xf]
        %v533 = vld [vmem:[%s393 + $0xe4] sm:$0xf]
        %v534 = vld [vmem:[%s393 + $0xe8] sm:$0xf]
        %v535 = vld [vmem:[%s393 + $0xec] sm:$0xf]
        %v536 = vld [vmem:[%s393 + $0xf0] sm:$0xf]
        %v537 = vld [vmem:[%s393 + $0xf4] sm:$0xf]
        %v538 = vld [vmem:[%s393 + $0xf8] sm:$0xf]
        %v539 = vld [vmem:[%s393 + $0xfc] sm:$0xf]
        %v540 = vld [vmem:[%s393 + $0x100] sm:$0xf]
        %v541 = vld [vmem:[%s393 + $0x104] sm:$0xf]
        %v542 = vld [vmem:[%s393 + $0x108] sm:$0xf]
        %v543 = vld [vmem:[%s393 + $0x10c] sm:$0xf]
        %v544 = vld [vmem:[%s393 + $0x110] sm:$0xf]
        %v545 = vld [vmem:[%s393 + $0x114] sm:$0xf]
        %v546 = vld [vmem:[%s393 + $0x118] sm:$0xf]
        %v547 = vld [vmem:[%s393 + $0x11c] sm:$0xf]
        %v548 = vld [vmem:[%s393 + $0x120] sm:$0xf]
        %v549 = vld [vmem:[%s393 + $0x124] sm:$0xf]
        %v550 = vld [vmem:[%s393 + $0x128] sm:$0xf]
        %v551 = vld [vmem:[%s393 + $0x12c] sm:$0xf]
        %v552 = vld [vmem:[%s393 + $0x130] sm:$0xf]
        %v553 = vld [vmem:[%s393 + $0x134] sm:$0xf]
        %v554 = vld [vmem:[%s393 + $0x138] sm:$0xf]
        %v555 = vld [vmem:[%s393 + $0x13c] sm:$0xf]
        %v556 = vld [vmem:[%s393 + $0x140] sm:$0xf]
        %v557 = vld [vmem:[%s393 + $0x144] sm:$0xf]
        %v558 = vld [vmem:[%s393 + $0x148] sm:$0xf]
        %v559 = vld [vmem:[%s393 + $0x14c] sm:$0xf]
        %v560 = vld [vmem:[%s393 + $0x150] sm:$0xf]
        %v561 = vld [vmem:[%s393 + $0x154] sm:$0xf]
        %v562 = vld [vmem:[%s393 + $0x158] sm:$0xf]
        %v563 = vld [vmem:[%s393 + $0x15c] sm:$0xf]
        %v564 = vld [vmem:[%s393 + $0x160] sm:$0xf]
        %v565 = vld [vmem:[%s393 + $0x164] sm:$0xf]
        %v566 = vld [vmem:[%s393 + $0x168] sm:$0xf]
        %v567 = vld [vmem:[%s393 + $0x16c] sm:$0xf]
        %v568 = vld [vmem:[%s393 + $0x170] sm:$0xf]
        %v569 = vld [vmem:[%s393 + $0x174] sm:$0xf]
        %v570 = vld [vmem:[%s393 + $0x178] sm:$0xf]
        %v571 = vld [vmem:[%s393 + $0x17c] sm:$0xf]
        %v572 = vld [vmem:[%s393 + $0x180] sm:$0xf]
        %v573 = vld [vmem:[%s393 + $0x184] sm:$0xf]
        %v574 = vld [vmem:[%s393 + $0x188] sm:$0xf]
        %v575 = vld [vmem:[%s393 + $0x18c] sm:$0xf]
        %v576 = vld [vmem:[%s393 + $0x190] sm:$0xf]
        %v577 = vld [vmem:[%s393 + $0x194] sm:$0xf]
        %v578 = vld [vmem:[%s393 + $0x198] sm:$0xf]
        %v579 = vld [vmem:[%s393 + $0x19c] sm:$0xf]
        %v580 = vld [vmem:[%s393 + $0x1a0] sm:$0xf]
        %v581 = vld [vmem:[%s393 + $0x1a4] sm:$0xf]
        %v582 = vld [vmem:[%s393 + $0x1a8] sm:$0xf]
        %v583 = vld [vmem:[%s393 + $0x1ac] sm:$0xf]
        %v584 = vld [vmem:[%s393 + $0x1b0] sm:$0xf]
        %v585 = vld [vmem:[%s393 + $0x1b4] sm:$0xf]
        %v586 = vld [vmem:[%s393 + $0x1b8] sm:$0xf]
        %v587 = vld [vmem:[%s393 + $0x1bc] sm:$0xf]
        %v588 = vld [vmem:[%s393 + $0x1c0] sm:$0xf]
        %v589 = vld [vmem:[%s393 + $0x1c4] sm:$0xf]
        %v590 = vld [vmem:[%s393 + $0x1c8] sm:$0xf]
        %v591 = vld [vmem:[%s393 + $0x1cc] sm:$0xf]
        %v592 = vld [vmem:[%s393 + $0x1d0] sm:$0xf]
        %v593 = vld [vmem:[%s393 + $0x1d4] sm:$0xf]
        %v594 = vld [vmem:[%s393 + $0x1d8] sm:$0xf]
        %v595 = vld [vmem:[%s393 + $0x1dc] sm:$0xf]
        %v596 = vld [vmem:[%s393 + $0x1e0] sm:$0xf]
        %v597 = vld [vmem:[%s393 + $0x1e4] sm:$0xf]
        %v598 = vld [vmem:[%s393 + $0x1e8] sm:$0xf]
        %v599 = vld [vmem:[%s393 + $0x1ec] sm:$0xf]
        %v600 = vld [vmem:[%s393 + $0x1f0] sm:$0xf]
        %v601 = vld [vmem:[%s393 + $0x1f4] sm:$0xf]
        %v602 = vld [vmem:[%s393 + $0x1f8] sm:$0xf]
        %v603 = vld [vmem:[%s393 + $0x1fc] sm:$0xf]
        %v604 = vld [vmem:[%s393 + $0x200] sm:$0xf]
        %v605 = vld [vmem:[%s393 + $0x204] sm:$0xf]
        %v606 = vld [vmem:[%s393 + $0x208] sm:$0xf]
        %v607 = vld [vmem:[%s393 + $0x20c] sm:$0xf]
        %v608 = vld [vmem:[%s393 + $0x210] sm:$0xf]
        %v609 = vld [vmem:[%s393 + $0x214] sm:$0xf]
        %v610 = vld [vmem:[%s393 + $0x218] sm:$0xf]
        %v611 = vld [vmem:[%s393 + $0x21c] sm:$0xf]
        %v612 = vld [vmem:[%s393 + $0x220] sm:$0xf]
        %v613 = vld [vmem:[%s393 + $0x224] sm:$0xf]
        %v614 = vld [vmem:[%s393 + $0x228] sm:$0xf]
        %v615 = vld [vmem:[%s393 + $0x22c] sm:$0xf]
        %v616 = vld [vmem:[%s393 + $0x230] sm:$0xf]
        %v617 = vld [vmem:[%s393 + $0x234] sm:$0xf]
        %v618 = vld [vmem:[%s393 + $0x238] sm:$0xf]
        %v619 = vld [vmem:[%s393 + $0x23c] sm:$0xf]
        %v620 = vld [vmem:[%s393 + $0x240] sm:$0xf]
        %v621 = vld [vmem:[%s393 + $0x244] sm:$0xf]
        %v622 = vld [vmem:[%s393 + $0x248] sm:$0xf]
        %v623 = vld [vmem:[%s393 + $0x24c] sm:$0xf]
        %v624 = vld [vmem:[%s393 + $0x250] sm:$0xf]
        %v625 = vld [vmem:[%s393 + $0x254] sm:$0xf]
        %v626 = vld [vmem:[%s393 + $0x258] sm:$0xf]
        %v627 = vld [vmem:[%s393 + $0x25c] sm:$0xf]
        %v628 = vld [vmem:[%s393 + $0x260] sm:$0xf]
        %v629 = vld [vmem:[%s393 + $0x264] sm:$0xf]
        %v630 = vld [vmem:[%s393 + $0x268] sm:$0xf]
        %v631 = vld [vmem:[%s393 + $0x26c] sm:$0xf]
        %v632 = vld [vmem:[%s393 + $0x270] sm:$0xf]
        %v633 = vld [vmem:[%s393 + $0x274] sm:$0xf]
        %v634 = vld [vmem:[%s393 + $0x278] sm:$0xf]
        %v635 = vld [vmem:[%s393 + $0x27c] sm:$0xf]
        %v636 = vld [vmem:[%s393 + $0x280] sm:$0xf]
        %v637 = vld [vmem:[%s393 + $0x284] sm:$0xf]
        %v638 = vld [vmem:[%s393 + $0x288] sm:$0xf]
        %v639 = vld [vmem:[%s393 + $0x28c] sm:$0xf]
        %v640 = vld [vmem:[%s393 + $0x290] sm:$0xf]
        %v641 = vld [vmem:[%s393 + $0x294] sm:$0xf]
        %v642 = vld [vmem:[%s393 + $0x298] sm:$0xf]
        %v643 = vld [vmem:[%s393 + $0x29c] sm:$0xf]
        %v644 = vld [vmem:[%s393 + $0x2a0] sm:$0xf]
        %v645 = vld [vmem:[%s393 + $0x2a4] sm:$0xf]
        %v646 = vld [vmem:[%s393 + $0x2a8] sm:$0xf]
        %v647 = vld [vmem:[%s393 + $0x2ac] sm:$0xf]
        %v648 = vld [vmem:[%s393 + $0x2b0] sm:$0xf]
        %v649 = vld [vmem:[%s393 + $0x2b4] sm:$0xf]
        %v650 = vld [vmem:[%s393 + $0x2b8] sm:$0xf]
        %v651 = vld [vmem:[%s393 + $0x2bc] sm:$0xf]
        %v652 = vld [vmem:[%s393 + $0x2c0] sm:$0xf]
        %v653 = vld [vmem:[%s393 + $0x2c4] sm:$0xf]
        %v654 = vld [vmem:[%s393 + $0x2c8] sm:$0xf]
        %v655 = vld [vmem:[%s393 + $0x2cc] sm:$0xf]
        %v656 = vld [vmem:[%s393 + $0x2d0] sm:$0xf]
        %v657 = vld [vmem:[%s393 + $0x2d4] sm:$0xf]
        %v658 = vld [vmem:[%s393 + $0x2d8] sm:$0xf]
        %v659 = vld [vmem:[%s393 + $0x2dc] sm:$0xf]
        %v660 = vld [vmem:[%s393 + $0x2e0] sm:$0xf]
        %v661 = vld [vmem:[%s393 + $0x2e4] sm:$0xf]
        %v662 = vld [vmem:[%s393 + $0x2e8] sm:$0xf]
        %v663 = vld [vmem:[%s393 + $0x2ec] sm:$0xf]
        %v664 = vld [vmem:[%s393 + $0x2f0] sm:$0xf]
        %v665 = vld [vmem:[%s393 + $0x2f4] sm:$0xf]
        %v666 = vld [vmem:[%s393 + $0x2f8] sm:$0xf]
        %v667 = vld [vmem:[%s393 + $0x2fc] sm:$0xf]
        %v668 = vld [vmem:[%s393 + $0x300] sm:$0xf]
        %v669 = vld [vmem:[%s393 + $0x304] sm:$0xf]
        %v670 = vld [vmem:[%s393 + $0x308] sm:$0xf]
        %v671 = vld [vmem:[%s393 + $0x30c] sm:$0xf]
        %v672 = vld [vmem:[%s393 + $0x310] sm:$0xf]
        %v673 = vld [vmem:[%s393 + $0x314] sm:$0xf]
        %v674 = vld [vmem:[%s393 + $0x318] sm:$0xf]
        %v675 = vld [vmem:[%s393 + $0x31c] sm:$0xf]
        %v676 = vld [vmem:[%s393 + $0x320] sm:$0xf]
        %v677 = vld [vmem:[%s393 + $0x324] sm:$0xf]
        %v678 = vld [vmem:[%s393 + $0x328] sm:$0xf]
        %v679 = vld [vmem:[%s393 + $0x32c] sm:$0xf]
        %v680 = vld [vmem:[%s393 + $0x330] sm:$0xf]
        %v681 = vld [vmem:[%s393 + $0x334] sm:$0xf]
        %v682 = vld [vmem:[%s393 + $0x338] sm:$0xf]
        %v683 = vld [vmem:[%s393 + $0x33c] sm:$0xf]
        %v684 = vld [vmem:[%s393 + $0x340] sm:$0xf]
        %v685 = vld [vmem:[%s393 + $0x344] sm:$0xf]
        %v686 = vld [vmem:[%s393 + $0x348] sm:$0xf]
        %v687 = vld [vmem:[%s393 + $0x34c] sm:$0xf]
        %v688 = vld [vmem:[%s393 + $0x350] sm:$0xf]
        %v689 = vld [vmem:[%s393 + $0x354] sm:$0xf]
        %v690 = vld [vmem:[%s393 + $0x358] sm:$0xf]
        %v691 = vld [vmem:[%s393 + $0x35c] sm:$0xf]
        %v692 = vld [vmem:[%s393 + $0x360] sm:$0xf]
        %v693 = vld [vmem:[%s393 + $0x364] sm:$0xf]
        %v694 = vld [vmem:[%s393 + $0x368] sm:$0xf]
        %v695 = vld [vmem:[%s393 + $0x36c] sm:$0xf]
        %v696 = vld [vmem:[%s393 + $0x370] sm:$0xf]
        %v697 = vld [vmem:[%s393 + $0x374] sm:$0xf]
        %v698 = vld [vmem:[%s393 + $0x378] sm:$0xf]
        %v699 = vld [vmem:[%s393 + $0x37c] sm:$0xf]
        %v700 = vld [vmem:[%s393 + $0x380] sm:$0xf]
        %v701 = vld [vmem:[%s393 + $0x384] sm:$0xf]
        %v702 = vld [vmem:[%s393 + $0x388] sm:$0xf]
        %v703 = vld [vmem:[%s393 + $0x38c] sm:$0xf]
        %v704 = vld [vmem:[%s393 + $0x390] sm:$0xf]
        %v705 = vld [vmem:[%s393 + $0x394] sm:$0xf]
        %v706 = vld [vmem:[%s393 + $0x398] sm:$0xf]
        %v707 = vld [vmem:[%s393 + $0x39c] sm:$0xf]
        %v708 = vld [vmem:[%s393 + $0x3a0] sm:$0xf]
        %v709 = vld [vmem:[%s393 + $0x3a4] sm:$0xf]
        %v710 = vld [vmem:[%s393 + $0x3a8] sm:$0xf]
        %v711 = vld [vmem:[%s393 + $0x3ac] sm:$0xf]
        %v712 = vld [vmem:[%s393 + $0x3b0] sm:$0xf]
        %v713 = vld [vmem:[%s393 + $0x3b4] sm:$0xf]
        %v714 = vld [vmem:[%s393 + $0x3b8] sm:$0xf]
        %v715 = vld [vmem:[%s393 + $0x3bc] sm:$0xf]
        %v716 = vld [vmem:[%s393 + $0x3c0] sm:$0xf]
        %v717 = vld [vmem:[%s393 + $0x3c4] sm:$0xf]
        %v718 = vld [vmem:[%s393 + $0x3c8] sm:$0xf]
        %v719 = vld [vmem:[%s393 + $0x3cc] sm:$0xf]
        %v720 = vld [vmem:[%s393 + $0x3d0] sm:$0xf]
        %v721 = vld [vmem:[%s393 + $0x3d4] sm:$0xf]
        %v722 = vld [vmem:[%s393 + $0x3d8] sm:$0xf]
        %v723 = vld [vmem:[%s393 + $0x3dc] sm:$0xf]
        %v724 = vld [vmem:[%s393 + $0x3e0] sm:$0xf]
        %v725 = vld [vmem:[%s393 + $0x3e4] sm:$0xf]
        %v726 = vld [vmem:[%s393 + $0x3e8] sm:$0xf]
        %v727 = vld [vmem:[%s393 + $0x3ec] sm:$0xf]
        %v728 = vld [vmem:[%s393 + $0x3f0] sm:$0xf]
        %v729 = vld [vmem:[%s393 + $0x3f4] sm:$0xf]
        %v730 = vld [vmem:[%s393 + $0x3f8] sm:$0xf]
        %v731 = vld [vmem:[%s393 + $0x3fc] sm:$0xf]
        %v732 = vld [vmem:[%s393 + $0x400] sm:$0xf]
        %v733 = vld [vmem:[%s393 + $0x404] sm:$0xf]
        %v734 = vld [vmem:[%s393 + $0x408] sm:$0xf]
        %v735 = vld [vmem:[%s393 + $0x40c] sm:$0xf]
        %v736 = vld [vmem:[%s393 + $0x410] sm:$0xf]
        %v737 = vld [vmem:[%s393 + $0x414] sm:$0xf]
        %v738 = vld [vmem:[%s393 + $0x418] sm:$0xf]
        %v739 = vld [vmem:[%s393 + $0x41c] sm:$0xf]
        %v740 = vld [vmem:[%s393 + $0x420] sm:$0xf]
        %v741 = vld [vmem:[%s393 + $0x424] sm:$0xf]
        %v742 = vld [vmem:[%s393 + $0x428] sm:$0xf]
        %v743 = vld [vmem:[%s393 + $0x42c] sm:$0xf]
        %v744 = vld [vmem:[%s393 + $0x430] sm:$0xf]
        %v745 = vld [vmem:[%s393 + $0x434] sm:$0xf]
        %v746 = vld [vmem:[%s393 + $0x438] sm:$0xf]
        %v747 = vld [vmem:[%s393 + $0x43c] sm:$0xf]
        %v748 = vld [vmem:[%s393 + $0x440] sm:$0xf]
        %v749 = vld [vmem:[%s393 + $0x444] sm:$0xf]
        %v750 = vld [vmem:[%s393 + $0x448] sm:$0xf]
        %v751 = vld [vmem:[%s393 + $0x44c] sm:$0xf]
        %v752 = vld [vmem:[%s393 + $0x450] sm:$0xf]
        %v753 = vld [vmem:[%s393 + $0x454] sm:$0xf]
        %v754 = vld [vmem:[%s393 + $0x458] sm:$0xf]
        %v755 = vld [vmem:[%s393 + $0x45c] sm:$0xf]
        %v756 = vld [vmem:[%s393 + $0x460] sm:$0xf]
        %v757 = vld [vmem:[%s393 + $0x464] sm:$0xf]
        %v758 = vld [vmem:[%s393 + $0x468] sm:$0xf]
        %v759 = vld [vmem:[%s393 + $0x46c] sm:$0xf]
        %v760 = vld [vmem:[%s393 + $0x470] sm:$0xf]
        %v761 = vld [vmem:[%s393 + $0x474] sm:$0xf]
        %v762 = vld [vmem:[%s393 + $0x478] sm:$0xf]
        %v763 = vld [vmem:[%s393 + $0x47c] sm:$0xf]
        %v764 = vld [vmem:[%s393 + $0x480] sm:$0xf]
        %v765 = vld [vmem:[%s393 + $0x484] sm:$0xf]
        %v766 = vld [vmem:[%s393 + $0x488] sm:$0xf]
        %v767 = vld [vmem:[%s393 + $0x48c] sm:$0xf]
        %v768 = vld [vmem:[%s393 + $0x490] sm:$0xf]
        %v769 = vld [vmem:[%s393 + $0x494] sm:$0xf]
        %v770 = vld [vmem:[%s393 + $0x498] sm:$0xf]
        %v771 = vld [vmem:[%s393 + $0x49c] sm:$0xf]
        %v772 = vld [vmem:[%s393 + $0x4a0] sm:$0xf]
        %v773 = vld [vmem:[%s393 + $0x4a4] sm:$0xf]
        %v774 = vld [vmem:[%s393 + $0x4a8] sm:$0xf]
        %v775 = vld [vmem:[%s393 + $0x4ac] sm:$0xf]
        %v776 = vld [vmem:[%s393 + $0x4b0] sm:$0xf]
        %v777 = vld [vmem:[%s393 + $0x4b4] sm:$0xf]
        %v778 = vld [vmem:[%s393 + $0x4b8] sm:$0xf]
        %v779 = vld [vmem:[%s393 + $0x4bc] sm:$0xf]
        %v780 = vld [vmem:[%s393 + $0x4c0] sm:$0xf]
        %v781 = vld [vmem:[%s393 + $0x4c4] sm:$0xf]
        %v782 = vld [vmem:[%s393 + $0x4c8] sm:$0xf]
        %v783 = vld [vmem:[%s393 + $0x4cc] sm:$0xf]
        %v784 = vld [vmem:[%s393 + $0x4d0] sm:$0xf]
        %v785 = vld [vmem:[%s393 + $0x4d4] sm:$0xf]
        %v786 = vld [vmem:[%s393 + $0x4d8] sm:$0xf]
        %v787 = vld [vmem:[%s393 + $0x4dc] sm:$0xf]
        %v788 = vld [vmem:[%s393 + $0x4e0] sm:$0xf]
        %v789 = vld [vmem:[%s393 + $0x4e4] sm:$0xf]
        %v790 = vld [vmem:[%s393 + $0x4e8] sm:$0xf]
        %v791 = vld [vmem:[%s393 + $0x4ec] sm:$0xf]
        %v792 = vld [vmem:[%s393 + $0x4f0] sm:$0xf]
        %v793 = vld [vmem:[%s393 + $0x4f4] sm:$0xf]
        %v794 = vld [vmem:[%s393 + $0x4f8] sm:$0xf]
        %v795 = vld [vmem:[%s393 + $0x4fc] sm:$0xf]
        %v796 = vld [vmem:[%s393 + $0x500] sm:$0xf]
        %v797 = vld [vmem:[%s393 + $0x504] sm:$0xf]
        %v798 = vld [vmem:[%s393 + $0x508] sm:$0xf]
        %v799 = vld [vmem:[%s393 + $0x50c] sm:$0xf]
        %v800 = vld [vmem:[%s393 + $0x510] sm:$0xf]
        %v801 = vld [vmem:[%s393 + $0x514] sm:$0xf]
        %v802 = vld [vmem:[%s393 + $0x518] sm:$0xf]
        %v803 = vld [vmem:[%s393 + $0x51c] sm:$0xf]
        %v804 = vld [vmem:[%s393 + $0x520] sm:$0xf]
        %v805 = vld [vmem:[%s393 + $0x524] sm:$0xf]
        %v806 = vld [vmem:[%s393 + $0x528] sm:$0xf]
        %v807 = vld [vmem:[%s393 + $0x52c] sm:$0xf]
        %v808 = vld [vmem:[%s393 + $0x530] sm:$0xf]
        %v809 = vld [vmem:[%s393 + $0x534] sm:$0xf]
        %v810 = vld [vmem:[%s393 + $0x538] sm:$0xf]
        %v811 = vld [vmem:[%s393 + $0x53c] sm:$0xf]
        %v812 = vld [vmem:[%s393 + $0x540] sm:$0xf]
        %v813 = vld [vmem:[%s393 + $0x544] sm:$0xf]
        %v814 = vld [vmem:[%s393 + $0x548] sm:$0xf]
        %v815 = vld [vmem:[%s393 + $0x54c] sm:$0xf]
        %v816 = vld [vmem:[%s393 + $0x550] sm:$0xf]
        %v817 = vld [vmem:[%s393 + $0x554] sm:$0xf]
        %v818 = vld [vmem:[%s393 + $0x558] sm:$0xf]
        %v819 = vld [vmem:[%s393 + $0x55c] sm:$0xf]
        %v820 = vld [vmem:[%s393 + $0x560] sm:$0xf]
        %v821 = vld [vmem:[%s393 + $0x564] sm:$0xf]
        %v822 = vld [vmem:[%s393 + $0x568] sm:$0xf]
        %v823 = vld [vmem:[%s393 + $0x56c] sm:$0xf]
        %v824 = vld [vmem:[%s393 + $0x570] sm:$0xf]
        %v825 = vld [vmem:[%s393 + $0x574] sm:$0xf]
        %v826 = vld [vmem:[%s393 + $0x578] sm:$0xf]
        %v827 = vld [vmem:[%s393 + $0x57c] sm:$0xf]
        %v828 = vld [vmem:[%s393 + $0x580] sm:$0xf]
        %v829 = vld [vmem:[%s393 + $0x584] sm:$0xf]
        %v830 = vld [vmem:[%s393 + $0x588] sm:$0xf]
        %v831 = vld [vmem:[%s393 + $0x58c] sm:$0xf]
        %v832 = vld [vmem:[%s393 + $0x590] sm:$0xf]
        %v833 = vld [vmem:[%s393 + $0x594] sm:$0xf]
        %v834 = vld [vmem:[%s393 + $0x598] sm:$0xf]
        %v835 = vld [vmem:[%s393 + $0x59c] sm:$0xf]
        %v836 = vld [vmem:[%s393 + $0x5a0] sm:$0xf]
        %v837 = vld [vmem:[%s393 + $0x5a4] sm:$0xf]
        %v838 = vld [vmem:[%s393 + $0x5a8] sm:$0xf]
        %v839 = vld [vmem:[%s393 + $0x5ac] sm:$0xf]
        %v840 = vld [vmem:[%s393 + $0x5b0] sm:$0xf]
        %v841 = vld [vmem:[%s393 + $0x5b4] sm:$0xf]
        %v842 = vld [vmem:[%s393 + $0x5b8] sm:$0xf]
        %v843 = vld [vmem:[%s393 + $0x5bc] sm:$0xf]
        %v844 = vld [vmem:[%s393 + $0x5c0] sm:$0xf]
        %v845 = vld [vmem:[%s393 + $0x5c4] sm:$0xf]
        %v846 = vld [vmem:[%s393 + $0x5c8] sm:$0xf]
        %v847 = vld [vmem:[%s393 + $0x5cc] sm:$0xf]
        %v848 = vld [vmem:[%s393 + $0x5d0] sm:$0xf]
        %v849 = vld [vmem:[%s393 + $0x5d4] sm:$0xf]
        %v850 = vld [vmem:[%s393 + $0x5d8] sm:$0xf]
        %v851 = vld [vmem:[%s393 + $0x5dc] sm:$0xf]
        %v852 = vld [vmem:[%s393 + $0x5e0] sm:$0xf]
        %v853 = vld [vmem:[%s393 + $0x5e4] sm:$0xf]
        %v854 = vld [vmem:[%s393 + $0x5e8] sm:$0xf]
        %v855 = vld [vmem:[%s393 + $0x5ec] sm:$0xf]
        %v856 = vld [vmem:[%s393 + $0x5f0] sm:$0xf]
        %v857 = vld [vmem:[%s393 + $0x5f4] sm:$0xf]
        %v858 = vld [vmem:[%s393 + $0x5f8] sm:$0xf]
        %v859 = vld [vmem:[%s393 + $0x5fc] sm:$0xf]
        %v860 = vld [vmem:[%s393 + $0x600] sm:$0xf]
        %v861 = vld [vmem:[%s393 + $0x604] sm:$0xf]
        %v862 = vld [vmem:[%s393 + $0x608] sm:$0xf]
        %v863 = vld [vmem:[%s393 + $0x60c] sm:$0xf]
        %v864 = vld [vmem:[%s393 + $0x610] sm:$0xf]
        %v865 = vld [vmem:[%s393 + $0x614] sm:$0xf]
        %v866 = vld [vmem:[%s393 + $0x618] sm:$0xf]
        %v867 = vld [vmem:[%s393 + $0x61c] sm:$0xf]
        %v868 = vld [vmem:[%s393 + $0x620] sm:$0xf]
        %v869 = vld [vmem:[%s393 + $0x624] sm:$0xf]
        %v870 = vld [vmem:[%s393 + $0x628] sm:$0xf]
        %v871 = vld [vmem:[%s393 + $0x62c] sm:$0xf]
        %v872 = vld [vmem:[%s393 + $0x630] sm:$0xf]
        %v873 = vld [vmem:[%s393 + $0x634] sm:$0xf]
        %v874 = vld [vmem:[%s393 + $0x638] sm:$0xf]
        %v875 = vld [vmem:[%s393 + $0x63c] sm:$0xf]
        %v876 = vld [vmem:[%s393 + $0x640] sm:$0xf]
        %v877 = vld [vmem:[%s393 + $0x644] sm:$0xf]
        %v878 = vld [vmem:[%s393 + $0x648] sm:$0xf]
        %v879 = vld [vmem:[%s393 + $0x64c] sm:$0xf]
        %v880 = vld [vmem:[%s393 + $0x650] sm:$0xf]
        %v881 = vld [vmem:[%s393 + $0x654] sm:$0xf]
        %v882 = vld [vmem:[%s393 + $0x658] sm:$0xf]
        %v883 = vld [vmem:[%s393 + $0x65c] sm:$0xf]
        %v884 = vld [vmem:[%s393 + $0x660] sm:$0xf]
        %v885 = vld [vmem:[%s393 + $0x664] sm:$0xf]
        %v886 = vld [vmem:[%s393 + $0x668] sm:$0xf]
        %v887 = vld [vmem:[%s393 + $0x66c] sm:$0xf]
        %v888 = vld [vmem:[%s393 + $0x670] sm:$0xf]
        %v889 = vld [vmem:[%s393 + $0x674] sm:$0xf]
        %v890 = vld [vmem:[%s393 + $0x678] sm:$0xf]
        %v891 = vld [vmem:[%s393 + $0x67c] sm:$0xf]
        %v892 = vld [vmem:[%s393 + $0x680] sm:$0xf]
        %v893 = vld [vmem:[%s393 + $0x684] sm:$0xf]
        %v894 = vld [vmem:[%s393 + $0x688] sm:$0xf]
        %v895 = vld [vmem:[%s393 + $0x68c] sm:$0xf]
        %v896 = vld [vmem:[%s393 + $0x690] sm:$0xf]
        %v897 = vld [vmem:[%s393 + $0x694] sm:$0xf]
        %v898 = vld [vmem:[%s393 + $0x698] sm:$0xf]
        %v899 = vld [vmem:[%s393 + $0x69c] sm:$0xf]
        %v900 = vld [vmem:[%s393 + $0x6a0] sm:$0xf]
        %v901 = vld [vmem:[%s393 + $0x6a4] sm:$0xf]
        %v902 = vld [vmem:[%s393 + $0x6a8] sm:$0xf]
        %v903 = vld [vmem:[%s393 + $0x6ac] sm:$0xf]
        %v904 = vld [vmem:[%s393 + $0x6b0] sm:$0xf]
        %v905 = vld [vmem:[%s393 + $0x6b4] sm:$0xf]
        %v906 = vld [vmem:[%s393 + $0x6b8] sm:$0xf]
        %v907 = vld [vmem:[%s393 + $0x6bc] sm:$0xf]
        %v908 = vld [vmem:[%s393 + $0x6c0] sm:$0xf]
        %v909 = vld [vmem:[%s393 + $0x6c4] sm:$0xf]
        %v910 = vld [vmem:[%s393 + $0x6c8] sm:$0xf]
        %v911 = vld [vmem:[%s393 + $0x6cc] sm:$0xf]
        %v912 = vld [vmem:[%s393 + $0x6d0] sm:$0xf]
        %v913 = vld [vmem:[%s393 + $0x6d4] sm:$0xf]
        %v914 = vld [vmem:[%s393 + $0x6d8] sm:$0xf]
        %v915 = vld [vmem:[%s393 + $0x6dc] sm:$0xf]
        %v916 = vld [vmem:[%s393 + $0x6e0] sm:$0xf]
        %v917 = vld [vmem:[%s393 + $0x6e4] sm:$0xf]
        %v918 = vld [vmem:[%s393 + $0x6e8] sm:$0xf]
        %v919 = vld [vmem:[%s393 + $0x6ec] sm:$0xf]
        %v920 = vld [vmem:[%s393 + $0x6f0] sm:$0xf]
        %v921 = vld [vmem:[%s393 + $0x6f4] sm:$0xf]
        %v922 = vld [vmem:[%s393 + $0x6f8] sm:$0xf]
        %v923 = vld [vmem:[%s393 + $0x6fc] sm:$0xf]
        %v924 = vld [vmem:[%s393 + $0x700] sm:$0xf]
        %v925 = vld [vmem:[%s393 + $0x704] sm:$0xf]
        %v926 = vld [vmem:[%s393 + $0x708] sm:$0xf]
        %v927 = vld [vmem:[%s393 + $0x70c] sm:$0xf]
        %v928 = vld [vmem:[%s393 + $0x710] sm:$0xf]
        %v929 = vld [vmem:[%s393 + $0x714] sm:$0xf]
        %v930 = vld [vmem:[%s393 + $0x718] sm:$0xf]
        %v931 = vld [vmem:[%s393 + $0x71c] sm:$0xf]
        %v932 = vld [vmem:[%s393 + $0x720] sm:$0xf]
        %v933 = vld [vmem:[%s393 + $0x724] sm:$0xf]
        %v934 = vld [vmem:[%s393 + $0x728] sm:$0xf]
        %v935 = vld [vmem:[%s393 + $0x72c] sm:$0xf]
        %v936 = vld [vmem:[%s393 + $0x730] sm:$0xf]
        %v937 = vld [vmem:[%s393 + $0x734] sm:$0xf]
        %v938 = vld [vmem:[%s393 + $0x738] sm:$0xf]
        %v939 = vld [vmem:[%s393 + $0x73c] sm:$0xf]
        %v940 = vld [vmem:[%s393 + $0x740] sm:$0xf]
        %v941 = vld [vmem:[%s393 + $0x744] sm:$0xf]
        %v942 = vld [vmem:[%s393 + $0x748] sm:$0xf]
        %v943 = vld [vmem:[%s393 + $0x74c] sm:$0xf]
        %v944 = vld [vmem:[%s393 + $0x750] sm:$0xf]
        %v945 = vld [vmem:[%s393 + $0x754] sm:$0xf]
        %v946 = vld [vmem:[%s393 + $0x758] sm:$0xf]
        %v947 = vld [vmem:[%s393 + $0x75c] sm:$0xf]
        %v948 = vld [vmem:[%s393 + $0x760] sm:$0xf]
        %v949 = vld [vmem:[%s393 + $0x764] sm:$0xf]
        %v950 = vld [vmem:[%s393 + $0x768] sm:$0xf]
        %v951 = vld [vmem:[%s393 + $0x76c] sm:$0xf]
        %v952 = vld [vmem:[%s393 + $0x770] sm:$0xf]
        %v953 = vld [vmem:[%s393 + $0x774] sm:$0xf]
        %v954 = vld [vmem:[%s393 + $0x778] sm:$0xf]
        %v955 = vld [vmem:[%s393 + $0x77c] sm:$0xf]
        %v956 = vld [vmem:[%s393 + $0x780] sm:$0xf]
        %v957 = vld [vmem:[%s393 + $0x784] sm:$0xf]
        %v958 = vld [vmem:[%s393 + $0x788] sm:$0xf]
        %v959 = vld [vmem:[%s393 + $0x78c] sm:$0xf]
        %v960 = vld [vmem:[%s393 + $0x790] sm:$0xf]
        %v961 = vld [vmem:[%s393 + $0x794] sm:$0xf]
        %v962 = vld [vmem:[%s393 + $0x798] sm:$0xf]
        %v963 = vld [vmem:[%s393 + $0x79c] sm:$0xf]
        %v964 = vld [vmem:[%s393 + $0x7a0] sm:$0xf]
        %v965 = vld [vmem:[%s393 + $0x7a4] sm:$0xf]
        %v966 = vld [vmem:[%s393 + $0x7a8] sm:$0xf]
        %v967 = vld [vmem:[%s393 + $0x7ac] sm:$0xf]
        %v968 = vld [vmem:[%s393 + $0x7b0] sm:$0xf]
        %v969 = vld [vmem:[%s393 + $0x7b4] sm:$0xf]
        %v970 = vld [vmem:[%s393 + $0x7b8] sm:$0xf]
        %v971 = vld [vmem:[%s393 + $0x7bc] sm:$0xf]
        %v972 = vld [vmem:[%s393 + $0x7c0] sm:$0xf]
        %v973 = vld [vmem:[%s393 + $0x7c4] sm:$0xf]
        %v974 = vld [vmem:[%s393 + $0x7c8] sm:$0xf]
        %v975 = vld [vmem:[%s393 + $0x7cc] sm:$0xf]
        %v976 = vld [vmem:[%s393 + $0x7d0] sm:$0xf]
        %v977 = vld [vmem:[%s393 + $0x7d4] sm:$0xf]
        %v978 = vld [vmem:[%s393 + $0x7d8] sm:$0xf]
        %v979 = vld [vmem:[%s393 + $0x7dc] sm:$0xf]
        %v980 = vld [vmem:[%s393 + $0x7e0] sm:$0xf]
        %v981 = vld [vmem:[%s393 + $0x7e4] sm:$0xf]
        %v982 = vld [vmem:[%s393 + $0x7e8] sm:$0xf]
        %v983 = vld [vmem:[%s393 + $0x7ec] sm:$0xf]
        %v984 = vld [vmem:[%s393 + $0x7f0] sm:$0xf]
        %v985 = vld [vmem:[%s393 + $0x7f4] sm:$0xf]
        %v986 = vld [vmem:[%s393 + $0x7f8] sm:$0xf]
        %v987 = vld [vmem:[%s393 + $0x7fc] sm:$0xf]
        %v988 = vld [vmem:[%s393 + $0x800] sm:$0xf]
        %v989 = vld [vmem:[%s393 + $0x804] sm:$0xf]
        %v990 = vld [vmem:[%s393 + $0x808] sm:$0xf]
        %v991 = vld [vmem:[%s393 + $0x80c] sm:$0xf]
        %v992 = vld [vmem:[%s393 + $0x810] sm:$0xf]
        %v993 = vld [vmem:[%s393 + $0x814] sm:$0xf]
        %v994 = vld [vmem:[%s393 + $0x818] sm:$0xf]
        %v995 = vld [vmem:[%s393 + $0x81c] sm:$0xf]
        %v996 = vld [vmem:[%s393 + $0x820] sm:$0xf]
        %v997 = vld [vmem:[%s393 + $0x824] sm:$0xf]
        %v998 = vld [vmem:[%s393 + $0x828] sm:$0xf]
        %v999 = vld [vmem:[%s393 + $0x82c] sm:$0xf]
        %v1000 = vld [vmem:[%s393 + $0x830] sm:$0xf]
        %v1001 = vld [vmem:[%s393 + $0x834] sm:$0xf]
        %v1002 = vld [vmem:[%s393 + $0x838] sm:$0xf]
        %v1003 = vld [vmem:[%s393 + $0x83c] sm:$0xf]
        %v1004 = vld [vmem:[%s393 + $0x840] sm:$0xf]
        %v1005 = vld [vmem:[%s393 + $0x844] sm:$0xf]
        %v1006 = vld [vmem:[%s393 + $0x848] sm:$0xf]
        %v1007 = vld [vmem:[%s393 + $0x84c] sm:$0xf]
        %v1008 = vld [vmem:[%s393 + $0x850] sm:$0xf]
        %v1009 = vld [vmem:[%s393 + $0x854] sm:$0xf]
        %v1010 = vld [vmem:[%s393 + $0x858] sm:$0xf]
        %v1011 = vld [vmem:[%s393 + $0x85c] sm:$0xf]
        %v1012 = vld [vmem:[%s393 + $0x860] sm:$0xf]
        %v1013 = vld [vmem:[%s393 + $0x864] sm:$0xf]
        %v1014 = vld [vmem:[%s393 + $0x868] sm:$0xf]
        %v1015 = vld [vmem:[%s393 + $0x86c] sm:$0xf]
        %v1016 = vld [vmem:[%s393 + $0x870] sm:$0xf]
        %v1017 = vld [vmem:[%s393 + $0x874] sm:$0xf]
        %v1018 = vld [vmem:[%s393 + $0x878] sm:$0xf]
        %v1019 = vld [vmem:[%s393 + $0x87c] sm:$0xf]
        %v1020 = vld [vmem:[%s393 + $0x880] sm:$0xf]
        %v1021 = vld [vmem:[%s393 + $0x884] sm:$0xf]
        %v1022 = vld [vmem:[%s393 + $0x888] sm:$0xf]
        %v1023 = vld [vmem:[%s393 + $0x88c] sm:$0xf]
        %v1024 = vld [vmem:[%s393 + $0x890] sm:$0xf]
        %v1025 = vld [vmem:[%s393 + $0x894] sm:$0xf]
        %v1026 = vld [vmem:[%s393 + $0x898] sm:$0xf]
        %v1027 = vld [vmem:[%s393 + $0x89c] sm:$0xf]
        %v1028 = vld [vmem:[%s393 + $0x8a0] sm:$0xf]
        %v1029 = vld [vmem:[%s393 + $0x8a4] sm:$0xf]
        %v1030 = vld [vmem:[%s393 + $0x8a8] sm:$0xf]
        %v1031 = vld [vmem:[%s393 + $0x8ac] sm:$0xf]
        %v1032 = vld [vmem:[%s393 + $0x8b0] sm:$0xf]
        %v1033 = vld [vmem:[%s393 + $0x8b4] sm:$0xf]
        %v1034 = vld [vmem:[%s393 + $0x8b8] sm:$0xf]
        %v1035 = vld [vmem:[%s393 + $0x8bc] sm:$0xf]
        %v1036 = vld [vmem:[%s393 + $0x8c0] sm:$0xf]
        %v1037 = vld [vmem:[%s393 + $0x8c4] sm:$0xf]
        %v1038 = vld [vmem:[%s393 + $0x8c8] sm:$0xf]
        %v1039 = vld [vmem:[%s393 + $0x8cc] sm:$0xf]
        %v1040 = vld [vmem:[%s393 + $0x8d0] sm:$0xf]
        %v1041 = vld [vmem:[%s393 + $0x8d4] sm:$0xf]
        %v1042 = vld [vmem:[%s393 + $0x8d8] sm:$0xf]
        %v1043 = vld [vmem:[%s393 + $0x8dc] sm:$0xf]
        %v1044 = vld [vmem:[%s393 + $0x8e0] sm:$0xf]
        %v1045 = vld [vmem:[%s393 + $0x8e4] sm:$0xf]
        %v1046 = vld [vmem:[%s393 + $0x8e8] sm:$0xf]
        %v1047 = vld [vmem:[%s393 + $0x8ec] sm:$0xf]
        %v1048 = vld [vmem:[%s393 + $0x8f0] sm:$0xf]
        %v1049 = vld [vmem:[%s393 + $0x8f4] sm:$0xf]
        %v1050 = vld [vmem:[%s393 + $0x8f8] sm:$0xf]
        %v1051 = vld [vmem:[%s393 + $0x8fc] sm:$0xf]
        %v1052 = vld [vmem:[%s393 + $0x900] sm:$0xf]
        %v1053 = vld [vmem:[%s393 + $0x904] sm:$0xf]
        %v1054 = vld [vmem:[%s393 + $0x908] sm:$0xf]
        %v1055 = vld [vmem:[%s393 + $0x90c] sm:$0xf]
        %v1056 = vld [vmem:[%s393 + $0x910] sm:$0xf]
        %v1057 = vld [vmem:[%s393 + $0x914] sm:$0xf]
        %v1058 = vld [vmem:[%s393 + $0x918] sm:$0xf]
        %v1059 = vld [vmem:[%s393 + $0x91c] sm:$0xf]
        %v1060 = vld [vmem:[%s393 + $0x920] sm:$0xf]
        %v1061 = vld [vmem:[%s393 + $0x924] sm:$0xf]
        %v1062 = vld [vmem:[%s393 + $0x928] sm:$0xf]
        %v1063 = vld [vmem:[%s393 + $0x92c] sm:$0xf]
        %v1064 = vld [vmem:[%s393 + $0x930] sm:$0xf]
        %v1065 = vld [vmem:[%s393 + $0x934] sm:$0xf]
        %v1066 = vld [vmem:[%s393 + $0x938] sm:$0xf]
        %v1067 = vld [vmem:[%s393 + $0x93c] sm:$0xf]
        %v1068 = vld [vmem:[%s393 + $0x940] sm:$0xf]
        %v1069 = vld [vmem:[%s393 + $0x944] sm:$0xf]
        %v1070 = vld [vmem:[%s393 + $0x948] sm:$0xf]
        %v1071 = vld [vmem:[%s393 + $0x94c] sm:$0xf]
        %v1072 = vld [vmem:[%s393 + $0x950] sm:$0xf]
        %v1073 = vld [vmem:[%s393 + $0x954] sm:$0xf]
        %v1074 = vld [vmem:[%s393 + $0x958] sm:$0xf]
        %v1075 = vld [vmem:[%s393 + $0x95c] sm:$0xf]
        %v1076 = vld [vmem:[%s393 + $0x960] sm:$0xf]
        %v1077 = vld [vmem:[%s393 + $0x964] sm:$0xf]
        %v1078 = vld [vmem:[%s393 + $0x968] sm:$0xf]
        %v1079 = vld [vmem:[%s393 + $0x96c] sm:$0xf]
        %v1080 = vld [vmem:[%s393 + $0x970] sm:$0xf]
        %v1081 = vld [vmem:[%s393 + $0x974] sm:$0xf]
        %v1082 = vld [vmem:[%s393 + $0x978] sm:$0xf]
        %v1083 = vld [vmem:[%s393 + $0x97c] sm:$0xf]
        %v1084 = vld [vmem:[%s393 + $0x980] sm:$0xf]
        %v1085 = vld [vmem:[%s393 + $0x984] sm:$0xf]
        %v1086 = vld [vmem:[%s393 + $0x988] sm:$0xf]
        %v1087 = vld [vmem:[%s393 + $0x98c] sm:$0xf]
        %v1088 = vld [vmem:[%s393 + $0x990] sm:$0xf]
        %v1089 = vld [vmem:[%s393 + $0x994] sm:$0xf]
        %v1090 = vld [vmem:[%s393 + $0x998] sm:$0xf]
        %v1091 = vld [vmem:[%s393 + $0x99c] sm:$0xf]
        %v1092 = vld [vmem:[%s393 + $0x9a0] sm:$0xf]
        %v1093 = vld [vmem:[%s393 + $0x9a4] sm:$0xf]
        %v1094 = vld [vmem:[%s393 + $0x9a8] sm:$0xf]
        %v1095 = vld [vmem:[%s393 + $0x9ac] sm:$0xf]
        %v1096 = vld [vmem:[%s393 + $0x9b0] sm:$0xf]
        %v1097 = vld [vmem:[%s393 + $0x9b4] sm:$0xf]
        %v1098 = vld [vmem:[%s393 + $0x9b8] sm:$0xf]
        %v1099 = vld [vmem:[%s393 + $0x9bc] sm:$0xf]
        %v1100 = vld [vmem:[%s393 + $0x9c0] sm:$0xf]
        %v1101 = vld [vmem:[%s393 + $0x9c4] sm:$0xf]
        %v1102 = vld [vmem:[%s393 + $0x9c8] sm:$0xf]
        %v1103 = vld [vmem:[%s393 + $0x9cc] sm:$0xf]
        %v1104 = vld [vmem:[%s393 + $0x9d0] sm:$0xf]
        %v1105 = vld [vmem:[%s393 + $0x9d4] sm:$0xf]
        %v1106 = vld [vmem:[%s393 + $0x9d8] sm:$0xf]
        %v1107 = vld [vmem:[%s393 + $0x9dc] sm:$0xf]
        %v1108 = vld [vmem:[%s393 + $0x9e0] sm:$0xf]
        %v1109 = vld [vmem:[%s393 + $0x9e4] sm:$0xf]
        %v1110 = vld [vmem:[%s393 + $0x9e8] sm:$0xf]
        %v1111 = vld [vmem:[%s393 + $0x9ec] sm:$0xf]
        %v1112 = vld [vmem:[%s393 + $0x9f0] sm:$0xf]
        %v1113 = vld [vmem:[%s393 + $0x9f4] sm:$0xf]
        %v1114 = vld [vmem:[%s393 + $0x9f8] sm:$0xf]
        %v1115 = vld [vmem:[%s393 + $0x9fc] sm:$0xf]
        %v1116 = vld [vmem:[%s393 + $0xa00] sm:$0xf]
        %v1117 = vld [vmem:[%s393 + $0xa04] sm:$0xf]
        %v1118 = vld [vmem:[%s393 + $0xa08] sm:$0xf]
        %v1119 = vld [vmem:[%s393 + $0xa0c] sm:$0xf]
        %v1120 = vld [vmem:[%s393 + $0xa10] sm:$0xf]
        %v1121 = vld [vmem:[%s393 + $0xa14] sm:$0xf]
        %v1122 = vld [vmem:[%s393 + $0xa18] sm:$0xf]
        %v1123 = vld [vmem:[%s393 + $0xa1c] sm:$0xf]
        %v1124 = vld [vmem:[%s393 + $0xa20] sm:$0xf]
        %v1125 = vld [vmem:[%s393 + $0xa24] sm:$0xf]
        %v1126 = vld [vmem:[%s393 + $0xa28] sm:$0xf]
        %v1127 = vld [vmem:[%s393 + $0xa2c] sm:$0xf]
        %v1128 = vld [vmem:[%s393 + $0xa30] sm:$0xf]
        %v1129 = vld [vmem:[%s393 + $0xa34] sm:$0xf]
        %v1130 = vld [vmem:[%s393 + $0xa38] sm:$0xf]
        %v1131 = vld [vmem:[%s393 + $0xa3c] sm:$0xf]
        %v1132 = vld [vmem:[%s393 + $0xa40] sm:$0xf]
        %v1133 = vld [vmem:[%s393 + $0xa44] sm:$0xf]
        %v1134 = vld [vmem:[%s393 + $0xa48] sm:$0xf]
        %v1135 = vld [vmem:[%s393 + $0xa4c] sm:$0xf]
        %v1136 = vld [vmem:[%s393 + $0xa50] sm:$0xf]
        %v1137 = vld [vmem:[%s393 + $0xa54] sm:$0xf]
        %v1138 = vld [vmem:[%s393 + $0xa58] sm:$0xf]
        %v1139 = vld [vmem:[%s393 + $0xa5c] sm:$0xf]
        %v1140 = vld [vmem:[%s393 + $0xa60] sm:$0xf]
        %v1141 = vld [vmem:[%s393 + $0xa64] sm:$0xf]
        %v1142 = vld [vmem:[%s393 + $0xa68] sm:$0xf]
        %v1143 = vld [vmem:[%s393 + $0xa6c] sm:$0xf]
        %v1144 = vld [vmem:[%s393 + $0xa70] sm:$0xf]
        %v1145 = vld [vmem:[%s393 + $0xa74] sm:$0xf]
        %v1146 = vld [vmem:[%s393 + $0xa78] sm:$0xf]
        %v1147 = vld [vmem:[%s393 + $0xa7c] sm:$0xf]
        %v1148 = vld [vmem:[%s393 + $0xa80] sm:$0xf]
        %v1149 = vld [vmem:[%s393 + $0xa84] sm:$0xf]
        %v1150 = vld [vmem:[%s393 + $0xa88] sm:$0xf]
        %v1151 = vld [vmem:[%s393 + $0xa8c] sm:$0xf]
        %v1152 = vld [vmem:[%s393 + $0xa90] sm:$0xf]
        %v1153 = vld [vmem:[%s393 + $0xa94] sm:$0xf]
        %v1154 = vld [vmem:[%s393 + $0xa98] sm:$0xf]
        %v1155 = vld [vmem:[%s393 + $0xa9c] sm:$0xf]
        %v1156 = vld [vmem:[%s393 + $0xaa0] sm:$0xf]
        %v1157 = vld [vmem:[%s393 + $0xaa4] sm:$0xf]
        %v1158 = vld [vmem:[%s393 + $0xaa8] sm:$0xf]
        %v1159 = vld [vmem:[%s393 + $0xaac] sm:$0xf]
        %v1160 = vld [vmem:[%s393 + $0xab0] sm:$0xf]
        %v1161 = vld [vmem:[%s393 + $0xab4] sm:$0xf]
        %v1162 = vld [vmem:[%s393 + $0xab8] sm:$0xf]
        %v1163 = vld [vmem:[%s393 + $0xabc] sm:$0xf]
        %v1164 = vld [vmem:[%s393 + $0xac0] sm:$0xf]
        %v1165 = vld [vmem:[%s393 + $0xac4] sm:$0xf]
        %v1166 = vld [vmem:[%s393 + $0xac8] sm:$0xf]
        %v1167 = vld [vmem:[%s393 + $0xacc] sm:$0xf]
        %v1168 = vld [vmem:[%s393 + $0xad0] sm:$0xf]
        %v1169 = vld [vmem:[%s393 + $0xad4] sm:$0xf]
        %v1170 = vld [vmem:[%s393 + $0xad8] sm:$0xf]
        %v1171 = vld [vmem:[%s393 + $0xadc] sm:$0xf]
        %v1172 = vld [vmem:[%s393 + $0xae0] sm:$0xf]
        %v1173 = vld [vmem:[%s393 + $0xae4] sm:$0xf]
        %v1174 = vld [vmem:[%s393 + $0xae8] sm:$0xf]
        %v1175 = vld [vmem:[%s393 + $0xaec] sm:$0xf]
        %v1176 = vld [vmem:[%s393 + $0xaf0] sm:$0xf]
        %v1177 = vld [vmem:[%s393 + $0xaf4] sm:$0xf]
        %v1178 = vld [vmem:[%s393 + $0xaf8] sm:$0xf]
        %v1179 = vld [vmem:[%s393 + $0xafc] sm:$0xf]
        %v1180 = vld [vmem:[%s393 + $0xb00] sm:$0xf]
        %v1181 = vld [vmem:[%s393 + $0xb04] sm:$0xf]
        %v1182 = vld [vmem:[%s393 + $0xb08] sm:$0xf]
        %v1183 = vld [vmem:[%s393 + $0xb0c] sm:$0xf]
        %v1184 = vld [vmem:[%s393 + $0xb10] sm:$0xf]
        %v1185 = vld [vmem:[%s393 + $0xb14] sm:$0xf]
        %v1186 = vld [vmem:[%s393 + $0xb18] sm:$0xf]
        %v1187 = vld [vmem:[%s393 + $0xb1c] sm:$0xf]
        %v1188 = vld [vmem:[%s393 + $0xb20] sm:$0xf]
        %v1189 = vld [vmem:[%s393 + $0xb24] sm:$0xf]
        %v1190 = vld [vmem:[%s393 + $0xb28] sm:$0xf]
        %v1191 = vld [vmem:[%s393 + $0xb2c] sm:$0xf]
        %v1192 = vld [vmem:[%s393 + $0xb30] sm:$0xf]
        %v1193 = vld [vmem:[%s393 + $0xb34] sm:$0xf]
        %v1194 = vld [vmem:[%s393 + $0xb38] sm:$0xf]
        %v1195 = vld [vmem:[%s393 + $0xb3c] sm:$0xf]
        %v1196 = vld [vmem:[%s393 + $0xb40] sm:$0xf]
        %v1197 = vld [vmem:[%s393 + $0xb44] sm:$0xf]
        %v1198 = vld [vmem:[%s393 + $0xb48] sm:$0xf]
        %v1199 = vld [vmem:[%s393 + $0xb4c] sm:$0xf]
        %v1200 = vld [vmem:[%s393 + $0xb50] sm:$0xf]
        %v1201 = vld [vmem:[%s393 + $0xb54] sm:$0xf]
        %v1202 = vld [vmem:[%s393 + $0xb58] sm:$0xf]
        %v1203 = vld [vmem:[%s393 + $0xb5c] sm:$0xf]
        %v1204 = vld [vmem:[%s393 + $0xb60] sm:$0xf]
        %v1205 = vld [vmem:[%s393 + $0xb64] sm:$0xf]
        %v1206 = vld [vmem:[%s393 + $0xb68] sm:$0xf]
        %v1207 = vld [vmem:[%s393 + $0xb6c] sm:$0xf]
        %v1208 = vld [vmem:[%s393 + $0xb70] sm:$0xf]
        %v1209 = vld [vmem:[%s393 + $0xb74] sm:$0xf]
        %v1210 = vld [vmem:[%s393 + $0xb78] sm:$0xf]
        %v1211 = vld [vmem:[%s393 + $0xb7c] sm:$0xf]
        %v1212 = vld [vmem:[%s393 + $0xb80] sm:$0xf]
        %v1213 = vld [vmem:[%s393 + $0xb84] sm:$0xf]
        %v1214 = vld [vmem:[%s393 + $0xb88] sm:$0xf]
        %v1215 = vld [vmem:[%s393 + $0xb8c] sm:$0xf]
        %v1216 = vld [vmem:[%s393 + $0xb90] sm:$0xf]
        %v1217 = vld [vmem:[%s393 + $0xb94] sm:$0xf]
        %v1218 = vld [vmem:[%s393 + $0xb98] sm:$0xf]
        %v1219 = vld [vmem:[%s393 + $0xb9c] sm:$0xf]
        %v1220 = vld [vmem:[%s393 + $0xba0] sm:$0xf]
        %v1221 = vld [vmem:[%s393 + $0xba4] sm:$0xf]
        %v1222 = vld [vmem:[%s393 + $0xba8] sm:$0xf]
        %v1223 = vld [vmem:[%s393 + $0xbac] sm:$0xf]
        %v1224 = vld [vmem:[%s393 + $0xbb0] sm:$0xf]
        %v1225 = vld [vmem:[%s393 + $0xbb4] sm:$0xf]
        %v1226 = vld [vmem:[%s393 + $0xbb8] sm:$0xf]
        %v1227 = vld [vmem:[%s393 + $0xbbc] sm:$0xf]
        %v1228 = vld [vmem:[%s393 + $0xbc0] sm:$0xf]
        %v1229 = vld [vmem:[%s393 + $0xbc4] sm:$0xf]
        %v1230 = vld [vmem:[%s393 + $0xbc8] sm:$0xf]
        %v1231 = vld [vmem:[%s393 + $0xbcc] sm:$0xf]
        %v1232 = vld [vmem:[%s393 + $0xbd0] sm:$0xf]
        %v1233 = vld [vmem:[%s393 + $0xbd4] sm:$0xf]
        %v1234 = vld [vmem:[%s393 + $0xbd8] sm:$0xf]
        %v1235 = vld [vmem:[%s393 + $0xbdc] sm:$0xf]
        %v1236 = vld [vmem:[%s393 + $0xbe0] sm:$0xf]
        %v1237 = vld [vmem:[%s393 + $0xbe4] sm:$0xf]
        %v1238 = vld [vmem:[%s393 + $0xbe8] sm:$0xf]
        %v1239 = vld [vmem:[%s393 + $0xbec] sm:$0xf]
        %v1240 = vld [vmem:[%s393 + $0xbf0] sm:$0xf]
        %v1241 = vld [vmem:[%s393 + $0xbf4] sm:$0xf]
        %v1242 = vld [vmem:[%s393 + $0xbf8] sm:$0xf]
        %v1243 = vld [vmem:[%s393 + $0xbfc] sm:$0xf]
        %v1244 = vld [vmem:[%s393 + $0xc00] sm:$0xf]
        %v1245 = vld [vmem:[%s393 + $0xc04] sm:$0xf]
        %v1246 = vld [vmem:[%s393 + $0xc08] sm:$0xf]
        %v1247 = vld [vmem:[%s393 + $0xc0c] sm:$0xf]
        %v1248 = vld [vmem:[%s393 + $0xc10] sm:$0xf]
        %v1249 = vld [vmem:[%s393 + $0xc14] sm:$0xf]
        %v1250 = vld [vmem:[%s393 + $0xc18] sm:$0xf]
        %v1251 = vld [vmem:[%s393 + $0xc1c] sm:$0xf]
        %v1252 = vld [vmem:[%s393 + $0xc20] sm:$0xf]
        %v1253 = vld [vmem:[%s393 + $0xc24] sm:$0xf]
        %v1254 = vld [vmem:[%s393 + $0xc28] sm:$0xf]
        %v1255 = vld [vmem:[%s393 + $0xc2c] sm:$0xf]
        %v1256 = vld [vmem:[%s393 + $0xc30] sm:$0xf]
        %v1257 = vld [vmem:[%s393 + $0xc34] sm:$0xf]
        %v1258 = vld [vmem:[%s393 + $0xc38] sm:$0xf]
        %v1259 = vld [vmem:[%s393 + $0xc3c] sm:$0xf]
        %v1260 = vld [vmem:[%s393 + $0xc40] sm:$0xf]
        %v1261 = vld [vmem:[%s393 + $0xc44] sm:$0xf]
        %v1262 = vld [vmem:[%s393 + $0xc48] sm:$0xf]
        %v1263 = vld [vmem:[%s393 + $0xc4c] sm:$0xf]
        %v1264 = vld [vmem:[%s393 + $0xc50] sm:$0xf]
        %v1265 = vld [vmem:[%s393 + $0xc54] sm:$0xf]
        %v1266 = vld [vmem:[%s393 + $0xc58] sm:$0xf]
        %v1267 = vld [vmem:[%s393 + $0xc5c] sm:$0xf]
        %v1268 = vld [vmem:[%s393 + $0xc60] sm:$0xf]
        %v1269 = vld [vmem:[%s393 + $0xc64] sm:$0xf]
        %v1270 = vld [vmem:[%s393 + $0xc68] sm:$0xf]
        %v1271 = vld [vmem:[%s393 + $0xc6c] sm:$0xf]
        %v1272 = vld [vmem:[%s393 + $0xc70] sm:$0xf]
        %v1273 = vld [vmem:[%s393 + $0xc74] sm:$0xf]
        %v1274 = vld [vmem:[%s393 + $0xc78] sm:$0xf]
        %v1275 = vld [vmem:[%s393 + $0xc7c] sm:$0xf]
        %v1276 = vld [vmem:[%s393 + $0xc80] sm:$0xf]
        %v1277 = vld [vmem:[%s393 + $0xc84] sm:$0xf]
        %v1278 = vld [vmem:[%s393 + $0xc88] sm:$0xf]
        %v1279 = vld [vmem:[%s393 + $0xc8c] sm:$0xf]
        %v1280 = vld [vmem:[%s393 + $0xc90] sm:$0xf]
        %v1281 = vld [vmem:[%s393 + $0xc94] sm:$0xf]
        %v1282 = vld [vmem:[%s393 + $0xc98] sm:$0xf]
        %v1283 = vld [vmem:[%s393 + $0xc9c] sm:$0xf]
        %v1284 = vld [vmem:[%s393 + $0xca0] sm:$0xf]
        %v1285 = vld [vmem:[%s393 + $0xca4] sm:$0xf]
        %v1286 = vld [vmem:[%s393 + $0xca8] sm:$0xf]
        %v1287 = vld [vmem:[%s393 + $0xcac] sm:$0xf]
        %v1288 = vld [vmem:[%s393 + $0xcb0] sm:$0xf]
        %v1289 = vld [vmem:[%s393 + $0xcb4] sm:$0xf]
        %v1290 = vld [vmem:[%s393 + $0xcb8] sm:$0xf]
        %v1291 = vld [vmem:[%s393 + $0xcbc] sm:$0xf]
        %v1292 = vld [vmem:[%s393 + $0xcc0] sm:$0xf]
        %v1293 = vld [vmem:[%s393 + $0xcc4] sm:$0xf]
        %v1294 = vld [vmem:[%s393 + $0xcc8] sm:$0xf]
        %v1295 = vld [vmem:[%s393 + $0xccc] sm:$0xf]
        %v1296 = vld [vmem:[%s393 + $0xcd0] sm:$0xf]
        %v1297 = vld [vmem:[%s393 + $0xcd4] sm:$0xf]
        %v1298 = vld [vmem:[%s393 + $0xcd8] sm:$0xf]
        %v1299 = vld [vmem:[%s393 + $0xcdc] sm:$0xf]
        %v1300 = vld [vmem:[%s393 + $0xce0] sm:$0xf]
        %v1301 = vld [vmem:[%s393 + $0xce4] sm:$0xf]
        %v1302 = vld [vmem:[%s393 + $0xce8] sm:$0xf]
        %v1303 = vld [vmem:[%s393 + $0xcec] sm:$0xf]
        %v1304 = vld [vmem:[%s393 + $0xcf0] sm:$0xf]
        %v1305 = vld [vmem:[%s393 + $0xcf4] sm:$0xf]
        %v1306 = vld [vmem:[%s393 + $0xcf8] sm:$0xf]
        %v1307 = vld [vmem:[%s393 + $0xcfc] sm:$0xf]
        %v1308 = vld [vmem:[%s393 + $0xd00] sm:$0xf]
        %v1309 = vld [vmem:[%s393 + $0xd04] sm:$0xf]
        %v1310 = vld [vmem:[%s393 + $0xd08] sm:$0xf]
        %v1311 = vld [vmem:[%s393 + $0xd0c] sm:$0xf]
        %v1312 = vld [vmem:[%s393 + $0xd10] sm:$0xf]
        %v1313 = vld [vmem:[%s393 + $0xd14] sm:$0xf]
        %v1314 = vld [vmem:[%s393 + $0xd18] sm:$0xf]
        %v1315 = vld [vmem:[%s393 + $0xd1c] sm:$0xf]
        %v1316 = vld [vmem:[%s393 + $0xd20] sm:$0xf]
        %v1317 = vld [vmem:[%s393 + $0xd24] sm:$0xf]
        %v1318 = vld [vmem:[%s393 + $0xd28] sm:$0xf]
        %v1319 = vld [vmem:[%s393 + $0xd2c] sm:$0xf]
        %v1320 = vld [vmem:[%s393 + $0xd30] sm:$0xf]
        %v1321 = vld [vmem:[%s393 + $0xd34] sm:$0xf]
        %v1322 = vld [vmem:[%s393 + $0xd38] sm:$0xf]
        %v1323 = vld [vmem:[%s393 + $0xd3c] sm:$0xf]
        %v1324 = vld [vmem:[%s393 + $0xd40] sm:$0xf]
        %v1325 = vld [vmem:[%s393 + $0xd44] sm:$0xf]
        %v1326 = vld [vmem:[%s393 + $0xd48] sm:$0xf]
        %v1327 = vld [vmem:[%s393 + $0xd4c] sm:$0xf]
        %v1328 = vld [vmem:[%s393 + $0xd50] sm:$0xf]
        %v1329 = vld [vmem:[%s393 + $0xd54] sm:$0xf]
        %v1330 = vld [vmem:[%s393 + $0xd58] sm:$0xf]
        %v1331 = vld [vmem:[%s393 + $0xd5c] sm:$0xf]
        %v1332 = vld [vmem:[%s393 + $0xd60] sm:$0xf]
        %v1333 = vld [vmem:[%s393 + $0xd64] sm:$0xf]
        %v1334 = vld [vmem:[%s393 + $0xd68] sm:$0xf]
        %v1335 = vld [vmem:[%s393 + $0xd6c] sm:$0xf]
        %v1336 = vld [vmem:[%s393 + $0xd70] sm:$0xf]
        %v1337 = vld [vmem:[%s393 + $0xd74] sm:$0xf]
        %v1338 = vld [vmem:[%s393 + $0xd78] sm:$0xf]
        %v1339 = vld [vmem:[%s393 + $0xd7c] sm:$0xf]
        %v1340 = vld [vmem:[%s393 + $0xd80] sm:$0xf]
        %v1341 = vld [vmem:[%s393 + $0xd84] sm:$0xf]
        %v1342 = vld [vmem:[%s393 + $0xd88] sm:$0xf]
        %v1343 = vld [vmem:[%s393 + $0xd8c] sm:$0xf]
        %v1344 = vld [vmem:[%s393 + $0xd90] sm:$0xf]
        %v1345 = vld [vmem:[%s393 + $0xd94] sm:$0xf]
        %v1346 = vld [vmem:[%s393 + $0xd98] sm:$0xf]
        %v1347 = vld [vmem:[%s393 + $0xd9c] sm:$0xf]
        %v1348 = vld [vmem:[%s393 + $0xda0] sm:$0xf]
        %v1349 = vld [vmem:[%s393 + $0xda4] sm:$0xf]
        %v1350 = vld [vmem:[%s393 + $0xda8] sm:$0xf]
        %v1351 = vld [vmem:[%s393 + $0xdac] sm:$0xf]
        %v1352 = vld [vmem:[%s393 + $0xdb0] sm:$0xf]
        %v1353 = vld [vmem:[%s393 + $0xdb4] sm:$0xf]
        %v1354 = vld [vmem:[%s393 + $0xdb8] sm:$0xf]
        %v1355 = vld [vmem:[%s393 + $0xdbc] sm:$0xf]
        %v1356 = vld [vmem:[%s393 + $0xdc0] sm:$0xf]
        %v1357 = vld [vmem:[%s393 + $0xdc4] sm:$0xf]
        %v1358 = vld [vmem:[%s393 + $0xdc8] sm:$0xf]
        %v1359 = vld [vmem:[%s393 + $0xdcc] sm:$0xf]
        %v1360 = vld [vmem:[%s393 + $0xdd0] sm:$0xf]
        %v1361 = vld [vmem:[%s393 + $0xdd4] sm:$0xf]
        %v1362 = vld [vmem:[%s393 + $0xdd8] sm:$0xf]
        %v1363 = vld [vmem:[%s393 + $0xddc] sm:$0xf]
        %v1364 = vld [vmem:[%s393 + $0xde0] sm:$0xf]
        %v1365 = vld [vmem:[%s393 + $0xde4] sm:$0xf]
        %v1366 = vld [vmem:[%s393 + $0xde8] sm:$0xf]
        %v1367 = vld [vmem:[%s393 + $0xdec] sm:$0xf]
        %v1368 = vld [vmem:[%s393 + $0xdf0] sm:$0xf]
        %v1369 = vld [vmem:[%s393 + $0xdf4] sm:$0xf]
        %v1370 = vld [vmem:[%s393 + $0xdf8] sm:$0xf]
        %v1371 = vld [vmem:[%s393 + $0xdfc] sm:$0xf]
        %v1372 = vld [vmem:[%s393 + $0xe00] sm:$0xf]
        %v1373 = vld [vmem:[%s393 + $0xe04] sm:$0xf]
        %v1374 = vld [vmem:[%s393 + $0xe08] sm:$0xf]
        %v1375 = vld [vmem:[%s393 + $0xe0c] sm:$0xf]
        %v1376 = vld [vmem:[%s393 + $0xe10] sm:$0xf]
        %v1377 = vld [vmem:[%s393 + $0xe14] sm:$0xf]
        %v1378 = vld [vmem:[%s393 + $0xe18] sm:$0xf]
        %v1379 = vld [vmem:[%s393 + $0xe1c] sm:$0xf]
        %v1380 = vld [vmem:[%s393 + $0xe20] sm:$0xf]
        %v1381 = vld [vmem:[%s393 + $0xe24] sm:$0xf]
        %v1382 = vld [vmem:[%s393 + $0xe28] sm:$0xf]
        %v1383 = vld [vmem:[%s393 + $0xe2c] sm:$0xf]
        %v1384 = vld [vmem:[%s393 + $0xe30] sm:$0xf]
        %v1385 = vld [vmem:[%s393 + $0xe34] sm:$0xf]
        %v1386 = vld [vmem:[%s393 + $0xe38] sm:$0xf]
        %v1387 = vld [vmem:[%s393 + $0xe3c] sm:$0xf]
        %v1388 = vld [vmem:[%s393 + $0xe40] sm:$0xf]
        %v1389 = vld [vmem:[%s393 + $0xe44] sm:$0xf]
        %v1390 = vld [vmem:[%s393 + $0xe48] sm:$0xf]
        %v1391 = vld [vmem:[%s393 + $0xe4c] sm:$0xf]
        %v1392 = vld [vmem:[%s393 + $0xe50] sm:$0xf]
        %v1393 = vld [vmem:[%s393 + $0xe54] sm:$0xf]
        %v1394 = vld [vmem:[%s393 + $0xe58] sm:$0xf]
        %v1395 = vld [vmem:[%s393 + $0xe5c] sm:$0xf]
        %v1396 = vld [vmem:[%s393 + $0xe60] sm:$0xf]
        %v1397 = vld [vmem:[%s393 + $0xe64] sm:$0xf]
        %v1398 = vld [vmem:[%s393 + $0xe68] sm:$0xf]
        %v1399 = vld [vmem:[%s393 + $0xe6c] sm:$0xf]
        %v1400 = vld [vmem:[%s393 + $0xe70] sm:$0xf]
        %v1401 = vld [vmem:[%s393 + $0xe74] sm:$0xf]
        %v1402 = vld [vmem:[%s393 + $0xe78] sm:$0xf]
        %v1403 = vld [vmem:[%s393 + $0xe7c] sm:$0xf]
        %v1404 = vld [vmem:[%s393 + $0xe80] sm:$0xf]
        %v1405 = vld [vmem:[%s393 + $0xe84] sm:$0xf]
        %v1406 = vld [vmem:[%s393 + $0xe88] sm:$0xf]
        %v1407 = vld [vmem:[%s393 + $0xe8c] sm:$0xf]
        %v1408 = vld [vmem:[%s393 + $0xe90] sm:$0xf]
        %v1409 = vld [vmem:[%s393 + $0xe94] sm:$0xf]
        %v1410 = vld [vmem:[%s393 + $0xe98] sm:$0xf]
        %v1411 = vld [vmem:[%s393 + $0xe9c] sm:$0xf]
        %v1412 = vld [vmem:[%s393 + $0xea0] sm:$0xf]
        %v1413 = vld [vmem:[%s393 + $0xea4] sm:$0xf]
        %v1414 = vld [vmem:[%s393 + $0xea8] sm:$0xf]
        %v1415 = vld [vmem:[%s393 + $0xeac] sm:$0xf]
        %v1416 = vld [vmem:[%s393 + $0xeb0] sm:$0xf]
        %v1417 = vld [vmem:[%s393 + $0xeb4] sm:$0xf]
        %v1418 = vld [vmem:[%s393 + $0xeb8] sm:$0xf]
        %v1419 = vld [vmem:[%s393 + $0xebc] sm:$0xf]
        %v1420 = vld [vmem:[%s393 + $0xec0] sm:$0xf]
        %v1421 = vld [vmem:[%s393 + $0xec4] sm:$0xf]
        %v1422 = vld [vmem:[%s393 + $0xec8] sm:$0xf]
        %v1423 = vld [vmem:[%s393 + $0xecc] sm:$0xf]
        %v1424 = vld [vmem:[%s393 + $0xed0] sm:$0xf]
        %v1425 = vld [vmem:[%s393 + $0xed4] sm:$0xf]
        %v1426 = vld [vmem:[%s393 + $0xed8] sm:$0xf]
        %v1427 = vld [vmem:[%s393 + $0xedc] sm:$0xf]
        %v1428 = vld [vmem:[%s393 + $0xee0] sm:$0xf]
        %v1429 = vld [vmem:[%s393 + $0xee4] sm:$0xf]
        %v1430 = vld [vmem:[%s393 + $0xee8] sm:$0xf]
        %v1431 = vld [vmem:[%s393 + $0xeec] sm:$0xf]
        %v1432 = vld [vmem:[%s393 + $0xef0] sm:$0xf]
        %v1433 = vld [vmem:[%s393 + $0xef4] sm:$0xf]
        %v1434 = vld [vmem:[%s393 + $0xef8] sm:$0xf]
        %v1435 = vld [vmem:[%s393 + $0xefc] sm:$0xf]
        %v1436 = vld [vmem:[%s393 + $0xf00] sm:$0xf]
        %v1437 = vld [vmem:[%s393 + $0xf04] sm:$0xf]
        %v1438 = vld [vmem:[%s393 + $0xf08] sm:$0xf]
        %v1439 = vld [vmem:[%s393 + $0xf0c] sm:$0xf]
        %v1440 = vld [vmem:[%s393 + $0xf10] sm:$0xf]
        %v1441 = vld [vmem:[%s393 + $0xf14] sm:$0xf]
        %v1442 = vld [vmem:[%s393 + $0xf18] sm:$0xf]
        %v1443 = vld [vmem:[%s393 + $0xf1c] sm:$0xf]
        %v1444 = vld [vmem:[%s393 + $0xf20] sm:$0xf]
        %v1445 = vld [vmem:[%s393 + $0xf24] sm:$0xf]
        %v1446 = vld [vmem:[%s393 + $0xf28] sm:$0xf]
        %v1447 = vld [vmem:[%s393 + $0xf2c] sm:$0xf]
        %v1448 = vld [vmem:[%s393 + $0xf30] sm:$0xf]
        %v1449 = vld [vmem:[%s393 + $0xf34] sm:$0xf]
        %v1450 = vld [vmem:[%s393 + $0xf38] sm:$0xf]
        %v1451 = vld [vmem:[%s393 + $0xf3c] sm:$0xf]
        %v1452 = vld [vmem:[%s393 + $0xf40] sm:$0xf]
        %v1453 = vld [vmem:[%s393 + $0xf44] sm:$0xf]
        %v1454 = vld [vmem:[%s393 + $0xf48] sm:$0xf]
        %v1455 = vld [vmem:[%s393 + $0xf4c] sm:$0xf]
        %v1456 = vld [vmem:[%s393 + $0xf50] sm:$0xf]
        %v1457 = vld [vmem:[%s393 + $0xf54] sm:$0xf]
        %v1458 = vld [vmem:[%s393 + $0xf58] sm:$0xf]
        %v1459 = vld [vmem:[%s393 + $0xf5c] sm:$0xf]
        %v1460 = vld [vmem:[%s393 + $0xf60] sm:$0xf]
        %v1461 = vld [vmem:[%s393 + $0xf64] sm:$0xf]
        %v1462 = vld [vmem:[%s393 + $0xf68] sm:$0xf]
        %v1463 = vld [vmem:[%s393 + $0xf6c] sm:$0xf]
        %v1464 = vld [vmem:[%s393 + $0xf70] sm:$0xf]
        %v1465 = vld [vmem:[%s393 + $0xf74] sm:$0xf]
        %v1466 = vld [vmem:[%s393 + $0xf78] sm:$0xf]
        %v1467 = vld [vmem:[%s393 + $0xf7c] sm:$0xf]
        %v1468 = vld [vmem:[%s393 + $0xf80] sm:$0xf]
        %v1469 = vld [vmem:[%s393 + $0xf84] sm:$0xf]
        %v1470 = vld [vmem:[%s393 + $0xf88] sm:$0xf]
        %v1471 = vld [vmem:[%s393 + $0xf8c] sm:$0xf]
        %v1472 = vld [vmem:[%s393 + $0xf90] sm:$0xf]
        %v1473 = vld [vmem:[%s393 + $0xf94] sm:$0xf]
        %v1474 = vld [vmem:[%s393 + $0xf98] sm:$0xf]
        %v1475 = vld [vmem:[%s393 + $0xf9c] sm:$0xf]
        %v1476 = vld [vmem:[%s393 + $0xfa0] sm:$0xf]
        %v1477 = vld [vmem:[%s393 + $0xfa4] sm:$0xf]
        %v1478 = vld [vmem:[%s393 + $0xfa8] sm:$0xf]
        %v1479 = vld [vmem:[%s393 + $0xfac] sm:$0xf]
        %v1480 = vld [vmem:[%s393 + $0xfb0] sm:$0xf]
        %v1481 = vld [vmem:[%s393 + $0xfb4] sm:$0xf]
        %v1482 = vld [vmem:[%s393 + $0xfb8] sm:$0xf]
        %v1483 = vld [vmem:[%s393 + $0xfbc] sm:$0xf]
        %v1484 = vld [vmem:[%s393 + $0xfc0] sm:$0xf]
        %v1485 = vld [vmem:[%s393 + $0xfc4] sm:$0xf]
        %v1486 = vld [vmem:[%s393 + $0xfc8] sm:$0xf]
        %v1487 = vld [vmem:[%s393 + $0xfcc] sm:$0xf]
        %v1488 = vld [vmem:[%s393 + $0xfd0] sm:$0xf]
        %v1489 = vld [vmem:[%s393 + $0xfd4] sm:$0xf]
        %v1490 = vld [vmem:[%s393 + $0xfd8] sm:$0xf]
        %v1491 = vld [vmem:[%s393 + $0xfdc] sm:$0xf]
        %v1492 = vld [vmem:[%s393 + $0xfe0] sm:$0xf]
        %v1493 = vld [vmem:[%s393 + $0xfe4] sm:$0xf]
        %v1494 = vld [vmem:[%s393 + $0xfe8] sm:$0xf]
        %v1495 = vld [vmem:[%s393 + $0xfec] sm:$0xf]
        %v1496 = vld [vmem:[%s393 + $0xff0] sm:$0xf]
        %v1497 = vld [vmem:[%s393 + $0xff4] sm:$0xf]
        %v1498 = vld [vmem:[%s393 + $0xff8] sm:$0xf]
        %v1499 = vld [vmem:[%s393 + $0xffc] sm:$0xf]
        %v1500 = vld [vmem:[%s393 + $0x1000] sm:$0xf]
        %v1501 = vld [vmem:[%s393 + $0x1004] sm:$0xf]
        %v1502 = vld [vmem:[%s393 + $0x1008] sm:$0xf]
        %v1503 = vld [vmem:[%s393 + $0x100c] sm:$0xf]
        %v1504 = vld [vmem:[%s393 + $0x1010] sm:$0xf]
        %v1505 = vld [vmem:[%s393 + $0x1014] sm:$0xf]
        %v1506 = vld [vmem:[%s393 + $0x1018] sm:$0xf]
        %v1507 = vld [vmem:[%s393 + $0x101c] sm:$0xf]
        %v1508 = vld [vmem:[%s393 + $0x1020] sm:$0xf]
        %v1509 = vld [vmem:[%s393 + $0x1024] sm:$0xf]
        %v1510 = vld [vmem:[%s393 + $0x1028] sm:$0xf]
        %v1511 = vld [vmem:[%s393 + $0x102c] sm:$0xf]
        %v1512 = vld [vmem:[%s393 + $0x1030] sm:$0xf]
        %v1513 = vld [vmem:[%s393 + $0x1034] sm:$0xf]
        %v1514 = vld [vmem:[%s393 + $0x1038] sm:$0xf]
        %v1515 = vld [vmem:[%s393 + $0x103c] sm:$0xf]
        %v1516 = vld [vmem:[%s393 + $0x1040] sm:$0xf]
        %v1517 = vld [vmem:[%s393 + $0x1044] sm:$0xf]
        %v1518 = vld [vmem:[%s393 + $0x1048] sm:$0xf]
        %v1519 = vld [vmem:[%s393 + $0x104c] sm:$0xf]
        %v1520 = vld [vmem:[%s393 + $0x1050] sm:$0xf]
        %v1521 = vld [vmem:[%s393 + $0x1054] sm:$0xf]
        %v1522 = vld [vmem:[%s393 + $0x1058] sm:$0xf]
        %v1523 = vld [vmem:[%s393 + $0x105c] sm:$0xf]
        %v1524 = vld [vmem:[%s393 + $0x1060] sm:$0xf]
        %v1525 = vld [vmem:[%s393 + $0x1064] sm:$0xf]
        %v1526 = vld [vmem:[%s393 + $0x1068] sm:$0xf]
        %v1527 = vld [vmem:[%s393 + $0x106c] sm:$0xf]
        %v1528 = vld [vmem:[%s393 + $0x1070] sm:$0xf]
        %v1529 = vld [vmem:[%s393 + $0x1074] sm:$0xf]
        %v1530 = vld [vmem:[%s393 + $0x1078] sm:$0xf]
        %v1531 = vld [vmem:[%s393 + $0x107c] sm:$0xf]
        %v1532 = vld [vmem:[%s393 + $0x1080] sm:$0xf]
        %v1533 = vld [vmem:[%s393 + $0x1084] sm:$0xf]
        %v1534 = vld [vmem:[%s393 + $0x1088] sm:$0xf]
        %v1535 = vld [vmem:[%s393 + $0x108c] sm:$0xf]
        %v1536 = vld [vmem:[%s393 + $0x1090] sm:$0xf]
        %v1537 = vld [vmem:[%s393 + $0x1094] sm:$0xf]
        %v1538 = vld [vmem:[%s393 + $0x1098] sm:$0xf]
        %v1539 = vld [vmem:[%s393 + $0x109c] sm:$0xf]
        %v1540 = vld [vmem:[%s393 + $0x10a0] sm:$0xf]
        %v1541 = vld [vmem:[%s393 + $0x10a4] sm:$0xf]
        %v1542 = vld [vmem:[%s393 + $0x10a8] sm:$0xf]
        %v1543 = vld [vmem:[%s393 + $0x10ac] sm:$0xf]
        %v1544 = vld [vmem:[%s393 + $0x10b0] sm:$0xf]
        %v1545 = vld [vmem:[%s393 + $0x10b4] sm:$0xf]
        %v1546 = vld [vmem:[%s393 + $0x10b8] sm:$0xf]
        %v1547 = vld [vmem:[%s393 + $0x10bc] sm:$0xf]
        %v1548 = vld [vmem:[%s393 + $0x10c0] sm:$0xf]
        %v1549 = vld [vmem:[%s393 + $0x10c4] sm:$0xf]
        %v1550 = vld [vmem:[%s393 + $0x10c8] sm:$0xf]
        %v1551 = vld [vmem:[%s393 + $0x10cc] sm:$0xf]
        %v1552 = vld [vmem:[%s393 + $0x10d0] sm:$0xf]
        %v1553 = vld [vmem:[%s393 + $0x10d4] sm:$0xf]
        %v1554 = vld [vmem:[%s393 + $0x10d8] sm:$0xf]
        %v1555 = vld [vmem:[%s393 + $0x10dc] sm:$0xf]
        %v1556 = vld [vmem:[%s393 + $0x10e0] sm:$0xf]
        %v1557 = vld [vmem:[%s393 + $0x10e4] sm:$0xf]
        %v1558 = vld [vmem:[%s393 + $0x10e8] sm:$0xf]
        %v1559 = vld [vmem:[%s393 + $0x10ec] sm:$0xf]
        %v1560 = vld [vmem:[%s393 + $0x10f0] sm:$0xf]
        %v1561 = vld [vmem:[%s393 + $0x10f4] sm:$0xf]
        %v1562 = vld [vmem:[%s393 + $0x10f8] sm:$0xf]
        %v1563 = vld [vmem:[%s393 + $0x10fc] sm:$0xf]
        %v1564 = vld [vmem:[%s393 + $0x1100] sm:$0xf]
        %v1565 = vld [vmem:[%s393 + $0x1104] sm:$0xf]
        %v1566 = vld [vmem:[%s393 + $0x1108] sm:$0xf]
        %v1567 = vld [vmem:[%s393 + $0x110c] sm:$0xf]
        %v1568 = vld [vmem:[%s393 + $0x1110] sm:$0xf]
        %v1569 = vld [vmem:[%s393 + $0x1114] sm:$0xf]
        %v1570 = vld [vmem:[%s393 + $0x1118] sm:$0xf]
        %v1571 = vld [vmem:[%s393 + $0x111c] sm:$0xf]
        %v1572 = vld [vmem:[%s393 + $0x1120] sm:$0xf]
        %v1573 = vld [vmem:[%s393 + $0x1124] sm:$0xf]
        %v1574 = vld [vmem:[%s393 + $0x1128] sm:$0xf]
        %v1575 = vld [vmem:[%s393 + $0x112c] sm:$0xf]
        %v1576 = vld [vmem:[%s393 + $0x1130] sm:$0xf]
        %v1577 = vld [vmem:[%s393 + $0x1134] sm:$0xf]
        %v1578 = vld [vmem:[%s393 + $0x1138] sm:$0xf]
        %v1579 = vld [vmem:[%s393 + $0x113c] sm:$0xf]
        %v1580 = vld [vmem:[%s393 + $0x1140] sm:$0xf]
        %v1581 = vld [vmem:[%s393 + $0x1144] sm:$0xf]
        %v1582 = vld [vmem:[%s393 + $0x1148] sm:$0xf]
        %v1583 = vld [vmem:[%s393 + $0x114c] sm:$0xf]
        %v1584 = vld [vmem:[%s393 + $0x1150] sm:$0xf]
        %v1585 = vld [vmem:[%s393 + $0x1154] sm:$0xf]
        %v1586 = vld [vmem:[%s393 + $0x1158] sm:$0xf]
        %v1587 = vld [vmem:[%s393 + $0x115c] sm:$0xf]
        %v1588 = vld [vmem:[%s393 + $0x1160] sm:$0xf]
        %v1589 = vld [vmem:[%s393 + $0x1164] sm:$0xf]
        %v1590 = vld [vmem:[%s393 + $0x1168] sm:$0xf]
        %v1591 = vld [vmem:[%s393 + $0x116c] sm:$0xf]
        %v1592 = vld [vmem:[%s393 + $0x1170] sm:$0xf]
        %v1593 = vld [vmem:[%s393 + $0x1174] sm:$0xf]
        %v1594 = vld [vmem:[%s393 + $0x1178] sm:$0xf]
        %v1595 = vld [vmem:[%s393 + $0x117c] sm:$0xf]
        %v1596 = vld [vmem:[%s393 + $0x1180] sm:$0xf]
        %v1597 = vld [vmem:[%s393 + $0x1184] sm:$0xf]
        %v1598 = vld [vmem:[%s393 + $0x1188] sm:$0xf]
        %v1599 = vld [vmem:[%s393 + $0x118c] sm:$0xf]
        %v1600 = vld [vmem:[%s393 + $0x1190] sm:$0xf]
        %v1601 = vld [vmem:[%s393 + $0x1194] sm:$0xf]
        %v1602 = vld [vmem:[%s393 + $0x1198] sm:$0xf]
        %v1603 = vld [vmem:[%s393 + $0x119c] sm:$0xf]
        %v1604 = vld [vmem:[%s393 + $0x11a0] sm:$0xf]
        %v1605 = vld [vmem:[%s393 + $0x11a4] sm:$0xf]
        %v1606 = vld [vmem:[%s393 + $0x11a8] sm:$0xf]
        %v1607 = vld [vmem:[%s393 + $0x11ac] sm:$0xf]
        %v1608 = vld [vmem:[%s393 + $0x11b0] sm:$0xf]
        %v1609 = vld [vmem:[%s393 + $0x11b4] sm:$0xf]
        %v1610 = vld [vmem:[%s393 + $0x11b8] sm:$0xf]
        %v1611 = vld [vmem:[%s393 + $0x11bc] sm:$0xf]
        %v1612 = vld [vmem:[%s393 + $0x11c0] sm:$0xf]
        %v1613 = vld [vmem:[%s393 + $0x11c4] sm:$0xf]
        %v1614 = vld [vmem:[%s393 + $0x11c8] sm:$0xf]
        %v1615 = vld [vmem:[%s393 + $0x11cc] sm:$0xf]
        %v1616 = vld [vmem:[%s393 + $0x11d0] sm:$0xf]
        %v1617 = vld [vmem:[%s393 + $0x11d4] sm:$0xf]
        %v1618 = vld [vmem:[%s393 + $0x11d8] sm:$0xf]
        %v1619 = vld [vmem:[%s393 + $0x11dc] sm:$0xf]
        %v1620 = vld [vmem:[%s393 + $0x11e0] sm:$0xf]
        %v1621 = vld [vmem:[%s393 + $0x11e4] sm:$0xf]
        %v1622 = vld [vmem:[%s393 + $0x11e8] sm:$0xf]
        %v1623 = vld [vmem:[%s393 + $0x11ec] sm:$0xf]
        %v1624 = vld [vmem:[%s393 + $0x11f0] sm:$0xf]
        %v1625 = vld [vmem:[%s393 + $0x11f4] sm:$0xf]
        %v1626 = vld [vmem:[%s393 + $0x11f8] sm:$0xf]
        %v1627 = vld [vmem:[%s393 + $0x11fc] sm:$0xf]
        %v1700 = vunpack.c.l.b16 %v404
        %v1701 = vunpack.c.h.b16 %v404
        %v1702 = vunpack.c.l.b16 %v405
        %v1703 = vunpack.c.h.b16 %v405
        %v1704 = vunpack.c.l.b16 %v406
        %v1705 = vunpack.c.h.b16 %v406
        %v1706 = vunpack.c.l.b16 %v407
        %v1707 = vunpack.c.h.b16 %v407
        %v1708 = vunpack.c.l.b16 %v408
        %v1709 = vunpack.c.h.b16 %v408
        %v1710 = vunpack.c.l.b16 %v409
        %v1711 = vunpack.c.h.b16 %v409
        %v1712 = vunpack.c.l.b16 %v410
        %v1713 = vunpack.c.h.b16 %v410
        %v1714 = vunpack.c.l.b16 %v411
        %v1715 = vunpack.c.h.b16 %v411
        %v1716 = vunpack.c.l.b16 %v412
        %v1717 = vunpack.c.h.b16 %v412
        %v1718 = vunpack.c.l.b16 %v413
        %v1719 = vunpack.c.h.b16 %v413
        %v1720 = vunpack.c.l.b16 %v414
        %v1721 = vunpack.c.h.b16 %v414
        %v1722 = vunpack.c.l.b16 %v415
        %v1723 = vunpack.c.h.b16 %v415
        %v1724 = vunpack.c.l.b16 %v416
        %v1725 = vunpack.c.h.b16 %v416
        %v1726 = vunpack.c.l.b16 %v417
        %v1727 = vunpack.c.h.b16 %v417
        %v1728 = vunpack.c.l.b16 %v418
        %v1729 = vunpack.c.h.b16 %v418
        %v1730 = vunpack.c.l.b16 %v419
        %v1731 = vunpack.c.h.b16 %v419
        %v1732 = vunpack.c.l.b16 %v420
        %v1733 = vunpack.c.h.b16 %v420
        %v1734 = vunpack.c.l.b16 %v421
        %v1735 = vunpack.c.h.b16 %v421
        %v1736 = vunpack.c.l.b16 %v422
        %v1737 = vunpack.c.h.b16 %v422
        %v1738 = vunpack.c.l.b16 %v423
        %v1739 = vunpack.c.h.b16 %v423
        %v1740 = vunpack.c.l.b16 %v424
        %v1741 = vunpack.c.h.b16 %v424
        %v1742 = vunpack.c.l.b16 %v425
        %v1743 = vunpack.c.h.b16 %v425
        %v1744 = vunpack.c.l.b16 %v426
        %v1745 = vunpack.c.h.b16 %v426
        %v1746 = vunpack.c.l.b16 %v427
        %v1747 = vunpack.c.h.b16 %v427
        %v1748 = vunpack.c.l.b16 %v428
        %v1749 = vunpack.c.h.b16 %v428
        %v1750 = vunpack.c.l.b16 %v429
        %v1751 = vunpack.c.h.b16 %v429
        %v1752 = vunpack.c.l.b16 %v430
        %v1753 = vunpack.c.h.b16 %v430
        %v1754 = vunpack.c.l.b16 %v431
        %v1755 = vunpack.c.h.b16 %v431
        %v1756 = vunpack.c.l.b16 %v432
        %v1757 = vunpack.c.h.b16 %v432
        %v1758 = vunpack.c.l.b16 %v433
        %v1759 = vunpack.c.h.b16 %v433
        %v1760 = vunpack.c.l.b16 %v434
        %v1761 = vunpack.c.h.b16 %v434
        %v1762 = vunpack.c.l.b16 %v435
        %v1763 = vunpack.c.h.b16 %v435
        %v1764 = vunpack.c.l.b16 %v436
        %v1765 = vunpack.c.h.b16 %v436
        %v1766 = vunpack.c.l.b16 %v437
        %v1767 = vunpack.c.h.b16 %v437
        %v1768 = vunpack.c.l.b16 %v438
        %v1769 = vunpack.c.h.b16 %v438
        %v1770 = vunpack.c.l.b16 %v439
        %v1771 = vunpack.c.h.b16 %v439
        %v1772 = vunpack.c.l.b16 %v440
        %v1773 = vunpack.c.h.b16 %v440
        %v1774 = vunpack.c.l.b16 %v441
        %v1775 = vunpack.c.h.b16 %v441
        %v1776 = vunpack.c.l.b16 %v442
        %v1777 = vunpack.c.h.b16 %v442
        %v1778 = vunpack.c.l.b16 %v443
        %v1779 = vunpack.c.h.b16 %v443
        %v1780 = vunpack.c.l.b16 %v444
        %v1781 = vunpack.c.h.b16 %v444
        %v1782 = vunpack.c.l.b16 %v445
        %v1783 = vunpack.c.h.b16 %v445
        %v1784 = vunpack.c.l.b16 %v446
        %v1785 = vunpack.c.h.b16 %v446
        %v1786 = vunpack.c.l.b16 %v447
        %v1787 = vunpack.c.h.b16 %v447
        %v1788 = vunpack.c.l.b16 %v448
        %v1789 = vunpack.c.h.b16 %v448
        %v1790 = vunpack.c.l.b16 %v449
        %v1791 = vunpack.c.h.b16 %v449
        %v1792 = vunpack.c.l.b16 %v450
        %v1793 = vunpack.c.h.b16 %v450
        %v1794 = vunpack.c.l.b16 %v451
        %v1795 = vunpack.c.h.b16 %v451
        %v1796 = vunpack.c.l.b16 %v452
        %v1797 = vunpack.c.h.b16 %v452
        %v1798 = vunpack.c.l.b16 %v453
        %v1799 = vunpack.c.h.b16 %v453
        %v1800 = vunpack.c.l.b16 %v454
        %v1801 = vunpack.c.h.b16 %v454
        %v1802 = vunpack.c.l.b16 %v455
        %v1803 = vunpack.c.h.b16 %v455
        %v1804 = vunpack.c.l.b16 %v456
        %v1805 = vunpack.c.h.b16 %v456
        %v1806 = vunpack.c.l.b16 %v457
        %v1807 = vunpack.c.h.b16 %v457
        %v1808 = vunpack.c.l.b16 %v458
        %v1809 = vunpack.c.h.b16 %v458
        %v1810 = vunpack.c.l.b16 %v459
        %v1811 = vunpack.c.h.b16 %v459
        %v1812 = vunpack.c.l.b16 %v460
        %v1813 = vunpack.c.h.b16 %v460
        %v1814 = vunpack.c.l.b16 %v461
        %v1815 = vunpack.c.h.b16 %v461
        %v1816 = vunpack.c.l.b16 %v462
        %v1817 = vunpack.c.h.b16 %v462
        %v1818 = vunpack.c.l.b16 %v463
        %v1819 = vunpack.c.h.b16 %v463
        %v1820 = vunpack.c.l.b16 %v464
        %v1821 = vunpack.c.h.b16 %v464
        %v1822 = vunpack.c.l.b16 %v465
        %v1823 = vunpack.c.h.b16 %v465
        %v1824 = vunpack.c.l.b16 %v466
        %v1825 = vunpack.c.h.b16 %v466
        %v1826 = vunpack.c.l.b16 %v467
        %v1827 = vunpack.c.h.b16 %v467
        %v1828 = vunpack.c.l.b16 %v468
        %v1829 = vunpack.c.h.b16 %v468
        %v1830 = vunpack.c.l.b16 %v469
        %v1831 = vunpack.c.h.b16 %v469
        %v1832 = vunpack.c.l.b16 %v470
        %v1833 = vunpack.c.h.b16 %v470
        %v1834 = vunpack.c.l.b16 %v471
        %v1835 = vunpack.c.h.b16 %v471
        %v1836 = vunpack.c.l.b16 %v472
        %v1837 = vunpack.c.h.b16 %v472
        %v1838 = vunpack.c.l.b16 %v473
        %v1839 = vunpack.c.h.b16 %v473
        %v1840 = vunpack.c.l.b16 %v474
        %v1841 = vunpack.c.h.b16 %v474
        %v1842 = vunpack.c.l.b16 %v475
        %v1843 = vunpack.c.h.b16 %v475
        %v1844 = vpack.c.b16 %v1772, %v1700
        %v1845 = vpack.c.b16 %v1773, %v1701
        %v1846 = vpack.c.b16 %v1774, %v1702
        %v1847 = vpack.c.b16 %v1775, %v1703
        %v1848 = vpack.c.b16 %v1776, %v1704
        %v1849 = vpack.c.b16 %v1777, %v1705
        %v1850 = vpack.c.b16 %v1778, %v1706
        %v1851 = vpack.c.b16 %v1779, %v1707
        %v1852 = vpack.c.b16 %v1780, %v1708
        %v1853 = vpack.c.b16 %v1781, %v1709
        %v1854 = vpack.c.b16 %v1782, %v1710
        %v1855 = vpack.c.b16 %v1783, %v1711
        %v1856 = vpack.c.b16 %v1784, %v1712
        %v1857 = vpack.c.b16 %v1785, %v1713
        %v1858 = vpack.c.b16 %v1786, %v1714
        %v1859 = vpack.c.b16 %v1787, %v1715
        %v1860 = vpack.c.b16 %v1788, %v1716
        %v1861 = vpack.c.b16 %v1789, %v1717
        %v1862 = vpack.c.b16 %v1790, %v1718
        %v1863 = vpack.c.b16 %v1791, %v1719
        %v1864 = vpack.c.b16 %v1792, %v1720
        %v1865 = vpack.c.b16 %v1793, %v1721
        %v1866 = vpack.c.b16 %v1794, %v1722
        %v1867 = vpack.c.b16 %v1795, %v1723
        %v1868 = vpack.c.b16 %v1796, %v1724
        %v1869 = vpack.c.b16 %v1797, %v1725
        %v1870 = vpack.c.b16 %v1798, %v1726
        %v1871 = vpack.c.b16 %v1799, %v1727
        %v1872 = vpack.c.b16 %v1800, %v1728
        %v1873 = vpack.c.b16 %v1801, %v1729
        %v1874 = vpack.c.b16 %v1802, %v1730
        %v1875 = vpack.c.b16 %v1803, %v1731
        %v1876 = vpack.c.b16 %v1804, %v1732
        %v1877 = vpack.c.b16 %v1805, %v1733
        %v1878 = vpack.c.b16 %v1806, %v1734
        %v1879 = vpack.c.b16 %v1807, %v1735
        %v1880 = vpack.c.b16 %v1808, %v1736
        %v1881 = vpack.c.b16 %v1809, %v1737
        %v1882 = vpack.c.b16 %v1810, %v1738
        %v1883 = vpack.c.b16 %v1811, %v1739
        %v1884 = vpack.c.b16 %v1812, %v1740
        %v1885 = vpack.c.b16 %v1813, %v1741
        %v1886 = vpack.c.b16 %v1814, %v1742
        %v1887 = vpack.c.b16 %v1815, %v1743
        %v1888 = vpack.c.b16 %v1816, %v1744
        %v1889 = vpack.c.b16 %v1817, %v1745
        %v1890 = vpack.c.b16 %v1818, %v1746
        %v1891 = vpack.c.b16 %v1819, %v1747
        %v1892 = vpack.c.b16 %v1820, %v1748
        %v1893 = vpack.c.b16 %v1821, %v1749
        %v1894 = vpack.c.b16 %v1822, %v1750
        %v1895 = vpack.c.b16 %v1823, %v1751
        %v1896 = vpack.c.b16 %v1824, %v1752
        %v1897 = vpack.c.b16 %v1825, %v1753
        %v1898 = vpack.c.b16 %v1826, %v1754
        %v1899 = vpack.c.b16 %v1827, %v1755
        %v1900 = vpack.c.b16 %v1828, %v1756
        %v1901 = vpack.c.b16 %v1829, %v1757
        %v1902 = vpack.c.b16 %v1830, %v1758
        %v1903 = vpack.c.b16 %v1831, %v1759
        %v1904 = vpack.c.b16 %v1832, %v1760
        %v1905 = vpack.c.b16 %v1833, %v1761
        %v1906 = vpack.c.b16 %v1834, %v1762
        %v1907 = vpack.c.b16 %v1835, %v1763
        %v1908 = vpack.c.b16 %v1836, %v1764
        %v1909 = vpack.c.b16 %v1837, %v1765
        %v1910 = vpack.c.b16 %v1838, %v1766
        %v1911 = vpack.c.b16 %v1839, %v1767
        %v1912 = vpack.c.b16 %v1840, %v1768
        %v1913 = vpack.c.b16 %v1841, %v1769
        %v1914 = vpack.c.b16 %v1842, %v1770
        %v1915 = vpack.c.b16 %v1843, %v1771
        %v3140 = vunpack.c.l.b16 %v476
        %v3141 = vunpack.c.l.b16 %v477
        %v3142 = vunpack.c.l.b16 %v478
        %v3143 = vunpack.c.l.b16 %v479
        %v3144 = vunpack.c.l.b16 %v480
        %v3145 = vunpack.c.l.b16 %v481
        %v3146 = vunpack.c.l.b16 %v482
        %v3147 = vunpack.c.l.b16 %v483
        %v3148 = vunpack.c.l.b16 %v484
        %v3149 = vunpack.c.l.b16 %v485
        %v3150 = vunpack.c.l.b16 %v486
        %v3151 = vunpack.c.l.b16 %v487
        %v3152 = vunpack.c.l.b16 %v488
        %v3153 = vunpack.c.l.b16 %v489
        %v3154 = vunpack.c.l.b16 %v490
        %v3155 = vunpack.c.l.b16 %v491
        %v3156 = vunpack.c.l.b16 %v492
        %v3157 = vunpack.c.l.b16 %v493
        %v3158 = vunpack.c.l.b16 %v494
        %v3159 = vunpack.c.l.b16 %v495
        %v3160 = vunpack.c.l.b16 %v496
        %v3161 = vunpack.c.l.b16 %v497
        %v3162 = vunpack.c.l.b16 %v498
        %v3163 = vunpack.c.l.b16 %v499
        %v3164 = vunpack.c.l.b16 %v500
        %v3165 = vunpack.c.l.b16 %v501
        %v3166 = vunpack.c.l.b16 %v502
        %v3167 = vunpack.c.l.b16 %v503
        %v3168 = vunpack.c.l.b16 %v504
        %v3169 = vunpack.c.l.b16 %v505
        %v3170 = vunpack.c.l.b16 %v506
        %v3171 = vunpack.c.l.b16 %v507
        %v3172 = vunpack.c.l.b16 %v508
        %v3173 = vunpack.c.l.b16 %v509
        %v3174 = vunpack.c.l.b16 %v510
        %v3175 = vunpack.c.l.b16 %v511
        %v3176 = vunpack.c.l.b16 %v512
        %v3177 = vunpack.c.l.b16 %v513
        %v3178 = vunpack.c.l.b16 %v514
        %v3179 = vunpack.c.l.b16 %v515
        %v3180 = vunpack.c.l.b16 %v516
        %v3181 = vunpack.c.l.b16 %v517
        %v3182 = vunpack.c.l.b16 %v518
        %v3183 = vunpack.c.l.b16 %v519
        %v3184 = vunpack.c.l.b16 %v520
        %v3185 = vunpack.c.l.b16 %v521
        %v3186 = vunpack.c.l.b16 %v522
        %v3187 = vunpack.c.l.b16 %v523
        %v3188 = vunpack.c.l.b16 %v524
        %v3189 = vunpack.c.l.b16 %v525
        %v3190 = vunpack.c.l.b16 %v526
        %v3191 = vunpack.c.l.b16 %v527
        %v3192 = vunpack.c.l.b16 %v528
        %v3193 = vunpack.c.l.b16 %v529
        %v3194 = vunpack.c.l.b16 %v530
        %v3195 = vunpack.c.l.b16 %v531
        %v3196 = vunpack.c.l.b16 %v532
        %v3197 = vunpack.c.l.b16 %v533
        %v3198 = vunpack.c.l.b16 %v534
        %v3199 = vunpack.c.l.b16 %v535
        %v3200 = vunpack.c.l.b16 %v536
        %v3201 = vunpack.c.l.b16 %v537
        %v3202 = vunpack.c.l.b16 %v538
        %v3203 = vunpack.c.l.b16 %v539
        %v3204 = vunpack.c.l.b16 %v540
        %v3205 = vunpack.c.l.b16 %v541
        %v3206 = vunpack.c.l.b16 %v542
        %v3207 = vunpack.c.l.b16 %v543
        %v3208 = vunpack.c.l.b16 %v544
        %v3209 = vunpack.c.l.b16 %v545
        %v3210 = vunpack.c.l.b16 %v546
        %v3211 = vunpack.c.l.b16 %v547
        %v3212 = vunpack.c.l.b16 %v548
        %v3213 = vunpack.c.l.b16 %v549
        %v3214 = vunpack.c.l.b16 %v550
        %v3215 = vunpack.c.l.b16 %v551
        %v3216 = vunpack.c.l.b16 %v552
        %v3217 = vunpack.c.l.b16 %v553
        %v3218 = vunpack.c.l.b16 %v554
        %v3219 = vunpack.c.l.b16 %v555
        %v3220 = vunpack.c.l.b16 %v556
        %v3221 = vunpack.c.l.b16 %v557
        %v3222 = vunpack.c.l.b16 %v558
        %v3223 = vunpack.c.l.b16 %v559
        %v3224 = vunpack.c.l.b16 %v560
        %v3225 = vunpack.c.l.b16 %v561
        %v3226 = vunpack.c.l.b16 %v562
        %v3227 = vunpack.c.l.b16 %v563
        %v3228 = vunpack.c.l.b16 %v564
        %v3229 = vunpack.c.l.b16 %v565
        %v3230 = vunpack.c.l.b16 %v566
        %v3231 = vunpack.c.l.b16 %v567
        %v3232 = vunpack.c.l.b16 %v568
        %v3233 = vunpack.c.l.b16 %v569
        %v3234 = vunpack.c.l.b16 %v570
        %v3235 = vunpack.c.l.b16 %v571
        %v3236 = vunpack.c.l.b16 %v572
        %v3237 = vunpack.c.l.b16 %v573
        %v3238 = vunpack.c.l.b16 %v574
        %v3239 = vunpack.c.l.b16 %v575
        %v3240 = vunpack.c.l.b16 %v576
        %v3241 = vunpack.c.l.b16 %v577
        %v3242 = vunpack.c.l.b16 %v578
        %v3243 = vunpack.c.l.b16 %v579
        %v3244 = vunpack.c.l.b16 %v580
        %v3245 = vunpack.c.l.b16 %v581
        %v3246 = vunpack.c.l.b16 %v582
        %v3247 = vunpack.c.l.b16 %v583
        %v3248 = vunpack.c.l.b16 %v584
        %v3249 = vunpack.c.l.b16 %v585
        %v3250 = vunpack.c.l.b16 %v586
        %v3251 = vunpack.c.l.b16 %v587
        %v3252 = vunpack.c.l.b16 %v588
        %v3253 = vunpack.c.l.b16 %v589
        %v3254 = vunpack.c.l.b16 %v590
        %v3255 = vunpack.c.l.b16 %v591
        %v3256 = vunpack.c.l.b16 %v592
        %v3257 = vunpack.c.l.b16 %v593
        %v3258 = vunpack.c.l.b16 %v594
        %v3259 = vunpack.c.l.b16 %v595
        %v3260 = vunpack.c.l.b16 %v596
        %v3261 = vunpack.c.l.b16 %v597
        %v3262 = vunpack.c.l.b16 %v598
        %v3263 = vunpack.c.l.b16 %v599
        %v3264 = vunpack.c.l.b16 %v600
        %v3265 = vunpack.c.l.b16 %v601
        %v3266 = vunpack.c.l.b16 %v602
        %v3267 = vunpack.c.l.b16 %v603
        %v3268 = vunpack.c.l.b16 %v604
        %v3269 = vunpack.c.l.b16 %v605
        %v3270 = vunpack.c.l.b16 %v606
        %v3271 = vunpack.c.l.b16 %v607
        %v3272 = vunpack.c.l.b16 %v608
        %v3273 = vunpack.c.l.b16 %v609
        %v3274 = vunpack.c.l.b16 %v610
        %v3275 = vunpack.c.l.b16 %v611
        %v3276 = vunpack.c.l.b16 %v612
        %v3277 = vunpack.c.l.b16 %v613
        %v3278 = vunpack.c.l.b16 %v614
        %v3279 = vunpack.c.l.b16 %v615
        %v3280 = vunpack.c.l.b16 %v616
        %v3281 = vunpack.c.l.b16 %v617
        %v3282 = vunpack.c.l.b16 %v618
        %v3283 = vunpack.c.l.b16 %v619
        %v3284 = vunpack.c.l.b16 %v620
        %v3285 = vunpack.c.l.b16 %v621
        %v3286 = vunpack.c.l.b16 %v622
        %v3287 = vunpack.c.l.b16 %v623
        %v3288 = vunpack.c.l.b16 %v624
        %v3289 = vunpack.c.l.b16 %v625
        %v3290 = vunpack.c.l.b16 %v626
        %v3291 = vunpack.c.l.b16 %v627
        %v3292 = vunpack.c.l.b16 %v628
        %v3293 = vunpack.c.l.b16 %v629
        %v3294 = vunpack.c.l.b16 %v630
        %v3295 = vunpack.c.l.b16 %v631
        %v3296 = vunpack.c.l.b16 %v632
        %v3297 = vunpack.c.l.b16 %v633
        %v3298 = vunpack.c.l.b16 %v634
        %v3299 = vunpack.c.l.b16 %v635
        %v3300 = vunpack.c.l.b16 %v636
        %v3301 = vunpack.c.l.b16 %v637
        %v3302 = vunpack.c.l.b16 %v638
        %v3303 = vunpack.c.l.b16 %v639
        %v3304 = vunpack.c.l.b16 %v640
        %v3305 = vunpack.c.l.b16 %v641
        %v3306 = vunpack.c.l.b16 %v642
        %v3307 = vunpack.c.l.b16 %v643
        %v3308 = vunpack.c.l.b16 %v644
        %v3309 = vunpack.c.l.b16 %v645
        %v3310 = vunpack.c.l.b16 %v646
        %v3311 = vunpack.c.l.b16 %v647
        %v3312 = vunpack.c.l.b16 %v648
        %v3313 = vunpack.c.l.b16 %v649
        %v3314 = vunpack.c.l.b16 %v650
        %v3315 = vunpack.c.l.b16 %v651
        %v3316 = vunpack.c.l.b16 %v652
        %v3317 = vunpack.c.l.b16 %v653
        %v3318 = vunpack.c.l.b16 %v654
        %v3319 = vunpack.c.l.b16 %v655
        %v3320 = vunpack.c.l.b16 %v656
        %v3321 = vunpack.c.l.b16 %v657
        %v3322 = vunpack.c.l.b16 %v658
        %v3323 = vunpack.c.l.b16 %v659
        %v3324 = vunpack.c.l.b16 %v660
        %v3325 = vunpack.c.l.b16 %v661
        %v3326 = vunpack.c.l.b16 %v662
        %v3327 = vunpack.c.l.b16 %v663
        %v3328 = vunpack.c.l.b16 %v664
        %v3329 = vunpack.c.l.b16 %v665
        %v3330 = vunpack.c.l.b16 %v666
        %v3331 = vunpack.c.l.b16 %v667
        %v3332 = vunpack.c.l.b16 %v668
        %v3333 = vunpack.c.l.b16 %v669
        %v3334 = vunpack.c.l.b16 %v670
        %v3335 = vunpack.c.l.b16 %v671
        %v3336 = vunpack.c.l.b16 %v672
        %v3337 = vunpack.c.l.b16 %v673
        %v3338 = vunpack.c.l.b16 %v674
        %v3339 = vunpack.c.l.b16 %v675
        %v3340 = vunpack.c.l.b16 %v676
        %v3341 = vunpack.c.l.b16 %v677
        %v3342 = vunpack.c.l.b16 %v678
        %v3343 = vunpack.c.l.b16 %v679
        %v3344 = vunpack.c.l.b16 %v680
        %v3345 = vunpack.c.l.b16 %v681
        %v3346 = vunpack.c.l.b16 %v682
        %v3347 = vunpack.c.l.b16 %v683
        %v3348 = vunpack.c.l.b16 %v684
        %v3349 = vunpack.c.l.b16 %v685
        %v3350 = vunpack.c.l.b16 %v686
        %v3351 = vunpack.c.l.b16 %v687
        %v3352 = vunpack.c.l.b16 %v688
        %v3353 = vunpack.c.l.b16 %v689
        %v3354 = vunpack.c.l.b16 %v690
        %v3355 = vunpack.c.l.b16 %v691
        %v3356 = vunpack.c.l.b16 %v692
        %v3357 = vunpack.c.l.b16 %v693
        %v3358 = vunpack.c.l.b16 %v694
        %v3359 = vunpack.c.l.b16 %v695
        %v3360 = vunpack.c.l.b16 %v696
        %v3361 = vunpack.c.l.b16 %v697
        %v3362 = vunpack.c.l.b16 %v698
        %v3363 = vunpack.c.l.b16 %v699
        %v3364 = vunpack.c.l.b16 %v700
        %v3365 = vunpack.c.l.b16 %v701
        %v3366 = vunpack.c.l.b16 %v702
        %v3367 = vunpack.c.l.b16 %v703
        %v3368 = vunpack.c.l.b16 %v704
        %v3369 = vunpack.c.l.b16 %v705
        %v3370 = vunpack.c.l.b16 %v706
        %v3371 = vunpack.c.l.b16 %v707
        %v3372 = vunpack.c.l.b16 %v708
        %v3373 = vunpack.c.l.b16 %v709
        %v3374 = vunpack.c.l.b16 %v710
        %v3375 = vunpack.c.l.b16 %v711
        %v3376 = vunpack.c.l.b16 %v712
        %v3377 = vunpack.c.l.b16 %v713
        %v3378 = vunpack.c.l.b16 %v714
        %v3379 = vunpack.c.l.b16 %v715
        %v3380 = vunpack.c.l.b16 %v716
        %v3381 = vunpack.c.l.b16 %v717
        %v3382 = vunpack.c.l.b16 %v718
        %v3383 = vunpack.c.l.b16 %v719
        %v3384 = vunpack.c.l.b16 %v720
        %v3385 = vunpack.c.l.b16 %v721
        %v3386 = vunpack.c.l.b16 %v722
        %v3387 = vunpack.c.l.b16 %v723
        %v3388 = vunpack.c.l.b16 %v724
        %v3389 = vunpack.c.l.b16 %v725
        %v3390 = vunpack.c.l.b16 %v726
        %v3391 = vunpack.c.l.b16 %v727
        %v3392 = vunpack.c.l.b16 %v728
        %v3393 = vunpack.c.l.b16 %v729
        %v3394 = vunpack.c.l.b16 %v730
        %v3395 = vunpack.c.l.b16 %v731
        %v3396 = vunpack.c.l.b16 %v732
        %v3397 = vunpack.c.l.b16 %v733
        %v3398 = vunpack.c.l.b16 %v734
        %v3399 = vunpack.c.l.b16 %v735
        %v3400 = vunpack.c.l.b16 %v736
        %v3401 = vunpack.c.l.b16 %v737
        %v3402 = vunpack.c.l.b16 %v738
        %v3403 = vunpack.c.l.b16 %v739
        %v3404 = vunpack.c.l.b16 %v740
        %v3405 = vunpack.c.l.b16 %v741
        %v3406 = vunpack.c.l.b16 %v742
        %v3407 = vunpack.c.l.b16 %v743
        %v3408 = vunpack.c.l.b16 %v744
        %v3409 = vunpack.c.l.b16 %v745
        %v3410 = vunpack.c.l.b16 %v746
        %v3411 = vunpack.c.l.b16 %v747
        %v3412 = vunpack.c.l.b16 %v748
        %v3413 = vunpack.c.l.b16 %v749
        %v3414 = vunpack.c.l.b16 %v750
        %v3415 = vunpack.c.l.b16 %v751
        %v3416 = vunpack.c.l.b16 %v752
        %v3417 = vunpack.c.l.b16 %v753
        %v3418 = vunpack.c.l.b16 %v754
        %v3419 = vunpack.c.l.b16 %v755
        %v3420 = vunpack.c.l.b16 %v756
        %v3421 = vunpack.c.l.b16 %v757
        %v3422 = vunpack.c.l.b16 %v758
        %v3423 = vunpack.c.l.b16 %v759
        %v3424 = vunpack.c.l.b16 %v760
        %v3425 = vunpack.c.l.b16 %v761
        %v3426 = vunpack.c.l.b16 %v762
        %v3427 = vunpack.c.l.b16 %v763
        %v3428 = vunpack.c.l.b16 %v764
        %v3429 = vunpack.c.l.b16 %v765
        %v3430 = vunpack.c.l.b16 %v766
        %v3431 = vunpack.c.l.b16 %v767
        %v3432 = vunpack.c.l.b16 %v768
        %v3433 = vunpack.c.l.b16 %v769
        %v3434 = vunpack.c.l.b16 %v770
        %v3435 = vunpack.c.l.b16 %v771
        %v3436 = vunpack.c.l.b16 %v772
        %v3437 = vunpack.c.l.b16 %v773
        %v3438 = vunpack.c.l.b16 %v774
        %v3439 = vunpack.c.l.b16 %v775
        %v3440 = vunpack.c.l.b16 %v776
        %v3441 = vunpack.c.l.b16 %v777
        %v3442 = vunpack.c.l.b16 %v778
        %v3443 = vunpack.c.l.b16 %v779
        %v3444 = vunpack.c.l.b16 %v780
        %v3445 = vunpack.c.l.b16 %v781
        %v3446 = vunpack.c.l.b16 %v782
        %v3447 = vunpack.c.l.b16 %v783
        %v3448 = vunpack.c.l.b16 %v784
        %v3449 = vunpack.c.l.b16 %v785
        %v3450 = vunpack.c.l.b16 %v786
        %v3451 = vunpack.c.l.b16 %v787
        %v3452 = vunpack.c.l.b16 %v788
        %v3453 = vunpack.c.l.b16 %v789
        %v3454 = vunpack.c.l.b16 %v790
        %v3455 = vunpack.c.l.b16 %v791
        %v3456 = vunpack.c.l.b16 %v792
        %v3457 = vunpack.c.l.b16 %v793
        %v3458 = vunpack.c.l.b16 %v794
        %v3459 = vunpack.c.l.b16 %v795
        %v3460 = vunpack.c.l.b16 %v796
        %v3461 = vunpack.c.l.b16 %v797
        %v3462 = vunpack.c.l.b16 %v798
        %v3463 = vunpack.c.l.b16 %v799
        %v3464 = vunpack.c.l.b16 %v800
        %v3465 = vunpack.c.l.b16 %v801
        %v3466 = vunpack.c.l.b16 %v802
        %v3467 = vunpack.c.l.b16 %v803
        %v3468 = vunpack.c.l.b16 %v804
        %v3469 = vunpack.c.l.b16 %v805
        %v3470 = vunpack.c.l.b16 %v806
        %v3471 = vunpack.c.l.b16 %v807
        %v3472 = vunpack.c.l.b16 %v808
        %v3473 = vunpack.c.l.b16 %v809
        %v3474 = vunpack.c.l.b16 %v810
        %v3475 = vunpack.c.l.b16 %v811
        %v3476 = vunpack.c.l.b16 %v812
        %v3477 = vunpack.c.l.b16 %v813
        %v3478 = vunpack.c.l.b16 %v814
        %v3479 = vunpack.c.l.b16 %v815
        %v3480 = vunpack.c.l.b16 %v816
        %v3481 = vunpack.c.l.b16 %v817
        %v3482 = vunpack.c.l.b16 %v818
        %v3483 = vunpack.c.l.b16 %v819
        %v3484 = vunpack.c.l.b16 %v820
        %v3485 = vunpack.c.l.b16 %v821
        %v3486 = vunpack.c.l.b16 %v822
        %v3487 = vunpack.c.l.b16 %v823
        %v3488 = vunpack.c.l.b16 %v824
        %v3489 = vunpack.c.l.b16 %v825
        %v3490 = vunpack.c.l.b16 %v826
        %v3491 = vunpack.c.l.b16 %v827
        %v3492 = vunpack.c.l.b16 %v828
        %v3493 = vunpack.c.l.b16 %v829
        %v3494 = vunpack.c.l.b16 %v830
        %v3495 = vunpack.c.l.b16 %v831
        %v3496 = vunpack.c.l.b16 %v832
        %v3497 = vunpack.c.l.b16 %v833
        %v3498 = vunpack.c.l.b16 %v834
        %v3499 = vunpack.c.l.b16 %v835
        %v3500 = vunpack.c.l.b16 %v836
        %v3501 = vunpack.c.l.b16 %v837
        %v3502 = vunpack.c.l.b16 %v838
        %v3503 = vunpack.c.l.b16 %v839
        %v3504 = vunpack.c.l.b16 %v840
        %v3505 = vunpack.c.l.b16 %v841
        %v3506 = vunpack.c.l.b16 %v842
        %v3507 = vunpack.c.l.b16 %v843
        %v3508 = vunpack.c.l.b16 %v844
        %v3509 = vunpack.c.l.b16 %v845
        %v3510 = vunpack.c.l.b16 %v846
        %v3511 = vunpack.c.l.b16 %v847
        %v3512 = vunpack.c.l.b16 %v848
        %v3513 = vunpack.c.l.b16 %v849
        %v3514 = vunpack.c.l.b16 %v850
        %v3515 = vunpack.c.l.b16 %v851
        %v3516 = vunpack.c.l.b16 %v852
        %v3517 = vunpack.c.l.b16 %v853
        %v3518 = vunpack.c.l.b16 %v854
        %v3519 = vunpack.c.l.b16 %v855
        %v3520 = vunpack.c.l.b16 %v856
        %v3521 = vunpack.c.l.b16 %v857
        %v3522 = vunpack.c.l.b16 %v858
        %v3523 = vunpack.c.l.b16 %v859
        %v3524 = vunpack.c.l.b16 %v860
        %v3525 = vunpack.c.l.b16 %v861
        %v3526 = vunpack.c.l.b16 %v862
        %v3527 = vunpack.c.l.b16 %v863
        %v3528 = vunpack.c.l.b16 %v864
        %v3529 = vunpack.c.l.b16 %v865
        %v3530 = vunpack.c.l.b16 %v866
        %v3531 = vunpack.c.l.b16 %v867
        %v3532 = vunpack.c.l.b16 %v868
        %v3533 = vunpack.c.l.b16 %v869
        %v3534 = vunpack.c.l.b16 %v870
        %v3535 = vunpack.c.l.b16 %v871
        %v3536 = vunpack.c.l.b16 %v872
        %v3537 = vunpack.c.l.b16 %v873
        %v3538 = vunpack.c.l.b16 %v874
        %v3539 = vunpack.c.l.b16 %v875
        %v3540 = vunpack.c.l.b16 %v876
        %v3541 = vunpack.c.l.b16 %v877
        %v3542 = vunpack.c.l.b16 %v878
        %v3543 = vunpack.c.l.b16 %v879
        %v3544 = vunpack.c.l.b16 %v880
        %v3545 = vunpack.c.l.b16 %v881
        %v3546 = vunpack.c.l.b16 %v882
        %v3547 = vunpack.c.l.b16 %v883
        %v3548 = vunpack.c.l.b16 %v884
        %v3549 = vunpack.c.l.b16 %v885
        %v3550 = vunpack.c.l.b16 %v886
        %v3551 = vunpack.c.l.b16 %v887
        %v3552 = vunpack.c.l.b16 %v888
        %v3553 = vunpack.c.l.b16 %v889
        %v3554 = vunpack.c.l.b16 %v890
        %v3555 = vunpack.c.l.b16 %v891
        %v3556 = vunpack.c.l.b16 %v892
        %v3557 = vunpack.c.l.b16 %v893
        %v3558 = vunpack.c.l.b16 %v894
        %v3559 = vunpack.c.l.b16 %v895
        %v3560 = vunpack.c.l.b16 %v896
        %v3561 = vunpack.c.l.b16 %v897
        %v3562 = vunpack.c.l.b16 %v898
        %v3563 = vunpack.c.l.b16 %v899
        %v3564 = vunpack.c.l.b16 %v900
        %v3565 = vunpack.c.l.b16 %v901
        %v3566 = vunpack.c.l.b16 %v902
        %v3567 = vunpack.c.l.b16 %v903
        %v3568 = vunpack.c.l.b16 %v904
        %v3569 = vunpack.c.l.b16 %v905
        %v3570 = vunpack.c.l.b16 %v906
        %v3571 = vunpack.c.l.b16 %v907
        %v3572 = vunpack.c.l.b16 %v908
        %v3573 = vunpack.c.l.b16 %v909
        %v3574 = vunpack.c.l.b16 %v910
        %v3575 = vunpack.c.l.b16 %v911
        %v3576 = vunpack.c.l.b16 %v912
        %v3577 = vunpack.c.l.b16 %v913
        %v3578 = vunpack.c.l.b16 %v914
        %v3579 = vunpack.c.l.b16 %v915
        %v3580 = vunpack.c.l.b16 %v916
        %v3581 = vunpack.c.l.b16 %v917
        %v3582 = vunpack.c.l.b16 %v918
        %v3583 = vunpack.c.l.b16 %v919
        %v3584 = vunpack.c.l.b16 %v920
        %v3585 = vunpack.c.l.b16 %v921
        %v3586 = vunpack.c.l.b16 %v922
        %v3587 = vunpack.c.l.b16 %v923
        %v3588 = vunpack.c.l.b16 %v924
        %v3589 = vunpack.c.l.b16 %v925
        %v3590 = vunpack.c.l.b16 %v926
        %v3591 = vunpack.c.l.b16 %v927
        %v3592 = vunpack.c.l.b16 %v928
        %v3593 = vunpack.c.l.b16 %v929
        %v3594 = vunpack.c.l.b16 %v930
        %v3595 = vunpack.c.l.b16 %v931
        %v3596 = vunpack.c.l.b16 %v932
        %v3597 = vunpack.c.l.b16 %v933
        %v3598 = vunpack.c.l.b16 %v934
        %v3599 = vunpack.c.l.b16 %v935
        %v3600 = vunpack.c.l.b16 %v936
        %v3601 = vunpack.c.l.b16 %v937
        %v3602 = vunpack.c.l.b16 %v938
        %v3603 = vunpack.c.l.b16 %v939
        %v3604 = vunpack.c.l.b16 %v940
        %v3605 = vunpack.c.l.b16 %v941
        %v3606 = vunpack.c.l.b16 %v942
        %v3607 = vunpack.c.l.b16 %v943
        %v3608 = vunpack.c.l.b16 %v944
        %v3609 = vunpack.c.l.b16 %v945
        %v3610 = vunpack.c.l.b16 %v946
        %v3611 = vunpack.c.l.b16 %v947
        %v3612 = vunpack.c.l.b16 %v948
        %v3613 = vunpack.c.l.b16 %v949
        %v3614 = vunpack.c.l.b16 %v950
        %v3615 = vunpack.c.l.b16 %v951
        %v3616 = vunpack.c.l.b16 %v952
        %v3617 = vunpack.c.l.b16 %v953
        %v3618 = vunpack.c.l.b16 %v954
        %v3619 = vunpack.c.l.b16 %v955
        %v3620 = vunpack.c.l.b16 %v956
        %v3621 = vunpack.c.l.b16 %v957
        %v3622 = vunpack.c.l.b16 %v958
        %v3623 = vunpack.c.l.b16 %v959
        %v3624 = vunpack.c.l.b16 %v960
        %v3625 = vunpack.c.l.b16 %v961
        %v3626 = vunpack.c.l.b16 %v962
        %v3627 = vunpack.c.l.b16 %v963
        %v3628 = vunpack.c.l.b16 %v964
        %v3629 = vunpack.c.l.b16 %v965
        %v3630 = vunpack.c.l.b16 %v966
        %v3631 = vunpack.c.l.b16 %v967
        %v3632 = vunpack.c.l.b16 %v968
        %v3633 = vunpack.c.l.b16 %v969
        %v3634 = vunpack.c.l.b16 %v970
        %v3635 = vunpack.c.l.b16 %v971
        %v3636 = vunpack.c.l.b16 %v972
        %v3637 = vunpack.c.l.b16 %v973
        %v3638 = vunpack.c.l.b16 %v974
        %v3639 = vunpack.c.l.b16 %v975
        %v3640 = vunpack.c.l.b16 %v976
        %v3641 = vunpack.c.l.b16 %v977
        %v3642 = vunpack.c.l.b16 %v978
        %v3643 = vunpack.c.l.b16 %v979
        %v3644 = vunpack.c.l.b16 %v980
        %v3645 = vunpack.c.l.b16 %v981
        %v3646 = vunpack.c.l.b16 %v982
        %v3647 = vunpack.c.l.b16 %v983
        %v3648 = vunpack.c.l.b16 %v984
        %v3649 = vunpack.c.l.b16 %v985
        %v3650 = vunpack.c.l.b16 %v986
        %v3651 = vunpack.c.l.b16 %v987
        %v3652 = vunpack.c.l.b16 %v988
        %v3653 = vunpack.c.l.b16 %v989
        %v3654 = vunpack.c.l.b16 %v990
        %v3655 = vunpack.c.l.b16 %v991
        %v3656 = vunpack.c.l.b16 %v992
        %v3657 = vunpack.c.l.b16 %v993
        %v3658 = vunpack.c.l.b16 %v994
        %v3659 = vunpack.c.l.b16 %v995
        %v3660 = vunpack.c.l.b16 %v996
        %v3661 = vunpack.c.l.b16 %v997
        %v3662 = vunpack.c.l.b16 %v998
        %v3663 = vunpack.c.l.b16 %v999
        %v3664 = vunpack.c.l.b16 %v1000
        %v3665 = vunpack.c.l.b16 %v1001
        %v3666 = vunpack.c.l.b16 %v1002
        %v3667 = vunpack.c.l.b16 %v1003
        %v3668 = vunpack.c.l.b16 %v1004
        %v3669 = vunpack.c.l.b16 %v1005
        %v3670 = vunpack.c.l.b16 %v1006
        %v3671 = vunpack.c.l.b16 %v1007
        %v3672 = vunpack.c.l.b16 %v1008
        %v3673 = vunpack.c.l.b16 %v1009
        %v3674 = vunpack.c.l.b16 %v1010
        %v3675 = vunpack.c.l.b16 %v1011
        %v3676 = vunpack.c.l.b16 %v1012
        %v3677 = vunpack.c.l.b16 %v1013
        %v3678 = vunpack.c.l.b16 %v1014
        %v3679 = vunpack.c.l.b16 %v1015
        %v3680 = vunpack.c.l.b16 %v1016
        %v3681 = vunpack.c.l.b16 %v1017
        %v3682 = vunpack.c.l.b16 %v1018
        %v3683 = vunpack.c.l.b16 %v1019
        %v3684 = vunpack.c.l.b16 %v1020
        %v3685 = vunpack.c.l.b16 %v1021
        %v3686 = vunpack.c.l.b16 %v1022
        %v3687 = vunpack.c.l.b16 %v1023
        %v3688 = vunpack.c.l.b16 %v1024
        %v3689 = vunpack.c.l.b16 %v1025
        %v3690 = vunpack.c.l.b16 %v1026
        %v3691 = vunpack.c.l.b16 %v1027
        %v3692 = vunpack.c.l.b16 %v1028
        %v3693 = vunpack.c.l.b16 %v1029
        %v3694 = vunpack.c.l.b16 %v1030
        %v3695 = vunpack.c.l.b16 %v1031
        %v3696 = vunpack.c.l.b16 %v1032
        %v3697 = vunpack.c.l.b16 %v1033
        %v3698 = vunpack.c.l.b16 %v1034
        %v3699 = vunpack.c.l.b16 %v1035
        %v3700 = vunpack.c.l.b16 %v1036
        %v3701 = vunpack.c.l.b16 %v1037
        %v3702 = vunpack.c.l.b16 %v1038
        %v3703 = vunpack.c.l.b16 %v1039
        %v3704 = vunpack.c.l.b16 %v1040
        %v3705 = vunpack.c.l.b16 %v1041
        %v3706 = vunpack.c.l.b16 %v1042
        %v3707 = vunpack.c.l.b16 %v1043
        %v3708 = vunpack.c.l.b16 %v1044
        %v3709 = vunpack.c.l.b16 %v1045
        %v3710 = vunpack.c.l.b16 %v1046
        %v3711 = vunpack.c.l.b16 %v1047
        %v3712 = vunpack.c.l.b16 %v1048
        %v3713 = vunpack.c.l.b16 %v1049
        %v3714 = vunpack.c.l.b16 %v1050
        %v3715 = vunpack.c.l.b16 %v1051
        %v3716 = vunpack.c.l.b16 %v1052
        %v3717 = vunpack.c.l.b16 %v1053
        %v3718 = vunpack.c.l.b16 %v1054
        %v3719 = vunpack.c.l.b16 %v1055
        %v3720 = vunpack.c.l.b16 %v1056
        %v3721 = vunpack.c.l.b16 %v1057
        %v3722 = vunpack.c.l.b16 %v1058
        %v3723 = vunpack.c.l.b16 %v1059
        %v3724 = vunpack.c.l.b16 %v1060
        %v3725 = vunpack.c.l.b16 %v1061
        %v3726 = vunpack.c.l.b16 %v1062
        %v3727 = vunpack.c.l.b16 %v1063
        %v3728 = vunpack.c.l.b16 %v1064
        %v3729 = vunpack.c.l.b16 %v1065
        %v3730 = vunpack.c.l.b16 %v1066
        %v3731 = vunpack.c.l.b16 %v1067
        %v3732 = vunpack.c.l.b16 %v1068
        %v3733 = vunpack.c.l.b16 %v1069
        %v3734 = vunpack.c.l.b16 %v1070
        %v3735 = vunpack.c.l.b16 %v1071
        %v3736 = vunpack.c.l.b16 %v1072
        %v3737 = vunpack.c.l.b16 %v1073
        %v3738 = vunpack.c.l.b16 %v1074
        %v3739 = vunpack.c.l.b16 %v1075
        %v3740 = vunpack.c.l.b16 %v1076
        %v3741 = vunpack.c.l.b16 %v1077
        %v3742 = vunpack.c.l.b16 %v1078
        %v3743 = vunpack.c.l.b16 %v1079
        %v3744 = vunpack.c.l.b16 %v1080
        %v3745 = vunpack.c.l.b16 %v1081
        %v3746 = vunpack.c.l.b16 %v1082
        %v3747 = vunpack.c.l.b16 %v1083
        %v3748 = vunpack.c.l.b16 %v1084
        %v3749 = vunpack.c.l.b16 %v1085
        %v3750 = vunpack.c.l.b16 %v1086
        %v3751 = vunpack.c.l.b16 %v1087
        %v3752 = vunpack.c.l.b16 %v1088
        %v3753 = vunpack.c.l.b16 %v1089
        %v3754 = vunpack.c.l.b16 %v1090
        %v3755 = vunpack.c.l.b16 %v1091
        %v3756 = vunpack.c.l.b16 %v1092
        %v3757 = vunpack.c.l.b16 %v1093
        %v3758 = vunpack.c.l.b16 %v1094
        %v3759 = vunpack.c.l.b16 %v1095
        %v3760 = vunpack.c.l.b16 %v1096
        %v3761 = vunpack.c.l.b16 %v1097
        %v3762 = vunpack.c.l.b16 %v1098
        %v3763 = vunpack.c.l.b16 %v1099
        %v3764 = vunpack.c.l.b16 %v1100
        %v3765 = vunpack.c.l.b16 %v1101
        %v3766 = vunpack.c.l.b16 %v1102
        %v3767 = vunpack.c.l.b16 %v1103
        %v3768 = vunpack.c.l.b16 %v1104
        %v3769 = vunpack.c.l.b16 %v1105
        %v3770 = vunpack.c.l.b16 %v1106
        %v3771 = vunpack.c.l.b16 %v1107
        %v3772 = vunpack.c.l.b16 %v1108
        %v3773 = vunpack.c.l.b16 %v1109
        %v3774 = vunpack.c.l.b16 %v1110
        %v3775 = vunpack.c.l.b16 %v1111
        %v3776 = vunpack.c.l.b16 %v1112
        %v3777 = vunpack.c.l.b16 %v1113
        %v3778 = vunpack.c.l.b16 %v1114
        %v3779 = vunpack.c.l.b16 %v1115
        %v3780 = vunpack.c.l.b16 %v1116
        %v3781 = vunpack.c.l.b16 %v1117
        %v3782 = vunpack.c.l.b16 %v1118
        %v3783 = vunpack.c.l.b16 %v1119
        %v3784 = vunpack.c.l.b16 %v1120
        %v3785 = vunpack.c.l.b16 %v1121
        %v3786 = vunpack.c.l.b16 %v1122
        %v3787 = vunpack.c.l.b16 %v1123
        %v3788 = vunpack.c.l.b16 %v1124
        %v3789 = vunpack.c.l.b16 %v1125
        %v3790 = vunpack.c.l.b16 %v1126
        %v3791 = vunpack.c.l.b16 %v1127
        %v3792 = vunpack.c.l.b16 %v1128
        %v3793 = vunpack.c.l.b16 %v1129
        %v3794 = vunpack.c.l.b16 %v1130
        %v3795 = vunpack.c.l.b16 %v1131
        %v3796 = vunpack.c.l.b16 %v1132
        %v3797 = vunpack.c.l.b16 %v1133
        %v3798 = vunpack.c.l.b16 %v1134
        %v3799 = vunpack.c.l.b16 %v1135
        %v3800 = vunpack.c.l.b16 %v1136
        %v3801 = vunpack.c.l.b16 %v1137
        %v3802 = vunpack.c.l.b16 %v1138
        %v3803 = vunpack.c.l.b16 %v1139
        %v3804 = vunpack.c.l.b16 %v1140
        %v3805 = vunpack.c.l.b16 %v1141
        %v3806 = vunpack.c.l.b16 %v1142
        %v3807 = vunpack.c.l.b16 %v1143
        %v3808 = vunpack.c.l.b16 %v1144
        %v3809 = vunpack.c.l.b16 %v1145
        %v3810 = vunpack.c.l.b16 %v1146
        %v3811 = vunpack.c.l.b16 %v1147
        %v3812 = vunpack.c.l.b16 %v1148
        %v3813 = vunpack.c.l.b16 %v1149
        %v3814 = vunpack.c.l.b16 %v1150
        %v3815 = vunpack.c.l.b16 %v1151
        %v3816 = vunpack.c.l.b16 %v1152
        %v3817 = vunpack.c.l.b16 %v1153
        %v3818 = vunpack.c.l.b16 %v1154
        %v3819 = vunpack.c.l.b16 %v1155
        %v3820 = vunpack.c.l.b16 %v1156
        %v3821 = vunpack.c.l.b16 %v1157
        %v3822 = vunpack.c.l.b16 %v1158
        %v3823 = vunpack.c.l.b16 %v1159
        %v3824 = vunpack.c.l.b16 %v1160
        %v3825 = vunpack.c.l.b16 %v1161
        %v3826 = vunpack.c.l.b16 %v1162
        %v3827 = vunpack.c.l.b16 %v1163
        %v3828 = vunpack.c.l.b16 %v1164
        %v3829 = vunpack.c.l.b16 %v1165
        %v3830 = vunpack.c.l.b16 %v1166
        %v3831 = vunpack.c.l.b16 %v1167
        %v3832 = vunpack.c.l.b16 %v1168
        %v3833 = vunpack.c.l.b16 %v1169
        %v3834 = vunpack.c.l.b16 %v1170
        %v3835 = vunpack.c.l.b16 %v1171
        %v3836 = vunpack.c.l.b16 %v1172
        %v3837 = vunpack.c.l.b16 %v1173
        %v3838 = vunpack.c.l.b16 %v1174
        %v3839 = vunpack.c.l.b16 %v1175
        %v3840 = vunpack.c.l.b16 %v1176
        %v3841 = vunpack.c.l.b16 %v1177
        %v3842 = vunpack.c.l.b16 %v1178
        %v3843 = vunpack.c.l.b16 %v1179
        %v3844 = vunpack.c.l.b16 %v1180
        %v3845 = vunpack.c.l.b16 %v1181
        %v3846 = vunpack.c.l.b16 %v1182
        %v3847 = vunpack.c.l.b16 %v1183
        %v3848 = vunpack.c.l.b16 %v1184
        %v3849 = vunpack.c.l.b16 %v1185
        %v3850 = vunpack.c.l.b16 %v1186
        %v3851 = vunpack.c.l.b16 %v1187
        %v3852 = vunpack.c.l.b16 %v1188
        %v3853 = vunpack.c.l.b16 %v1189
        %v3854 = vunpack.c.l.b16 %v1190
        %v3855 = vunpack.c.l.b16 %v1191
        %v3856 = vunpack.c.l.b16 %v1192
        %v3857 = vunpack.c.l.b16 %v1193
        %v3858 = vunpack.c.l.b16 %v1194
        %v3859 = vunpack.c.l.b16 %v1195
        %v3860 = vunpack.c.l.b16 %v1196
        %v3861 = vunpack.c.l.b16 %v1197
        %v3862 = vunpack.c.l.b16 %v1198
        %v3863 = vunpack.c.l.b16 %v1199
        %v3864 = vunpack.c.l.b16 %v1200
        %v3865 = vunpack.c.l.b16 %v1201
        %v3866 = vunpack.c.l.b16 %v1202
        %v3867 = vunpack.c.l.b16 %v1203
        %v3868 = vunpack.c.l.b16 %v1204
        %v3869 = vunpack.c.l.b16 %v1205
        %v3870 = vunpack.c.l.b16 %v1206
        %v3871 = vunpack.c.l.b16 %v1207
        %v3872 = vunpack.c.l.b16 %v1208
        %v3873 = vunpack.c.l.b16 %v1209
        %v3874 = vunpack.c.l.b16 %v1210
        %v3875 = vunpack.c.l.b16 %v1211
        %v3876 = vunpack.c.l.b16 %v1212
        %v3877 = vunpack.c.l.b16 %v1213
        %v3878 = vunpack.c.l.b16 %v1214
        %v3879 = vunpack.c.l.b16 %v1215
        %v3880 = vunpack.c.l.b16 %v1216
        %v3881 = vunpack.c.l.b16 %v1217
        %v3882 = vunpack.c.l.b16 %v1218
        %v3883 = vunpack.c.l.b16 %v1219
        %v3884 = vunpack.c.l.b16 %v1220
        %v3885 = vunpack.c.l.b16 %v1221
        %v3886 = vunpack.c.l.b16 %v1222
        %v3887 = vunpack.c.l.b16 %v1223
        %v3888 = vunpack.c.l.b16 %v1224
        %v3889 = vunpack.c.l.b16 %v1225
        %v3890 = vunpack.c.l.b16 %v1226
        %v3891 = vunpack.c.l.b16 %v1227
        %v3892 = vunpack.c.l.b16 %v1228
        %v3893 = vunpack.c.l.b16 %v1229
        %v3894 = vunpack.c.l.b16 %v1230
        %v3895 = vunpack.c.l.b16 %v1231
        %v3896 = vunpack.c.l.b16 %v1232
        %v3897 = vunpack.c.l.b16 %v1233
        %v3898 = vunpack.c.l.b16 %v1234
        %v3899 = vunpack.c.l.b16 %v1235
        %v3900 = vunpack.c.l.b16 %v1236
        %v3901 = vunpack.c.l.b16 %v1237
        %v3902 = vunpack.c.l.b16 %v1238
        %v3903 = vunpack.c.l.b16 %v1239
        %v3904 = vunpack.c.l.b16 %v1240
        %v3905 = vunpack.c.l.b16 %v1241
        %v3906 = vunpack.c.l.b16 %v1242
        %v3907 = vunpack.c.l.b16 %v1243
        %v3908 = vunpack.c.l.b16 %v1244
        %v3909 = vunpack.c.l.b16 %v1245
        %v3910 = vunpack.c.l.b16 %v1246
        %v3911 = vunpack.c.l.b16 %v1247
        %v3912 = vunpack.c.l.b16 %v1248
        %v3913 = vunpack.c.l.b16 %v1249
        %v3914 = vunpack.c.l.b16 %v1250
        %v3915 = vunpack.c.l.b16 %v1251
        %v3916 = vunpack.c.l.b16 %v1252
        %v3917 = vunpack.c.l.b16 %v1253
        %v3918 = vunpack.c.l.b16 %v1254
        %v3919 = vunpack.c.l.b16 %v1255
        %v3920 = vunpack.c.l.b16 %v1256
        %v3921 = vunpack.c.l.b16 %v1257
        %v3922 = vunpack.c.l.b16 %v1258
        %v3923 = vunpack.c.l.b16 %v1259
        %v3924 = vunpack.c.l.b16 %v1260
        %v3925 = vunpack.c.l.b16 %v1261
        %v3926 = vunpack.c.l.b16 %v1262
        %v3927 = vunpack.c.l.b16 %v1263
        %v3928 = vunpack.c.l.b16 %v1264
        %v3929 = vunpack.c.l.b16 %v1265
        %v3930 = vunpack.c.l.b16 %v1266
        %v3931 = vunpack.c.l.b16 %v1267
        %v3932 = vunpack.c.l.b16 %v1268
        %v3933 = vunpack.c.l.b16 %v1269
        %v3934 = vunpack.c.l.b16 %v1270
        %v3935 = vunpack.c.l.b16 %v1271
        %v3936 = vunpack.c.l.b16 %v1272
        %v3937 = vunpack.c.l.b16 %v1273
        %v3938 = vunpack.c.l.b16 %v1274
        %v3939 = vunpack.c.l.b16 %v1275
        %v3940 = vunpack.c.l.b16 %v1276
        %v3941 = vunpack.c.l.b16 %v1277
        %v3942 = vunpack.c.l.b16 %v1278
        %v3943 = vunpack.c.l.b16 %v1279
        %v3944 = vunpack.c.l.b16 %v1280
        %v3945 = vunpack.c.l.b16 %v1281
        %v3946 = vunpack.c.l.b16 %v1282
        %v3947 = vunpack.c.l.b16 %v1283
        %v3948 = vunpack.c.l.b16 %v1284
        %v3949 = vunpack.c.l.b16 %v1285
        %v3950 = vunpack.c.l.b16 %v1286
        %v3951 = vunpack.c.l.b16 %v1287
        %v3952 = vunpack.c.l.b16 %v1288
        %v3953 = vunpack.c.l.b16 %v1289
        %v3954 = vunpack.c.l.b16 %v1290
        %v3955 = vunpack.c.l.b16 %v1291
        %v3956 = vunpack.c.l.b16 %v1292
        %v3957 = vunpack.c.l.b16 %v1293
        %v3958 = vunpack.c.l.b16 %v1294
        %v3959 = vunpack.c.l.b16 %v1295
        %v3960 = vunpack.c.l.b16 %v1296
        %v3961 = vunpack.c.l.b16 %v1297
        %v3962 = vunpack.c.l.b16 %v1298
        %v3963 = vunpack.c.l.b16 %v1299
        %v3964 = vunpack.c.l.b16 %v1300
        %v3965 = vunpack.c.l.b16 %v1301
        %v3966 = vunpack.c.l.b16 %v1302
        %v3967 = vunpack.c.l.b16 %v1303
        %v3968 = vunpack.c.l.b16 %v1304
        %v3969 = vunpack.c.l.b16 %v1305
        %v3970 = vunpack.c.l.b16 %v1306
        %v3971 = vunpack.c.l.b16 %v1307
        %v3972 = vunpack.c.l.b16 %v1308
        %v3973 = vunpack.c.l.b16 %v1309
        %v3974 = vunpack.c.l.b16 %v1310
        %v3975 = vunpack.c.l.b16 %v1311
        %v3976 = vunpack.c.l.b16 %v1312
        %v3977 = vunpack.c.l.b16 %v1313
        %v3978 = vunpack.c.l.b16 %v1314
        %v3979 = vunpack.c.l.b16 %v1315
        %v3980 = vunpack.c.l.b16 %v1316
        %v3981 = vunpack.c.l.b16 %v1317
        %v3982 = vunpack.c.l.b16 %v1318
        %v3983 = vunpack.c.l.b16 %v1319
        %v3984 = vunpack.c.l.b16 %v1320
        %v3985 = vunpack.c.l.b16 %v1321
        %v3986 = vunpack.c.l.b16 %v1322
        %v3987 = vunpack.c.l.b16 %v1323
        %v3988 = vunpack.c.l.b16 %v1324
        %v3989 = vunpack.c.l.b16 %v1325
        %v3990 = vunpack.c.l.b16 %v1326
        %v3991 = vunpack.c.l.b16 %v1327
        %v3992 = vunpack.c.l.b16 %v1328
        %v3993 = vunpack.c.l.b16 %v1329
        %v3994 = vunpack.c.l.b16 %v1330
        %v3995 = vunpack.c.l.b16 %v1331
        %v3996 = vunpack.c.l.b16 %v1332
        %v3997 = vunpack.c.l.b16 %v1333
        %v3998 = vunpack.c.l.b16 %v1334
        %v3999 = vunpack.c.l.b16 %v1335
        %v4000 = vunpack.c.l.b16 %v1336
        %v4001 = vunpack.c.l.b16 %v1337
        %v4002 = vunpack.c.l.b16 %v1338
        %v4003 = vunpack.c.l.b16 %v1339
        %v4004 = vunpack.c.l.b16 %v1340
        %v4005 = vunpack.c.l.b16 %v1341
        %v4006 = vunpack.c.l.b16 %v1342
        %v4007 = vunpack.c.l.b16 %v1343
        %v4008 = vunpack.c.l.b16 %v1344
        %v4009 = vunpack.c.l.b16 %v1345
        %v4010 = vunpack.c.l.b16 %v1346
        %v4011 = vunpack.c.l.b16 %v1347
        %v4012 = vunpack.c.l.b16 %v1348
        %v4013 = vunpack.c.l.b16 %v1349
        %v4014 = vunpack.c.l.b16 %v1350
        %v4015 = vunpack.c.l.b16 %v1351
        %v4016 = vunpack.c.l.b16 %v1352
        %v4017 = vunpack.c.l.b16 %v1353
        %v4018 = vunpack.c.l.b16 %v1354
        %v4019 = vunpack.c.l.b16 %v1355
        %v4020 = vunpack.c.l.b16 %v1356
        %v4021 = vunpack.c.l.b16 %v1357
        %v4022 = vunpack.c.l.b16 %v1358
        %v4023 = vunpack.c.l.b16 %v1359
        %v4024 = vunpack.c.l.b16 %v1360
        %v4025 = vunpack.c.l.b16 %v1361
        %v4026 = vunpack.c.l.b16 %v1362
        %v4027 = vunpack.c.l.b16 %v1363
        %v4028 = vunpack.c.l.b16 %v1364
        %v4029 = vunpack.c.l.b16 %v1365
        %v4030 = vunpack.c.l.b16 %v1366
        %v4031 = vunpack.c.l.b16 %v1367
        %v4032 = vunpack.c.l.b16 %v1368
        %v4033 = vunpack.c.l.b16 %v1369
        %v4034 = vunpack.c.l.b16 %v1370
        %v4035 = vunpack.c.l.b16 %v1371
        %v4036 = vunpack.c.l.b16 %v1372
        %v4037 = vunpack.c.l.b16 %v1373
        %v4038 = vunpack.c.l.b16 %v1374
        %v4039 = vunpack.c.l.b16 %v1375
        %v4040 = vunpack.c.l.b16 %v1376
        %v4041 = vunpack.c.l.b16 %v1377
        %v4042 = vunpack.c.l.b16 %v1378
        %v4043 = vunpack.c.l.b16 %v1379
        %v4044 = vunpack.c.l.b16 %v1380
        %v4045 = vunpack.c.l.b16 %v1381
        %v4046 = vunpack.c.l.b16 %v1382
        %v4047 = vunpack.c.l.b16 %v1383
        %v4048 = vunpack.c.l.b16 %v1384
        %v4049 = vunpack.c.l.b16 %v1385
        %v4050 = vunpack.c.l.b16 %v1386
        %v4051 = vunpack.c.l.b16 %v1387
        %v4052 = vunpack.c.l.b16 %v1388
        %v4053 = vunpack.c.l.b16 %v1389
        %v4054 = vunpack.c.l.b16 %v1390
        %v4055 = vunpack.c.l.b16 %v1391
        %v4056 = vunpack.c.l.b16 %v1392
        %v4057 = vunpack.c.l.b16 %v1393
        %v4058 = vunpack.c.l.b16 %v1394
        %v4059 = vunpack.c.l.b16 %v1395
        %v4060 = vunpack.c.l.b16 %v1396
        %v4061 = vunpack.c.l.b16 %v1397
        %v4062 = vunpack.c.l.b16 %v1398
        %v4063 = vunpack.c.l.b16 %v1399
        %v4064 = vunpack.c.l.b16 %v1400
        %v4065 = vunpack.c.l.b16 %v1401
        %v4066 = vunpack.c.l.b16 %v1402
        %v4067 = vunpack.c.l.b16 %v1403
        %v4068 = vunpack.c.l.b16 %v1404
        %v4069 = vunpack.c.l.b16 %v1405
        %v4070 = vunpack.c.l.b16 %v1406
        %v4071 = vunpack.c.l.b16 %v1407
        %v4072 = vunpack.c.l.b16 %v1408
        %v4073 = vunpack.c.l.b16 %v1409
        %v4074 = vunpack.c.l.b16 %v1410
        %v4075 = vunpack.c.l.b16 %v1411
        %v4076 = vunpack.c.l.b16 %v1412
        %v4077 = vunpack.c.l.b16 %v1413
        %v4078 = vunpack.c.l.b16 %v1414
        %v4079 = vunpack.c.l.b16 %v1415
        %v4080 = vunpack.c.l.b16 %v1416
        %v4081 = vunpack.c.l.b16 %v1417
        %v4082 = vunpack.c.l.b16 %v1418
        %v4083 = vunpack.c.l.b16 %v1419
        %v4084 = vunpack.c.l.b16 %v1420
        %v4085 = vunpack.c.l.b16 %v1421
        %v4086 = vunpack.c.l.b16 %v1422
        %v4087 = vunpack.c.l.b16 %v1423
        %v4088 = vunpack.c.l.b16 %v1424
        %v4089 = vunpack.c.l.b16 %v1425
        %v4090 = vunpack.c.l.b16 %v1426
        %v4091 = vunpack.c.l.b16 %v1427
        %v4092 = vunpack.c.l.b16 %v1428
        %v4093 = vunpack.c.l.b16 %v1429
        %v4094 = vunpack.c.l.b16 %v1430
        %v4095 = vunpack.c.l.b16 %v1431
        %v4096 = vunpack.c.l.b16 %v1432
        %v4097 = vunpack.c.l.b16 %v1433
        %v4098 = vunpack.c.l.b16 %v1434
        %v4099 = vunpack.c.l.b16 %v1435
        %v4100 = vunpack.c.l.b16 %v1436
        %v4101 = vunpack.c.l.b16 %v1437
        %v4102 = vunpack.c.l.b16 %v1438
        %v4103 = vunpack.c.l.b16 %v1439
        %v4104 = vunpack.c.l.b16 %v1440
        %v4105 = vunpack.c.l.b16 %v1441
        %v4106 = vunpack.c.l.b16 %v1442
        %v4107 = vunpack.c.l.b16 %v1443
        %v4108 = vunpack.c.l.b16 %v1444
        %v4109 = vunpack.c.l.b16 %v1445
        %v4110 = vunpack.c.l.b16 %v1446
        %v4111 = vunpack.c.l.b16 %v1447
        %v4112 = vunpack.c.l.b16 %v1448
        %v4113 = vunpack.c.l.b16 %v1449
        %v4114 = vunpack.c.l.b16 %v1450
        %v4115 = vunpack.c.l.b16 %v1451
        %v4116 = vunpack.c.l.b16 %v1452
        %v4117 = vunpack.c.l.b16 %v1453
        %v4118 = vunpack.c.l.b16 %v1454
        %v4119 = vunpack.c.l.b16 %v1455
        %v4120 = vunpack.c.l.b16 %v1456
        %v4121 = vunpack.c.l.b16 %v1457
        %v4122 = vunpack.c.l.b16 %v1458
        %v4123 = vunpack.c.l.b16 %v1459
        %v4124 = vunpack.c.l.b16 %v1460
        %v4125 = vunpack.c.l.b16 %v1461
        %v4126 = vunpack.c.l.b16 %v1462
        %v4127 = vunpack.c.l.b16 %v1463
        %v4128 = vunpack.c.l.b16 %v1464
        %v4129 = vunpack.c.l.b16 %v1465
        %v4130 = vunpack.c.l.b16 %v1466
        %v4131 = vunpack.c.l.b16 %v1467
        %v4132 = vunpack.c.l.b16 %v1468
        %v4133 = vunpack.c.l.b16 %v1469
        %v4134 = vunpack.c.l.b16 %v1470
        %v4135 = vunpack.c.l.b16 %v1471
        %v4136 = vunpack.c.l.b16 %v1472
        %v4137 = vunpack.c.l.b16 %v1473
        %v4138 = vunpack.c.l.b16 %v1474
        %v4139 = vunpack.c.l.b16 %v1475
        %v4140 = vunpack.c.l.b16 %v1476
        %v4141 = vunpack.c.l.b16 %v1477
        %v4142 = vunpack.c.l.b16 %v1478
        %v4143 = vunpack.c.l.b16 %v1479
        %v4144 = vunpack.c.l.b16 %v1480
        %v4145 = vunpack.c.l.b16 %v1481
        %v4146 = vunpack.c.l.b16 %v1482
        %v4147 = vunpack.c.l.b16 %v1483
        %v4148 = vunpack.c.l.b16 %v1484
        %v4149 = vunpack.c.l.b16 %v1485
        %v4150 = vunpack.c.l.b16 %v1486
        %v4151 = vunpack.c.l.b16 %v1487
        %v4152 = vunpack.c.l.b16 %v1488
        %v4153 = vunpack.c.l.b16 %v1489
        %v4154 = vunpack.c.l.b16 %v1490
        %v4155 = vunpack.c.l.b16 %v1491
        %v4156 = vunpack.c.l.b16 %v1492
        %v4157 = vunpack.c.l.b16 %v1493
        %v4158 = vunpack.c.l.b16 %v1494
        %v4159 = vunpack.c.l.b16 %v1495
        %v4160 = vunpack.c.l.b16 %v1496
        %v4161 = vunpack.c.l.b16 %v1497
        %v4162 = vunpack.c.l.b16 %v1498
        %v4163 = vunpack.c.l.b16 %v1499
        %v4164 = vunpack.c.l.b16 %v1500
        %v4165 = vunpack.c.l.b16 %v1501
        %v4166 = vunpack.c.l.b16 %v1502
        %v4167 = vunpack.c.l.b16 %v1503
        %v4168 = vunpack.c.l.b16 %v1504
        %v4169 = vunpack.c.l.b16 %v1505
        %v4170 = vunpack.c.l.b16 %v1506
        %v4171 = vunpack.c.l.b16 %v1507
        %v4172 = vunpack.c.l.b16 %v1508
        %v4173 = vunpack.c.l.b16 %v1509
        %v4174 = vunpack.c.l.b16 %v1510
        %v4175 = vunpack.c.l.b16 %v1511
        %v4176 = vunpack.c.l.b16 %v1512
        %v4177 = vunpack.c.l.b16 %v1513
        %v4178 = vunpack.c.l.b16 %v1514
        %v4179 = vunpack.c.l.b16 %v1515
        %v4180 = vunpack.c.l.b16 %v1516
        %v4181 = vunpack.c.l.b16 %v1517
        %v4182 = vunpack.c.l.b16 %v1518
        %v4183 = vunpack.c.l.b16 %v1519
        %v4184 = vunpack.c.l.b16 %v1520
        %v4185 = vunpack.c.l.b16 %v1521
        %v4186 = vunpack.c.l.b16 %v1522
        %v4187 = vunpack.c.l.b16 %v1523
        %v4188 = vunpack.c.l.b16 %v1524
        %v4189 = vunpack.c.l.b16 %v1525
        %v4190 = vunpack.c.l.b16 %v1526
        %v4191 = vunpack.c.l.b16 %v1527
        %v4192 = vunpack.c.l.b16 %v1528
        %v4193 = vunpack.c.l.b16 %v1529
        %v4194 = vunpack.c.l.b16 %v1530
        %v4195 = vunpack.c.l.b16 %v1531
        %v4196 = vunpack.c.l.b16 %v1532
        %v4197 = vunpack.c.l.b16 %v1533
        %v4198 = vunpack.c.l.b16 %v1534
        %v4199 = vunpack.c.l.b16 %v1535
        %v4200 = vunpack.c.l.b16 %v1536
        %v4201 = vunpack.c.l.b16 %v1537
        %v4202 = vunpack.c.l.b16 %v1538
        %v4203 = vunpack.c.l.b16 %v1539
        %v4204 = vunpack.c.l.b16 %v1540
        %v4205 = vunpack.c.l.b16 %v1541
        %v4206 = vunpack.c.l.b16 %v1542
        %v4207 = vunpack.c.l.b16 %v1543
        %v4208 = vunpack.c.l.b16 %v1544
        %v4209 = vunpack.c.l.b16 %v1545
        %v4210 = vunpack.c.l.b16 %v1546
        %v4211 = vunpack.c.l.b16 %v1547
        %v4212 = vunpack.c.l.b16 %v1548
        %v4213 = vunpack.c.l.b16 %v1549
        %v4214 = vunpack.c.l.b16 %v1550
        %v4215 = vunpack.c.l.b16 %v1551
        %v4216 = vunpack.c.l.b16 %v1552
        %v4217 = vunpack.c.l.b16 %v1553
        %v4218 = vunpack.c.l.b16 %v1554
        %v4219 = vunpack.c.l.b16 %v1555
        %v4220 = vunpack.c.l.b16 %v1556
        %v4221 = vunpack.c.l.b16 %v1557
        %v4222 = vunpack.c.l.b16 %v1558
        %v4223 = vunpack.c.l.b16 %v1559
        %v4224 = vunpack.c.l.b16 %v1560
        %v4225 = vunpack.c.l.b16 %v1561
        %v4226 = vunpack.c.l.b16 %v1562
        %v4227 = vunpack.c.l.b16 %v1563
        %v4228 = vunpack.c.l.b16 %v1564
        %v4229 = vunpack.c.l.b16 %v1565
        %v4230 = vunpack.c.l.b16 %v1566
        %v4231 = vunpack.c.l.b16 %v1567
        %v4232 = vunpack.c.l.b16 %v1568
        %v4233 = vunpack.c.l.b16 %v1569
        %v4234 = vunpack.c.l.b16 %v1570
        %v4235 = vunpack.c.l.b16 %v1571
        %v4236 = vunpack.c.l.b16 %v1572
        %v4237 = vunpack.c.l.b16 %v1573
        %v4238 = vunpack.c.l.b16 %v1574
        %v4239 = vunpack.c.l.b16 %v1575
        %v4240 = vunpack.c.l.b16 %v1576
        %v4241 = vunpack.c.l.b16 %v1577
        %v4242 = vunpack.c.l.b16 %v1578
        %v4243 = vunpack.c.l.b16 %v1579
        %v4244 = vunpack.c.l.b16 %v1580
        %v4245 = vunpack.c.l.b16 %v1581
        %v4246 = vunpack.c.l.b16 %v1582
        %v4247 = vunpack.c.l.b16 %v1583
        %v4248 = vunpack.c.l.b16 %v1584
        %v4249 = vunpack.c.l.b16 %v1585
        %v4250 = vunpack.c.l.b16 %v1586
        %v4251 = vunpack.c.l.b16 %v1587
        %v4252 = vunpack.c.l.b16 %v1588
        %v4253 = vunpack.c.l.b16 %v1589
        %v4254 = vunpack.c.l.b16 %v1590
        %v4255 = vunpack.c.l.b16 %v1591
        %v4256 = vunpack.c.l.b16 %v1592
        %v4257 = vunpack.c.l.b16 %v1593
        %v4258 = vunpack.c.l.b16 %v1594
        %v4259 = vunpack.c.l.b16 %v1595
        %v4260 = vunpack.c.l.b16 %v1596
        %v4261 = vunpack.c.l.b16 %v1597
        %v4262 = vunpack.c.l.b16 %v1598
        %v4263 = vunpack.c.l.b16 %v1599
        %v4264 = vunpack.c.l.b16 %v1600
        %v4265 = vunpack.c.l.b16 %v1601
        %v4266 = vunpack.c.l.b16 %v1602
        %v4267 = vunpack.c.l.b16 %v1603
        %v4268 = vunpack.c.l.b16 %v1604
        %v4269 = vunpack.c.l.b16 %v1605
        %v4270 = vunpack.c.l.b16 %v1606
        %v4271 = vunpack.c.l.b16 %v1607
        %v4272 = vunpack.c.l.b16 %v1608
        %v4273 = vunpack.c.l.b16 %v1609
        %v4274 = vunpack.c.l.b16 %v1610
        %v4275 = vunpack.c.l.b16 %v1611
        %v4276 = vunpack.c.l.b16 %v1612
        %v4277 = vunpack.c.l.b16 %v1613
        %v4278 = vunpack.c.l.b16 %v1614
        %v4279 = vunpack.c.l.b16 %v1615
        %v4280 = vunpack.c.l.b16 %v1616
        %v4281 = vunpack.c.l.b16 %v1617
        %v4282 = vunpack.c.l.b16 %v1618
        %v4283 = vunpack.c.l.b16 %v1619
        %v4284 = vunpack.c.l.b16 %v1620
        %v4285 = vunpack.c.l.b16 %v1621
        %v4286 = vunpack.c.l.b16 %v1622
        %v4287 = vunpack.c.l.b16 %v1623
        %v4288 = vunpack.c.l.b16 %v1624
        %v4289 = vunpack.c.l.b16 %v1625
        %v4290 = vunpack.c.l.b16 %v1626
        %v4291 = vunpack.c.l.b16 %v1627
        %v4292 = vpack.c.b16 %v3141, %v3140
        %v4293 = vpack.c.b16 %v3143, %v3142
        %v4294 = vpack.c.b16 %v3145, %v3144
        %v4295 = vpack.c.b16 %v3147, %v3146
        %v4296 = vpack.c.b16 %v3149, %v3148
        %v4297 = vpack.c.b16 %v3151, %v3150
        %v4298 = vpack.c.b16 %v3153, %v3152
        %v4299 = vpack.c.b16 %v3155, %v3154
        %v4300 = vpack.c.b16 %v3157, %v3156
        %v4301 = vpack.c.b16 %v3159, %v3158
        %v4302 = vpack.c.b16 %v3161, %v3160
        %v4303 = vpack.c.b16 %v3163, %v3162
        %v4304 = vpack.c.b16 %v3165, %v3164
        %v4305 = vpack.c.b16 %v3167, %v3166
        %v4306 = vpack.c.b16 %v3169, %v3168
        %v4307 = vpack.c.b16 %v3171, %v3170
        %v4308 = vpack.c.b16 %v3173, %v3172
        %v4309 = vpack.c.b16 %v3175, %v3174
        %v4310 = vpack.c.b16 %v3177, %v3176
        %v4311 = vpack.c.b16 %v3179, %v3178
        %v4312 = vpack.c.b16 %v3181, %v3180
        %v4313 = vpack.c.b16 %v3183, %v3182
        %v4314 = vpack.c.b16 %v3185, %v3184
        %v4315 = vpack.c.b16 %v3187, %v3186
        %v4316 = vpack.c.b16 %v3189, %v3188
        %v4317 = vpack.c.b16 %v3191, %v3190
        %v4318 = vpack.c.b16 %v3193, %v3192
        %v4319 = vpack.c.b16 %v3195, %v3194
        %v4320 = vpack.c.b16 %v3197, %v3196
        %v4321 = vpack.c.b16 %v3199, %v3198
        %v4322 = vpack.c.b16 %v3201, %v3200
        %v4323 = vpack.c.b16 %v3203, %v3202
        %v4324 = vpack.c.b16 %v3205, %v3204
        %v4325 = vpack.c.b16 %v3207, %v3206
        %v4326 = vpack.c.b16 %v3209, %v3208
        %v4327 = vpack.c.b16 %v3211, %v3210
        %v4328 = vpack.c.b16 %v3213, %v3212
        %v4329 = vpack.c.b16 %v3215, %v3214
        %v4330 = vpack.c.b16 %v3217, %v3216
        %v4331 = vpack.c.b16 %v3219, %v3218
        %v4332 = vpack.c.b16 %v3221, %v3220
        %v4333 = vpack.c.b16 %v3223, %v3222
        %v4334 = vpack.c.b16 %v3225, %v3224
        %v4335 = vpack.c.b16 %v3227, %v3226
        %v4336 = vpack.c.b16 %v3229, %v3228
        %v4337 = vpack.c.b16 %v3231, %v3230
        %v4338 = vpack.c.b16 %v3233, %v3232
        %v4339 = vpack.c.b16 %v3235, %v3234
        %v4340 = vpack.c.b16 %v3237, %v3236
        %v4341 = vpack.c.b16 %v3239, %v3238
        %v4342 = vpack.c.b16 %v3241, %v3240
        %v4343 = vpack.c.b16 %v3243, %v3242
        %v4344 = vpack.c.b16 %v3245, %v3244
        %v4345 = vpack.c.b16 %v3247, %v3246
        %v4346 = vpack.c.b16 %v3249, %v3248
        %v4347 = vpack.c.b16 %v3251, %v3250
        %v4348 = vpack.c.b16 %v3253, %v3252
        %v4349 = vpack.c.b16 %v3255, %v3254
        %v4350 = vpack.c.b16 %v3257, %v3256
        %v4351 = vpack.c.b16 %v3259, %v3258
        %v4352 = vpack.c.b16 %v3261, %v3260
        %v4353 = vpack.c.b16 %v3263, %v3262
        %v4354 = vpack.c.b16 %v3265, %v3264
        %v4355 = vpack.c.b16 %v3267, %v3266
        %v4356 = vpack.c.b16 %v3269, %v3268
        %v4357 = vpack.c.b16 %v3271, %v3270
        %v4358 = vpack.c.b16 %v3273, %v3272
        %v4359 = vpack.c.b16 %v3275, %v3274
        %v4360 = vpack.c.b16 %v3277, %v3276
        %v4361 = vpack.c.b16 %v3279, %v3278
        %v4362 = vpack.c.b16 %v3281, %v3280
        %v4363 = vpack.c.b16 %v3283, %v3282
        %v4364 = vpack.c.b16 %v3285, %v3284
        %v4365 = vpack.c.b16 %v3287, %v3286
        %v4366 = vpack.c.b16 %v3289, %v3288
        %v4367 = vpack.c.b16 %v3291, %v3290
        %v4368 = vpack.c.b16 %v3293, %v3292
        %v4369 = vpack.c.b16 %v3295, %v3294
        %v4370 = vpack.c.b16 %v3297, %v3296
        %v4371 = vpack.c.b16 %v3299, %v3298
        %v4372 = vpack.c.b16 %v3301, %v3300
        %v4373 = vpack.c.b16 %v3303, %v3302
        %v4374 = vpack.c.b16 %v3305, %v3304
        %v4375 = vpack.c.b16 %v3307, %v3306
        %v4376 = vpack.c.b16 %v3309, %v3308
        %v4377 = vpack.c.b16 %v3311, %v3310
        %v4378 = vpack.c.b16 %v3313, %v3312
        %v4379 = vpack.c.b16 %v3315, %v3314
        %v4380 = vpack.c.b16 %v3317, %v3316
        %v4381 = vpack.c.b16 %v3319, %v3318
        %v4382 = vpack.c.b16 %v3321, %v3320
        %v4383 = vpack.c.b16 %v3323, %v3322
        %v4384 = vpack.c.b16 %v3325, %v3324
        %v4385 = vpack.c.b16 %v3327, %v3326
        %v4386 = vpack.c.b16 %v3329, %v3328
        %v4387 = vpack.c.b16 %v3331, %v3330
        %v4388 = vpack.c.b16 %v3333, %v3332
        %v4389 = vpack.c.b16 %v3335, %v3334
        %v4390 = vpack.c.b16 %v3337, %v3336
        %v4391 = vpack.c.b16 %v3339, %v3338
        %v4392 = vpack.c.b16 %v3341, %v3340
        %v4393 = vpack.c.b16 %v3343, %v3342
        %v4394 = vpack.c.b16 %v3345, %v3344
        %v4395 = vpack.c.b16 %v3347, %v3346
        %v4396 = vpack.c.b16 %v3349, %v3348
        %v4397 = vpack.c.b16 %v3351, %v3350
        %v4398 = vpack.c.b16 %v3353, %v3352
        %v4399 = vpack.c.b16 %v3355, %v3354
        %v4400 = vpack.c.b16 %v3357, %v3356
        %v4401 = vpack.c.b16 %v3359, %v3358
        %v4402 = vpack.c.b16 %v3361, %v3360
        %v4403 = vpack.c.b16 %v3363, %v3362
        %v4404 = vpack.c.b16 %v3365, %v3364
        %v4405 = vpack.c.b16 %v3367, %v3366
        %v4406 = vpack.c.b16 %v3369, %v3368
        %v4407 = vpack.c.b16 %v3371, %v3370
        %v4408 = vpack.c.b16 %v3373, %v3372
        %v4409 = vpack.c.b16 %v3375, %v3374
        %v4410 = vpack.c.b16 %v3377, %v3376
        %v4411 = vpack.c.b16 %v3379, %v3378
        %v4412 = vpack.c.b16 %v3381, %v3380
        %v4413 = vpack.c.b16 %v3383, %v3382
        %v4414 = vpack.c.b16 %v3385, %v3384
        %v4415 = vpack.c.b16 %v3387, %v3386
        %v4416 = vpack.c.b16 %v3389, %v3388
        %v4417 = vpack.c.b16 %v3391, %v3390
        %v4418 = vpack.c.b16 %v3393, %v3392
        %v4419 = vpack.c.b16 %v3395, %v3394
        %v4420 = vpack.c.b16 %v3397, %v3396
        %v4421 = vpack.c.b16 %v3399, %v3398
        %v4422 = vpack.c.b16 %v3401, %v3400
        %v4423 = vpack.c.b16 %v3403, %v3402
        %v4424 = vpack.c.b16 %v3405, %v3404
        %v4425 = vpack.c.b16 %v3407, %v3406
        %v4426 = vpack.c.b16 %v3409, %v3408
        %v4427 = vpack.c.b16 %v3411, %v3410
        %v4428 = vpack.c.b16 %v3413, %v3412
        %v4429 = vpack.c.b16 %v3415, %v3414
        %v4430 = vpack.c.b16 %v3417, %v3416
        %v4431 = vpack.c.b16 %v3419, %v3418
        %v4432 = vpack.c.b16 %v3421, %v3420
        %v4433 = vpack.c.b16 %v3423, %v3422
        %v4434 = vpack.c.b16 %v3425, %v3424
        %v4435 = vpack.c.b16 %v3427, %v3426
        %v4436 = vpack.c.b16 %v3429, %v3428
        %v4437 = vpack.c.b16 %v3431, %v3430
        %v4438 = vpack.c.b16 %v3433, %v3432
        %v4439 = vpack.c.b16 %v3435, %v3434
        %v4440 = vpack.c.b16 %v3437, %v3436
        %v4441 = vpack.c.b16 %v3439, %v3438
        %v4442 = vpack.c.b16 %v3441, %v3440
        %v4443 = vpack.c.b16 %v3443, %v3442
        %v4444 = vpack.c.b16 %v3445, %v3444
        %v4445 = vpack.c.b16 %v3447, %v3446
        %v4446 = vpack.c.b16 %v3449, %v3448
        %v4447 = vpack.c.b16 %v3451, %v3450
        %v4448 = vpack.c.b16 %v3453, %v3452
        %v4449 = vpack.c.b16 %v3455, %v3454
        %v4450 = vpack.c.b16 %v3457, %v3456
        %v4451 = vpack.c.b16 %v3459, %v3458
        %v4452 = vpack.c.b16 %v3461, %v3460
        %v4453 = vpack.c.b16 %v3463, %v3462
        %v4454 = vpack.c.b16 %v3465, %v3464
        %v4455 = vpack.c.b16 %v3467, %v3466
        %v4456 = vpack.c.b16 %v3469, %v3468
        %v4457 = vpack.c.b16 %v3471, %v3470
        %v4458 = vpack.c.b16 %v3473, %v3472
        %v4459 = vpack.c.b16 %v3475, %v3474
        %v4460 = vpack.c.b16 %v3477, %v3476
        %v4461 = vpack.c.b16 %v3479, %v3478
        %v4462 = vpack.c.b16 %v3481, %v3480
        %v4463 = vpack.c.b16 %v3483, %v3482
        %v4464 = vpack.c.b16 %v3485, %v3484
        %v4465 = vpack.c.b16 %v3487, %v3486
        %v4466 = vpack.c.b16 %v3489, %v3488
        %v4467 = vpack.c.b16 %v3491, %v3490
        %v4468 = vpack.c.b16 %v3493, %v3492
        %v4469 = vpack.c.b16 %v3495, %v3494
        %v4470 = vpack.c.b16 %v3497, %v3496
        %v4471 = vpack.c.b16 %v3499, %v3498
        %v4472 = vpack.c.b16 %v3501, %v3500
        %v4473 = vpack.c.b16 %v3503, %v3502
        %v4474 = vpack.c.b16 %v3505, %v3504
        %v4475 = vpack.c.b16 %v3507, %v3506
        %v4476 = vpack.c.b16 %v3509, %v3508
        %v4477 = vpack.c.b16 %v3511, %v3510
        %v4478 = vpack.c.b16 %v3513, %v3512
        %v4479 = vpack.c.b16 %v3515, %v3514
        %v4480 = vpack.c.b16 %v3517, %v3516
        %v4481 = vpack.c.b16 %v3519, %v3518
        %v4482 = vpack.c.b16 %v3521, %v3520
        %v4483 = vpack.c.b16 %v3523, %v3522
        %v4484 = vpack.c.b16 %v3525, %v3524
        %v4485 = vpack.c.b16 %v3527, %v3526
        %v4486 = vpack.c.b16 %v3529, %v3528
        %v4487 = vpack.c.b16 %v3531, %v3530
        %v4488 = vpack.c.b16 %v3533, %v3532
        %v4489 = vpack.c.b16 %v3535, %v3534
        %v4490 = vpack.c.b16 %v3537, %v3536
        %v4491 = vpack.c.b16 %v3539, %v3538
        %v4492 = vpack.c.b16 %v3541, %v3540
        %v4493 = vpack.c.b16 %v3543, %v3542
        %v4494 = vpack.c.b16 %v3545, %v3544
        %v4495 = vpack.c.b16 %v3547, %v3546
        %v4496 = vpack.c.b16 %v3549, %v3548
        %v4497 = vpack.c.b16 %v3551, %v3550
        %v4498 = vpack.c.b16 %v3553, %v3552
        %v4499 = vpack.c.b16 %v3555, %v3554
        %v4500 = vpack.c.b16 %v3557, %v3556
        %v4501 = vpack.c.b16 %v3559, %v3558
        %v4502 = vpack.c.b16 %v3561, %v3560
        %v4503 = vpack.c.b16 %v3563, %v3562
        %v4504 = vpack.c.b16 %v3565, %v3564
        %v4505 = vpack.c.b16 %v3567, %v3566
        %v4506 = vpack.c.b16 %v3569, %v3568
        %v4507 = vpack.c.b16 %v3571, %v3570
        %v4508 = vpack.c.b16 %v3573, %v3572
        %v4509 = vpack.c.b16 %v3575, %v3574
        %v4510 = vpack.c.b16 %v3577, %v3576
        %v4511 = vpack.c.b16 %v3579, %v3578
        %v4512 = vpack.c.b16 %v3581, %v3580
        %v4513 = vpack.c.b16 %v3583, %v3582
        %v4514 = vpack.c.b16 %v3585, %v3584
        %v4515 = vpack.c.b16 %v3587, %v3586
        %v4516 = vpack.c.b16 %v3589, %v3588
        %v4517 = vpack.c.b16 %v3591, %v3590
        %v4518 = vpack.c.b16 %v3593, %v3592
        %v4519 = vpack.c.b16 %v3595, %v3594
        %v4520 = vpack.c.b16 %v3597, %v3596
        %v4521 = vpack.c.b16 %v3599, %v3598
        %v4522 = vpack.c.b16 %v3601, %v3600
        %v4523 = vpack.c.b16 %v3603, %v3602
        %v4524 = vpack.c.b16 %v3605, %v3604
        %v4525 = vpack.c.b16 %v3607, %v3606
        %v4526 = vpack.c.b16 %v3609, %v3608
        %v4527 = vpack.c.b16 %v3611, %v3610
        %v4528 = vpack.c.b16 %v3613, %v3612
        %v4529 = vpack.c.b16 %v3615, %v3614
        %v4530 = vpack.c.b16 %v3617, %v3616
        %v4531 = vpack.c.b16 %v3619, %v3618
        %v4532 = vpack.c.b16 %v3621, %v3620
        %v4533 = vpack.c.b16 %v3623, %v3622
        %v4534 = vpack.c.b16 %v3625, %v3624
        %v4535 = vpack.c.b16 %v3627, %v3626
        %v4536 = vpack.c.b16 %v3629, %v3628
        %v4537 = vpack.c.b16 %v3631, %v3630
        %v4538 = vpack.c.b16 %v3633, %v3632
        %v4539 = vpack.c.b16 %v3635, %v3634
        %v4540 = vpack.c.b16 %v3637, %v3636
        %v4541 = vpack.c.b16 %v3639, %v3638
        %v4542 = vpack.c.b16 %v3641, %v3640
        %v4543 = vpack.c.b16 %v3643, %v3642
        %v4544 = vpack.c.b16 %v3645, %v3644
        %v4545 = vpack.c.b16 %v3647, %v3646
        %v4546 = vpack.c.b16 %v3649, %v3648
        %v4547 = vpack.c.b16 %v3651, %v3650
        %v4548 = vpack.c.b16 %v3653, %v3652
        %v4549 = vpack.c.b16 %v3655, %v3654
        %v4550 = vpack.c.b16 %v3657, %v3656
        %v4551 = vpack.c.b16 %v3659, %v3658
        %v4552 = vpack.c.b16 %v3661, %v3660
        %v4553 = vpack.c.b16 %v3663, %v3662
        %v4554 = vpack.c.b16 %v3665, %v3664
        %v4555 = vpack.c.b16 %v3667, %v3666
        %v4556 = vpack.c.b16 %v3669, %v3668
        %v4557 = vpack.c.b16 %v3671, %v3670
        %v4558 = vpack.c.b16 %v3673, %v3672
        %v4559 = vpack.c.b16 %v3675, %v3674
        %v4560 = vpack.c.b16 %v3677, %v3676
        %v4561 = vpack.c.b16 %v3679, %v3678
        %v4562 = vpack.c.b16 %v3681, %v3680
        %v4563 = vpack.c.b16 %v3683, %v3682
        %v4564 = vpack.c.b16 %v3685, %v3684
        %v4565 = vpack.c.b16 %v3687, %v3686
        %v4566 = vpack.c.b16 %v3689, %v3688
        %v4567 = vpack.c.b16 %v3691, %v3690
        %v4568 = vpack.c.b16 %v3693, %v3692
        %v4569 = vpack.c.b16 %v3695, %v3694
        %v4570 = vpack.c.b16 %v3697, %v3696
        %v4571 = vpack.c.b16 %v3699, %v3698
        %v4572 = vpack.c.b16 %v3701, %v3700
        %v4573 = vpack.c.b16 %v3703, %v3702
        %v4574 = vpack.c.b16 %v3705, %v3704
        %v4575 = vpack.c.b16 %v3707, %v3706
        %v4576 = vpack.c.b16 %v3709, %v3708
        %v4577 = vpack.c.b16 %v3711, %v3710
        %v4578 = vpack.c.b16 %v3713, %v3712
        %v4579 = vpack.c.b16 %v3715, %v3714
        %v4580 = vpack.c.b16 %v3717, %v3716
        %v4581 = vpack.c.b16 %v3719, %v3718
        %v4582 = vpack.c.b16 %v3721, %v3720
        %v4583 = vpack.c.b16 %v3723, %v3722
        %v4584 = vpack.c.b16 %v3725, %v3724
        %v4585 = vpack.c.b16 %v3727, %v3726
        %v4586 = vpack.c.b16 %v3729, %v3728
        %v4587 = vpack.c.b16 %v3731, %v3730
        %v4588 = vpack.c.b16 %v3733, %v3732
        %v4589 = vpack.c.b16 %v3735, %v3734
        %v4590 = vpack.c.b16 %v3737, %v3736
        %v4591 = vpack.c.b16 %v3739, %v3738
        %v4592 = vpack.c.b16 %v3741, %v3740
        %v4593 = vpack.c.b16 %v3743, %v3742
        %v4594 = vpack.c.b16 %v3745, %v3744
        %v4595 = vpack.c.b16 %v3747, %v3746
        %v4596 = vpack.c.b16 %v3749, %v3748
        %v4597 = vpack.c.b16 %v3751, %v3750
        %v4598 = vpack.c.b16 %v3753, %v3752
        %v4599 = vpack.c.b16 %v3755, %v3754
        %v4600 = vpack.c.b16 %v3757, %v3756
        %v4601 = vpack.c.b16 %v3759, %v3758
        %v4602 = vpack.c.b16 %v3761, %v3760
        %v4603 = vpack.c.b16 %v3763, %v3762
        %v4604 = vpack.c.b16 %v3765, %v3764
        %v4605 = vpack.c.b16 %v3767, %v3766
        %v4606 = vpack.c.b16 %v3769, %v3768
        %v4607 = vpack.c.b16 %v3771, %v3770
        %v4608 = vpack.c.b16 %v3773, %v3772
        %v4609 = vpack.c.b16 %v3775, %v3774
        %v4610 = vpack.c.b16 %v3777, %v3776
        %v4611 = vpack.c.b16 %v3779, %v3778
        %v4612 = vpack.c.b16 %v3781, %v3780
        %v4613 = vpack.c.b16 %v3783, %v3782
        %v4614 = vpack.c.b16 %v3785, %v3784
        %v4615 = vpack.c.b16 %v3787, %v3786
        %v4616 = vpack.c.b16 %v3789, %v3788
        %v4617 = vpack.c.b16 %v3791, %v3790
        %v4618 = vpack.c.b16 %v3793, %v3792
        %v4619 = vpack.c.b16 %v3795, %v3794
        %v4620 = vpack.c.b16 %v3797, %v3796
        %v4621 = vpack.c.b16 %v3799, %v3798
        %v4622 = vpack.c.b16 %v3801, %v3800
        %v4623 = vpack.c.b16 %v3803, %v3802
        %v4624 = vpack.c.b16 %v3805, %v3804
        %v4625 = vpack.c.b16 %v3807, %v3806
        %v4626 = vpack.c.b16 %v3809, %v3808
        %v4627 = vpack.c.b16 %v3811, %v3810
        %v4628 = vpack.c.b16 %v3813, %v3812
        %v4629 = vpack.c.b16 %v3815, %v3814
        %v4630 = vpack.c.b16 %v3817, %v3816
        %v4631 = vpack.c.b16 %v3819, %v3818
        %v4632 = vpack.c.b16 %v3821, %v3820
        %v4633 = vpack.c.b16 %v3823, %v3822
        %v4634 = vpack.c.b16 %v3825, %v3824
        %v4635 = vpack.c.b16 %v3827, %v3826
        %v4636 = vpack.c.b16 %v3829, %v3828
        %v4637 = vpack.c.b16 %v3831, %v3830
        %v4638 = vpack.c.b16 %v3833, %v3832
        %v4639 = vpack.c.b16 %v3835, %v3834
        %v4640 = vpack.c.b16 %v3837, %v3836
        %v4641 = vpack.c.b16 %v3839, %v3838
        %v4642 = vpack.c.b16 %v3841, %v3840
        %v4643 = vpack.c.b16 %v3843, %v3842
        %v4644 = vpack.c.b16 %v3845, %v3844
        %v4645 = vpack.c.b16 %v3847, %v3846
        %v4646 = vpack.c.b16 %v3849, %v3848
        %v4647 = vpack.c.b16 %v3851, %v3850
        %v4648 = vpack.c.b16 %v3853, %v3852
        %v4649 = vpack.c.b16 %v3855, %v3854
        %v4650 = vpack.c.b16 %v3857, %v3856
        %v4651 = vpack.c.b16 %v3859, %v3858
        %v4652 = vpack.c.b16 %v3861, %v3860
        %v4653 = vpack.c.b16 %v3863, %v3862
        %v4654 = vpack.c.b16 %v3865, %v3864
        %v4655 = vpack.c.b16 %v3867, %v3866
        %v4656 = vpack.c.b16 %v3869, %v3868
        %v4657 = vpack.c.b16 %v3871, %v3870
        %v4658 = vpack.c.b16 %v3873, %v3872
        %v4659 = vpack.c.b16 %v3875, %v3874
        %v4660 = vpack.c.b16 %v3877, %v3876
        %v4661 = vpack.c.b16 %v3879, %v3878
        %v4662 = vpack.c.b16 %v3881, %v3880
        %v4663 = vpack.c.b16 %v3883, %v3882
        %v4664 = vpack.c.b16 %v3885, %v3884
        %v4665 = vpack.c.b16 %v3887, %v3886
        %v4666 = vpack.c.b16 %v3889, %v3888
        %v4667 = vpack.c.b16 %v3891, %v3890
        %v4668 = vpack.c.b16 %v3893, %v3892
        %v4669 = vpack.c.b16 %v3895, %v3894
        %v4670 = vpack.c.b16 %v3897, %v3896
        %v4671 = vpack.c.b16 %v3899, %v3898
        %v4672 = vpack.c.b16 %v3901, %v3900
        %v4673 = vpack.c.b16 %v3903, %v3902
        %v4674 = vpack.c.b16 %v3905, %v3904
        %v4675 = vpack.c.b16 %v3907, %v3906
        %v4676 = vpack.c.b16 %v3909, %v3908
        %v4677 = vpack.c.b16 %v3911, %v3910
        %v4678 = vpack.c.b16 %v3913, %v3912
        %v4679 = vpack.c.b16 %v3915, %v3914
        %v4680 = vpack.c.b16 %v3917, %v3916
        %v4681 = vpack.c.b16 %v3919, %v3918
        %v4682 = vpack.c.b16 %v3921, %v3920
        %v4683 = vpack.c.b16 %v3923, %v3922
        %v4684 = vpack.c.b16 %v3925, %v3924
        %v4685 = vpack.c.b16 %v3927, %v3926
        %v4686 = vpack.c.b16 %v3929, %v3928
        %v4687 = vpack.c.b16 %v3931, %v3930
        %v4688 = vpack.c.b16 %v3933, %v3932
        %v4689 = vpack.c.b16 %v3935, %v3934
        %v4690 = vpack.c.b16 %v3937, %v3936
        %v4691 = vpack.c.b16 %v3939, %v3938
        %v4692 = vpack.c.b16 %v3941, %v3940
        %v4693 = vpack.c.b16 %v3943, %v3942
        %v4694 = vpack.c.b16 %v3945, %v3944
        %v4695 = vpack.c.b16 %v3947, %v3946
        %v4696 = vpack.c.b16 %v3949, %v3948
        %v4697 = vpack.c.b16 %v3951, %v3950
        %v4698 = vpack.c.b16 %v3953, %v3952
        %v4699 = vpack.c.b16 %v3955, %v3954
        %v4700 = vpack.c.b16 %v3957, %v3956
        %v4701 = vpack.c.b16 %v3959, %v3958
        %v4702 = vpack.c.b16 %v3961, %v3960
        %v4703 = vpack.c.b16 %v3963, %v3962
        %v4704 = vpack.c.b16 %v3965, %v3964
        %v4705 = vpack.c.b16 %v3967, %v3966
        %v4706 = vpack.c.b16 %v3969, %v3968
        %v4707 = vpack.c.b16 %v3971, %v3970
        %v4708 = vpack.c.b16 %v3973, %v3972
        %v4709 = vpack.c.b16 %v3975, %v3974
        %v4710 = vpack.c.b16 %v3977, %v3976
        %v4711 = vpack.c.b16 %v3979, %v3978
        %v4712 = vpack.c.b16 %v3981, %v3980
        %v4713 = vpack.c.b16 %v3983, %v3982
        %v4714 = vpack.c.b16 %v3985, %v3984
        %v4715 = vpack.c.b16 %v3987, %v3986
        %v4716 = vpack.c.b16 %v3989, %v3988
        %v4717 = vpack.c.b16 %v3991, %v3990
        %v4718 = vpack.c.b16 %v3993, %v3992
        %v4719 = vpack.c.b16 %v3995, %v3994
        %v4720 = vpack.c.b16 %v3997, %v3996
        %v4721 = vpack.c.b16 %v3999, %v3998
        %v4722 = vpack.c.b16 %v4001, %v4000
        %v4723 = vpack.c.b16 %v4003, %v4002
        %v4724 = vpack.c.b16 %v4005, %v4004
        %v4725 = vpack.c.b16 %v4007, %v4006
        %v4726 = vpack.c.b16 %v4009, %v4008
        %v4727 = vpack.c.b16 %v4011, %v4010
        %v4728 = vpack.c.b16 %v4013, %v4012
        %v4729 = vpack.c.b16 %v4015, %v4014
        %v4730 = vpack.c.b16 %v4017, %v4016
        %v4731 = vpack.c.b16 %v4019, %v4018
        %v4732 = vpack.c.b16 %v4021, %v4020
        %v4733 = vpack.c.b16 %v4023, %v4022
        %v4734 = vpack.c.b16 %v4025, %v4024
        %v4735 = vpack.c.b16 %v4027, %v4026
        %v4736 = vpack.c.b16 %v4029, %v4028
        %v4737 = vpack.c.b16 %v4031, %v4030
        %v4738 = vpack.c.b16 %v4033, %v4032
        %v4739 = vpack.c.b16 %v4035, %v4034
        %v4740 = vpack.c.b16 %v4037, %v4036
        %v4741 = vpack.c.b16 %v4039, %v4038
        %v4742 = vpack.c.b16 %v4041, %v4040
        %v4743 = vpack.c.b16 %v4043, %v4042
        %v4744 = vpack.c.b16 %v4045, %v4044
        %v4745 = vpack.c.b16 %v4047, %v4046
        %v4746 = vpack.c.b16 %v4049, %v4048
        %v4747 = vpack.c.b16 %v4051, %v4050
        %v4748 = vpack.c.b16 %v4053, %v4052
        %v4749 = vpack.c.b16 %v4055, %v4054
        %v4750 = vpack.c.b16 %v4057, %v4056
        %v4751 = vpack.c.b16 %v4059, %v4058
        %v4752 = vpack.c.b16 %v4061, %v4060
        %v4753 = vpack.c.b16 %v4063, %v4062
        %v4754 = vpack.c.b16 %v4065, %v4064
        %v4755 = vpack.c.b16 %v4067, %v4066
        %v4756 = vpack.c.b16 %v4069, %v4068
        %v4757 = vpack.c.b16 %v4071, %v4070
        %v4758 = vpack.c.b16 %v4073, %v4072
        %v4759 = vpack.c.b16 %v4075, %v4074
        %v4760 = vpack.c.b16 %v4077, %v4076
        %v4761 = vpack.c.b16 %v4079, %v4078
        %v4762 = vpack.c.b16 %v4081, %v4080
        %v4763 = vpack.c.b16 %v4083, %v4082
        %v4764 = vpack.c.b16 %v4085, %v4084
        %v4765 = vpack.c.b16 %v4087, %v4086
        %v4766 = vpack.c.b16 %v4089, %v4088
        %v4767 = vpack.c.b16 %v4091, %v4090
        %v4768 = vpack.c.b16 %v4093, %v4092
        %v4769 = vpack.c.b16 %v4095, %v4094
        %v4770 = vpack.c.b16 %v4097, %v4096
        %v4771 = vpack.c.b16 %v4099, %v4098
        %v4772 = vpack.c.b16 %v4101, %v4100
        %v4773 = vpack.c.b16 %v4103, %v4102
        %v4774 = vpack.c.b16 %v4105, %v4104
        %v4775 = vpack.c.b16 %v4107, %v4106
        %v4776 = vpack.c.b16 %v4109, %v4108
        %v4777 = vpack.c.b16 %v4111, %v4110
        %v4778 = vpack.c.b16 %v4113, %v4112
        %v4779 = vpack.c.b16 %v4115, %v4114
        %v4780 = vpack.c.b16 %v4117, %v4116
        %v4781 = vpack.c.b16 %v4119, %v4118
        %v4782 = vpack.c.b16 %v4121, %v4120
        %v4783 = vpack.c.b16 %v4123, %v4122
        %v4784 = vpack.c.b16 %v4125, %v4124
        %v4785 = vpack.c.b16 %v4127, %v4126
        %v4786 = vpack.c.b16 %v4129, %v4128
        %v4787 = vpack.c.b16 %v4131, %v4130
        %v4788 = vpack.c.b16 %v4133, %v4132
        %v4789 = vpack.c.b16 %v4135, %v4134
        %v4790 = vpack.c.b16 %v4137, %v4136
        %v4791 = vpack.c.b16 %v4139, %v4138
        %v4792 = vpack.c.b16 %v4141, %v4140
        %v4793 = vpack.c.b16 %v4143, %v4142
        %v4794 = vpack.c.b16 %v4145, %v4144
        %v4795 = vpack.c.b16 %v4147, %v4146
        %v4796 = vpack.c.b16 %v4149, %v4148
        %v4797 = vpack.c.b16 %v4151, %v4150
        %v4798 = vpack.c.b16 %v4153, %v4152
        %v4799 = vpack.c.b16 %v4155, %v4154
        %v4800 = vpack.c.b16 %v4157, %v4156
        %v4801 = vpack.c.b16 %v4159, %v4158
        %v4802 = vpack.c.b16 %v4161, %v4160
        %v4803 = vpack.c.b16 %v4163, %v4162
        %v4804 = vpack.c.b16 %v4165, %v4164
        %v4805 = vpack.c.b16 %v4167, %v4166
        %v4806 = vpack.c.b16 %v4169, %v4168
        %v4807 = vpack.c.b16 %v4171, %v4170
        %v4808 = vpack.c.b16 %v4173, %v4172
        %v4809 = vpack.c.b16 %v4175, %v4174
        %v4810 = vpack.c.b16 %v4177, %v4176
        %v4811 = vpack.c.b16 %v4179, %v4178
        %v4812 = vpack.c.b16 %v4181, %v4180
        %v4813 = vpack.c.b16 %v4183, %v4182
        %v4814 = vpack.c.b16 %v4185, %v4184
        %v4815 = vpack.c.b16 %v4187, %v4186
        %v4816 = vpack.c.b16 %v4189, %v4188
        %v4817 = vpack.c.b16 %v4191, %v4190
        %v4818 = vpack.c.b16 %v4193, %v4192
        %v4819 = vpack.c.b16 %v4195, %v4194
        %v4820 = vpack.c.b16 %v4197, %v4196
        %v4821 = vpack.c.b16 %v4199, %v4198
        %v4822 = vpack.c.b16 %v4201, %v4200
        %v4823 = vpack.c.b16 %v4203, %v4202
        %v4824 = vpack.c.b16 %v4205, %v4204
        %v4825 = vpack.c.b16 %v4207, %v4206
        %v4826 = vpack.c.b16 %v4209, %v4208
        %v4827 = vpack.c.b16 %v4211, %v4210
        %v4828 = vpack.c.b16 %v4213, %v4212
        %v4829 = vpack.c.b16 %v4215, %v4214
        %v4830 = vpack.c.b16 %v4217, %v4216
        %v4831 = vpack.c.b16 %v4219, %v4218
        %v4832 = vpack.c.b16 %v4221, %v4220
        %v4833 = vpack.c.b16 %v4223, %v4222
        %v4834 = vpack.c.b16 %v4225, %v4224
        %v4835 = vpack.c.b16 %v4227, %v4226
        %v4836 = vpack.c.b16 %v4229, %v4228
        %v4837 = vpack.c.b16 %v4231, %v4230
        %v4838 = vpack.c.b16 %v4233, %v4232
        %v4839 = vpack.c.b16 %v4235, %v4234
        %v4840 = vpack.c.b16 %v4237, %v4236
        %v4841 = vpack.c.b16 %v4239, %v4238
        %v4842 = vpack.c.b16 %v4241, %v4240
        %v4843 = vpack.c.b16 %v4243, %v4242
        %v4844 = vpack.c.b16 %v4245, %v4244
        %v4845 = vpack.c.b16 %v4247, %v4246
        %v4846 = vpack.c.b16 %v4249, %v4248
        %v4847 = vpack.c.b16 %v4251, %v4250
        %v4848 = vpack.c.b16 %v4253, %v4252
        %v4849 = vpack.c.b16 %v4255, %v4254
        %v4850 = vpack.c.b16 %v4257, %v4256
        %v4851 = vpack.c.b16 %v4259, %v4258
        %v4852 = vpack.c.b16 %v4261, %v4260
        %v4853 = vpack.c.b16 %v4263, %v4262
        %v4854 = vpack.c.b16 %v4265, %v4264
        %v4855 = vpack.c.b16 %v4267, %v4266
        %v4856 = vpack.c.b16 %v4269, %v4268
        %v4857 = vpack.c.b16 %v4271, %v4270
        %v4858 = vpack.c.b16 %v4273, %v4272
        %v4859 = vpack.c.b16 %v4275, %v4274
        %v4860 = vpack.c.b16 %v4277, %v4276
        %v4861 = vpack.c.b16 %v4279, %v4278
        %v4862 = vpack.c.b16 %v4281, %v4280
        %v4863 = vpack.c.b16 %v4283, %v4282
        %v4864 = vpack.c.b16 %v4285, %v4284
        %v4865 = vpack.c.b16 %v4287, %v4286
        %v4866 = vpack.c.b16 %v4289, %v4288
        %v4867 = vpack.c.b16 %v4291, %v4290
        %5444 = vmatprep.subr.bf16.mxu0 0
        %5445 = vmatpush1.bf16.msra.mxu0 %v4292
        %5446 = vmatprep.subr.bf16.mxu0 0
        %5447 = vmatpush1.bf16.msra.mxu0 %v4293
        %5448 = vmatprep.subr.bf16.mxu0 0
        %5449 = vmatpush1.bf16.msra.mxu0 %v4294
        %5450 = vmatprep.subr.bf16.mxu0 0
        %5451 = vmatpush1.bf16.msra.mxu0 %v4295
        %5452 = vmatprep.subr.bf16.mxu0 0
        %5453 = vmatpush1.bf16.msra.mxu0 %v4296
        %5454 = vmatprep.subr.bf16.mxu0 0
        %5455 = vmatpush1.bf16.msra.mxu0 %v4297
        %5456 = vmatprep.subr.bf16.mxu0 0
        %5457 = vmatpush1.bf16.msra.mxu0 %v4298
        %5458 = vmatprep.subr.bf16.mxu0 0
        %5459 = vmatpush1.bf16.msra.mxu0 %v4299
        %5460 = vmatprep.subr.bf16.mxu0 0
        %5461 = vmatpush1.bf16.msra.mxu0 %v4300
        %5462 = vmatprep.subr.bf16.mxu0 0
        %5463 = vmatpush1.bf16.msra.mxu0 %v4301
        %5464 = vmatprep.subr.bf16.mxu0 0
        %5465 = vmatpush1.bf16.msra.mxu0 %v4302
        %5466 = vmatprep.subr.bf16.mxu0 0
        %5467 = vmatpush1.bf16.msra.mxu0 %v4303
        %5468 = vmatprep.subr.bf16.mxu0 0
        %5469 = vmatpush1.bf16.msra.mxu0 %v4304
        %5470 = vmatprep.subr.bf16.mxu0 0
        %5471 = vmatpush1.bf16.msra.mxu0 %v4305
        %5472 = vmatprep.subr.bf16.mxu0 0
        %5473 = vmatpush1.bf16.msra.mxu0 %v4306
        %5474 = vmatprep.subr.bf16.mxu0 0
        %5475 = vmatpush1.bf16.msra.mxu0 %v4307
        %5476 = vmatprep.mubr.bf16.mxu0 %v1845
        %5477 = vmatmul.mubr.bf16.gmra.mrb[0].mxu0 %v1844
        %v5478 = vpop.f32.mrb[0].mxu0
        %v5479 = vadd.f32 0.0, %v5478
        %v5480 = vpop.f32.mrb[0].mxu0
        %v5481 = vpop.f32.mrb[0].mxu0
        %v5482 = vadd.f32 0.0, %v5481
        %v5483 = vpop.f32.mrb[0].mxu0
        %5484 = vdwg.mxu0
        %5485 = vmatprep.subr.bf16.mxu0 0
        %5486 = vmatpush1.bf16.msra.mxu0 %v4308
        %5487 = vmatprep.subr.bf16.mxu0 0
        %5488 = vmatpush1.bf16.msra.mxu0 %v4309
        %5489 = vmatprep.subr.bf16.mxu0 0
        %5490 = vmatpush1.bf16.msra.mxu0 %v4310
        %5491 = vmatprep.subr.bf16.mxu0 0
        %5492 = vmatpush1.bf16.msra.mxu0 %v4311
        %5493 = vmatprep.subr.bf16.mxu0 0
        %5494 = vmatpush1.bf16.msra.mxu0 %v4312
        %5495 = vmatprep.subr.bf16.mxu0 0
        %5496 = vmatpush1.bf16.msra.mxu0 %v4313
        %5497 = vmatprep.subr.bf16.mxu0 0
        %5498 = vmatpush1.bf16.msra.mxu0 %v4314
        %5499 = vmatprep.subr.bf16.mxu0 0
        %5500 = vmatpush1.bf16.msra.mxu0 %v4315
        %5501 = vmatprep.subr.bf16.mxu0 0
        %5502 = vmatpush1.bf16.msra.mxu0 %v4316
        %5503 = vmatprep.subr.bf16.mxu0 0
        %5504 = vmatpush1.bf16.msra.mxu0 %v4317
        %5505 = vmatprep.subr.bf16.mxu0 0
        %5506 = vmatpush1.bf16.msra.mxu0 %v4318
        %5507 = vmatprep.subr.bf16.mxu0 0
        %5508 = vmatpush1.bf16.msra.mxu0 %v4319
        %5509 = vmatprep.subr.bf16.mxu0 0
        %5510 = vmatpush1.bf16.msra.mxu0 %v4320
        %5511 = vmatprep.subr.bf16.mxu0 0
        %5512 = vmatpush1.bf16.msra.mxu0 %v4321
        %5513 = vmatprep.subr.bf16.mxu0 0
        %5514 = vmatpush1.bf16.msra.mxu0 %v4322
        %5515 = vmatprep.subr.bf16.mxu0 0
        %5516 = vmatpush1.bf16.msra.mxu0 %v4323
        %5517 = vmatprep.mubr.bf16.mxu0 %v1847
        %5518 = vmatmul.mubr.bf16.gmra.mrb[0].mxu0 %v1846
        %v5519 = vpop.f32.mrb[0].mxu0
        %v5520 = vadd.f32 %v5479, %v5519
        %v5521 = vpop.f32.mrb[0].mxu0
        %v5522 = vpop.f32.mrb[0].mxu0
        %v5523 = vadd.f32 %v5482, %v5522
        %v5524 = vpop.f32.mrb[0].mxu0
        %5525 = vdwg.mxu0
        %5526 = vmatprep.subr.bf16.mxu0 0
        %5527 = vmatpush1.bf16.msra.mxu0 %v4324
        %5528 = vmatprep.subr.bf16.mxu0 0
        %5529 = vmatpush1.bf16.msra.mxu0 %v4325
        %5530 = vmatprep.subr.bf16.mxu0 0
        %5531 = vmatpush1.bf16.msra.mxu0 %v4326
        %5532 = vmatprep.subr.bf16.mxu0 0
        %5533 = vmatpush1.bf16.msra.mxu0 %v4327
        %5534 = vmatprep.subr.bf16.mxu0 0
        %5535 = vmatpush1.bf16.msra.mxu0 %v4328
        %5536 = vmatprep.subr.bf16.mxu0 0
        %5537 = vmatpush1.bf16.msra.mxu0 %v4329
        %5538 = vmatprep.subr.bf16.mxu0 0
        %5539 = vmatpush1.bf16.msra.mxu0 %v4330
        %5540 = vmatprep.subr.bf16.mxu0 0
        %5541 = vmatpush1.bf16.msra.mxu0 %v4331
        %5542 = vmatprep.subr.bf16.mxu0 0
        %5543 = vmatpush1.bf16.msra.mxu0 %v4332
        %5544 = vmatprep.subr.bf16.mxu0 0
        %5545 = vmatpush1.bf16.msra.mxu0 %v4333
        %5546 = vmatprep.subr.bf16.mxu0 0
        %5547 = vmatpush1.bf16.msra.mxu0 %v4334
        %5548 = vmatprep.subr.bf16.mxu0 0
        %5549 = vmatpush1.bf16.msra.mxu0 %v4335
        %5550 = vmatprep.subr.bf16.mxu0 0
        %5551 = vmatpush1.bf16.msra.mxu0 %v4336
        %5552 = vmatprep.subr.bf16.mxu0 0
        %5553 = vmatpush1.bf16.msra.mxu0 %v4337
        %5554 = vmatprep.subr.bf16.mxu0 0
        %5555 = vmatpush1.bf16.msra.mxu0 %v4338
        %5556 = vmatprep.subr.bf16.mxu0 0
        %5557 = vmatpush1.bf16.msra.mxu0 %v4339
        %5558 = vmatprep.mubr.bf16.mxu0 %v1849
        %5559 = vmatmul.mubr.bf16.gmra.mrb[0].mxu0 %v1848
        %v5560 = vpop.f32.mrb[0].mxu0
        %v5561 = vadd.f32 %v5520, %v5560
        %v5562 = vpop.f32.mrb[0].mxu0
        %v5563 = vpop.f32.mrb[0].mxu0
        %v5564 = vadd.f32 %v5523, %v5563
        %v5565 = vpop.f32.mrb[0].mxu0
        %5566 = vdwg.mxu0
        %5567 = vmatprep.subr.bf16.mxu0 0
        %5568 = vmatpush1.bf16.msra.mxu0 %v4340
        %5569 = vmatprep.subr.bf16.mxu0 0
        %5570 = vmatpush1.bf16.msra.mxu0 %v4341
        %5571 = vmatprep.subr.bf16.mxu0 0
        %5572 = vmatpush1.bf16.msra.mxu0 %v4342
        %5573 = vmatprep.subr.bf16.mxu0 0
        %5574 = vmatpush1.bf16.msra.mxu0 %v4343
        %5575 = vmatprep.subr.bf16.mxu0 0
        %5576 = vmatpush1.bf16.msra.mxu0 %v4344
        %5577 = vmatprep.subr.bf16.mxu0 0
        %5578 = vmatpush1.bf16.msra.mxu0 %v4345
        %5579 = vmatprep.subr.bf16.mxu0 0
        %5580 = vmatpush1.bf16.msra.mxu0 %v4346
        %5581 = vmatprep.subr.bf16.mxu0 0
        %5582 = vmatpush1.bf16.msra.mxu0 %v4347
        %5583 = vmatprep.subr.bf16.mxu0 0
        %5584 = vmatpush1.bf16.msra.mxu0 %v4348
        %5585 = vmatprep.subr.bf16.mxu0 0
        %5586 = vmatpush1.bf16.msra.mxu0 %v4349
        %5587 = vmatprep.subr.bf16.mxu0 0
        %5588 = vmatpush1.bf16.msra.mxu0 %v4350
        %5589 = vmatprep.subr.bf16.mxu0 0
        %5590 = vmatpush1.bf16.msra.mxu0 %v4351
        %5591 = vmatprep.subr.bf16.mxu0 0
        %5592 = vmatpush1.bf16.msra.mxu0 %v4352
        %5593 = vmatprep.subr.bf16.mxu0 0
        %5594 = vmatpush1.bf16.msra.mxu0 %v4353
        %5595 = vmatprep.subr.bf16.mxu0 0
        %5596 = vmatpush1.bf16.msra.mxu0 %v4354
        %5597 = vmatprep.subr.bf16.mxu0 0
        %5598 = vmatpush1.bf16.msra.mxu0 %v4355
        %5599 = vmatprep.mubr.bf16.mxu0 %v1851
        %5600 = vmatmul.mubr.bf16.gmra.mrb[0].mxu0 %v1850
        %v5601 = vpop.f32.mrb[0].mxu0
        %v5602 = vadd.f32 %v5561, %v5601
        %v5603 = vpop.f32.mrb[0].mxu0
        %v5604 = vpop.f32.mrb[0].mxu0
        %v5605 = vadd.f32 %v5564, %v5604
        %v5606 = vpop.f32.mrb[0].mxu0
        %5607 = vdwg.mxu0
        %5608 = vmatprep.subr.bf16.mxu0 0
        %5609 = vmatpush1.bf16.msra.mxu0 %v4356
        %5610 = vmatprep.subr.bf16.mxu0 0
        %5611 = vmatpush1.bf16.msra.mxu0 %v4357
        %5612 = vmatprep.subr.bf16.mxu0 0
        %5613 = vmatpush1.bf16.msra.mxu0 %v4358
        %5614 = vmatprep.subr.bf16.mxu0 0
        %5615 = vmatpush1.bf16.msra.mxu0 %v4359
        %5616 = vmatprep.subr.bf16.mxu0 0
        %5617 = vmatpush1.bf16.msra.mxu0 %v4360
        %5618 = vmatprep.subr.bf16.mxu0 0
        %5619 = vmatpush1.bf16.msra.mxu0 %v4361
        %5620 = vmatprep.subr.bf16.mxu0 0
        %5621 = vmatpush1.bf16.msra.mxu0 %v4362
        %5622 = vmatprep.subr.bf16.mxu0 0
        %5623 = vmatpush1.bf16.msra.mxu0 %v4363
        %5624 = vmatprep.subr.bf16.mxu0 0
        %5625 = vmatpush1.bf16.msra.mxu0 %v4364
        %5626 = vmatprep.subr.bf16.mxu0 0
        %5627 = vmatpush1.bf16.msra.mxu0 %v4365
        %5628 = vmatprep.subr.bf16.mxu0 0
        %5629 = vmatpush1.bf16.msra.mxu0 %v4366
        %5630 = vmatprep.subr.bf16.mxu0 0
        %5631 = vmatpush1.bf16.msra.mxu0 %v4367
        %5632 = vmatprep.subr.bf16.mxu0 0
        %5633 = vmatpush1.bf16.msra.mxu0 %v4368
        %5634 = vmatprep.subr.bf16.mxu0 0
        %5635 = vmatpush1.bf16.msra.mxu0 %v4369
        %5636 = vmatprep.subr.bf16.mxu0 0
        %5637 = vmatpush1.bf16.msra.mxu0 %v4370
        %5638 = vmatprep.subr.bf16.mxu0 0
        %5639 = vmatpush1.bf16.msra.mxu0 %v4371
        %5640 = vmatprep.mubr.bf16.mxu0 %v1853
        %5641 = vmatmul.mubr.bf16.gmra.mrb[0].mxu0 %v1852
        %v5642 = vpop.f32.mrb[0].mxu0
        %v5643 = vadd.f32 %v5602, %v5642
        %v5644 = vpop.f32.mrb[0].mxu0
        %v5645 = vpop.f32.mrb[0].mxu0
        %v5646 = vadd.f32 %v5605, %v5645
        %v5647 = vpop.f32.mrb[0].mxu0
        %5648 = vdwg.mxu0
        %5649 = vmatprep.subr.bf16.mxu0 0
        %5650 = vmatpush1.bf16.msra.mxu0 %v4372
        %5651 = vmatprep.subr.bf16.mxu0 0
        %5652 = vmatpush1.bf16.msra.mxu0 %v4373
        %5653 = vmatprep.subr.bf16.mxu0 0
        %5654 = vmatpush1.bf16.msra.mxu0 %v4374
        %5655 = vmatprep.subr.bf16.mxu0 0
        %5656 = vmatpush1.bf16.msra.mxu0 %v4375
        %5657 = vmatprep.subr.bf16.mxu0 0
        %5658 = vmatpush1.bf16.msra.mxu0 %v4376
        %5659 = vmatprep.subr.bf16.mxu0 0
        %5660 = vmatpush1.bf16.msra.mxu0 %v4377
        %5661 = vmatprep.subr.bf16.mxu0 0
        %5662 = vmatpush1.bf16.msra.mxu0 %v4378
        %5663 = vmatprep.subr.bf16.mxu0 0
        %5664 = vmatpush1.bf16.msra.mxu0 %v4379
        %5665 = vmatprep.subr.bf16.mxu0 0
        %5666 = vmatpush1.bf16.msra.mxu0 %v4380
        %5667 = vmatprep.subr.bf16.mxu0 0
        %5668 = vmatpush1.bf16.msra.mxu0 %v4381
        %5669 = vmatprep.subr.bf16.mxu0 0
        %5670 = vmatpush1.bf16.msra.mxu0 %v4382
        %5671 = vmatprep.subr.bf16.mxu0 0
        %5672 = vmatpush1.bf16.msra.mxu0 %v4383
        %5673 = vmatprep.subr.bf16.mxu0 0
        %5674 = vmatpush1.bf16.msra.mxu0 %v4384
        %5675 = vmatprep.subr.bf16.mxu0 0
        %5676 = vmatpush1.bf16.msra.mxu0 %v4385
        %5677 = vmatprep.subr.bf16.mxu0 0
        %5678 = vmatpush1.bf16.msra.mxu0 %v4386
        %5679 = vmatprep.subr.bf16.mxu0 0
        %5680 = vmatpush1.bf16.msra.mxu0 %v4387
        %5681 = vmatprep.mubr.bf16.mxu0 %v1855
        %5682 = vmatmul.mubr.bf16.gmra.mrb[0].mxu0 %v1854
        %v5683 = vpop.f32.mrb[0].mxu0
        %v5684 = vadd.f32 %v5643, %v5683
        %v5685 = vpop.f32.mrb[0].mxu0
        %v5686 = vpop.f32.mrb[0].mxu0
        %v5687 = vadd.f32 %v5646, %v5686
        %v5688 = vpop.f32.mrb[0].mxu0
        %5689 = vdwg.mxu0
        %5690 = vmatprep.subr.bf16.mxu0 0
        %5691 = vmatpush1.bf16.msra.mxu0 %v4388
        %5692 = vmatprep.subr.bf16.mxu0 0
        %5693 = vmatpush1.bf16.msra.mxu0 %v4389
        %5694 = vmatprep.subr.bf16.mxu0 0
        %5695 = vmatpush1.bf16.msra.mxu0 %v4390
        %5696 = vmatprep.subr.bf16.mxu0 0
        %5697 = vmatpush1.bf16.msra.mxu0 %v4391
        %5698 = vmatprep.subr.bf16.mxu0 0
        %5699 = vmatpush1.bf16.msra.mxu0 %v4392
        %5700 = vmatprep.subr.bf16.mxu0 0
        %5701 = vmatpush1.bf16.msra.mxu0 %v4393
        %5702 = vmatprep.subr.bf16.mxu0 0
        %5703 = vmatpush1.bf16.msra.mxu0 %v4394
        %5704 = vmatprep.subr.bf16.mxu0 0
        %5705 = vmatpush1.bf16.msra.mxu0 %v4395
        %5706 = vmatprep.subr.bf16.mxu0 0
        %5707 = vmatpush1.bf16.msra.mxu0 %v4396
        %5708 = vmatprep.subr.bf16.mxu0 0
        %5709 = vmatpush1.bf16.msra.mxu0 %v4397
        %5710 = vmatprep.subr.bf16.mxu0 0
        %5711 = vmatpush1.bf16.msra.mxu0 %v4398
        %5712 = vmatprep.subr.bf16.mxu0 0
        %5713 = vmatpush1.bf16.msra.mxu0 %v4399
        %5714 = vmatprep.subr.bf16.mxu0 0
        %5715 = vmatpush1.bf16.msra.mxu0 %v4400
        %5716 = vmatprep.subr.bf16.mxu0 0
        %5717 = vmatpush1.bf16.msra.mxu0 %v4401
        %5718 = vmatprep.subr.bf16.mxu0 0
        %5719 = vmatpush1.bf16.msra.mxu0 %v4402
        %5720 = vmatprep.subr.bf16.mxu0 0
        %5721 = vmatpush1.bf16.msra.mxu0 %v4403
        %5722 = vmatprep.mubr.bf16.mxu0 %v1857
        %5723 = vmatmul.mubr.bf16.gmra.mrb[0].mxu0 %v1856
        %v5724 = vpop.f32.mrb[0].mxu0
        %v5725 = vadd.f32 %v5684, %v5724
        %v5726 = vpop.f32.mrb[0].mxu0
        %v5727 = vpop.f32.mrb[0].mxu0
        %v5728 = vadd.f32 %v5687, %v5727
        %v5729 = vpop.f32.mrb[0].mxu0
        %5730 = vdwg.mxu0
        %5731 = vmatprep.subr.bf16.mxu0 0
        %5732 = vmatpush1.bf16.msra.mxu0 %v4404
        %5733 = vmatprep.subr.bf16.mxu0 0
        %5734 = vmatpush1.bf16.msra.mxu0 %v4405
        %5735 = vmatprep.subr.bf16.mxu0 0
        %5736 = vmatpush1.bf16.msra.mxu0 %v4406
        %5737 = vmatprep.subr.bf16.mxu0 0
        %5738 = vmatpush1.bf16.msra.mxu0 %v4407
        %5739 = vmatprep.subr.bf16.mxu0 0
        %5740 = vmatpush1.bf16.msra.mxu0 %v4408
        %5741 = vmatprep.subr.bf16.mxu0 0
        %5742 = vmatpush1.bf16.msra.mxu0 %v4409
        %5743 = vmatprep.subr.bf16.mxu0 0
        %5744 = vmatpush1.bf16.msra.mxu0 %v4410
        %5745 = vmatprep.subr.bf16.mxu0 0
        %5746 = vmatpush1.bf16.msra.mxu0 %v4411
        %5747 = vmatprep.subr.bf16.mxu0 0
        %5748 = vmatpush1.bf16.msra.mxu0 %v4412
        %5749 = vmatprep.subr.bf16.mxu0 0
        %5750 = vmatpush1.bf16.msra.mxu0 %v4413
        %5751 = vmatprep.subr.bf16.mxu0 0
        %5752 = vmatpush1.bf16.msra.mxu0 %v4414
        %5753 = vmatprep.subr.bf16.mxu0 0
        %5754 = vmatpush1.bf16.msra.mxu0 %v4415
        %5755 = vmatprep.subr.bf16.mxu0 0
        %5756 = vmatpush1.bf16.msra.mxu0 %v4416
        %5757 = vmatprep.subr.bf16.mxu0 0
        %5758 = vmatpush1.bf16.msra.mxu0 %v4417
        %5759 = vmatprep.subr.bf16.mxu0 0
        %5760 = vmatpush1.bf16.msra.mxu0 %v4418
        %5761 = vmatprep.subr.bf16.mxu0 0
        %5762 = vmatpush1.bf16.msra.mxu0 %v4419
        %5763 = vmatprep.mubr.bf16.mxu0 %v1859
        %5764 = vmatmul.mubr.bf16.gmra.mrb[0].mxu0 %v1858
        %v5765 = vpop.f32.mrb[0].mxu0
        %v5766 = vadd.f32 %v5725, %v5765
        %v5767 = vpop.f32.mrb[0].mxu0
        %v5768 = vpop.f32.mrb[0].mxu0
        %v5769 = vadd.f32 %v5728, %v5768
        %v5770 = vpop.f32.mrb[0].mxu0
        %5771 = vdwg.mxu0
        %5772 = vmatprep.subr.bf16.mxu0 0
        %5773 = vmatpush1.bf16.msra.mxu0 %v4420
        %5774 = vmatprep.subr.bf16.mxu0 0
        %5775 = vmatpush1.bf16.msra.mxu0 %v4421
        %5776 = vmatprep.subr.bf16.mxu0 0
        %5777 = vmatpush1.bf16.msra.mxu0 %v4422
        %5778 = vmatprep.subr.bf16.mxu0 0
        %5779 = vmatpush1.bf16.msra.mxu0 %v4423
        %5780 = vmatprep.subr.bf16.mxu0 0
        %5781 = vmatpush1.bf16.msra.mxu0 %v4424
        %5782 = vmatprep.subr.bf16.mxu0 0
        %5783 = vmatpush1.bf16.msra.mxu0 %v4425
        %5784 = vmatprep.subr.bf16.mxu0 0
        %5785 = vmatpush1.bf16.msra.mxu0 %v4426
        %5786 = vmatprep.subr.bf16.mxu0 0
        %5787 = vmatpush1.bf16.msra.mxu0 %v4427
        %5788 = vmatprep.subr.bf16.mxu0 0
        %5789 = vmatpush1.bf16.msra.mxu0 %v4428
        %5790 = vmatprep.subr.bf16.mxu0 0
        %5791 = vmatpush1.bf16.msra.mxu0 %v4429
        %5792 = vmatprep.subr.bf16.mxu0 0
        %5793 = vmatpush1.bf16.msra.mxu0 %v4430
        %5794 = vmatprep.subr.bf16.mxu0 0
        %5795 = vmatpush1.bf16.msra.mxu0 %v4431
        %5796 = vmatprep.subr.bf16.mxu0 0
        %5797 = vmatpush1.bf16.msra.mxu0 %v4432
        %5798 = vmatprep.subr.bf16.mxu0 0
        %5799 = vmatpush1.bf16.msra.mxu0 %v4433
        %5800 = vmatprep.subr.bf16.mxu0 0
        %5801 = vmatpush1.bf16.msra.mxu0 %v4434
        %5802 = vmatprep.subr.bf16.mxu0 0
        %5803 = vmatpush1.bf16.msra.mxu0 %v4435
        %5804 = vmatprep.mubr.bf16.mxu0 %v1861
        %5805 = vmatmul.mubr.bf16.gmra.mrb[0].mxu0 %v1860
        %v5806 = vpop.f32.mrb[0].mxu0
        %v5807 = vadd.f32 %v5766, %v5806
        %v5808 = vpop.f32.mrb[0].mxu0
        %v5809 = vpop.f32.mrb[0].mxu0
        %v5810 = vadd.f32 %v5769, %v5809
        %v5811 = vpop.f32.mrb[0].mxu0
        %5812 = vdwg.mxu0
        %5813 = vmatprep.subr.bf16.mxu0 0
        %5814 = vmatpush1.bf16.msra.mxu0 %v4436
        %5815 = vmatprep.subr.bf16.mxu0 0
        %5816 = vmatpush1.bf16.msra.mxu0 %v4437
        %5817 = vmatprep.subr.bf16.mxu0 0
        %5818 = vmatpush1.bf16.msra.mxu0 %v4438
        %5819 = vmatprep.subr.bf16.mxu0 0
        %5820 = vmatpush1.bf16.msra.mxu0 %v4439
        %5821 = vmatprep.subr.bf16.mxu0 0
        %5822 = vmatpush1.bf16.msra.mxu0 %v4440
        %5823 = vmatprep.subr.bf16.mxu0 0
        %5824 = vmatpush1.bf16.msra.mxu0 %v4441
        %5825 = vmatprep.subr.bf16.mxu0 0
        %5826 = vmatpush1.bf16.msra.mxu0 %v4442
        %5827 = vmatprep.subr.bf16.mxu0 0
        %5828 = vmatpush1.bf16.msra.mxu0 %v4443
        %5829 = vmatprep.subr.bf16.mxu0 0
        %5830 = vmatpush1.bf16.msra.mxu0 %v4444
        %5831 = vmatprep.subr.bf16.mxu0 0
        %5832 = vmatpush1.bf16.msra.mxu0 %v4445
        %5833 = vmatprep.subr.bf16.mxu0 0
        %5834 = vmatpush1.bf16.msra.mxu0 %v4446
        %5835 = vmatprep.subr.bf16.mxu0 0
        %5836 = vmatpush1.bf16.msra.mxu0 %v4447
        %5837 = vmatprep.subr.bf16.mxu0 0
        %5838 = vmatpush1.bf16.msra.mxu0 %v4448
        %5839 = vmatprep.subr.bf16.mxu0 0
        %5840 = vmatpush1.bf16.msra.mxu0 %v4449
        %5841 = vmatprep.subr.bf16.mxu0 0
        %5842 = vmatpush1.bf16.msra.mxu0 %v4450
        %5843 = vmatprep.subr.bf16.mxu0 0
        %5844 = vmatpush1.bf16.msra.mxu0 %v4451
        %5845 = vmatprep.mubr.bf16.mxu0 %v1863
        %5846 = vmatmul.mubr.bf16.gmra.mrb[0].mxu0 %v1862
        %v5847 = vpop.f32.mrb[0].mxu0
        %v5848 = vadd.f32 %v5807, %v5847
        %v5849 = vpop.f32.mrb[0].mxu0
        %v5850 = vpop.f32.mrb[0].mxu0
        %v5851 = vadd.f32 %v5810, %v5850
        %v5852 = vpop.f32.mrb[0].mxu0
        %5853 = vdwg.mxu0
        %5854 = vmatprep.subr.bf16.mxu0 0
        %5855 = vmatpush1.bf16.msra.mxu0 %v4452
        %5856 = vmatprep.subr.bf16.mxu0 0
        %5857 = vmatpush1.bf16.msra.mxu0 %v4453
        %5858 = vmatprep.subr.bf16.mxu0 0
        %5859 = vmatpush1.bf16.msra.mxu0 %v4454
        %5860 = vmatprep.subr.bf16.mxu0 0
        %5861 = vmatpush1.bf16.msra.mxu0 %v4455
        %5862 = vmatprep.subr.bf16.mxu0 0
        %5863 = vmatpush1.bf16.msra.mxu0 %v4456
        %5864 = vmatprep.subr.bf16.mxu0 0
        %5865 = vmatpush1.bf16.msra.mxu0 %v4457
        %5866 = vmatprep.subr.bf16.mxu0 0
        %5867 = vmatpush1.bf16.msra.mxu0 %v4458
        %5868 = vmatprep.subr.bf16.mxu0 0
        %5869 = vmatpush1.bf16.msra.mxu0 %v4459
        %5870 = vmatprep.subr.bf16.mxu0 0
        %5871 = vmatpush1.bf16.msra.mxu0 %v4460
        %5872 = vmatprep.subr.bf16.mxu0 0
        %5873 = vmatpush1.bf16.msra.mxu0 %v4461
        %5874 = vmatprep.subr.bf16.mxu0 0
        %5875 = vmatpush1.bf16.msra.mxu0 %v4462
        %5876 = vmatprep.subr.bf16.mxu0 0
        %5877 = vmatpush1.bf16.msra.mxu0 %v4463
        %5878 = vmatprep.subr.bf16.mxu0 0
        %5879 = vmatpush1.bf16.msra.mxu0 %v4464
        %5880 = vmatprep.subr.bf16.mxu0 0
        %5881 = vmatpush1.bf16.msra.mxu0 %v4465
        %5882 = vmatprep.subr.bf16.mxu0 0
        %5883 = vmatpush1.bf16.msra.mxu0 %v4466
        %5884 = vmatprep.subr.bf16.mxu0 0
        %5885 = vmatpush1.bf16.msra.mxu0 %v4467
        %5886 = vmatprep.mubr.bf16.mxu0 %v1865
        %5887 = vmatmul.mubr.bf16.gmra.mrb[0].mxu0 %v1864
        %v5888 = vpop.f32.mrb[0].mxu0
        %v5889 = vadd.f32 %v5848, %v5888
        %v5890 = vpop.f32.mrb[0].mxu0
        %v5891 = vpop.f32.mrb[0].mxu0
        %v5892 = vadd.f32 %v5851, %v5891
        %v5893 = vpop.f32.mrb[0].mxu0
        %5894 = vdwg.mxu0
        %5895 = vmatprep.subr.bf16.mxu0 0
        %5896 = vmatpush1.bf16.msra.mxu0 %v4468
        %5897 = vmatprep.subr.bf16.mxu0 0
        %5898 = vmatpush1.bf16.msra.mxu0 %v4469
        %5899 = vmatprep.subr.bf16.mxu0 0
        %5900 = vmatpush1.bf16.msra.mxu0 %v4470
        %5901 = vmatprep.subr.bf16.mxu0 0
        %5902 = vmatpush1.bf16.msra.mxu0 %v4471
        %5903 = vmatprep.subr.bf16.mxu0 0
        %5904 = vmatpush1.bf16.msra.mxu0 %v4472
        %5905 = vmatprep.subr.bf16.mxu0 0
        %5906 = vmatpush1.bf16.msra.mxu0 %v4473
        %5907 = vmatprep.subr.bf16.mxu0 0
        %5908 = vmatpush1.bf16.msra.mxu0 %v4474
        %5909 = vmatprep.subr.bf16.mxu0 0
        %5910 = vmatpush1.bf16.msra.mxu0 %v4475
        %5911 = vmatprep.subr.bf16.mxu0 0
        %5912 = vmatpush1.bf16.msra.mxu0 %v4476
        %5913 = vmatprep.subr.bf16.mxu0 0
        %5914 = vmatpush1.bf16.msra.mxu0 %v4477
        %5915 = vmatprep.subr.bf16.mxu0 0
        %5916 = vmatpush1.bf16.msra.mxu0 %v4478
        %5917 = vmatprep.subr.bf16.mxu0 0
        %5918 = vmatpush1.bf16.msra.mxu0 %v4479
        %5919 = vmatprep.subr.bf16.mxu0 0
        %5920 = vmatpush1.bf16.msra.mxu0 %v4480
        %5921 = vmatprep.subr.bf16.mxu0 0
        %5922 = vmatpush1.bf16.msra.mxu0 %v4481
        %5923 = vmatprep.subr.bf16.mxu0 0
        %5924 = vmatpush1.bf16.msra.mxu0 %v4482
        %5925 = vmatprep.subr.bf16.mxu0 0
        %5926 = vmatpush1.bf16.msra.mxu0 %v4483
        %5927 = vmatprep.mubr.bf16.mxu0 %v1867
        %5928 = vmatmul.mubr.bf16.gmra.mrb[0].mxu0 %v1866
        %v5929 = vpop.f32.mrb[0].mxu0
        %v5930 = vadd.f32 %v5889, %v5929
        %v5931 = vpop.f32.mrb[0].mxu0
        %v5932 = vpop.f32.mrb[0].mxu0
        %v5933 = vadd.f32 %v5892, %v5932
        %v5934 = vpop.f32.mrb[0].mxu0
        %5935 = vdwg.mxu0
        %5936 = vmatprep.subr.bf16.mxu0 0
        %5937 = vmatpush1.bf16.msra.mxu0 %v4484
        %5938 = vmatprep.subr.bf16.mxu0 0
        %5939 = vmatpush1.bf16.msra.mxu0 %v4485
        %5940 = vmatprep.subr.bf16.mxu0 0
        %5941 = vmatpush1.bf16.msra.mxu0 %v4486
        %5942 = vmatprep.subr.bf16.mxu0 0
        %5943 = vmatpush1.bf16.msra.mxu0 %v4487
        %5944 = vmatprep.subr.bf16.mxu0 0
        %5945 = vmatpush1.bf16.msra.mxu0 %v4488
        %5946 = vmatprep.subr.bf16.mxu0 0
        %5947 = vmatpush1.bf16.msra.mxu0 %v4489
        %5948 = vmatprep.subr.bf16.mxu0 0
        %5949 = vmatpush1.bf16.msra.mxu0 %v4490
        %5950 = vmatprep.subr.bf16.mxu0 0
        %5951 = vmatpush1.bf16.msra.mxu0 %v4491
        %5952 = vmatprep.subr.bf16.mxu0 0
        %5953 = vmatpush1.bf16.msra.mxu0 %v4492
        %5954 = vmatprep.subr.bf16.mxu0 0
        %5955 = vmatpush1.bf16.msra.mxu0 %v4493
        %5956 = vmatprep.subr.bf16.mxu0 0
        %5957 = vmatpush1.bf16.msra.mxu0 %v4494
        %5958 = vmatprep.subr.bf16.mxu0 0
        %5959 = vmatpush1.bf16.msra.mxu0 %v4495
        %5960 = vmatprep.subr.bf16.mxu0 0
        %5961 = vmatpush1.bf16.msra.mxu0 %v4496
        %5962 = vmatprep.subr.bf16.mxu0 0
        %5963 = vmatpush1.bf16.msra.mxu0 %v4497
        %5964 = vmatprep.subr.bf16.mxu0 0
        %5965 = vmatpush1.bf16.msra.mxu0 %v4498
        %5966 = vmatprep.subr.bf16.mxu0 0
        %5967 = vmatpush1.bf16.msra.mxu0 %v4499
        %5968 = vmatprep.mubr.bf16.mxu0 %v1869
        %5969 = vmatmul.mubr.bf16.gmra.mrb[0].mxu0 %v1868
        %v5970 = vpop.f32.mrb[0].mxu0
        %v5971 = vadd.f32 %v5930, %v5970
        %v5972 = vpop.f32.mrb[0].mxu0
        %v5973 = vpop.f32.mrb[0].mxu0
        %v5974 = vadd.f32 %v5933, %v5973
        %v5975 = vpop.f32.mrb[0].mxu0
        %5976 = vdwg.mxu0
        %5977 = vmatprep.subr.bf16.mxu0 0
        %5978 = vmatpush1.bf16.msra.mxu0 %v4500
        %5979 = vmatprep.subr.bf16.mxu0 0
        %5980 = vmatpush1.bf16.msra.mxu0 %v4501
        %5981 = vmatprep.subr.bf16.mxu0 0
        %5982 = vmatpush1.bf16.msra.mxu0 %v4502
        %5983 = vmatprep.subr.bf16.mxu0 0
        %5984 = vmatpush1.bf16.msra.mxu0 %v4503
        %5985 = vmatprep.subr.bf16.mxu0 0
        %5986 = vmatpush1.bf16.msra.mxu0 %v4504
        %5987 = vmatprep.subr.bf16.mxu0 0
        %5988 = vmatpush1.bf16.msra.mxu0 %v4505
        %5989 = vmatprep.subr.bf16.mxu0 0
        %5990 = vmatpush1.bf16.msra.mxu0 %v4506
        %5991 = vmatprep.subr.bf16.mxu0 0
        %5992 = vmatpush1.bf16.msra.mxu0 %v4507
        %5993 = vmatprep.subr.bf16.mxu0 0
        %5994 = vmatpush1.bf16.msra.mxu0 %v4508
        %5995 = vmatprep.subr.bf16.mxu0 0
        %5996 = vmatpush1.bf16.msra.mxu0 %v4509
        %5997 = vmatprep.subr.bf16.mxu0 0
        %5998 = vmatpush1.bf16.msra.mxu0 %v4510
        %5999 = vmatprep.subr.bf16.mxu0 0
        %6000 = vmatpush1.bf16.msra.mxu0 %v4511
        %6001 = vmatprep.subr.bf16.mxu0 0
        %6002 = vmatpush1.bf16.msra.mxu0 %v4512
        %6003 = vmatprep.subr.bf16.mxu0 0
        %6004 = vmatpush1.bf16.msra.mxu0 %v4513
        %6005 = vmatprep.subr.bf16.mxu0 0
        %6006 = vmatpush1.bf16.msra.mxu0 %v4514
        %6007 = vmatprep.subr.bf16.mxu0 0
        %6008 = vmatpush1.bf16.msra.mxu0 %v4515
        %6009 = vmatprep.mubr.bf16.mxu0 %v1871
        %6010 = vmatmul.mubr.bf16.gmra.mrb[0].mxu0 %v1870
        %v6011 = vpop.f32.mrb[0].mxu0
        %v6012 = vadd.f32 %v5971, %v6011
        %v6013 = vpop.f32.mrb[0].mxu0
        %v6014 = vpop.f32.mrb[0].mxu0
        %v6015 = vadd.f32 %v5974, %v6014
        %v6016 = vpop.f32.mrb[0].mxu0
        %6017 = vdwg.mxu0
        %6018 = vmatprep.subr.bf16.mxu0 0
        %6019 = vmatpush1.bf16.msra.mxu0 %v4516
        %6020 = vmatprep.subr.bf16.mxu0 0
        %6021 = vmatpush1.bf16.msra.mxu0 %v4517
        %6022 = vmatprep.subr.bf16.mxu0 0
        %6023 = vmatpush1.bf16.msra.mxu0 %v4518
        %6024 = vmatprep.subr.bf16.mxu0 0
        %6025 = vmatpush1.bf16.msra.mxu0 %v4519
        %6026 = vmatprep.subr.bf16.mxu0 0
        %6027 = vmatpush1.bf16.msra.mxu0 %v4520
        %6028 = vmatprep.subr.bf16.mxu0 0
        %6029 = vmatpush1.bf16.msra.mxu0 %v4521
        %6030 = vmatprep.subr.bf16.mxu0 0
        %6031 = vmatpush1.bf16.msra.mxu0 %v4522
        %6032 = vmatprep.subr.bf16.mxu0 0
        %6033 = vmatpush1.bf16.msra.mxu0 %v4523
        %6034 = vmatprep.subr.bf16.mxu0 0
        %6035 = vmatpush1.bf16.msra.mxu0 %v4524
        %6036 = vmatprep.subr.bf16.mxu0 0
        %6037 = vmatpush1.bf16.msra.mxu0 %v4525
        %6038 = vmatprep.subr.bf16.mxu0 0
        %6039 = vmatpush1.bf16.msra.mxu0 %v4526
        %6040 = vmatprep.subr.bf16.mxu0 0
        %6041 = vmatpush1.bf16.msra.mxu0 %v4527
        %6042 = vmatprep.subr.bf16.mxu0 0
        %6043 = vmatpush1.bf16.msra.mxu0 %v4528
        %6044 = vmatprep.subr.bf16.mxu0 0
        %6045 = vmatpush1.bf16.msra.mxu0 %v4529
        %6046 = vmatprep.subr.bf16.mxu0 0
        %6047 = vmatpush1.bf16.msra.mxu0 %v4530
        %6048 = vmatprep.subr.bf16.mxu0 0
        %6049 = vmatpush1.bf16.msra.mxu0 %v4531
        %6050 = vmatprep.mubr.bf16.mxu0 %v1873
        %6051 = vmatmul.mubr.bf16.gmra.mrb[0].mxu0 %v1872
        %v6052 = vpop.f32.mrb[0].mxu0
        %v6053 = vadd.f32 %v6012, %v6052
        %v6054 = vpop.f32.mrb[0].mxu0
        %v6055 = vpop.f32.mrb[0].mxu0
        %v6056 = vadd.f32 %v6015, %v6055
        %v6057 = vpop.f32.mrb[0].mxu0
        %6058 = vdwg.mxu0
        %6059 = vmatprep.subr.bf16.mxu0 0
        %6060 = vmatpush1.bf16.msra.mxu0 %v4532
        %6061 = vmatprep.subr.bf16.mxu0 0
        %6062 = vmatpush1.bf16.msra.mxu0 %v4533
        %6063 = vmatprep.subr.bf16.mxu0 0
        %6064 = vmatpush1.bf16.msra.mxu0 %v4534
        %6065 = vmatprep.subr.bf16.mxu0 0
        %6066 = vmatpush1.bf16.msra.mxu0 %v4535
        %6067 = vmatprep.subr.bf16.mxu0 0
        %6068 = vmatpush1.bf16.msra.mxu0 %v4536
        %6069 = vmatprep.subr.bf16.mxu0 0
        %6070 = vmatpush1.bf16.msra.mxu0 %v4537
        %6071 = vmatprep.subr.bf16.mxu0 0
        %6072 = vmatpush1.bf16.msra.mxu0 %v4538
        %6073 = vmatprep.subr.bf16.mxu0 0
        %6074 = vmatpush1.bf16.msra.mxu0 %v4539
        %6075 = vmatprep.subr.bf16.mxu0 0
        %6076 = vmatpush1.bf16.msra.mxu0 %v4540
        %6077 = vmatprep.subr.bf16.mxu0 0
        %6078 = vmatpush1.bf16.msra.mxu0 %v4541
        %6079 = vmatprep.subr.bf16.mxu0 0
        %6080 = vmatpush1.bf16.msra.mxu0 %v4542
        %6081 = vmatprep.subr.bf16.mxu0 0
        %6082 = vmatpush1.bf16.msra.mxu0 %v4543
        %6083 = vmatprep.subr.bf16.mxu0 0
        %6084 = vmatpush1.bf16.msra.mxu0 %v4544
        %6085 = vmatprep.subr.bf16.mxu0 0
        %6086 = vmatpush1.bf16.msra.mxu0 %v4545
        %6087 = vmatprep.subr.bf16.mxu0 0
        %6088 = vmatpush1.bf16.msra.mxu0 %v4546
        %6089 = vmatprep.subr.bf16.mxu0 0
        %6090 = vmatpush1.bf16.msra.mxu0 %v4547
        %6091 = vmatprep.mubr.bf16.mxu0 %v1875
        %6092 = vmatmul.mubr.bf16.gmra.mrb[0].mxu0 %v1874
        %v6093 = vpop.f32.mrb[0].mxu0
        %v6094 = vadd.f32 %v6053, %v6093
        %v6095 = vpop.f32.mrb[0].mxu0
        %v6096 = vpop.f32.mrb[0].mxu0
        %v6097 = vadd.f32 %v6056, %v6096
        %v6098 = vpop.f32.mrb[0].mxu0
        %6099 = vdwg.mxu0
        %6100 = vmatprep.subr.bf16.mxu0 0
        %6101 = vmatpush1.bf16.msra.mxu0 %v4548
        %6102 = vmatprep.subr.bf16.mxu0 0
        %6103 = vmatpush1.bf16.msra.mxu0 %v4549
        %6104 = vmatprep.subr.bf16.mxu0 0
        %6105 = vmatpush1.bf16.msra.mxu0 %v4550
        %6106 = vmatprep.subr.bf16.mxu0 0
        %6107 = vmatpush1.bf16.msra.mxu0 %v4551
        %6108 = vmatprep.subr.bf16.mxu0 0
        %6109 = vmatpush1.bf16.msra.mxu0 %v4552
        %6110 = vmatprep.subr.bf16.mxu0 0
        %6111 = vmatpush1.bf16.msra.mxu0 %v4553
        %6112 = vmatprep.subr.bf16.mxu0 0
        %6113 = vmatpush1.bf16.msra.mxu0 %v4554
        %6114 = vmatprep.subr.bf16.mxu0 0
        %6115 = vmatpush1.bf16.msra.mxu0 %v4555
        %6116 = vmatprep.subr.bf16.mxu0 0
        %6117 = vmatpush1.bf16.msra.mxu0 %v4556
        %6118 = vmatprep.subr.bf16.mxu0 0
        %6119 = vmatpush1.bf16.msra.mxu0 %v4557
        %6120 = vmatprep.subr.bf16.mxu0 0
        %6121 = vmatpush1.bf16.msra.mxu0 %v4558
        %6122 = vmatprep.subr.bf16.mxu0 0
        %6123 = vmatpush1.bf16.msra.mxu0 %v4559
        %6124 = vmatprep.subr.bf16.mxu0 0
        %6125 = vmatpush1.bf16.msra.mxu0 %v4560
        %6126 = vmatprep.subr.bf16.mxu0 0
        %6127 = vmatpush1.bf16.msra.mxu0 %v4561
        %6128 = vmatprep.subr.bf16.mxu0 0
        %6129 = vmatpush1.bf16.msra.mxu0 %v4562
        %6130 = vmatprep.subr.bf16.mxu0 0
        %6131 = vmatpush1.bf16.msra.mxu0 %v4563
        %6132 = vmatprep.mubr.bf16.mxu0 %v1877
        %6133 = vmatmul.mubr.bf16.gmra.mrb[0].mxu0 %v1876
        %v6134 = vpop.f32.mrb[0].mxu0
        %v6135 = vadd.f32 %v6094, %v6134
        %v6136 = vpop.f32.mrb[0].mxu0
        %v6137 = vpop.f32.mrb[0].mxu0
        %v6138 = vadd.f32 %v6097, %v6137
        %v6139 = vpop.f32.mrb[0].mxu0
        %6140 = vdwg.mxu0
        %6141 = vmatprep.subr.bf16.mxu0 0
        %6142 = vmatpush1.bf16.msra.mxu0 %v4564
        %6143 = vmatprep.subr.bf16.mxu0 0
        %6144 = vmatpush1.bf16.msra.mxu0 %v4565
        %6145 = vmatprep.subr.bf16.mxu0 0
        %6146 = vmatpush1.bf16.msra.mxu0 %v4566
        %6147 = vmatprep.subr.bf16.mxu0 0
        %6148 = vmatpush1.bf16.msra.mxu0 %v4567
        %6149 = vmatprep.subr.bf16.mxu0 0
        %6150 = vmatpush1.bf16.msra.mxu0 %v4568
        %6151 = vmatprep.subr.bf16.mxu0 0
        %6152 = vmatpush1.bf16.msra.mxu0 %v4569
        %6153 = vmatprep.subr.bf16.mxu0 0
        %6154 = vmatpush1.bf16.msra.mxu0 %v4570
        %6155 = vmatprep.subr.bf16.mxu0 0
        %6156 = vmatpush1.bf16.msra.mxu0 %v4571
        %6157 = vmatprep.subr.bf16.mxu0 0
        %6158 = vmatpush1.bf16.msra.mxu0 %v4572
        %6159 = vmatprep.subr.bf16.mxu0 0
        %6160 = vmatpush1.bf16.msra.mxu0 %v4573
        %6161 = vmatprep.subr.bf16.mxu0 0
        %6162 = vmatpush1.bf16.msra.mxu0 %v4574
        %6163 = vmatprep.subr.bf16.mxu0 0
        %6164 = vmatpush1.bf16.msra.mxu0 %v4575
        %6165 = vmatprep.subr.bf16.mxu0 0
        %6166 = vmatpush1.bf16.msra.mxu0 %v4576
        %6167 = vmatprep.subr.bf16.mxu0 0
        %6168 = vmatpush1.bf16.msra.mxu0 %v4577
        %6169 = vmatprep.subr.bf16.mxu0 0
        %6170 = vmatpush1.bf16.msra.mxu0 %v4578
        %6171 = vmatprep.subr.bf16.mxu0 0
        %6172 = vmatpush1.bf16.msra.mxu0 %v4579
        %6173 = vmatprep.mubr.bf16.mxu0 %v1879
        %6174 = vmatmul.mubr.bf16.gmra.mrb[0].mxu0 %v1878
        %v6175 = vpop.f32.mrb[0].mxu0
        %v6176 = vadd.f32 %v6135, %v6175
        %v6177 = vpop.f32.mrb[0].mxu0
        %v6178 = vpop.f32.mrb[0].mxu0
        %v6179 = vadd.f32 %v6138, %v6178
        %v6180 = vpop.f32.mrb[0].mxu0
        %6181 = vdwg.mxu0
        %6182 = vmatprep.subr.bf16.mxu0 0
        %6183 = vmatpush1.bf16.msra.mxu0 %v4580
        %6184 = vmatprep.subr.bf16.mxu0 0
        %6185 = vmatpush1.bf16.msra.mxu0 %v4581
        %6186 = vmatprep.subr.bf16.mxu0 0
        %6187 = vmatpush1.bf16.msra.mxu0 %v4582
        %6188 = vmatprep.subr.bf16.mxu0 0
        %6189 = vmatpush1.bf16.msra.mxu0 %v4583
        %6190 = vmatprep.subr.bf16.mxu0 0
        %6191 = vmatpush1.bf16.msra.mxu0 %v4584
        %6192 = vmatprep.subr.bf16.mxu0 0
        %6193 = vmatpush1.bf16.msra.mxu0 %v4585
        %6194 = vmatprep.subr.bf16.mxu0 0
        %6195 = vmatpush1.bf16.msra.mxu0 %v4586
        %6196 = vmatprep.subr.bf16.mxu0 0
        %6197 = vmatpush1.bf16.msra.mxu0 %v4587
        %6198 = vmatprep.subr.bf16.mxu0 0
        %6199 = vmatpush1.bf16.msra.mxu0 %v4588
        %6200 = vmatprep.subr.bf16.mxu0 0
        %6201 = vmatpush1.bf16.msra.mxu0 %v4589
        %6202 = vmatprep.subr.bf16.mxu0 0
        %6203 = vmatpush1.bf16.msra.mxu0 %v4590
        %6204 = vmatprep.subr.bf16.mxu0 0
        %6205 = vmatpush1.bf16.msra.mxu0 %v4591
        %6206 = vmatprep.subr.bf16.mxu0 0
        %6207 = vmatpush1.bf16.msra.mxu0 %v4592
        %6208 = vmatprep.subr.bf16.mxu0 0
        %6209 = vmatpush1.bf16.msra.mxu0 %v4593
        %6210 = vmatprep.subr.bf16.mxu0 0
        %6211 = vmatpush1.bf16.msra.mxu0 %v4594
        %6212 = vmatprep.subr.bf16.mxu0 0
        %6213 = vmatpush1.bf16.msra.mxu0 %v4595
        %6214 = vmatprep.mubr.bf16.mxu0 %v1881
        %6215 = vmatmul.mubr.bf16.gmra.mrb[0].mxu0 %v1880
        %v6216 = vpop.f32.mrb[0].mxu0
        %v6217 = vadd.f32 %v6176, %v6216
        %v6218 = vpop.f32.mrb[0].mxu0
        %v6219 = vpop.f32.mrb[0].mxu0
        %v6220 = vadd.f32 %v6179, %v6219
        %v6221 = vpop.f32.mrb[0].mxu0
        %6222 = vdwg.mxu0
        %6223 = vmatprep.subr.bf16.mxu0 0
        %6224 = vmatpush1.bf16.msra.mxu0 %v4596
        %6225 = vmatprep.subr.bf16.mxu0 0
        %6226 = vmatpush1.bf16.msra.mxu0 %v4597
        %6227 = vmatprep.subr.bf16.mxu0 0
        %6228 = vmatpush1.bf16.msra.mxu0 %v4598
        %6229 = vmatprep.subr.bf16.mxu0 0
        %6230 = vmatpush1.bf16.msra.mxu0 %v4599
        %6231 = vmatprep.subr.bf16.mxu0 0
        %6232 = vmatpush1.bf16.msra.mxu0 %v4600
        %6233 = vmatprep.subr.bf16.mxu0 0
        %6234 = vmatpush1.bf16.msra.mxu0 %v4601
        %6235 = vmatprep.subr.bf16.mxu0 0
        %6236 = vmatpush1.bf16.msra.mxu0 %v4602
        %6237 = vmatprep.subr.bf16.mxu0 0
        %6238 = vmatpush1.bf16.msra.mxu0 %v4603
        %6239 = vmatprep.subr.bf16.mxu0 0
        %6240 = vmatpush1.bf16.msra.mxu0 %v4604
        %6241 = vmatprep.subr.bf16.mxu0 0
        %6242 = vmatpush1.bf16.msra.mxu0 %v4605
        %6243 = vmatprep.subr.bf16.mxu0 0
        %6244 = vmatpush1.bf16.msra.mxu0 %v4606
        %6245 = vmatprep.subr.bf16.mxu0 0
        %6246 = vmatpush1.bf16.msra.mxu0 %v4607
        %6247 = vmatprep.subr.bf16.mxu0 0
        %6248 = vmatpush1.bf16.msra.mxu0 %v4608
        %6249 = vmatprep.subr.bf16.mxu0 0
        %6250 = vmatpush1.bf16.msra.mxu0 %v4609
        %6251 = vmatprep.subr.bf16.mxu0 0
        %6252 = vmatpush1.bf16.msra.mxu0 %v4610
        %6253 = vmatprep.subr.bf16.mxu0 0
        %6254 = vmatpush1.bf16.msra.mxu0 %v4611
        %6255 = vmatprep.mubr.bf16.mxu0 %v1883
        %6256 = vmatmul.mubr.bf16.gmra.mrb[0].mxu0 %v1882
        %v6257 = vpop.f32.mrb[0].mxu0
        %v6258 = vadd.f32 %v6217, %v6257
        %v6259 = vpop.f32.mrb[0].mxu0
        %v6260 = vpop.f32.mrb[0].mxu0
        %v6261 = vadd.f32 %v6220, %v6260
        %v6262 = vpop.f32.mrb[0].mxu0
        %6263 = vdwg.mxu0
        %6264 = vmatprep.subr.bf16.mxu0 0
        %6265 = vmatpush1.bf16.msra.mxu0 %v4612
        %6266 = vmatprep.subr.bf16.mxu0 0
        %6267 = vmatpush1.bf16.msra.mxu0 %v4613
        %6268 = vmatprep.subr.bf16.mxu0 0
        %6269 = vmatpush1.bf16.msra.mxu0 %v4614
        %6270 = vmatprep.subr.bf16.mxu0 0
        %6271 = vmatpush1.bf16.msra.mxu0 %v4615
        %6272 = vmatprep.subr.bf16.mxu0 0
        %6273 = vmatpush1.bf16.msra.mxu0 %v4616
        %6274 = vmatprep.subr.bf16.mxu0 0
        %6275 = vmatpush1.bf16.msra.mxu0 %v4617
        %6276 = vmatprep.subr.bf16.mxu0 0
        %6277 = vmatpush1.bf16.msra.mxu0 %v4618
        %6278 = vmatprep.subr.bf16.mxu0 0
        %6279 = vmatpush1.bf16.msra.mxu0 %v4619
        %6280 = vmatprep.subr.bf16.mxu0 0
        %6281 = vmatpush1.bf16.msra.mxu0 %v4620
        %6282 = vmatprep.subr.bf16.mxu0 0
        %6283 = vmatpush1.bf16.msra.mxu0 %v4621
        %6284 = vmatprep.subr.bf16.mxu0 0
        %6285 = vmatpush1.bf16.msra.mxu0 %v4622
        %6286 = vmatprep.subr.bf16.mxu0 0
        %6287 = vmatpush1.bf16.msra.mxu0 %v4623
        %6288 = vmatprep.subr.bf16.mxu0 0
        %6289 = vmatpush1.bf16.msra.mxu0 %v4624
        %6290 = vmatprep.subr.bf16.mxu0 0
        %6291 = vmatpush1.bf16.msra.mxu0 %v4625
        %6292 = vmatprep.subr.bf16.mxu0 0
        %6293 = vmatpush1.bf16.msra.mxu0 %v4626
        %6294 = vmatprep.subr.bf16.mxu0 0
        %6295 = vmatpush1.bf16.msra.mxu0 %v4627
        %6296 = vmatprep.mubr.bf16.mxu0 %v1885
        %6297 = vmatmul.mubr.bf16.gmra.mrb[0].mxu0 %v1884
        %v6298 = vpop.f32.mrb[0].mxu0
        %v6299 = vadd.f32 %v6258, %v6298
        %v6300 = vpop.f32.mrb[0].mxu0
        %v6301 = vpop.f32.mrb[0].mxu0
        %v6302 = vadd.f32 %v6261, %v6301
        %v6303 = vpop.f32.mrb[0].mxu0
        %6304 = vdwg.mxu0
        %6305 = vmatprep.subr.bf16.mxu0 0
        %6306 = vmatpush1.bf16.msra.mxu0 %v4628
        %6307 = vmatprep.subr.bf16.mxu0 0
        %6308 = vmatpush1.bf16.msra.mxu0 %v4629
        %6309 = vmatprep.subr.bf16.mxu0 0
        %6310 = vmatpush1.bf16.msra.mxu0 %v4630
        %6311 = vmatprep.subr.bf16.mxu0 0
        %6312 = vmatpush1.bf16.msra.mxu0 %v4631
        %6313 = vmatprep.subr.bf16.mxu0 0
        %6314 = vmatpush1.bf16.msra.mxu0 %v4632
        %6315 = vmatprep.subr.bf16.mxu0 0
        %6316 = vmatpush1.bf16.msra.mxu0 %v4633
        %6317 = vmatprep.subr.bf16.mxu0 0
        %6318 = vmatpush1.bf16.msra.mxu0 %v4634
        %6319 = vmatprep.subr.bf16.mxu0 0
        %6320 = vmatpush1.bf16.msra.mxu0 %v4635
        %6321 = vmatprep.subr.bf16.mxu0 0
        %6322 = vmatpush1.bf16.msra.mxu0 %v4636
        %6323 = vmatprep.subr.bf16.mxu0 0
        %6324 = vmatpush1.bf16.msra.mxu0 %v4637
        %6325 = vmatprep.subr.bf16.mxu0 0
        %6326 = vmatpush1.bf16.msra.mxu0 %v4638
        %6327 = vmatprep.subr.bf16.mxu0 0
        %6328 = vmatpush1.bf16.msra.mxu0 %v4639
        %6329 = vmatprep.subr.bf16.mxu0 0
        %6330 = vmatpush1.bf16.msra.mxu0 %v4640
        %6331 = vmatprep.subr.bf16.mxu0 0
        %6332 = vmatpush1.bf16.msra.mxu0 %v4641
        %6333 = vmatprep.subr.bf16.mxu0 0
        %6334 = vmatpush1.bf16.msra.mxu0 %v4642
        %6335 = vmatprep.subr.bf16.mxu0 0
        %6336 = vmatpush1.bf16.msra.mxu0 %v4643
        %6337 = vmatprep.mubr.bf16.mxu0 %v1887
        %6338 = vmatmul.mubr.bf16.gmra.mrb[0].mxu0 %v1886
        %v6339 = vpop.f32.mrb[0].mxu0
        %v6340 = vadd.f32 %v6299, %v6339
        %v6341 = vpop.f32.mrb[0].mxu0
        %v6342 = vpop.f32.mrb[0].mxu0
        %v6343 = vadd.f32 %v6302, %v6342
        %v6344 = vpop.f32.mrb[0].mxu0
        %6345 = vdwg.mxu0
        %6346 = vmatprep.subr.bf16.mxu0 0
        %6347 = vmatpush1.bf16.msra.mxu0 %v4644
        %6348 = vmatprep.subr.bf16.mxu0 0
        %6349 = vmatpush1.bf16.msra.mxu0 %v4645
        %6350 = vmatprep.subr.bf16.mxu0 0
        %6351 = vmatpush1.bf16.msra.mxu0 %v4646
        %6352 = vmatprep.subr.bf16.mxu0 0
        %6353 = vmatpush1.bf16.msra.mxu0 %v4647
        %6354 = vmatprep.subr.bf16.mxu0 0
        %6355 = vmatpush1.bf16.msra.mxu0 %v4648
        %6356 = vmatprep.subr.bf16.mxu0 0
        %6357 = vmatpush1.bf16.msra.mxu0 %v4649
        %6358 = vmatprep.subr.bf16.mxu0 0
        %6359 = vmatpush1.bf16.msra.mxu0 %v4650
        %6360 = vmatprep.subr.bf16.mxu0 0
        %6361 = vmatpush1.bf16.msra.mxu0 %v4651
        %6362 = vmatprep.subr.bf16.mxu0 0
        %6363 = vmatpush1.bf16.msra.mxu0 %v4652
        %6364 = vmatprep.subr.bf16.mxu0 0
        %6365 = vmatpush1.bf16.msra.mxu0 %v4653
        %6366 = vmatprep.subr.bf16.mxu0 0
        %6367 = vmatpush1.bf16.msra.mxu0 %v4654
        %6368 = vmatprep.subr.bf16.mxu0 0
        %6369 = vmatpush1.bf16.msra.mxu0 %v4655
        %6370 = vmatprep.subr.bf16.mxu0 0
        %6371 = vmatpush1.bf16.msra.mxu0 %v4656
        %6372 = vmatprep.subr.bf16.mxu0 0
        %6373 = vmatpush1.bf16.msra.mxu0 %v4657
        %6374 = vmatprep.subr.bf16.mxu0 0
        %6375 = vmatpush1.bf16.msra.mxu0 %v4658
        %6376 = vmatprep.subr.bf16.mxu0 0
        %6377 = vmatpush1.bf16.msra.mxu0 %v4659
        %6378 = vmatprep.mubr.bf16.mxu0 %v1889
        %6379 = vmatmul.mubr.bf16.gmra.mrb[0].mxu0 %v1888
        %v6380 = vpop.f32.mrb[0].mxu0
        %v6381 = vadd.f32 %v6340, %v6380
        %v6382 = vpop.f32.mrb[0].mxu0
        %v6383 = vpop.f32.mrb[0].mxu0
        %v6384 = vadd.f32 %v6343, %v6383
        %v6385 = vpop.f32.mrb[0].mxu0
        %6386 = vdwg.mxu0
        %6387 = vmatprep.subr.bf16.mxu0 0
        %6388 = vmatpush1.bf16.msra.mxu0 %v4660
        %6389 = vmatprep.subr.bf16.mxu0 0
        %6390 = vmatpush1.bf16.msra.mxu0 %v4661
        %6391 = vmatprep.subr.bf16.mxu0 0
        %6392 = vmatpush1.bf16.msra.mxu0 %v4662
        %6393 = vmatprep.subr.bf16.mxu0 0
        %6394 = vmatpush1.bf16.msra.mxu0 %v4663
        %6395 = vmatprep.subr.bf16.mxu0 0
        %6396 = vmatpush1.bf16.msra.mxu0 %v4664
        %6397 = vmatprep.subr.bf16.mxu0 0
        %6398 = vmatpush1.bf16.msra.mxu0 %v4665
        %6399 = vmatprep.subr.bf16.mxu0 0
        %6400 = vmatpush1.bf16.msra.mxu0 %v4666
        %6401 = vmatprep.subr.bf16.mxu0 0
        %6402 = vmatpush1.bf16.msra.mxu0 %v4667
        %6403 = vmatprep.subr.bf16.mxu0 0
        %6404 = vmatpush1.bf16.msra.mxu0 %v4668
        %6405 = vmatprep.subr.bf16.mxu0 0
        %6406 = vmatpush1.bf16.msra.mxu0 %v4669
        %6407 = vmatprep.subr.bf16.mxu0 0
        %6408 = vmatpush1.bf16.msra.mxu0 %v4670
        %6409 = vmatprep.subr.bf16.mxu0 0
        %6410 = vmatpush1.bf16.msra.mxu0 %v4671
        %6411 = vmatprep.subr.bf16.mxu0 0
        %6412 = vmatpush1.bf16.msra.mxu0 %v4672
        %6413 = vmatprep.subr.bf16.mxu0 0
        %6414 = vmatpush1.bf16.msra.mxu0 %v4673
        %6415 = vmatprep.subr.bf16.mxu0 0
        %6416 = vmatpush1.bf16.msra.mxu0 %v4674
        %6417 = vmatprep.subr.bf16.mxu0 0
        %6418 = vmatpush1.bf16.msra.mxu0 %v4675
        %6419 = vmatprep.mubr.bf16.mxu0 %v1891
        %6420 = vmatmul.mubr.bf16.gmra.mrb[0].mxu0 %v1890
        %v6421 = vpop.f32.mrb[0].mxu0
        %v6422 = vadd.f32 %v6381, %v6421
        %v6423 = vpop.f32.mrb[0].mxu0
        %v6424 = vpop.f32.mrb[0].mxu0
        %v6425 = vadd.f32 %v6384, %v6424
        %v6426 = vpop.f32.mrb[0].mxu0
        %6427 = vdwg.mxu0
        %6428 = vmatprep.subr.bf16.mxu0 0
        %6429 = vmatpush1.bf16.msra.mxu0 %v4676
        %6430 = vmatprep.subr.bf16.mxu0 0
        %6431 = vmatpush1.bf16.msra.mxu0 %v4677
        %6432 = vmatprep.subr.bf16.mxu0 0
        %6433 = vmatpush1.bf16.msra.mxu0 %v4678
        %6434 = vmatprep.subr.bf16.mxu0 0
        %6435 = vmatpush1.bf16.msra.mxu0 %v4679
        %6436 = vmatprep.subr.bf16.mxu0 0
        %6437 = vmatpush1.bf16.msra.mxu0 %v4680
        %6438 = vmatprep.subr.bf16.mxu0 0
        %6439 = vmatpush1.bf16.msra.mxu0 %v4681
        %6440 = vmatprep.subr.bf16.mxu0 0
        %6441 = vmatpush1.bf16.msra.mxu0 %v4682
        %6442 = vmatprep.subr.bf16.mxu0 0
        %6443 = vmatpush1.bf16.msra.mxu0 %v4683
        %6444 = vmatprep.subr.bf16.mxu0 0
        %6445 = vmatpush1.bf16.msra.mxu0 %v4684
        %6446 = vmatprep.subr.bf16.mxu0 0
        %6447 = vmatpush1.bf16.msra.mxu0 %v4685
        %6448 = vmatprep.subr.bf16.mxu0 0
        %6449 = vmatpush1.bf16.msra.mxu0 %v4686
        %6450 = vmatprep.subr.bf16.mxu0 0
        %6451 = vmatpush1.bf16.msra.mxu0 %v4687
        %6452 = vmatprep.subr.bf16.mxu0 0
        %6453 = vmatpush1.bf16.msra.mxu0 %v4688
        %6454 = vmatprep.subr.bf16.mxu0 0
        %6455 = vmatpush1.bf16.msra.mxu0 %v4689
        %6456 = vmatprep.subr.bf16.mxu0 0
        %6457 = vmatpush1.bf16.msra.mxu0 %v4690
        %6458 = vmatprep.subr.bf16.mxu0 0
        %6459 = vmatpush1.bf16.msra.mxu0 %v4691
        %6460 = vmatprep.mubr.bf16.mxu0 %v1893
        %6461 = vmatmul.mubr.bf16.gmra.mrb[0].mxu0 %v1892
        %v6462 = vpop.f32.mrb[0].mxu0
        %v6463 = vadd.f32 %v6422, %v6462
        %v6464 = vpop.f32.mrb[0].mxu0
        %v6465 = vpop.f32.mrb[0].mxu0
        %v6466 = vadd.f32 %v6425, %v6465
        %v6467 = vpop.f32.mrb[0].mxu0
        %6468 = vdwg.mxu0
        %6469 = vmatprep.subr.bf16.mxu0 0
        %6470 = vmatpush1.bf16.msra.mxu0 %v4692
        %6471 = vmatprep.subr.bf16.mxu0 0
        %6472 = vmatpush1.bf16.msra.mxu0 %v4693
        %6473 = vmatprep.subr.bf16.mxu0 0
        %6474 = vmatpush1.bf16.msra.mxu0 %v4694
        %6475 = vmatprep.subr.bf16.mxu0 0
        %6476 = vmatpush1.bf16.msra.mxu0 %v4695
        %6477 = vmatprep.subr.bf16.mxu0 0
        %6478 = vmatpush1.bf16.msra.mxu0 %v4696
        %6479 = vmatprep.subr.bf16.mxu0 0
        %6480 = vmatpush1.bf16.msra.mxu0 %v4697
        %6481 = vmatprep.subr.bf16.mxu0 0
        %6482 = vmatpush1.bf16.msra.mxu0 %v4698
        %6483 = vmatprep.subr.bf16.mxu0 0
        %6484 = vmatpush1.bf16.msra.mxu0 %v4699
        %6485 = vmatprep.subr.bf16.mxu0 0
        %6486 = vmatpush1.bf16.msra.mxu0 %v4700
        %6487 = vmatprep.subr.bf16.mxu0 0
        %6488 = vmatpush1.bf16.msra.mxu0 %v4701
        %6489 = vmatprep.subr.bf16.mxu0 0
        %6490 = vmatpush1.bf16.msra.mxu0 %v4702
        %6491 = vmatprep.subr.bf16.mxu0 0
        %6492 = vmatpush1.bf16.msra.mxu0 %v4703
        %6493 = vmatprep.subr.bf16.mxu0 0
        %6494 = vmatpush1.bf16.msra.mxu0 %v4704
        %6495 = vmatprep.subr.bf16.mxu0 0
        %6496 = vmatpush1.bf16.msra.mxu0 %v4705
        %6497 = vmatprep.subr.bf16.mxu0 0
        %6498 = vmatpush1.bf16.msra.mxu0 %v4706
        %6499 = vmatprep.subr.bf16.mxu0 0
        %6500 = vmatpush1.bf16.msra.mxu0 %v4707
        %6501 = vmatprep.mubr.bf16.mxu0 %v1895
        %6502 = vmatmul.mubr.bf16.gmra.mrb[0].mxu0 %v1894
        %v6503 = vpop.f32.mrb[0].mxu0
        %v6504 = vadd.f32 %v6463, %v6503
        %v6505 = vpop.f32.mrb[0].mxu0
        %v6506 = vpop.f32.mrb[0].mxu0
        %v6507 = vadd.f32 %v6466, %v6506
        %v6508 = vpop.f32.mrb[0].mxu0
        %6509 = vdwg.mxu0
        %6510 = vmatprep.subr.bf16.mxu0 0
        %6511 = vmatpush1.bf16.msra.mxu0 %v4708
        %6512 = vmatprep.subr.bf16.mxu0 0
        %6513 = vmatpush1.bf16.msra.mxu0 %v4709
        %6514 = vmatprep.subr.bf16.mxu0 0
        %6515 = vmatpush1.bf16.msra.mxu0 %v4710
        %6516 = vmatprep.subr.bf16.mxu0 0
        %6517 = vmatpush1.bf16.msra.mxu0 %v4711
        %6518 = vmatprep.subr.bf16.mxu0 0
        %6519 = vmatpush1.bf16.msra.mxu0 %v4712
        %6520 = vmatprep.subr.bf16.mxu0 0
        %6521 = vmatpush1.bf16.msra.mxu0 %v4713
        %6522 = vmatprep.subr.bf16.mxu0 0
        %6523 = vmatpush1.bf16.msra.mxu0 %v4714
        %6524 = vmatprep.subr.bf16.mxu0 0
        %6525 = vmatpush1.bf16.msra.mxu0 %v4715
        %6526 = vmatprep.subr.bf16.mxu0 0
        %6527 = vmatpush1.bf16.msra.mxu0 %v4716
        %6528 = vmatprep.subr.bf16.mxu0 0
        %6529 = vmatpush1.bf16.msra.mxu0 %v4717
        %6530 = vmatprep.subr.bf16.mxu0 0
        %6531 = vmatpush1.bf16.msra.mxu0 %v4718
        %6532 = vmatprep.subr.bf16.mxu0 0
        %6533 = vmatpush1.bf16.msra.mxu0 %v4719
        %6534 = vmatprep.subr.bf16.mxu0 0
        %6535 = vmatpush1.bf16.msra.mxu0 %v4720
        %6536 = vmatprep.subr.bf16.mxu0 0
        %6537 = vmatpush1.bf16.msra.mxu0 %v4721
        %6538 = vmatprep.subr.bf16.mxu0 0
        %6539 = vmatpush1.bf16.msra.mxu0 %v4722
        %6540 = vmatprep.subr.bf16.mxu0 0
        %6541 = vmatpush1.bf16.msra.mxu0 %v4723
        %6542 = vmatprep.mubr.bf16.mxu0 %v1897
        %6543 = vmatmul.mubr.bf16.gmra.mrb[0].mxu0 %v1896
        %v6544 = vpop.f32.mrb[0].mxu0
        %v6545 = vadd.f32 %v6504, %v6544
        %v6546 = vpop.f32.mrb[0].mxu0
        %v6547 = vpop.f32.mrb[0].mxu0
        %v6548 = vadd.f32 %v6507, %v6547
        %v6549 = vpop.f32.mrb[0].mxu0
        %6550 = vdwg.mxu0
        %6551 = vmatprep.subr.bf16.mxu0 0
        %6552 = vmatpush1.bf16.msra.mxu0 %v4724
        %6553 = vmatprep.subr.bf16.mxu0 0
        %6554 = vmatpush1.bf16.msra.mxu0 %v4725
        %6555 = vmatprep.subr.bf16.mxu0 0
        %6556 = vmatpush1.bf16.msra.mxu0 %v4726
        %6557 = vmatprep.subr.bf16.mxu0 0
        %6558 = vmatpush1.bf16.msra.mxu0 %v4727
        %6559 = vmatprep.subr.bf16.mxu0 0
        %6560 = vmatpush1.bf16.msra.mxu0 %v4728
        %6561 = vmatprep.subr.bf16.mxu0 0
        %6562 = vmatpush1.bf16.msra.mxu0 %v4729
        %6563 = vmatprep.subr.bf16.mxu0 0
        %6564 = vmatpush1.bf16.msra.mxu0 %v4730
        %6565 = vmatprep.subr.bf16.mxu0 0
        %6566 = vmatpush1.bf16.msra.mxu0 %v4731
        %6567 = vmatprep.subr.bf16.mxu0 0
        %6568 = vmatpush1.bf16.msra.mxu0 %v4732
        %6569 = vmatprep.subr.bf16.mxu0 0
        %6570 = vmatpush1.bf16.msra.mxu0 %v4733
        %6571 = vmatprep.subr.bf16.mxu0 0
        %6572 = vmatpush1.bf16.msra.mxu0 %v4734
        %6573 = vmatprep.subr.bf16.mxu0 0
        %6574 = vmatpush1.bf16.msra.mxu0 %v4735
        %6575 = vmatprep.subr.bf16.mxu0 0
        %6576 = vmatpush1.bf16.msra.mxu0 %v4736
        %6577 = vmatprep.subr.bf16.mxu0 0
        %6578 = vmatpush1.bf16.msra.mxu0 %v4737
        %6579 = vmatprep.subr.bf16.mxu0 0
        %6580 = vmatpush1.bf16.msra.mxu0 %v4738
        %6581 = vmatprep.subr.bf16.mxu0 0
        %6582 = vmatpush1.bf16.msra.mxu0 %v4739
        %6583 = vmatprep.mubr.bf16.mxu0 %v1899
        %6584 = vmatmul.mubr.bf16.gmra.mrb[0].mxu0 %v1898
        %v6585 = vpop.f32.mrb[0].mxu0
        %v6586 = vadd.f32 %v6545, %v6585
        %v6587 = vpop.f32.mrb[0].mxu0
        %v6588 = vpop.f32.mrb[0].mxu0
        %v6589 = vadd.f32 %v6548, %v6588
        %v6590 = vpop.f32.mrb[0].mxu0
        %6591 = vdwg.mxu0
        %6592 = vmatprep.subr.bf16.mxu0 0
        %6593 = vmatpush1.bf16.msra.mxu0 %v4740
        %6594 = vmatprep.subr.bf16.mxu0 0
        %6595 = vmatpush1.bf16.msra.mxu0 %v4741
        %6596 = vmatprep.subr.bf16.mxu0 0
        %6597 = vmatpush1.bf16.msra.mxu0 %v4742
        %6598 = vmatprep.subr.bf16.mxu0 0
        %6599 = vmatpush1.bf16.msra.mxu0 %v4743
        %6600 = vmatprep.subr.bf16.mxu0 0
        %6601 = vmatpush1.bf16.msra.mxu0 %v4744
        %6602 = vmatprep.subr.bf16.mxu0 0
        %6603 = vmatpush1.bf16.msra.mxu0 %v4745
        %6604 = vmatprep.subr.bf16.mxu0 0
        %6605 = vmatpush1.bf16.msra.mxu0 %v4746
        %6606 = vmatprep.subr.bf16.mxu0 0
        %6607 = vmatpush1.bf16.msra.mxu0 %v4747
        %6608 = vmatprep.subr.bf16.mxu0 0
        %6609 = vmatpush1.bf16.msra.mxu0 %v4748
        %6610 = vmatprep.subr.bf16.mxu0 0
        %6611 = vmatpush1.bf16.msra.mxu0 %v4749
        %6612 = vmatprep.subr.bf16.mxu0 0
        %6613 = vmatpush1.bf16.msra.mxu0 %v4750
        %6614 = vmatprep.subr.bf16.mxu0 0
        %6615 = vmatpush1.bf16.msra.mxu0 %v4751
        %6616 = vmatprep.subr.bf16.mxu0 0
        %6617 = vmatpush1.bf16.msra.mxu0 %v4752
        %6618 = vmatprep.subr.bf16.mxu0 0
        %6619 = vmatpush1.bf16.msra.mxu0 %v4753
        %6620 = vmatprep.subr.bf16.mxu0 0
        %6621 = vmatpush1.bf16.msra.mxu0 %v4754
        %6622 = vmatprep.subr.bf16.mxu0 0
        %6623 = vmatpush1.bf16.msra.mxu0 %v4755
        %6624 = vmatprep.mubr.bf16.mxu0 %v1901
        %6625 = vmatmul.mubr.bf16.gmra.mrb[0].mxu0 %v1900
        %v6626 = vpop.f32.mrb[0].mxu0
        %v6627 = vadd.f32 %v6586, %v6626
        %v6628 = vpop.f32.mrb[0].mxu0
        %v6629 = vpop.f32.mrb[0].mxu0
        %v6630 = vadd.f32 %v6589, %v6629
        %v6631 = vpop.f32.mrb[0].mxu0
        %6632 = vdwg.mxu0
        %6633 = vmatprep.subr.bf16.mxu0 0
        %6634 = vmatpush1.bf16.msra.mxu0 %v4756
        %6635 = vmatprep.subr.bf16.mxu0 0
        %6636 = vmatpush1.bf16.msra.mxu0 %v4757
        %6637 = vmatprep.subr.bf16.mxu0 0
        %6638 = vmatpush1.bf16.msra.mxu0 %v4758
        %6639 = vmatprep.subr.bf16.mxu0 0
        %6640 = vmatpush1.bf16.msra.mxu0 %v4759
        %6641 = vmatprep.subr.bf16.mxu0 0
        %6642 = vmatpush1.bf16.msra.mxu0 %v4760
        %6643 = vmatprep.subr.bf16.mxu0 0
        %6644 = vmatpush1.bf16.msra.mxu0 %v4761
        %6645 = vmatprep.subr.bf16.mxu0 0
        %6646 = vmatpush1.bf16.msra.mxu0 %v4762
        %6647 = vmatprep.subr.bf16.mxu0 0
        %6648 = vmatpush1.bf16.msra.mxu0 %v4763
        %6649 = vmatprep.subr.bf16.mxu0 0
        %6650 = vmatpush1.bf16.msra.mxu0 %v4764
        %6651 = vmatprep.subr.bf16.mxu0 0
        %6652 = vmatpush1.bf16.msra.mxu0 %v4765
        %6653 = vmatprep.subr.bf16.mxu0 0
        %6654 = vmatpush1.bf16.msra.mxu0 %v4766
        %6655 = vmatprep.subr.bf16.mxu0 0
        %6656 = vmatpush1.bf16.msra.mxu0 %v4767
        %6657 = vmatprep.subr.bf16.mxu0 0
        %6658 = vmatpush1.bf16.msra.mxu0 %v4768
        %6659 = vmatprep.subr.bf16.mxu0 0
        %6660 = vmatpush1.bf16.msra.mxu0 %v4769
        %6661 = vmatprep.subr.bf16.mxu0 0
        %6662 = vmatpush1.bf16.msra.mxu0 %v4770
        %6663 = vmatprep.subr.bf16.mxu0 0
        %6664 = vmatpush1.bf16.msra.mxu0 %v4771
        %6665 = vmatprep.mubr.bf16.mxu0 %v1903
        %6666 = vmatmul.mubr.bf16.gmra.mrb[0].mxu0 %v1902
        %v6667 = vpop.f32.mrb[0].mxu0
        %v6668 = vadd.f32 %v6627, %v6667
        %v6669 = vpop.f32.mrb[0].mxu0
        %v6670 = vpop.f32.mrb[0].mxu0
        %v6671 = vadd.f32 %v6630, %v6670
        %v6672 = vpop.f32.mrb[0].mxu0
        %6673 = vdwg.mxu0
        %6674 = vmatprep.subr.bf16.mxu0 0
        %6675 = vmatpush1.bf16.msra.mxu0 %v4772
        %6676 = vmatprep.subr.bf16.mxu0 0
        %6677 = vmatpush1.bf16.msra.mxu0 %v4773
        %6678 = vmatprep.subr.bf16.mxu0 0
        %6679 = vmatpush1.bf16.msra.mxu0 %v4774
        %6680 = vmatprep.subr.bf16.mxu0 0
        %6681 = vmatpush1.bf16.msra.mxu0 %v4775
        %6682 = vmatprep.subr.bf16.mxu0 0
        %6683 = vmatpush1.bf16.msra.mxu0 %v4776
        %6684 = vmatprep.subr.bf16.mxu0 0
        %6685 = vmatpush1.bf16.msra.mxu0 %v4777
        %6686 = vmatprep.subr.bf16.mxu0 0
        %6687 = vmatpush1.bf16.msra.mxu0 %v4778
        %6688 = vmatprep.subr.bf16.mxu0 0
        %6689 = vmatpush1.bf16.msra.mxu0 %v4779
        %6690 = vmatprep.subr.bf16.mxu0 0
        %6691 = vmatpush1.bf16.msra.mxu0 %v4780
        %6692 = vmatprep.subr.bf16.mxu0 0
        %6693 = vmatpush1.bf16.msra.mxu0 %v4781
        %6694 = vmatprep.subr.bf16.mxu0 0
        %6695 = vmatpush1.bf16.msra.mxu0 %v4782
        %6696 = vmatprep.subr.bf16.mxu0 0
        %6697 = vmatpush1.bf16.msra.mxu0 %v4783
        %6698 = vmatprep.subr.bf16.mxu0 0
        %6699 = vmatpush1.bf16.msra.mxu0 %v4784
        %6700 = vmatprep.subr.bf16.mxu0 0
        %6701 = vmatpush1.bf16.msra.mxu0 %v4785
        %6702 = vmatprep.subr.bf16.mxu0 0
        %6703 = vmatpush1.bf16.msra.mxu0 %v4786
        %6704 = vmatprep.subr.bf16.mxu0 0
        %6705 = vmatpush1.bf16.msra.mxu0 %v4787
        %6706 = vmatprep.mubr.bf16.mxu0 %v1905
        %6707 = vmatmul.mubr.bf16.gmra.mrb[0].mxu0 %v1904
        %v6708 = vpop.f32.mrb[0].mxu0
        %v6709 = vadd.f32 %v6668, %v6708
        %v6710 = vpop.f32.mrb[0].mxu0
        %v6711 = vpop.f32.mrb[0].mxu0
        %v6712 = vadd.f32 %v6671, %v6711
        %v6713 = vpop.f32.mrb[0].mxu0
        %6714 = vdwg.mxu0
        %6715 = vmatprep.subr.bf16.mxu0 0
        %6716 = vmatpush1.bf16.msra.mxu0 %v4788
        %6717 = vmatprep.subr.bf16.mxu0 0
        %6718 = vmatpush1.bf16.msra.mxu0 %v4789
        %6719 = vmatprep.subr.bf16.mxu0 0
        %6720 = vmatpush1.bf16.msra.mxu0 %v4790
        %6721 = vmatprep.subr.bf16.mxu0 0
        %6722 = vmatpush1.bf16.msra.mxu0 %v4791
        %6723 = vmatprep.subr.bf16.mxu0 0
        %6724 = vmatpush1.bf16.msra.mxu0 %v4792
        %6725 = vmatprep.subr.bf16.mxu0 0
        %6726 = vmatpush1.bf16.msra.mxu0 %v4793
        %6727 = vmatprep.subr.bf16.mxu0 0
        %6728 = vmatpush1.bf16.msra.mxu0 %v4794
        %6729 = vmatprep.subr.bf16.mxu0 0
        %6730 = vmatpush1.bf16.msra.mxu0 %v4795
        %6731 = vmatprep.subr.bf16.mxu0 0
        %6732 = vmatpush1.bf16.msra.mxu0 %v4796
        %6733 = vmatprep.subr.bf16.mxu0 0
        %6734 = vmatpush1.bf16.msra.mxu0 %v4797
        %6735 = vmatprep.subr.bf16.mxu0 0
        %6736 = vmatpush1.bf16.msra.mxu0 %v4798
        %6737 = vmatprep.subr.bf16.mxu0 0
        %6738 = vmatpush1.bf16.msra.mxu0 %v4799
        %6739 = vmatprep.subr.bf16.mxu0 0
        %6740 = vmatpush1.bf16.msra.mxu0 %v4800
        %6741 = vmatprep.subr.bf16.mxu0 0
        %6742 = vmatpush1.bf16.msra.mxu0 %v4801
        %6743 = vmatprep.subr.bf16.mxu0 0
        %6744 = vmatpush1.bf16.msra.mxu0 %v4802
        %6745 = vmatprep.subr.bf16.mxu0 0
        %6746 = vmatpush1.bf16.msra.mxu0 %v4803
        %6747 = vmatprep.mubr.bf16.mxu0 %v1907
        %6748 = vmatmul.mubr.bf16.gmra.mrb[0].mxu0 %v1906
        %v6749 = vpop.f32.mrb[0].mxu0
        %v6750 = vadd.f32 %v6709, %v6749
        %v6751 = vpop.f32.mrb[0].mxu0
        %v6752 = vpop.f32.mrb[0].mxu0
        %v6753 = vadd.f32 %v6712, %v6752
        %v6754 = vpop.f32.mrb[0].mxu0
        %6755 = vdwg.mxu0
        %6756 = vmatprep.subr.bf16.mxu0 0
        %6757 = vmatpush1.bf16.msra.mxu0 %v4804
        %6758 = vmatprep.subr.bf16.mxu0 0
        %6759 = vmatpush1.bf16.msra.mxu0 %v4805
        %6760 = vmatprep.subr.bf16.mxu0 0
        %6761 = vmatpush1.bf16.msra.mxu0 %v4806
        %6762 = vmatprep.subr.bf16.mxu0 0
        %6763 = vmatpush1.bf16.msra.mxu0 %v4807
        %6764 = vmatprep.subr.bf16.mxu0 0
        %6765 = vmatpush1.bf16.msra.mxu0 %v4808
        %6766 = vmatprep.subr.bf16.mxu0 0
        %6767 = vmatpush1.bf16.msra.mxu0 %v4809
        %6768 = vmatprep.subr.bf16.mxu0 0
        %6769 = vmatpush1.bf16.msra.mxu0 %v4810
        %6770 = vmatprep.subr.bf16.mxu0 0
        %6771 = vmatpush1.bf16.msra.mxu0 %v4811
        %6772 = vmatprep.subr.bf16.mxu0 0
        %6773 = vmatpush1.bf16.msra.mxu0 %v4812
        %6774 = vmatprep.subr.bf16.mxu0 0
        %6775 = vmatpush1.bf16.msra.mxu0 %v4813
        %6776 = vmatprep.subr.bf16.mxu0 0
        %6777 = vmatpush1.bf16.msra.mxu0 %v4814
        %6778 = vmatprep.subr.bf16.mxu0 0
        %6779 = vmatpush1.bf16.msra.mxu0 %v4815
        %6780 = vmatprep.subr.bf16.mxu0 0
        %6781 = vmatpush1.bf16.msra.mxu0 %v4816
        %6782 = vmatprep.subr.bf16.mxu0 0
        %6783 = vmatpush1.bf16.msra.mxu0 %v4817
        %6784 = vmatprep.subr.bf16.mxu0 0
        %6785 = vmatpush1.bf16.msra.mxu0 %v4818
        %6786 = vmatprep.subr.bf16.mxu0 0
        %6787 = vmatpush1.bf16.msra.mxu0 %v4819
        %6788 = vmatprep.mubr.bf16.mxu0 %v1909
        %6789 = vmatmul.mubr.bf16.gmra.mrb[0].mxu0 %v1908
        %v6790 = vpop.f32.mrb[0].mxu0
        %v6791 = vadd.f32 %v6750, %v6790
        %v6792 = vpop.f32.mrb[0].mxu0
        %v6793 = vpop.f32.mrb[0].mxu0
        %v6794 = vadd.f32 %v6753, %v6793
        %v6795 = vpop.f32.mrb[0].mxu0
        %6796 = vdwg.mxu0
        %6797 = vmatprep.subr.bf16.mxu0 0
        %6798 = vmatpush1.bf16.msra.mxu0 %v4820
        %6799 = vmatprep.subr.bf16.mxu0 0
        %6800 = vmatpush1.bf16.msra.mxu0 %v4821
        %6801 = vmatprep.subr.bf16.mxu0 0
        %6802 = vmatpush1.bf16.msra.mxu0 %v4822
        %6803 = vmatprep.subr.bf16.mxu0 0
        %6804 = vmatpush1.bf16.msra.mxu0 %v4823
        %6805 = vmatprep.subr.bf16.mxu0 0
        %6806 = vmatpush1.bf16.msra.mxu0 %v4824
        %6807 = vmatprep.subr.bf16.mxu0 0
        %6808 = vmatpush1.bf16.msra.mxu0 %v4825
        %6809 = vmatprep.subr.bf16.mxu0 0
        %6810 = vmatpush1.bf16.msra.mxu0 %v4826
        %6811 = vmatprep.subr.bf16.mxu0 0
        %6812 = vmatpush1.bf16.msra.mxu0 %v4827
        %6813 = vmatprep.subr.bf16.mxu0 0
        %6814 = vmatpush1.bf16.msra.mxu0 %v4828
        %6815 = vmatprep.subr.bf16.mxu0 0
        %6816 = vmatpush1.bf16.msra.mxu0 %v4829
        %6817 = vmatprep.subr.bf16.mxu0 0
        %6818 = vmatpush1.bf16.msra.mxu0 %v4830
        %6819 = vmatprep.subr.bf16.mxu0 0
        %6820 = vmatpush1.bf16.msra.mxu0 %v4831
        %6821 = vmatprep.subr.bf16.mxu0 0
        %6822 = vmatpush1.bf16.msra.mxu0 %v4832
        %6823 = vmatprep.subr.bf16.mxu0 0
        %6824 = vmatpush1.bf16.msra.mxu0 %v4833
        %6825 = vmatprep.subr.bf16.mxu0 0
        %6826 = vmatpush1.bf16.msra.mxu0 %v4834
        %6827 = vmatprep.subr.bf16.mxu0 0
        %6828 = vmatpush1.bf16.msra.mxu0 %v4835
        %6829 = vmatprep.mubr.bf16.mxu0 %v1911
        %6830 = vmatmul.mubr.bf16.gmra.mrb[0].mxu0 %v1910
        %v6831 = vpop.f32.mrb[0].mxu0
        %v6832 = vadd.f32 %v6791, %v6831
        %v6833 = vpop.f32.mrb[0].mxu0
        %v6834 = vpop.f32.mrb[0].mxu0
        %v6835 = vadd.f32 %v6794, %v6834
        %v6836 = vpop.f32.mrb[0].mxu0
        %6837 = vdwg.mxu0
        %6838 = vmatprep.subr.bf16.mxu0 0
        %6839 = vmatpush1.bf16.msra.mxu0 %v4836
        %6840 = vmatprep.subr.bf16.mxu0 0
        %6841 = vmatpush1.bf16.msra.mxu0 %v4837
        %6842 = vmatprep.subr.bf16.mxu0 0
        %6843 = vmatpush1.bf16.msra.mxu0 %v4838
        %6844 = vmatprep.subr.bf16.mxu0 0
        %6845 = vmatpush1.bf16.msra.mxu0 %v4839
        %6846 = vmatprep.subr.bf16.mxu0 0
        %6847 = vmatpush1.bf16.msra.mxu0 %v4840
        %6848 = vmatprep.subr.bf16.mxu0 0
        %6849 = vmatpush1.bf16.msra.mxu0 %v4841
        %6850 = vmatprep.subr.bf16.mxu0 0
        %6851 = vmatpush1.bf16.msra.mxu0 %v4842
        %6852 = vmatprep.subr.bf16.mxu0 0
        %6853 = vmatpush1.bf16.msra.mxu0 %v4843
        %6854 = vmatprep.subr.bf16.mxu0 0
        %6855 = vmatpush1.bf16.msra.mxu0 %v4844
        %6856 = vmatprep.subr.bf16.mxu0 0
        %6857 = vmatpush1.bf16.msra.mxu0 %v4845
        %6858 = vmatprep.subr.bf16.mxu0 0
        %6859 = vmatpush1.bf16.msra.mxu0 %v4846
        %6860 = vmatprep.subr.bf16.mxu0 0
        %6861 = vmatpush1.bf16.msra.mxu0 %v4847
        %6862 = vmatprep.subr.bf16.mxu0 0
        %6863 = vmatpush1.bf16.msra.mxu0 %v4848
        %6864 = vmatprep.subr.bf16.mxu0 0
        %6865 = vmatpush1.bf16.msra.mxu0 %v4849
        %6866 = vmatprep.subr.bf16.mxu0 0
        %6867 = vmatpush1.bf16.msra.mxu0 %v4850
        %6868 = vmatprep.subr.bf16.mxu0 0
        %6869 = vmatpush1.bf16.msra.mxu0 %v4851
        %6870 = vmatprep.mubr.bf16.mxu0 %v1913
        %6871 = vmatmul.mubr.bf16.gmra.mrb[0].mxu0 %v1912
        %v6872 = vpop.f32.mrb[0].mxu0
        %v6873 = vadd.f32 %v6832, %v6872
        %v6874 = vpop.f32.mrb[0].mxu0
        %v6875 = vpop.f32.mrb[0].mxu0
        %v6876 = vadd.f32 %v6835, %v6875
        %v6877 = vpop.f32.mrb[0].mxu0
        %6878 = vdwg.mxu0
        %6879 = vmatprep.subr.bf16.mxu0 0
        %6880 = vmatpush1.bf16.msra.mxu0 %v4852
        %6881 = vmatprep.subr.bf16.mxu0 0
        %6882 = vmatpush1.bf16.msra.mxu0 %v4853
        %6883 = vmatprep.subr.bf16.mxu0 0
        %6884 = vmatpush1.bf16.msra.mxu0 %v4854
        %6885 = vmatprep.subr.bf16.mxu0 0
        %6886 = vmatpush1.bf16.msra.mxu0 %v4855
        %6887 = vmatprep.subr.bf16.mxu0 0
        %6888 = vmatpush1.bf16.msra.mxu0 %v4856
        %6889 = vmatprep.subr.bf16.mxu0 0
        %6890 = vmatpush1.bf16.msra.mxu0 %v4857
        %6891 = vmatprep.subr.bf16.mxu0 0
        %6892 = vmatpush1.bf16.msra.mxu0 %v4858
        %6893 = vmatprep.subr.bf16.mxu0 0
        %6894 = vmatpush1.bf16.msra.mxu0 %v4859
        %6895 = vmatprep.subr.bf16.mxu0 0
        %6896 = vmatpush1.bf16.msra.mxu0 %v4860
        %6897 = vmatprep.subr.bf16.mxu0 0
        %6898 = vmatpush1.bf16.msra.mxu0 %v4861
        %6899 = vmatprep.subr.bf16.mxu0 0
        %6900 = vmatpush1.bf16.msra.mxu0 %v4862
        %6901 = vmatprep.subr.bf16.mxu0 0
        %6902 = vmatpush1.bf16.msra.mxu0 %v4863
        %6903 = vmatprep.subr.bf16.mxu0 0
        %6904 = vmatpush1.bf16.msra.mxu0 %v4864
        %6905 = vmatprep.subr.bf16.mxu0 0
        %6906 = vmatpush1.bf16.msra.mxu0 %v4865
        %6907 = vmatprep.subr.bf16.mxu0 0
        %6908 = vmatpush1.bf16.msra.mxu0 %v4866
        %6909 = vmatprep.subr.bf16.mxu0 0
        %6910 = vmatpush1.bf16.msra.mxu0 %v4867
        %6911 = vmatprep.mubr.bf16.mxu0 %v1915
        %6912 = vmatmul.mubr.bf16.gmra.mrb[0].mxu0 %v1914
        %v6913 = vpop.f32.mrb[0].mxu0
        %v6914 = vadd.f32 %v6873, %v6913
        %v6915 = vpop.f32.mrb[0].mxu0
        %v6916 = vpop.f32.mrb[0].mxu0
        %v6917 = vadd.f32 %v6876, %v6916
        %v6918 = vpop.f32.mrb[0].mxu0
        %6919 = vdwg.mxu0
        %v6920 = vadd.f32 %v402, %v6914
        %v6921 = vadd.f32 %v403, %v6917
        %6922 = vst [vmem:[#allocation2] sm:$0xff] %v6920
        %6923 = vst [vmem:[#allocation2 + $0x8] sm:$0xff] %v6921
        %p6924 = scmp.eq.s32.totalorder %s16, 1
        // Predicated region
        $region68: #{forward.5} parent=58 // pred_check
          %p6925 = pneg %p6924
        $region69: #{forward.5} parent=58 // pred_check_branch
          %6927 = sbr.rel (%p6925) target = $region71
        $region70: #{forward.5} parent=58 // pred_region
          %v6928 = vld [vmem:[#allocation2] sm:$0xff]
          %v6929 = vld [vmem:[#allocation2 + $0x8] sm:$0xff]
          %v6930 = vld [vmem:[%s2] sm:$0x1]
          %v6932 = vlaneseq
          %v6933 = vshrl.u32 %v6932, 7
          %v6934 = vsub.s32 0, %v6933
          %v6935 = vrot.slane %v6930, %v6934
          %v6937 = vadd.f32 %v6928, %v6935
          %v6938 = vadd.f32 %v6929, %v6935
          %6941 = vrot.lane.b32.xlu0 %v6937, 104
          %v6942 = vpop.permute.xlu0 %6941
          %6943 = vrot.lane.b32.xlu0 %v6938, 104
          %v6944 = vpop.permute.xlu0 %6943
          %v6947 = vmax.f32 %v6937, %v6942
          %v6948 = vmax.f32 %v6938, %v6944
          %6949 = vrot.lane.b32.xlu0 %v6937, 80
          %v6950 = vpop.permute.xlu0 %6949
          %6951 = vrot.lane.b32.xlu0 %v6938, 80
          %v6952 = vpop.permute.xlu0 %6951
          %v6955 = vmax.f32 %v6947, %v6950
          %v6956 = vmax.f32 %v6948, %v6952
          %6957 = vrot.lane.b32.xlu0 %v6937, 56
          %v6958 = vpop.permute.xlu0 %6957
          %6959 = vrot.lane.b32.xlu0 %v6938, 56
          %v6960 = vpop.permute.xlu0 %6959
          %v6963 = vmax.f32 %v6955, %v6958
          %v6964 = vmax.f32 %v6956, %v6960
          %6965 = vrot.lane.b32.xlu0 %v6937, 32
          %v6966 = vpop.permute.xlu0 %6965
          %6967 = vrot.lane.b32.xlu0 %v6938, 32
          %v6968 = vpop.permute.xlu0 %6967
          %v6971 = vmax.f32 %v6963, %v6966
          %v6972 = vmax.f32 %v6964, %v6968
          %v6973 = vld [vmem:[%s3] sm:$0xff]
          %v6974 = vld [vmem:[%s3 + $0x8] sm:$0xff]
          %v6975 = vld [vmem:[%s3 + $0x10] sm:$0xff]
          %v6976 = vld [vmem:[%s4] sm:$0x1]
          %v6978 = vlaneseq
          %v6979 = vshrl.u32 %v6978, 7
          %v6980 = vsub.s32 0, %v6979
          %v6981 = vrot.slane %v6976, %v6980
          %vm6983 = vcmask 195584
          %v6985 = vsel %vm6983, %v6971, 0
          %v6988 = vsel %vm6983, %v6972, 0
          %6990 = vmatprep.subr.mxu0 0.0
          %6991 = vmatpush1.msra.mxu0 %v6973
          %6992 = vmatprep.subr.mxu0 0.0
          %6993 = vmatpush1.msra.mxu0 %v6974
          %6994 = vmatprep.subr.mxu0 0.0
          %6995 = vmatpush1.msra.mxu0 %v6975
          %6996 = vmatprep.subr.mxu0 0.0
          %6997 = vmatpush1.msra.mxu0 0.0
          %6998 = vmatprep.subr.mxu0 0.0
          %6999 = vmatpush1.msra.mxu0 0.0
          %7000 = vmatprep.subr.mxu0 0.0
          %7001 = vmatpush1.msra.mxu0 0.0
          %7002 = vmatprep.subr.mxu0 0.0
          %7003 = vmatpush1.msra.mxu0 0.0
          %7004 = vmatprep.subr.mxu0 0.0
          %7005 = vmatpush1.msra.mxu0 0.0
          %7006 = vmatprep.subr.mxu0 0.0
          %7007 = vmatpush1.msra.mxu0 0.0
          %7008 = vmatprep.subr.mxu0 0.0
          %7009 = vmatpush1.msra.mxu0 0.0
          %7010 = vmatprep.subr.mxu0 0.0
          %7011 = vmatpush1.msra.mxu0 0.0
          %7012 = vmatprep.subr.mxu0 0.0
          %7013 = vmatpush1.msra.mxu0 0.0
          %7014 = vmatprep.subr.mxu0 0.0
          %7015 = vmatpush1.msra.mxu0 0.0
          %7016 = vmatprep.subr.mxu0 0.0
          %7017 = vmatpush1.msra.mxu0 0.0
          %7018 = vmatprep.subr.mxu0 0.0
          %7019 = vmatpush1.msra.mxu0 0.0
          %7020 = vmatprep.subr.mxu0 0.0
          %7021 = vmatpush1.msra.mxu0 0.0
          %7022 = vmatprep.subr.mxu0 0.0
          %7023 = vmatpush1.msra.mxu0 0.0
          %7024 = vmatprep.subr.mxu0 0.0
          %7025 = vmatpush1.msra.mxu0 0.0
          %7026 = vmatprep.subr.mxu0 0.0
          %7027 = vmatpush1.msra.mxu0 0.0
          %7028 = vmatprep.subr.mxu0 0.0
          %7029 = vmatpush1.msra.mxu0 0.0
          %7030 = vmatprep.subr.mxu0 0.0
          %7031 = vmatpush1.msra.mxu0 0.0
          %7032 = vmatprep.subr.mxu0 0.0
          %7033 = vmatpush1.msra.mxu0 0.0
          %7034 = vmatprep.subr.mxu0 0.0
          %7035 = vmatpush1.msra.mxu0 0.0
          %7036 = vmatprep.subr.mxu0 0.0
          %7037 = vmatpush1.msra.mxu0 0.0
          %7038 = vmatprep.subr.mxu0 0.0
          %7039 = vmatpush1.msra.mxu0 0.0
          %7040 = vmatprep.subr.mxu0 0.0
          %7041 = vmatpush1.msra.mxu0 0.0
          %7042 = vmatprep.subr.mxu0 0.0
          %7043 = vmatpush1.msra.mxu0 0.0
          %7044 = vmatprep.subr.mxu0 0.0
          %7045 = vmatpush1.msra.mxu0 0.0
          %7046 = vmatprep.subr.mxu0 0.0
          %7047 = vmatpush1.msra.mxu0 0.0
          %7048 = vmatprep.subr.mxu0 0.0
          %7049 = vmatpush1.msra.mxu0 0.0
          %7050 = vmatprep.subr.mxu0 0.0
          %7051 = vmatpush1.msra.mxu0 0.0
          %7052 = vmatprep.subr.mxu0 0.0
          %7053 = vmatpush1.msra.mxu0 0.0
          %7054 = vmatprep.mubr.f32.mxu0 0.0
          %7055 = vmatmul.mubr.f32.gmra.mrb[0].mxu0 %v6985
          %v7056 = vpop.f32.mrb[0].mxu0
          %v7057 = vadd.f32 %v6981, %v7056
          %v7058 = vpop.f32.mrb[0].mxu0
          %7059 = vmatprep.mubr.f32.mxu0 0.0
          %7060 = vmatmul.mubr.f32.gmra.mrb[0].mxu0 %v6988
          %v7061 = vpop.f32.mrb[0].mxu0
          %v7062 = vadd.f32 %v6981, %v7061
          %v7063 = vpop.f32.mrb[0].mxu0
          %7064 = vdwg.mxu0
          %7065 = vmax.xlane.f32.xlu0 %v7057
          %v7066 = vpop.xlane.xlu0 %7065
          %7067 = vmax.xlane.f32.xlu0 %v7062
          %v7068 = vpop.xlane.xlu0 %7067
          %v7069 = vsub.f32 %v7057, %v7066
          %v7070 = vsub.f32 %v7062, %v7068
          %v7071 = vmul.f32 %v7069, 1.442695
          %v7072 = vpow.pop %v7071
          %v7073 = vmul.f32 %v7070, 1.442695
          %v7074 = vpow.pop %v7073
          %7075 = vadd.xlane.f32.xlu0 %v7072
          %v7076 = vpop.xlane.xlu0 %7075
          %7077 = vadd.xlane.f32.xlu0 %v7074
          %v7078 = vpop.xlane.xlu0 %7077
          %v7079 = vrcp.pop %v7076
          %v7080 = vrcp.pop %v7078
          %v7081 = vmul.f32 %v7072, %v7079
          %v7082 = vmul.f32 %v7074, %v7080
          %7083 = vst [vmem:[%s5] sm:$0xff] %v7081
          %7084 = vst [vmem:[%s5 + $0x8] sm:$0xff] %v7082
        $region71: #{forward.5} parent=58 // pred_fallthru
          _
        // Predicated region
        $region72: #{forward.5} parent=58 // pred_check
          %p7085 = pneg %p144
        $region73: #{forward.5} parent=58 // pred_check_branch
          %7087 = sbr.rel (%p7085) target = $region75
        $region74: #{forward.5} parent=58 // pred_region
          _
        $region75: #{forward.5} parent=58 // pred_fallthru
          _
        // Predicated region
        $region76: #{forward.5} parent=58 // pred_check
          %p7088 = pneg %p144
        $region77: #{forward.5} parent=58 // pred_check_branch
          %7090 = sbr.rel (%p7088) target = $region79
        $region78: #{forward.5} parent=58 // pred_region
          _
        $region79: #{forward.5} parent=58 // pred_fallthru
          _
      $region59: #{forward.5} parent=5 // pred_fallthru
        _
      %p7091 = scmp.le.s32.totalorder 2, %s11
      // Predicated region
      $region80: #{forward.5} parent=5 // pred_check
        %p7092 = pneg %p7091
      $region81: #{forward.5} parent=5 // pred_check_branch
        %7094 = sbr.rel (%p7092) target = $region83
      $region82: #{forward.5} parent=5 // pred_region
        %s7095 = ssub.s32 %s11, 2
      $region83: #{forward.5} parent=5 // pred_fallthru
        _
    $region6: #{forward.5} parent=1 // loop_footer
      %s15 = sadd.s32 1, %s11
    $region7: #{forward.5} parent=1 // loop_footer_branch
      %10 = sbr.rel target = $region3
    $region8: #{forward.5} parent=1 // loop_exit
      _

</llo_original>
